<compile_context>
chip_gen: v7x
topology: tpu7x:2x2x1
jax: 0.10.0
libtpu: 0.0.40
codegen_flags: <defaults>
</compile_context>

<pallas_src>
import functools

import jax
import jax.numpy as jnp
from jax.experimental import pallas as pl
from jax.experimental.pallas import tpu as pltpu


def _window_attn_body(x_ref, wqkv_ref, bqkv_ref, bias_ref, wproj_ref, bproj_ref,
                      mask_ref, o_ref, *, WB, N, C, num_heads, head_dim,
                      compute_dtype):
    # (WB, N, C) -> (WB*N, C): leading-dim collapse, lane layout (C) unchanged.
    x = x_ref[...].reshape(WB * N, C)

    # Fused QKV projection for all WB windows: one (WB*N, C) @ (C, 3C) MXU matmul.
    # `scale` is already folded into the Q third of the weight/bias.
    qkv = jnp.dot(x, wqkv_ref[...], preferred_element_type=jnp.float32)
    qkv = qkv + bqkv_ref[0]                                        # (WB*N, 3C) f32

    # Optional shifted-window mask for this window batch (loaded once, f32).
    mask = mask_ref[...] if mask_ref is not None else None         # (WB, N, N)

    # Per-head attention, batched over all WB windows with 3-D einsums (single batch
    # dim -> clean MXU lowering). The head loop is unrolled at trace time.
    ctx_heads = []
    for h in range(num_heads):
        q = qkv[:, h * head_dim:(h + 1) * head_dim]
        k = qkv[:, C + h * head_dim:C + (h + 1) * head_dim]
        v = qkv[:, 2 * C + h * head_dim:2 * C + (h + 1) * head_dim]
        q = q.reshape(WB, N, head_dim).astype(compute_dtype)
        k = k.reshape(WB, N, head_dim).astype(compute_dtype)
        v = v.reshape(WB, N, head_dim).astype(compute_dtype)

        # Scores for all WB windows of this head; contract head_dim directly
        # (no materialized k.T).
        s = jnp.einsum('bqd,bkd->bqk', q, k,
                       preferred_element_type=jnp.float32)         # (WB, N, N)
        s = s + bias_ref[h][None]                                   # rel-pos bias
        if mask is not None:
            s = s + mask                                             # shifted-window mask

        # Numerically stable softmax in f32; approx reciprocal goes to the EUP slot.
        m = jnp.max(s, axis=-1, keepdims=True)
        e = jnp.exp(s - m)
        p = e * pl.reciprocal(jnp.sum(e, axis=-1, keepdims=True), approx=True)

        ctx_heads.append(
            jnp.einsum('bqk,bkd->bqd', p.astype(compute_dtype), v,
                       preferred_element_type=jnp.float32))         # (WB, N, hd)

    # Merge heads along channels, then one fused (WB*N, C) @ (C, C) output projection.
    ctx = jnp.concatenate(ctx_heads, axis=-1).reshape(WB * N, C)
    out = jnp.dot(ctx.astype(compute_dtype), wproj_ref[...],
                  preferred_element_type=jnp.float32)
    out = out + bproj_ref[0]
    o_ref[...] = out.reshape(WB, N, C).astype(o_ref.dtype)


def _window_attn_kernel(x_ref, wqkv_ref, bqkv_ref, bias_ref, wproj_ref,
                        bproj_ref, o_ref, **static):
    _window_attn_body(x_ref, wqkv_ref, bqkv_ref, bias_ref, wproj_ref, bproj_ref,
                      None, o_ref, **static)


def _window_attn_kernel_masked(x_ref, wqkv_ref, bqkv_ref, bias_ref, wproj_ref,
                               bproj_ref, mask_ref, o_ref, **static):
    _window_attn_body(x_ref, wqkv_ref, bqkv_ref, bias_ref, wproj_ref, bproj_ref,
                      mask_ref, o_ref, **static)


def make_relative_position_index(window_size):
    """Reproduces the PyTorch buffer `relative_position_index` (N, N) int32."""
    Wh, Ww = window_size
    coords_h = jnp.arange(Wh)
    coords_w = jnp.arange(Ww)
    coords = jnp.stack(jnp.meshgrid(coords_h, coords_w, indexing="ij"))   # (2, Wh, Ww)
    coords_flatten = coords.reshape(2, -1)                                # (2, N)
    rel = coords_flatten[:, :, None] - coords_flatten[:, None, :]         # (2, N, N)
    rel = rel.transpose(1, 2, 0)                                          # (N, N, 2)
    r0 = (rel[..., 0] + Wh - 1) * (2 * Ww - 1)
    r1 = rel[..., 1] + Ww - 1
    return (r0 + r1).astype(jnp.int32)                                    # (N, N)


def relative_position_bias(table, window_size, num_heads):
    """(nH, N, N) bias, same as the PyTorch gather + permute (plain-JAX glue)."""
    Wh, Ww = window_size
    N = Wh * Ww
    idx = make_relative_position_index(window_size).reshape(-1)           # (N*N,)
    bias = table[idx].reshape(N, N, num_heads)                            # gather
    return bias.transpose(2, 0, 1)                                        # (nH, N, N)


def _choose_window_batch(B_, N, C, num_heads, itemsize,
                         max_rows=1024, vmem_budget_bytes=8 * 1024 * 1024):
    """Largest divisor WB of B_ whose per-step working set stays comfortably inside the
    default scoped-VMEM budget while making WB*N large (>=128 rows) for the MXU."""
    best = 1
    for wb in range(1, B_ + 1):
        if B_ % wb:
            continue
        rows = wb * N
        if rows > max_rows:
            break
        # rough per-step VMEM: double-buffered x/out tiles + double-buffered weights +
        # f32 qkv / per-head score+exp / merged-context / f32-out intermediates
        # (+ allowance for an optional mask block).
        io_tiles = 4 * rows * C * itemsize
        weights = 2 * (C * 3 * C + C * C) * itemsize
        scratch = (rows * 3 * C * 4 + 3 * wb * N * N * 4
                   + 2 * rows * C * 4 + num_heads * N * N * 4)
        if io_tiles + weights + scratch > vmem_budget_bytes:
            break
        best = wb
    return best


def window_attention_pallas(x, params, window_size, num_heads, mask=None, *,
                            window_batch=None):
    B_, N, C = x.shape
    head_dim = C // num_heads
    scale = head_dim ** (-0.5)
    cdtype = x.dtype

    # --- static weight preprocessing (glue, one-time cost) ---
    # torch Linear convention: w is (out, in). Transpose once; fold `scale` into the
    # Q third of the QKV weight and bias so the kernel never multiplies by scale.
    scale_cols = jnp.concatenate([jnp.full((C,), scale, jnp.float32),
                                  jnp.ones((2 * C,), jnp.float32)])
    wqkv_t = (jnp.asarray(params["w_qkv"]).T.astype(jnp.float32)
              * scale_cols[None, :]).astype(cdtype)                         # (C, 3C)
    bqkv = (jnp.asarray(params["b_qkv"]).astype(jnp.float32)
            * scale_cols).reshape(1, 3 * C)                                 # f32
    wproj_t = jnp.asarray(params["w_proj"]).T.astype(cdtype)                # (C, C)
    bproj = jnp.asarray(params["b_proj"]).astype(jnp.float32).reshape(1, C)
    bias = relative_position_bias(params["rpb_table"], window_size,
                                  num_heads).astype(jnp.float32)            # (nH, N, N)

    if window_batch is None:
        window_batch = _choose_window_batch(B_, N, C, num_heads,
                                            jnp.dtype(cdtype).itemsize)
    WB = window_batch
    assert B_ % WB == 0, "window_batch must divide num_windows*batch"

    static = dict(WB=WB, N=N, C=C, num_heads=num_heads, head_dim=head_dim,
                  compute_dtype=cdtype)

    inputs = [x, wqkv_t, bqkv, bias, wproj_t, bproj]
    in_specs = [
        pl.BlockSpec((WB, N, C), lambda b: (b, 0, 0)),          # x: WB windows
        pl.BlockSpec((C, 3 * C), lambda b: (0, 0)),             # qkv weight^T (scaled)
        pl.BlockSpec((1, 3 * C), lambda b: (0, 0)),             # qkv bias (scaled, f32)
        pl.BlockSpec((num_heads, N, N), lambda b: (0, 0, 0)),   # rel-pos bias (f32)
        pl.BlockSpec((C, C), lambda b: (0, 0)),                 # proj weight^T
        pl.BlockSpec((1, C), lambda b: (0, 0)),                 # proj bias (f32)
    ]

    if mask is None:
        kernel = functools.partial(_window_attn_kernel, **static)
    else:
        nW = mask.shape[0]
        assert B_ % nW == 0, "mask windows must divide num_windows*batch"
        # Expand the (nW, N, N) mask to one row per window so each (WB, N, N) block is a
        # simple contiguous slice (small duplication; a modulo index_map could avoid it).
        mask_full = jnp.tile(jnp.asarray(mask, jnp.float32), (B_ // nW, 1, 1))
        inputs.append(mask_full)
        in_specs.append(pl.BlockSpec((WB, N, N), lambda b: (b, 0, 0)))
        kernel = functools.partial(_window_attn_kernel_masked, **static)

    return pl.pallas_call(
        kernel,
        out_shape=jax.ShapeDtypeStruct((B_, N, C), x.dtype),
        grid=(B_ // WB,),
        in_specs=in_specs,
        out_specs=pl.BlockSpec((WB, N, C), lambda b: (b, 0, 0)),
        compiler_params=pltpu.CompilerParams(
            # parallel window-batch axis -> shards across TensorCores on multi-core parts.
            dimension_semantics=("parallel",)),
        # TODO(synk): at production Swin widths (C >= 512) also set vmem_limit_bytes
        # explicitly (v7x has 64 MiB physical VMEM / 32 MiB default scoped limit).
    )(*inputs)


def window_attention_reference(x, params, window_size, num_heads, mask=None):
    """Pure-JAX reference mirroring the PyTorch forward."""
    B_, N, C = x.shape
    hd = C // num_heads
    scale = hd ** (-0.5)
    qkv = x @ params["w_qkv"].T + params["b_qkv"]
    qkv = qkv.reshape(B_, N, 3, num_heads, hd).transpose(2, 0, 3, 1, 4)
    q, k, v = qkv[0] * scale, qkv[1], qkv[2]
    attn = q @ k.transpose(0, 1, 3, 2)                                  # (B_, nH, N, N)
    bias = relative_position_bias(params["rpb_table"], window_size, num_heads)
    attn = attn + bias[None]
    if mask is not None:
        nW = mask.shape[0]
        attn = attn.reshape(B_ // nW, nW, num_heads, N, N) + mask[None, :, None]
        attn = attn.reshape(B_, num_heads, N, N)
    attn = jax.nn.softmax(attn, axis=-1)
    out = (attn @ v).transpose(0, 2, 1, 3).reshape(B_, N, C)
    return out @ params["w_proj"].T + params["b_proj"]


def init_params(key, dim, window_size, num_heads):
    Wh, Ww = window_size
    k0, k1, k2, k3, k4 = jax.random.split(key, 5)
    table_size = (2 * Wh - 1) * (2 * Ww - 1)
    return {
        # trunc_normal_(std=0.02) approximated by a plain normal (deterministic seed)
        "rpb_table": 0.02 * jax.random.normal(k0, (table_size, num_heads), jnp.float32),
        "w_qkv": 0.02 * jax.random.normal(k1, (3 * dim, dim), jnp.float32),
        "b_qkv": 0.02 * jax.random.normal(k2, (3 * dim,), jnp.float32),
        "w_proj": 0.02 * jax.random.normal(k3, (dim, dim), jnp.float32),
        "b_proj": 0.02 * jax.random.normal(k4, (dim,), jnp.float32),
    }


if __name__ == "__main__":
    # Small shapes: dim=32, window 4x4 -> N=16 tokens, 4 heads (head_dim=8),
    # B_ = batch(2) * num_windows(4) = 8 windows. With WB=8, one grid step does a
    # (128, 32) @ (32, 96) QKV matmul (128 MXU rows) instead of eight (16, 32) ones.
    dim = 32
    window_size = (4, 4)
    num_heads = 4
    nW = 4                       # windows per image
    B_ = 2 * nW                  # batch(2) * num_windows(4)
    N = window_size[0] * window_size[1]

    key = jax.random.PRNGKey(0)
    pkey, xkey, mkey = jax.random.split(key, 3)
    params = init_params(pkey, dim, window_size, num_heads)
    x = jax.random.normal(xkey, (B_, N, dim), jnp.float32)

    # --- W-MSA path (mask=None) ---
    out = window_attention_pallas(x, params, window_size, num_heads)
    out = jax.block_until_ready(out)
    ref = window_attention_reference(x, params, window_size, num_heads)
    assert out.shape == (B_, N, dim)
    # approx reciprocal in the softmax denominator slightly loosens the tolerance
    assert jnp.allclose(out, ref, atol=1e-3, rtol=1e-3), "mismatch vs reference (no mask)"

    # --- SW-MSA path (0/-100 shifted-window style mask) ---
    mask = jnp.where(jax.random.bernoulli(mkey, 0.3, (nW, N, N)), -100.0, 0.0)
    out_m = window_attention_pallas(x, params, window_size, num_heads, mask=mask)
    out_m = jax.block_until_ready(out_m)
    ref_m = window_attention_reference(x, params, window_size, num_heads, mask=mask)
    assert jnp.allclose(out_m, ref_m, atol=1e-3, rtol=1e-3), "mismatch vs reference (mask)"

    print("KERNEL_OK")
</pallas_src>

<mosaic_0001>
module attributes {stable_mosaic.version = 11 : i64} {
  func.func @_window_attn_kernel(%arg0: i32, %arg1: memref<8x16x32xf32, #tpu.memory_space<vmem>>, %arg2: memref<32x96xf32, #tpu.memory_space<vmem>>, %arg3: memref<1x96xf32, #tpu.memory_space<vmem>>, %arg4: memref<4x16x16xf32, #tpu.memory_space<vmem>>, %arg5: memref<32x32xf32, #tpu.memory_space<vmem>>, %arg6: memref<1x32xf32, #tpu.memory_space<vmem>>, %arg7: memref<8x16x32xf32, #tpu.memory_space<vmem>>) attributes {dimension_semantics = [#tpu.dimension_semantics<parallel>], iteration_bounds = array<i64: 1>, scalar_prefetch = 0 : i64, scratch_operands = 0 : i64, tpu.core_type = #tpu.core_type<tc>, window_params = [{transform_indices = @transform_0, window_bounds = array<i64: 8, 16, 32>}, {pipeline_mode = #tpu.pipeline_mode<synchronous>, transform_indices = @transform_1, window_bounds = array<i64: 32, 96>}, {pipeline_mode = #tpu.pipeline_mode<synchronous>, transform_indices = @transform_2, window_bounds = array<i64: 1, 96>}, {pipeline_mode = #tpu.pipeline_mode<synchronous>, transform_indices = @transform_3, window_bounds = array<i64: 4, 16, 16>}, {pipeline_mode = #tpu.pipeline_mode<synchronous>, transform_indices = @transform_4, window_bounds = array<i64: 32, 32>}, {pipeline_mode = #tpu.pipeline_mode<synchronous>, transform_indices = @transform_5, window_bounds = array<i64: 1, 32>}, {transform_indices = @transform_6, window_bounds = array<i64: 8, 16, 32>}]} {
    %c0 = arith.constant 0 : index
    %c0_0 = arith.constant 0 : index
    %c0_1 = arith.constant 0 : index
    %0 = vector.load %arg1[%c0, %c0_0, %c0_1] : memref<8x16x32xf32, #tpu.memory_space<vmem>>, vector<8x16x32xf32>
    %1 = vector.shape_cast %0 : vector<8x16x32xf32> to vector<128x32xf32>
    %c0_2 = arith.constant 0 : index
    %c0_3 = arith.constant 0 : index
    %2 = vector.load %arg2[%c0_2, %c0_3] : memref<32x96xf32, #tpu.memory_space<vmem>>, vector<32x96xf32>
    %cst = arith.constant dense<0.000000e+00> : vector<128x96xf32>
    %3 = tpu.matmul %1, %2, %cst {dimension_numbers = #tpu.dot_dimension_numbers<[1], [0], [0], [1], [0, 0, 1, 1], [], []>} : vector<128x32xf32>, vector<32x96xf32>, vector<128x96xf32> -> vector<128x96xf32>
    %c0_4 = arith.constant 0 : index
    %c0_5 = arith.constant 0 : index
    %4 = vector.load %arg3[%c0_4, %c0_5] : memref<1x96xf32, #tpu.memory_space<vmem>>, vector<1x96xf32>
    %5 = vector.shape_cast %4 : vector<1x96xf32> to vector<96xf32>
    %6 = vector.shape_cast %5 : vector<96xf32> to vector<1x96xf32>
    %7 = vector.broadcast %6 : vector<1x96xf32> to vector<128x96xf32>
    %8 = arith.addf %3, %7 : vector<128x96xf32>
    %9 = vector.extract_strided_slice %8 {offsets = [0, 0], sizes = [128, 8], strides = [1, 1]} : vector<128x96xf32> to vector<128x8xf32>
    %10 = vector.extract_strided_slice %8 {offsets = [0, 32], sizes = [128, 8], strides = [1, 1]} : vector<128x96xf32> to vector<128x8xf32>
    %11 = vector.extract_strided_slice %8 {offsets = [0, 64], sizes = [128, 8], strides = [1, 1]} : vector<128x96xf32> to vector<128x8xf32>
    %12 = vector.shape_cast %9 : vector<128x8xf32> to vector<8x16x8xf32>
    %13 = vector.shape_cast %10 : vector<128x8xf32> to vector<8x16x8xf32>
    %14 = vector.shape_cast %11 : vector<128x8xf32> to vector<8x16x8xf32>
    "tpu.trace_start"() <{level = 10 : i32, message = "bqd,bkd->bqk"}> : () -> ()
    %cst_6 = arith.constant dense<0.000000e+00> : vector<8x16x16xf32>
    %15 = tpu.matmul %12, %13, %cst_6 {dimension_numbers = #tpu.dot_dimension_numbers<[2], [2], [1], [1], [0, 0, 0, 1, 1, 1], [0], [0]>} : vector<8x16x8xf32>, vector<8x16x8xf32>, vector<8x16x16xf32> -> vector<8x16x16xf32>
    "tpu.trace_stop"() : () -> ()
    %c0_7 = arith.constant 0 : index
    %c0_8 = arith.constant 0 : index
    %c0_9 = arith.constant 0 : index
    %16 = vector.load %arg4[%c0_7, %c0_8, %c0_9] : memref<4x16x16xf32, #tpu.memory_space<vmem>>, vector<1x16x16xf32>
    %17 = vector.shape_cast %16 : vector<1x16x16xf32> to vector<16x16xf32>
    %18 = vector.shape_cast %17 : vector<16x16xf32> to vector<1x16x16xf32>
    %19 = vector.broadcast %18 : vector<1x16x16xf32> to vector<8x16x16xf32>
    %20 = arith.addf %15, %19 : vector<8x16x16xf32>
    %cst_10 = arith.constant dense<0xFF800000> : vector<8x16xf32>
    %21 = vector.multi_reduction <maximumf>, %20, %cst_10 [2] : vector<8x16x16xf32> to vector<8x16xf32>
    %22 = vector.shape_cast %21 : vector<8x16xf32> to vector<8x16x1xf32>
    %23 = vector.broadcast %22 : vector<8x16x1xf32> to vector<8x16x16xf32>
    %24 = arith.subf %20, %23 : vector<8x16x16xf32>
    %25 = math.exp %24 : vector<8x16x16xf32>
    %cst_11 = arith.constant dense<0.000000e+00> : vector<8x16xf32>
    %26 = vector.multi_reduction <add>, %25, %cst_11 [2] : vector<8x16x16xf32> to vector<8x16xf32>
    %27 = vector.shape_cast %26 : vector<8x16xf32> to vector<8x16x1xf32>
    %28 = tpu.reciprocal %27 {approx = true} : vector<8x16x1xf32> -> vector<8x16x1xf32>
    %29 = vector.broadcast %28 : vector<8x16x1xf32> to vector<8x16x16xf32>
    %30 = arith.mulf %25, %29 : vector<8x16x16xf32>
    "tpu.trace_start"() <{level = 10 : i32, message = "bqk,bkd->bqd"}> : () -> ()
    %cst_12 = arith.constant dense<0.000000e+00> : vector<8x16x8xf32>
    %31 = tpu.matmul %30, %14, %cst_12 {dimension_numbers = #tpu.dot_dimension_numbers<[2], [1], [1], [2], [0, 0, 0, 1, 1, 2], [0], [0]>} : vector<8x16x16xf32>, vector<8x16x8xf32>, vector<8x16x8xf32> -> vector<8x16x8xf32>
    "tpu.trace_stop"() : () -> ()
    %32 = vector.extract_strided_slice %8 {offsets = [0, 8], sizes = [128, 8], strides = [1, 1]} : vector<128x96xf32> to vector<128x8xf32>
    %33 = vector.extract_strided_slice %8 {offsets = [0, 40], sizes = [128, 8], strides = [1, 1]} : vector<128x96xf32> to vector<128x8xf32>
    %34 = vector.extract_strided_slice %8 {offsets = [0, 72], sizes = [128, 8], strides = [1, 1]} : vector<128x96xf32> to vector<128x8xf32>
    %35 = vector.shape_cast %32 : vector<128x8xf32> to vector<8x16x8xf32>
    %36 = vector.shape_cast %33 : vector<128x8xf32> to vector<8x16x8xf32>
    %37 = vector.shape_cast %34 : vector<128x8xf32> to vector<8x16x8xf32>
    "tpu.trace_start"() <{level = 10 : i32, message = "bqd,bkd->bqk"}> : () -> ()
    %cst_13 = arith.constant dense<0.000000e+00> : vector<8x16x16xf32>
    %38 = tpu.matmul %35, %36, %cst_13 {dimension_numbers = #tpu.dot_dimension_numbers<[2], [2], [1], [1], [0, 0, 0, 1, 1, 1], [0], [0]>} : vector<8x16x8xf32>, vector<8x16x8xf32>, vector<8x16x16xf32> -> vector<8x16x16xf32>
    "tpu.trace_stop"() : () -> ()
    %c1 = arith.constant 1 : index
    %c0_14 = arith.constant 0 : index
    %c0_15 = arith.constant 0 : index
    %39 = vector.load %arg4[%c1, %c0_14, %c0_15] : memref<4x16x16xf32, #tpu.memory_space<vmem>>, vector<1x16x16xf32>
    %40 = vector.shape_cast %39 : vector<1x16x16xf32> to vector<16x16xf32>
    %41 = vector.shape_cast %40 : vector<16x16xf32> to vector<1x16x16xf32>
    %42 = vector.broadcast %41 : vector<1x16x16xf32> to vector<8x16x16xf32>
    %43 = arith.addf %38, %42 : vector<8x16x16xf32>
    %cst_16 = arith.constant dense<0xFF800000> : vector<8x16xf32>
    %44 = vector.multi_reduction <maximumf>, %43, %cst_16 [2] : vector<8x16x16xf32> to vector<8x16xf32>
    %45 = vector.shape_cast %44 : vector<8x16xf32> to vector<8x16x1xf32>
    %46 = vector.broadcast %45 : vector<8x16x1xf32> to vector<8x16x16xf32>
    %47 = arith.subf %43, %46 : vector<8x16x16xf32>
    %48 = math.exp %47 : vector<8x16x16xf32>
    %cst_17 = arith.constant dense<0.000000e+00> : vector<8x16xf32>
    %49 = vector.multi_reduction <add>, %48, %cst_17 [2] : vector<8x16x16xf32> to vector<8x16xf32>
    %50 = vector.shape_cast %49 : vector<8x16xf32> to vector<8x16x1xf32>
    %51 = tpu.reciprocal %50 {approx = true} : vector<8x16x1xf32> -> vector<8x16x1xf32>
    %52 = vector.broadcast %51 : vector<8x16x1xf32> to vector<8x16x16xf32>
    %53 = arith.mulf %48, %52 : vector<8x16x16xf32>
    "tpu.trace_start"() <{level = 10 : i32, message = "bqk,bkd->bqd"}> : () -> ()
    %cst_18 = arith.constant dense<0.000000e+00> : vector<8x16x8xf32>
    %54 = tpu.matmul %53, %37, %cst_18 {dimension_numbers = #tpu.dot_dimension_numbers<[2], [1], [1], [2], [0, 0, 0, 1, 1, 2], [0], [0]>} : vector<8x16x16xf32>, vector<8x16x8xf32>, vector<8x16x8xf32> -> vector<8x16x8xf32>
    "tpu.trace_stop"() : () -> ()
    %55 = vector.extract_strided_slice %8 {offsets = [0, 16], sizes = [128, 8], strides = [1, 1]} : vector<128x96xf32> to vector<128x8xf32>
    %56 = vector.extract_strided_slice %8 {offsets = [0, 48], sizes = [128, 8], strides = [1, 1]} : vector<128x96xf32> to vector<128x8xf32>
    %57 = vector.extract_strided_slice %8 {offsets = [0, 80], sizes = [128, 8], strides = [1, 1]} : vector<128x96xf32> to vector<128x8xf32>
    %58 = vector.shape_cast %55 : vector<128x8xf32> to vector<8x16x8xf32>
    %59 = vector.shape_cast %56 : vector<128x8xf32> to vector<8x16x8xf32>
    %60 = vector.shape_cast %57 : vector<128x8xf32> to vector<8x16x8xf32>
    "tpu.trace_start"() <{level = 10 : i32, message = "bqd,bkd->bqk"}> : () -> ()
    %cst_19 = arith.constant dense<0.000000e+00> : vector<8x16x16xf32>
    %61 = tpu.matmul %58, %59, %cst_19 {dimension_numbers = #tpu.dot_dimension_numbers<[2], [2], [1], [1], [0, 0, 0, 1, 1, 1], [0], [0]>} : vector<8x16x8xf32>, vector<8x16x8xf32>, vector<8x16x16xf32> -> vector<8x16x16xf32>
    "tpu.trace_stop"() : () -> ()
    %c2 = arith.constant 2 : index
    %c0_20 = arith.constant 0 : index
    %c0_21 = arith.constant 0 : index
    %62 = vector.load %arg4[%c2, %c0_20, %c0_21] : memref<4x16x16xf32, #tpu.memory_space<vmem>>, vector<1x16x16xf32>
    %63 = vector.shape_cast %62 : vector<1x16x16xf32> to vector<16x16xf32>
    %64 = vector.shape_cast %63 : vector<16x16xf32> to vector<1x16x16xf32>
    %65 = vector.broadcast %64 : vector<1x16x16xf32> to vector<8x16x16xf32>
    %66 = arith.addf %61, %65 : vector<8x16x16xf32>
    %cst_22 = arith.constant dense<0xFF800000> : vector<8x16xf32>
    %67 = vector.multi_reduction <maximumf>, %66, %cst_22 [2] : vector<8x16x16xf32> to vector<8x16xf32>
    %68 = vector.shape_cast %67 : vector<8x16xf32> to vector<8x16x1xf32>
    %69 = vector.broadcast %68 : vector<8x16x1xf32> to vector<8x16x16xf32>
    %70 = arith.subf %66, %69 : vector<8x16x16xf32>
    %71 = math.exp %70 : vector<8x16x16xf32>
    %cst_23 = arith.constant dense<0.000000e+00> : vector<8x16xf32>
    %72 = vector.multi_reduction <add>, %71, %cst_23 [2] : vector<8x16x16xf32> to vector<8x16xf32>
    %73 = vector.shape_cast %72 : vector<8x16xf32> to vector<8x16x1xf32>
    %74 = tpu.reciprocal %73 {approx = true} : vector<8x16x1xf32> -> vector<8x16x1xf32>
    %75 = vector.broadcast %74 : vector<8x16x1xf32> to vector<8x16x16xf32>
    %76 = arith.mulf %71, %75 : vector<8x16x16xf32>
    "tpu.trace_start"() <{level = 10 : i32, message = "bqk,bkd->bqd"}> : () -> ()
    %cst_24 = arith.constant dense<0.000000e+00> : vector<8x16x8xf32>
    %77 = tpu.matmul %76, %60, %cst_24 {dimension_numbers = #tpu.dot_dimension_numbers<[2], [1], [1], [2], [0, 0, 0, 1, 1, 2], [0], [0]>} : vector<8x16x16xf32>, vector<8x16x8xf32>, vector<8x16x8xf32> -> vector<8x16x8xf32>
    "tpu.trace_stop"() : () -> ()
    %78 = vector.extract_strided_slice %8 {offsets = [0, 24], sizes = [128, 8], strides = [1, 1]} : vector<128x96xf32> to vector<128x8xf32>
    %79 = vector.extract_strided_slice %8 {offsets = [0, 56], sizes = [128, 8], strides = [1, 1]} : vector<128x96xf32> to vector<128x8xf32>
    %80 = vector.extract_strided_slice %8 {offsets = [0, 88], sizes = [128, 8], strides = [1, 1]} : vector<128x96xf32> to vector<128x8xf32>
    %81 = vector.shape_cast %78 : vector<128x8xf32> to vector<8x16x8xf32>
    %82 = vector.shape_cast %79 : vector<128x8xf32> to vector<8x16x8xf32>
    %83 = vector.shape_cast %80 : vector<128x8xf32> to vector<8x16x8xf32>
    "tpu.trace_start"() <{level = 10 : i32, message = "bqd,bkd->bqk"}> : () -> ()
    %cst_25 = arith.constant dense<0.000000e+00> : vector<8x16x16xf32>
    %84 = tpu.matmul %81, %82, %cst_25 {dimension_numbers = #tpu.dot_dimension_numbers<[2], [2], [1], [1], [0, 0, 0, 1, 1, 1], [0], [0]>} : vector<8x16x8xf32>, vector<8x16x8xf32>, vector<8x16x16xf32> -> vector<8x16x16xf32>
    "tpu.trace_stop"() : () -> ()
    %c3 = arith.constant 3 : index
    %c0_26 = arith.constant 0 : index
    %c0_27 = arith.constant 0 : index
    %85 = vector.load %arg4[%c3, %c0_26, %c0_27] : memref<4x16x16xf32, #tpu.memory_space<vmem>>, vector<1x16x16xf32>
    %86 = vector.shape_cast %85 : vector<1x16x16xf32> to vector<16x16xf32>
    %87 = vector.shape_cast %86 : vector<16x16xf32> to vector<1x16x16xf32>
    %88 = vector.broadcast %87 : vector<1x16x16xf32> to vector<8x16x16xf32>
    %89 = arith.addf %84, %88 : vector<8x16x16xf32>
    %cst_28 = arith.constant dense<0xFF800000> : vector<8x16xf32>
    %90 = vector.multi_reduction <maximumf>, %89, %cst_28 [2] : vector<8x16x16xf32> to vector<8x16xf32>
    %91 = vector.shape_cast %90 : vector<8x16xf32> to vector<8x16x1xf32>
    %92 = vector.broadcast %91 : vector<8x16x1xf32> to vector<8x16x16xf32>
    %93 = arith.subf %89, %92 : vector<8x16x16xf32>
    %94 = math.exp %93 : vector<8x16x16xf32>
    %cst_29 = arith.constant dense<0.000000e+00> : vector<8x16xf32>
    %95 = vector.multi_reduction <add>, %94, %cst_29 [2] : vector<8x16x16xf32> to vector<8x16xf32>
    %96 = vector.shape_cast %95 : vector<8x16xf32> to vector<8x16x1xf32>
    %97 = tpu.reciprocal %96 {approx = true} : vector<8x16x1xf32> -> vector<8x16x1xf32>
    %98 = vector.broadcast %97 : vector<8x16x1xf32> to vector<8x16x16xf32>
    %99 = arith.mulf %94, %98 : vector<8x16x16xf32>
    "tpu.trace_start"() <{level = 10 : i32, message = "bqk,bkd->bqd"}> : () -> ()
    %cst_30 = arith.constant dense<0.000000e+00> : vector<8x16x8xf32>
    %100 = tpu.matmul %99, %83, %cst_30 {dimension_numbers = #tpu.dot_dimension_numbers<[2], [1], [1], [2], [0, 0, 0, 1, 1, 2], [0], [0]>} : vector<8x16x16xf32>, vector<8x16x8xf32>, vector<8x16x8xf32> -> vector<8x16x8xf32>
    "tpu.trace_stop"() : () -> ()
    %101 = tpu.concatenate %31, %54, %77, %100 in 2 : vector<8x16x8xf32>, vector<8x16x8xf32>, vector<8x16x8xf32>, vector<8x16x8xf32> -> vector<8x16x32xf32>
    %102 = vector.shape_cast %101 : vector<8x16x32xf32> to vector<128x32xf32>
    %c0_31 = arith.constant 0 : index
    %c0_32 = arith.constant 0 : index
    %103 = vector.load %arg5[%c0_31, %c0_32] : memref<32x32xf32, #tpu.memory_space<vmem>>, vector<32x32xf32>
    %cst_33 = arith.constant dense<0.000000e+00> : vector<128x32xf32>
    %104 = tpu.matmul %102, %103, %cst_33 {dimension_numbers = #tpu.dot_dimension_numbers<[1], [0], [0], [1], [0, 0, 1, 1], [], []>} : vector<128x32xf32>, vector<32x32xf32>, vector<128x32xf32> -> vector<128x32xf32>
    %c0_34 = arith.constant 0 : index
    %c0_35 = arith.constant 0 : index
    %105 = vector.load %arg6[%c0_34, %c0_35] : memref<1x32xf32, #tpu.memory_space<vmem>>, vector<1x32xf32>
    %106 = vector.shape_cast %105 : vector<1x32xf32> to vector<32xf32>
    %107 = vector.shape_cast %106 : vector<32xf32> to vector<1x32xf32>
    %108 = vector.broadcast %107 : vector<1x32xf32> to vector<128x32xf32>
    %109 = arith.addf %104, %108 : vector<128x32xf32>
    %110 = vector.shape_cast %109 : vector<128x32xf32> to vector<8x16x32xf32>
    %c0_36 = arith.constant 0 : index
    %c0_37 = arith.constant 0 : index
    %c0_38 = arith.constant 0 : index
    %111 = vector.load %arg7[%c0_36, %c0_37, %c0_38] : memref<8x16x32xf32, #tpu.memory_space<vmem>>, vector<8x16x32xf32>
    tpu.vector_store %arg7[%c0_36, %c0_37, %c0_38], %110 {strides = array<i32>} : memref<8x16x32xf32, #tpu.memory_space<vmem>>, vector<8x16x32xf32>,
    return
  }
  func.func @transform_0(%arg0: i32) -> (i32, i32, i32) {
    %c0_i32 = arith.constant 0 : i32
    %c0_i32_0 = arith.constant 0 : i32
    %c0_i32_1 = arith.constant 0 : i32
    return %arg0, %c0_i32, %c0_i32_0 : i32, i32, i32
  }
  func.func @transform_1(%arg0: i32) -> (i32, i32) {
    %c0_i32 = arith.constant 0 : i32
    %c0_i32_0 = arith.constant 0 : i32
    %c0_i32_1 = arith.constant 0 : i32
    return %c0_i32, %c0_i32_0 : i32, i32
  }
  func.func @transform_2(%arg0: i32) -> (i32, i32) {
    %c0_i32 = arith.constant 0 : i32
    %c0_i32_0 = arith.constant 0 : i32
    %c0_i32_1 = arith.constant 0 : i32
    return %c0_i32, %c0_i32_0 : i32, i32
  }
  func.func @transform_3(%arg0: i32) -> (i32, i32, i32) {
    %c0_i32 = arith.constant 0 : i32
    %c0_i32_0 = arith.constant 0 : i32
    %c0_i32_1 = arith.constant 0 : i32
    %c0_i32_2 = arith.constant 0 : i32
    return %c0_i32, %c0_i32_0, %c0_i32_1 : i32, i32, i32
  }
  func.func @transform_4(%arg0: i32) -> (i32, i32) {
    %c0_i32 = arith.constant 0 : i32
    %c0_i32_0 = arith.constant 0 : i32
    %c0_i32_1 = arith.constant 0 : i32
    return %c0_i32, %c0_i32_0 : i32, i32
  }
  func.func @transform_5(%arg0: i32) -> (i32, i32) {
    %c0_i32 = arith.constant 0 : i32
    %c0_i32_0 = arith.constant 0 : i32
    %c0_i32_1 = arith.constant 0 : i32
    return %c0_i32, %c0_i32_0 : i32, i32
  }
  func.func @transform_6(%arg0: i32) -> (i32, i32, i32) {
    %c0_i32 = arith.constant 0 : i32
    %c0_i32_0 = arith.constant 0 : i32
    %c0_i32_1 = arith.constant 0 : i32
    return %arg0, %c0_i32, %c0_i32_0 : i32, i32, i32
  }
}

</mosaic_0001>

<llo_original>
// kernel: tpu_custom_call.1
$region0: #{tpu_custom_call.1}
  #allocation0 [shape = 'u32[]', space=smem, size = 0x4, offset = 0x4, fixed_abs, tag = 'smem constant byte address 0x4 - core index']
  #allocation1 [shape = 'u32[144,128]{1,0:T(1,128)}', space=vmem, size = 0x12000, scoped, tag = 'internal scratch']
  %s0 = inlined_call_operand.hbm [shape: f32[8,16,32], index: 0, kind: input, shape index: {}]
  %s1 = inlined_call_operand.hbm [shape: f32[32,96], index: 1, kind: input, shape index: {}]
  %s2 = inlined_call_operand.vmem [shape: f32[1,96], index: 2, kind: input, shape index: {}]
  %s3 = inlined_call_operand.hbm [shape: f32[4,16,16], index: 3, kind: input, shape index: {}]
  %s4 = inlined_call_operand.hbm [shape: f32[32,32], index: 4, kind: input, shape index: {}]
  %s5 = inlined_call_operand.vmem [shape: f32[1,32], index: 5, kind: input, shape index: {}]
  %s6 = inlined_call_operand.hbm [shape: f32[8,16,32], index: 6, kind: output, shape index: {}]
  %s7 = sld [smem:[#allocation0]]
  $region50: #{tpu_custom_call.1} parent=0
    _
  %s9 = ssub.s32 1, %s7
  %s10 = scalar_select 0, %s9, %s7
  $region1: #{tpu_custom_call.1} parent=0
    #allocation2 [shape = 'u8[65536]{0}', space=vmem, size = 0x10000, scoped, tag = 'input window, operand 0, single buffered']
    #allocation3 [shape = 's32[1]{0}', space=sflag, size = 0x4, scoped, tag = 'scoped memory for tpu_custom_call.1']
    #allocation4 [shape = 's32[1]{0}', space=sflag, size = 0x4, scoped, tag = 'scoped memory for tpu_custom_call.1']
    #allocation5 [shape = 'u8[16384]{0}', space=vmem, size = 0x4000, scoped, tag = 'input window, operand 1, single buffered']
    #allocation6 [shape = 's32[1]{0}', space=sflag, size = 0x4, scoped, tag = 'scoped memory for tpu_custom_call.1']
    #allocation7 [shape = 'u8[32768]{0}', space=vmem, size = 0x8000, scoped, tag = 'input window, operand 3, single buffered']
    #allocation8 [shape = 'u8[16384]{0}', space=vmem, size = 0x4000, scoped, tag = 'input window, operand 4, single buffered']
    #allocation9 [shape = 's32[1]{0}', space=sflag, size = 0x4, scoped, tag = 'scoped memory for tpu_custom_call.1']
    #allocation10 [shape = 'u8[65536]{0}', space=vmem, size = 0x10000, scoped, tag = 'output window, operand 0, single buffered']
    %11 = vsyncpa [#allocation3], 0
    %12 = vsyncpa [#allocation6], 0
    %13 = vsyncpa [#allocation9], 0
    %14 = vsyncpa [#allocation4], 0
    // Predicated region
    $region2: #{tpu_custom_call.1} parent=1 // pred_check
      _
    $region3: #{tpu_custom_call.1} parent=1 // pred_check_branch
      %16 = sbr.rel (0) target = $region5
    $region4: #{tpu_custom_call.1} parent=1 // pred_region
      %s18 = ssub.s32 2048, 2048
      %19 = vsyncadd [#allocation3], %s18
      %s20 = sshll.u32 [#allocation2], 4
      %s21 = int_to_ptr.vmem [resolvable:$true] %s20
      %26 = dma.hbm_to_vmem [thread:$0]  %s0, 2048, %s21, [#allocation3], 128, 128, 8
    $region5: #{tpu_custom_call.1} parent=1 // pred_fallthru
      _
    // Predicated region
    $region6: #{tpu_custom_call.1} parent=1 // pred_check
      _
    $region7: #{tpu_custom_call.1} parent=1 // pred_check_branch
      %28 = sbr.rel (0) target = $region9
    $region8: #{tpu_custom_call.1} parent=1 // pred_region
      %s30 = ssub.s32 512, 512
      %31 = vsyncadd [#allocation6], %s30
      %s32 = sshll.u32 [#allocation5], 4
      %s33 = int_to_ptr.vmem [resolvable:$true] %s32
      %38 = dma.hbm_to_vmem [thread:$0]  %s1, 512, %s33, [#allocation6], 128, 128, 8
    $region9: #{tpu_custom_call.1} parent=1 // pred_fallthru
      _
    // Predicated region
    $region10: #{tpu_custom_call.1} parent=1 // pred_check
      _
    $region11: #{tpu_custom_call.1} parent=1 // pred_check_branch
      %40 = sbr.rel (0) target = $region13
    $region12: #{tpu_custom_call.1} parent=1 // pred_region
      _
    $region13: #{tpu_custom_call.1} parent=1 // pred_fallthru
      _
    // Predicated region
    $region14: #{tpu_custom_call.1} parent=1 // pred_check
      _
    $region15: #{tpu_custom_call.1} parent=1 // pred_check_branch
      %42 = sbr.rel (0) target = $region17
    $region16: #{tpu_custom_call.1} parent=1 // pred_region
      %s44 = ssub.s32 1024, 1024
      %45 = vsyncadd [#allocation6], %s44
      %s46 = sshll.u32 [#allocation7], 4
      %s47 = int_to_ptr.vmem [resolvable:$true] %s46
      %52 = dma.hbm_to_vmem [thread:$0]  %s3, 1024, %s47, [#allocation6], 128, 128, 8
    $region17: #{tpu_custom_call.1} parent=1 // pred_fallthru
      _
    // Predicated region
    $region18: #{tpu_custom_call.1} parent=1 // pred_check
      _
    $region19: #{tpu_custom_call.1} parent=1 // pred_check_branch
      %54 = sbr.rel (0) target = $region21
    $region20: #{tpu_custom_call.1} parent=1 // pred_region
      %s56 = ssub.s32 512, 512
      %57 = vsyncadd [#allocation9], %s56
      %s58 = sshll.u32 [#allocation8], 4
      %s59 = int_to_ptr.vmem [resolvable:$true] %s58
      %64 = dma.hbm_to_vmem [thread:$0]  %s4, 512, %s59, [#allocation9], 128, 128, 8
    $region21: #{tpu_custom_call.1} parent=1 // pred_fallthru
      _
    // Predicated region
    $region22: #{tpu_custom_call.1} parent=1 // pred_check
      _
    $region23: #{tpu_custom_call.1} parent=1 // pred_check_branch
      %66 = sbr.rel (0) target = $region25
    $region24: #{tpu_custom_call.1} parent=1 // pred_region
      _
    $region25: #{tpu_custom_call.1} parent=1 // pred_fallthru
      _
    // Predicated region
    $region26: #{tpu_custom_call.1} parent=1 // pred_check
      _
    $region27: #{tpu_custom_call.1} parent=1 // pred_check_branch
      %68 = sbr.rel (0) target = $region29
    $region28: #{tpu_custom_call.1} parent=1 // pred_region
      %69 = dma.done [#allocation3], 2048
    $region29: #{tpu_custom_call.1} parent=1 // pred_fallthru
      _
    // Predicated region
    $region30: #{tpu_custom_call.1} parent=1 // pred_check
      _
    $region31: #{tpu_custom_call.1} parent=1 // pred_check_branch
      %71 = sbr.rel (0) target = $region33
    $region32: #{tpu_custom_call.1} parent=1 // pred_region
      %72 = dma.done [#allocation6], 512
    $region33: #{tpu_custom_call.1} parent=1 // pred_fallthru
      _
    // Predicated region
    $region34: #{tpu_custom_call.1} parent=1 // pred_check
      _
    $region35: #{tpu_custom_call.1} parent=1 // pred_check_branch
      %74 = sbr.rel (0) target = $region37
    $region36: #{tpu_custom_call.1} parent=1 // pred_region
      %75 = dma.done [#allocation6], 1024
    $region37: #{tpu_custom_call.1} parent=1 // pred_fallthru
      _
    // Predicated region
    $region38: #{tpu_custom_call.1} parent=1 // pred_check
      _
    $region39: #{tpu_custom_call.1} parent=1 // pred_check_branch
      %77 = sbr.rel (0) target = $region41
    $region40: #{tpu_custom_call.1} parent=1 // pred_region
      %78 = dma.done [#allocation9], 512
    $region41: #{tpu_custom_call.1} parent=1 // pred_fallthru
      _
    %v79 = vld [vmem:[#allocation2] sm:$0xff]
    %v80 = vld [vmem:[#allocation2 + $0x8] sm:$0xff]
    %v81 = vld [vmem:[#allocation2 + $0x10] sm:$0xff]
    %v82 = vld [vmem:[#allocation2 + $0x18] sm:$0xff]
    %v83 = vld [vmem:[#allocation2 + $0x20] sm:$0xff]
    %v84 = vld [vmem:[#allocation2 + $0x28] sm:$0xff]
    %v85 = vld [vmem:[#allocation2 + $0x30] sm:$0xff]
    %v86 = vld [vmem:[#allocation2 + $0x38] sm:$0xff]
    %v87 = vld [vmem:[#allocation2 + $0x40] sm:$0xff]
    %v88 = vld [vmem:[#allocation2 + $0x48] sm:$0xff]
    %v89 = vld [vmem:[#allocation2 + $0x50] sm:$0xff]
    %v90 = vld [vmem:[#allocation2 + $0x58] sm:$0xff]
    %v91 = vld [vmem:[#allocation2 + $0x60] sm:$0xff]
    %v92 = vld [vmem:[#allocation2 + $0x68] sm:$0xff]
    %v93 = vld [vmem:[#allocation2 + $0x70] sm:$0xff]
    %v94 = vld [vmem:[#allocation2 + $0x78] sm:$0xff]
    %v95 = vld [vmem:[#allocation5] sm:$0xff]
    %v96 = vld [vmem:[#allocation5 + $0x8] sm:$0xff]
    %v97 = vld [vmem:[#allocation5 + $0x10] sm:$0xff]
    %v98 = vld [vmem:[#allocation5 + $0x18] sm:$0xff]
    %v99 = vld [vmem:[%s2] sm:$0x1]
    %v101 = vlaneseq
    %v102 = vshrl.u32 %v101, 7
    %v103 = vsub.s32 0, %v102
    %v104 = vrot.slane %v99, %v103
    %vm106 = vcmask 261120
    %v108 = vsel %vm106, %v79, 0
    %v111 = vsel %vm106, %v80, 0
    %v114 = vsel %vm106, %v81, 0
    %v117 = vsel %vm106, %v82, 0
    %v120 = vsel %vm106, %v83, 0
    %v123 = vsel %vm106, %v84, 0
    %v126 = vsel %vm106, %v85, 0
    %v129 = vsel %vm106, %v86, 0
    %v132 = vsel %vm106, %v87, 0
    %v135 = vsel %vm106, %v88, 0
    %v138 = vsel %vm106, %v89, 0
    %v141 = vsel %vm106, %v90, 0
    %v144 = vsel %vm106, %v91, 0
    %v147 = vsel %vm106, %v92, 0
    %v150 = vsel %vm106, %v93, 0
    %v153 = vsel %vm106, %v94, 0
    %155 = vmatprep.subr.mxu0 0.0
    %156 = vmatpush1.msra.mxu0 %v95
    %157 = vmatprep.subr.mxu0 0.0
    %158 = vmatpush1.msra.mxu0 %v96
    %159 = vmatprep.subr.mxu0 0.0
    %160 = vmatpush1.msra.mxu0 %v97
    %161 = vmatprep.subr.mxu0 0.0
    %162 = vmatpush1.msra.mxu0 %v98
    %163 = vmatprep.subr.mxu0 0.0
    %164 = vmatpush1.msra.mxu0 0.0
    %165 = vmatprep.subr.mxu0 0.0
    %166 = vmatpush1.msra.mxu0 0.0
    %167 = vmatprep.subr.mxu0 0.0
    %168 = vmatpush1.msra.mxu0 0.0
    %169 = vmatprep.subr.mxu0 0.0
    %170 = vmatpush1.msra.mxu0 0.0
    %171 = vmatprep.subr.mxu0 0.0
    %172 = vmatpush1.msra.mxu0 0.0
    %173 = vmatprep.subr.mxu0 0.0
    %174 = vmatpush1.msra.mxu0 0.0
    %175 = vmatprep.subr.mxu0 0.0
    %176 = vmatpush1.msra.mxu0 0.0
    %177 = vmatprep.subr.mxu0 0.0
    %178 = vmatpush1.msra.mxu0 0.0
    %179 = vmatprep.subr.mxu0 0.0
    %180 = vmatpush1.msra.mxu0 0.0
    %181 = vmatprep.subr.mxu0 0.0
    %182 = vmatpush1.msra.mxu0 0.0
    %183 = vmatprep.subr.mxu0 0.0
    %184 = vmatpush1.msra.mxu0 0.0
    %185 = vmatprep.subr.mxu0 0.0
    %186 = vmatpush1.msra.mxu0 0.0
    %187 = vmatprep.subr.mxu0 0.0
    %188 = vmatpush1.msra.mxu0 0.0
    %189 = vmatprep.subr.mxu0 0.0
    %190 = vmatpush1.msra.mxu0 0.0
    %191 = vmatprep.subr.mxu0 0.0
    %192 = vmatpush1.msra.mxu0 0.0
    %193 = vmatprep.subr.mxu0 0.0
    %194 = vmatpush1.msra.mxu0 0.0
    %195 = vmatprep.subr.mxu0 0.0
    %196 = vmatpush1.msra.mxu0 0.0
    %197 = vmatprep.subr.mxu0 0.0
    %198 = vmatpush1.msra.mxu0 0.0
    %199 = vmatprep.subr.mxu0 0.0
    %200 = vmatpush1.msra.mxu0 0.0
    %201 = vmatprep.subr.mxu0 0.0
    %202 = vmatpush1.msra.mxu0 0.0
    %203 = vmatprep.subr.mxu0 0.0
    %204 = vmatpush1.msra.mxu0 0.0
    %205 = vmatprep.subr.mxu0 0.0
    %206 = vmatpush1.msra.mxu0 0.0
    %207 = vmatprep.subr.mxu0 0.0
    %208 = vmatpush1.msra.mxu0 0.0
    %209 = vmatprep.subr.mxu0 0.0
    %210 = vmatpush1.msra.mxu0 0.0
    %211 = vmatprep.subr.mxu0 0.0
    %212 = vmatpush1.msra.mxu0 0.0
    %213 = vmatprep.subr.mxu0 0.0
    %214 = vmatpush1.msra.mxu0 0.0
    %215 = vmatprep.subr.mxu0 0.0
    %216 = vmatpush1.msra.mxu0 0.0
    %217 = vmatprep.subr.mxu0 0.0
    %218 = vmatpush1.msra.mxu0 0.0
    %219 = vmatprep.mubr.f32.mxu0 0.0
    %220 = vmatmul.mubr.f32.gmra.mrb[0].mxu0 %v108
    %v221 = vpop.f32.mrb[0].mxu0
    %v222 = vadd.f32 %v104, %v221
    %v223 = vpop.f32.mrb[0].mxu0
    %224 = vmatprep.mubr.f32.mxu0 0.0
    %225 = vmatmul.mubr.f32.gmra.mrb[0].mxu0 %v111
    %v226 = vpop.f32.mrb[0].mxu0
    %v227 = vadd.f32 %v104, %v226
    %v228 = vpop.f32.mrb[0].mxu0
    %229 = vmatprep.mubr.f32.mxu0 0.0
    %230 = vmatmul.mubr.f32.gmra.mrb[0].mxu0 %v114
    %v231 = vpop.f32.mrb[0].mxu0
    %v232 = vadd.f32 %v104, %v231
    %v233 = vpop.f32.mrb[0].mxu0
    %234 = vmatprep.mubr.f32.mxu0 0.0
    %235 = vmatmul.mubr.f32.gmra.mrb[0].mxu0 %v117
    %v236 = vpop.f32.mrb[0].mxu0
    %v237 = vadd.f32 %v104, %v236
    %v238 = vpop.f32.mrb[0].mxu0
    %239 = vmatprep.mubr.f32.mxu0 0.0
    %240 = vmatmul.mubr.f32.gmra.mrb[0].mxu0 %v120
    %v241 = vpop.f32.mrb[0].mxu0
    %v242 = vadd.f32 %v104, %v241
    %v243 = vpop.f32.mrb[0].mxu0
    %244 = vmatprep.mubr.f32.mxu0 0.0
    %245 = vmatmul.mubr.f32.gmra.mrb[0].mxu0 %v123
    %v246 = vpop.f32.mrb[0].mxu0
    %v247 = vadd.f32 %v104, %v246
    %v248 = vpop.f32.mrb[0].mxu0
    %249 = vmatprep.mubr.f32.mxu0 0.0
    %250 = vmatmul.mubr.f32.gmra.mrb[0].mxu0 %v126
    %v251 = vpop.f32.mrb[0].mxu0
    %v252 = vadd.f32 %v104, %v251
    %v253 = vpop.f32.mrb[0].mxu0
    %254 = vmatprep.mubr.f32.mxu0 0.0
    %255 = vmatmul.mubr.f32.gmra.mrb[0].mxu0 %v129
    %v256 = vpop.f32.mrb[0].mxu0
    %v257 = vadd.f32 %v104, %v256
    %v258 = vpop.f32.mrb[0].mxu0
    %259 = vmatprep.mubr.f32.mxu0 0.0
    %260 = vmatmul.mubr.f32.gmra.mrb[0].mxu0 %v132
    %v261 = vpop.f32.mrb[0].mxu0
    %v262 = vadd.f32 %v104, %v261
    %v263 = vpop.f32.mrb[0].mxu0
    %264 = vmatprep.mubr.f32.mxu0 0.0
    %265 = vmatmul.mubr.f32.gmra.mrb[0].mxu0 %v135
    %v266 = vpop.f32.mrb[0].mxu0
    %v267 = vadd.f32 %v104, %v266
    %v268 = vpop.f32.mrb[0].mxu0
    %269 = vmatprep.mubr.f32.mxu0 0.0
    %270 = vmatmul.mubr.f32.gmra.mrb[0].mxu0 %v138
    %v271 = vpop.f32.mrb[0].mxu0
    %v272 = vadd.f32 %v104, %v271
    %v273 = vpop.f32.mrb[0].mxu0
    %274 = vmatprep.mubr.f32.mxu0 0.0
    %275 = vmatmul.mubr.f32.gmra.mrb[0].mxu0 %v141
    %v276 = vpop.f32.mrb[0].mxu0
    %v277 = vadd.f32 %v104, %v276
    %v278 = vpop.f32.mrb[0].mxu0
    %279 = vmatprep.mubr.f32.mxu0 0.0
    %280 = vmatmul.mubr.f32.gmra.mrb[0].mxu0 %v144
    %v281 = vpop.f32.mrb[0].mxu0
    %v282 = vadd.f32 %v104, %v281
    %v283 = vpop.f32.mrb[0].mxu0
    %284 = vmatprep.mubr.f32.mxu0 0.0
    %285 = vmatmul.mubr.f32.gmra.mrb[0].mxu0 %v147
    %v286 = vpop.f32.mrb[0].mxu0
    %v287 = vadd.f32 %v104, %v286
    %v288 = vpop.f32.mrb[0].mxu0
    %289 = vmatprep.mubr.f32.mxu0 0.0
    %290 = vmatmul.mubr.f32.gmra.mrb[0].mxu0 %v150
    %v291 = vpop.f32.mrb[0].mxu0
    %v292 = vadd.f32 %v104, %v291
    %v293 = vpop.f32.mrb[0].mxu0
    %294 = vmatprep.mubr.f32.mxu0 0.0
    %295 = vmatmul.mubr.f32.gmra.mrb[0].mxu0 %v153
    %v296 = vpop.f32.mrb[0].mxu0
    %v297 = vadd.f32 %v104, %v296
    %v298 = vpop.f32.mrb[0].mxu0
    %299 = vdwg.mxu0
    %v300 = vld [vmem:[#allocation7] sm:$0xff]
    %v301 = vld [vmem:[#allocation7 + $0x8] sm:$0xff]
    %304 = vrot.lane.b32.xlu0 %v222, 96
    %v305 = vpop.permute.xlu0 %304
    %306 = vrot.lane.b32.xlu0 %v227, 96
    %v307 = vpop.permute.xlu0 %306
    %vm308 = vcmask 64512
    %v309 = vsel %vm308, %v222, 0
    %v311 = vsel %vm308, %v227, 0
    %v313 = vsel %vm308, %v305, 0
    %v315 = vsel %vm308, %v307, 0
    %317 = vmatprep.subr.mxu0 0.0
    %318 = vmatpush1.xpose.msra.mxu0 %v313
    %319 = vmatprep.subr.mxu0 0.0
    %320 = vmatpush1.xpose.msra.mxu0 %v315
    %321 = vmatprep.subr.mxu0 0.0
    %322 = vmatpush1.xpose.msra.mxu0 0.0
    %323 = vmatprep.subr.mxu0 0.0
    %324 = vmatpush1.xpose.msra.mxu0 0.0
    %325 = vmatprep.subr.mxu0 0.0
    %326 = vmatpush1.xpose.msra.mxu0 0.0
    %327 = vmatprep.subr.mxu0 0.0
    %328 = vmatpush1.xpose.msra.mxu0 0.0
    %329 = vmatprep.subr.mxu0 0.0
    %330 = vmatpush1.xpose.msra.mxu0 0.0
    %331 = vmatprep.subr.mxu0 0.0
    %332 = vmatpush1.xpose.msra.mxu0 0.0
    %333 = vmatprep.subr.mxu0 0.0
    %334 = vmatpush1.xpose.msra.mxu0 0.0
    %335 = vmatprep.subr.mxu0 0.0
    %336 = vmatpush1.xpose.msra.mxu0 0.0
    %337 = vmatprep.subr.mxu0 0.0
    %338 = vmatpush1.xpose.msra.mxu0 0.0
    %339 = vmatprep.subr.mxu0 0.0
    %340 = vmatpush1.xpose.msra.mxu0 0.0
    %341 = vmatprep.subr.mxu0 0.0
    %342 = vmatpush1.xpose.msra.mxu0 0.0
    %343 = vmatprep.subr.mxu0 0.0
    %344 = vmatpush1.xpose.msra.mxu0 0.0
    %345 = vmatprep.subr.mxu0 0.0
    %346 = vmatpush1.xpose.msra.mxu0 0.0
    %347 = vmatprep.subr.mxu0 0.0
    %348 = vmatpush1.xpose.msra.mxu0 0.0
    %349 = vmatprep.subr.mxu0 0.0
    %350 = vmatpush1.xpose.msra.mxu0 0.0
    %351 = vmatprep.subr.mxu0 0.0
    %352 = vmatpush1.xpose.msra.mxu0 0.0
    %353 = vmatprep.subr.mxu0 0.0
    %354 = vmatpush1.xpose.msra.mxu0 0.0
    %355 = vmatprep.subr.mxu0 0.0
    %356 = vmatpush1.xpose.msra.mxu0 0.0
    %357 = vmatprep.subr.mxu0 0.0
    %358 = vmatpush1.xpose.msra.mxu0 0.0
    %359 = vmatprep.subr.mxu0 0.0
    %360 = vmatpush1.xpose.msra.mxu0 0.0
    %361 = vmatprep.subr.mxu0 0.0
    %362 = vmatpush1.xpose.msra.mxu0 0.0
    %363 = vmatprep.subr.mxu0 0.0
    %364 = vmatpush1.xpose.msra.mxu0 0.0
    %365 = vmatprep.subr.mxu0 0.0
    %366 = vmatpush1.xpose.msra.mxu0 0.0
    %367 = vmatprep.subr.mxu0 0.0
    %368 = vmatpush1.xpose.msra.mxu0 0.0
    %369 = vmatprep.subr.mxu0 0.0
    %370 = vmatpush1.xpose.msra.mxu0 0.0
    %371 = vmatprep.subr.mxu0 0.0
    %372 = vmatpush1.xpose.msra.mxu0 0.0
    %373 = vmatprep.subr.mxu0 0.0
    %374 = vmatpush1.xpose.msra.mxu0 0.0
    %375 = vmatprep.subr.mxu0 0.0
    %376 = vmatpush1.xpose.msra.mxu0 0.0
    %377 = vmatprep.subr.mxu0 0.0
    %378 = vmatpush1.xpose.msra.mxu0 0.0
    %379 = vmatprep.subr.mxu0 0.0
    %380 = vmatpush1.xpose.msra.mxu0 0.0
    %381 = vmatprep.mubr.f32.mxu0 0.0
    %382 = vmatmul.mubr.f32.gmra.mrb[0].mxu0 %v309
    %v383 = vpop.f32.mrb[0].mxu0
    %v384 = vadd.f32 %v300, %v383
    %v385 = vpop.f32.mrb[0].mxu0
    %386 = vmatprep.mubr.f32.mxu0 0.0
    %387 = vmatmul.mubr.f32.gmra.mrb[0].mxu0 %v311
    %v388 = vpop.f32.mrb[0].mxu0
    %v389 = vadd.f32 %v301, %v388
    %v390 = vpop.f32.mrb[0].mxu0
    %391 = vdwg.mxu0
    %394 = vrot.lane.b32.xlu0 %v232, 96
    %v395 = vpop.permute.xlu0 %394
    %396 = vrot.lane.b32.xlu0 %v237, 96
    %v397 = vpop.permute.xlu0 %396
    %v398 = vsel %vm308, %v232, 0
    %v400 = vsel %vm308, %v237, 0
    %v402 = vsel %vm308, %v395, 0
    %v404 = vsel %vm308, %v397, 0
    %406 = vmatprep.subr.mxu0 0.0
    %407 = vmatpush1.xpose.msra.mxu0 %v402
    %408 = vmatprep.subr.mxu0 0.0
    %409 = vmatpush1.xpose.msra.mxu0 %v404
    %410 = vmatprep.subr.mxu0 0.0
    %411 = vmatpush1.xpose.msra.mxu0 0.0
    %412 = vmatprep.subr.mxu0 0.0
    %413 = vmatpush1.xpose.msra.mxu0 0.0
    %414 = vmatprep.subr.mxu0 0.0
    %415 = vmatpush1.xpose.msra.mxu0 0.0
    %416 = vmatprep.subr.mxu0 0.0
    %417 = vmatpush1.xpose.msra.mxu0 0.0
    %418 = vmatprep.subr.mxu0 0.0
    %419 = vmatpush1.xpose.msra.mxu0 0.0
    %420 = vmatprep.subr.mxu0 0.0
    %421 = vmatpush1.xpose.msra.mxu0 0.0
    %422 = vmatprep.subr.mxu0 0.0
    %423 = vmatpush1.xpose.msra.mxu0 0.0
    %424 = vmatprep.subr.mxu0 0.0
    %425 = vmatpush1.xpose.msra.mxu0 0.0
    %426 = vmatprep.subr.mxu0 0.0
    %427 = vmatpush1.xpose.msra.mxu0 0.0
    %428 = vmatprep.subr.mxu0 0.0
    %429 = vmatpush1.xpose.msra.mxu0 0.0
    %430 = vmatprep.subr.mxu0 0.0
    %431 = vmatpush1.xpose.msra.mxu0 0.0
    %432 = vmatprep.subr.mxu0 0.0
    %433 = vmatpush1.xpose.msra.mxu0 0.0
    %434 = vmatprep.subr.mxu0 0.0
    %435 = vmatpush1.xpose.msra.mxu0 0.0
    %436 = vmatprep.subr.mxu0 0.0
    %437 = vmatpush1.xpose.msra.mxu0 0.0
    %438 = vmatprep.subr.mxu0 0.0
    %439 = vmatpush1.xpose.msra.mxu0 0.0
    %440 = vmatprep.subr.mxu0 0.0
    %441 = vmatpush1.xpose.msra.mxu0 0.0
    %442 = vmatprep.subr.mxu0 0.0
    %443 = vmatpush1.xpose.msra.mxu0 0.0
    %444 = vmatprep.subr.mxu0 0.0
    %445 = vmatpush1.xpose.msra.mxu0 0.0
    %446 = vmatprep.subr.mxu0 0.0
    %447 = vmatpush1.xpose.msra.mxu0 0.0
    %448 = vmatprep.subr.mxu0 0.0
    %449 = vmatpush1.xpose.msra.mxu0 0.0
    %450 = vmatprep.subr.mxu0 0.0
    %451 = vmatpush1.xpose.msra.mxu0 0.0
    %452 = vmatprep.subr.mxu0 0.0
    %453 = vmatpush1.xpose.msra.mxu0 0.0
    %454 = vmatprep.subr.mxu0 0.0
    %455 = vmatpush1.xpose.msra.mxu0 0.0
    %456 = vmatprep.subr.mxu0 0.0
    %457 = vmatpush1.xpose.msra.mxu0 0.0
    %458 = vmatprep.subr.mxu0 0.0
    %459 = vmatpush1.xpose.msra.mxu0 0.0
    %460 = vmatprep.subr.mxu0 0.0
    %461 = vmatpush1.xpose.msra.mxu0 0.0
    %462 = vmatprep.subr.mxu0 0.0
    %463 = vmatpush1.xpose.msra.mxu0 0.0
    %464 = vmatprep.subr.mxu0 0.0
    %465 = vmatpush1.xpose.msra.mxu0 0.0
    %466 = vmatprep.subr.mxu0 0.0
    %467 = vmatpush1.xpose.msra.mxu0 0.0
    %468 = vmatprep.subr.mxu0 0.0
    %469 = vmatpush1.xpose.msra.mxu0 0.0
    %470 = vmatprep.mubr.f32.mxu0 0.0
    %471 = vmatmul.mubr.f32.gmra.mrb[0].mxu0 %v398
    %v472 = vpop.f32.mrb[0].mxu0
    %v473 = vadd.f32 %v300, %v472
    %v474 = vpop.f32.mrb[0].mxu0
    %475 = vmatprep.mubr.f32.mxu0 0.0
    %476 = vmatmul.mubr.f32.gmra.mrb[0].mxu0 %v400
    %v477 = vpop.f32.mrb[0].mxu0
    %v478 = vadd.f32 %v301, %v477
    %v479 = vpop.f32.mrb[0].mxu0
    %480 = vdwg.mxu0
    %483 = vrot.lane.b32.xlu0 %v242, 96
    %v484 = vpop.permute.xlu0 %483
    %485 = vrot.lane.b32.xlu0 %v247, 96
    %v486 = vpop.permute.xlu0 %485
    %v487 = vsel %vm308, %v242, 0
    %v489 = vsel %vm308, %v247, 0
    %v491 = vsel %vm308, %v484, 0
    %v493 = vsel %vm308, %v486, 0
    %495 = vmatprep.subr.mxu0 0.0
    %496 = vmatpush1.xpose.msra.mxu0 %v491
    %497 = vmatprep.subr.mxu0 0.0
    %498 = vmatpush1.xpose.msra.mxu0 %v493
    %499 = vmatprep.subr.mxu0 0.0
    %500 = vmatpush1.xpose.msra.mxu0 0.0
    %501 = vmatprep.subr.mxu0 0.0
    %502 = vmatpush1.xpose.msra.mxu0 0.0
    %503 = vmatprep.subr.mxu0 0.0
    %504 = vmatpush1.xpose.msra.mxu0 0.0
    %505 = vmatprep.subr.mxu0 0.0
    %506 = vmatpush1.xpose.msra.mxu0 0.0
    %507 = vmatprep.subr.mxu0 0.0
    %508 = vmatpush1.xpose.msra.mxu0 0.0
    %509 = vmatprep.subr.mxu0 0.0
    %510 = vmatpush1.xpose.msra.mxu0 0.0
    %511 = vmatprep.subr.mxu0 0.0
    %512 = vmatpush1.xpose.msra.mxu0 0.0
    %513 = vmatprep.subr.mxu0 0.0
    %514 = vmatpush1.xpose.msra.mxu0 0.0
    %515 = vmatprep.subr.mxu0 0.0
    %516 = vmatpush1.xpose.msra.mxu0 0.0
    %517 = vmatprep.subr.mxu0 0.0
    %518 = vmatpush1.xpose.msra.mxu0 0.0
    %519 = vmatprep.subr.mxu0 0.0
    %520 = vmatpush1.xpose.msra.mxu0 0.0
    %521 = vmatprep.subr.mxu0 0.0
    %522 = vmatpush1.xpose.msra.mxu0 0.0
    %523 = vmatprep.subr.mxu0 0.0
    %524 = vmatpush1.xpose.msra.mxu0 0.0
    %525 = vmatprep.subr.mxu0 0.0
    %526 = vmatpush1.xpose.msra.mxu0 0.0
    %527 = vmatprep.subr.mxu0 0.0
    %528 = vmatpush1.xpose.msra.mxu0 0.0
    %529 = vmatprep.subr.mxu0 0.0
    %530 = vmatpush1.xpose.msra.mxu0 0.0
    %531 = vmatprep.subr.mxu0 0.0
    %532 = vmatpush1.xpose.msra.mxu0 0.0
    %533 = vmatprep.subr.mxu0 0.0
    %534 = vmatpush1.xpose.msra.mxu0 0.0
    %535 = vmatprep.subr.mxu0 0.0
    %536 = vmatpush1.xpose.msra.mxu0 0.0
    %537 = vmatprep.subr.mxu0 0.0
    %538 = vmatpush1.xpose.msra.mxu0 0.0
    %539 = vmatprep.subr.mxu0 0.0
    %540 = vmatpush1.xpose.msra.mxu0 0.0
    %541 = vmatprep.subr.mxu0 0.0
    %542 = vmatpush1.xpose.msra.mxu0 0.0
    %543 = vmatprep.subr.mxu0 0.0
    %544 = vmatpush1.xpose.msra.mxu0 0.0
    %545 = vmatprep.subr.mxu0 0.0
    %546 = vmatpush1.xpose.msra.mxu0 0.0
    %547 = vmatprep.subr.mxu0 0.0
    %548 = vmatpush1.xpose.msra.mxu0 0.0
    %549 = vmatprep.subr.mxu0 0.0
    %550 = vmatpush1.xpose.msra.mxu0 0.0
    %551 = vmatprep.subr.mxu0 0.0
    %552 = vmatpush1.xpose.msra.mxu0 0.0
    %553 = vmatprep.subr.mxu0 0.0
    %554 = vmatpush1.xpose.msra.mxu0 0.0
    %555 = vmatprep.subr.mxu0 0.0
    %556 = vmatpush1.xpose.msra.mxu0 0.0
    %557 = vmatprep.subr.mxu0 0.0
    %558 = vmatpush1.xpose.msra.mxu0 0.0
    %559 = vmatprep.mubr.f32.mxu0 0.0
    %560 = vmatmul.mubr.f32.gmra.mrb[0].mxu0 %v487
    %v561 = vpop.f32.mrb[0].mxu0
    %v562 = vadd.f32 %v300, %v561
    %v563 = vpop.f32.mrb[0].mxu0
    %564 = vmatprep.mubr.f32.mxu0 0.0
    %565 = vmatmul.mubr.f32.gmra.mrb[0].mxu0 %v489
    %v566 = vpop.f32.mrb[0].mxu0
    %v567 = vadd.f32 %v301, %v566
    %v568 = vpop.f32.mrb[0].mxu0
    %569 = vdwg.mxu0
    %572 = vrot.lane.b32.xlu0 %v252, 96
    %v573 = vpop.permute.xlu0 %572
    %574 = vrot.lane.b32.xlu0 %v257, 96
    %v575 = vpop.permute.xlu0 %574
    %v576 = vsel %vm308, %v252, 0
    %v578 = vsel %vm308, %v257, 0
    %v580 = vsel %vm308, %v573, 0
    %v582 = vsel %vm308, %v575, 0
    %584 = vmatprep.subr.mxu0 0.0
    %585 = vmatpush1.xpose.msra.mxu0 %v580
    %586 = vmatprep.subr.mxu0 0.0
    %587 = vmatpush1.xpose.msra.mxu0 %v582
    %588 = vmatprep.subr.mxu0 0.0
    %589 = vmatpush1.xpose.msra.mxu0 0.0
    %590 = vmatprep.subr.mxu0 0.0
    %591 = vmatpush1.xpose.msra.mxu0 0.0
    %592 = vmatprep.subr.mxu0 0.0
    %593 = vmatpush1.xpose.msra.mxu0 0.0
    %594 = vmatprep.subr.mxu0 0.0
    %595 = vmatpush1.xpose.msra.mxu0 0.0
    %596 = vmatprep.subr.mxu0 0.0
    %597 = vmatpush1.xpose.msra.mxu0 0.0
    %598 = vmatprep.subr.mxu0 0.0
    %599 = vmatpush1.xpose.msra.mxu0 0.0
    %600 = vmatprep.subr.mxu0 0.0
    %601 = vmatpush1.xpose.msra.mxu0 0.0
    %602 = vmatprep.subr.mxu0 0.0
    %603 = vmatpush1.xpose.msra.mxu0 0.0
    %604 = vmatprep.subr.mxu0 0.0
    %605 = vmatpush1.xpose.msra.mxu0 0.0
    %606 = vmatprep.subr.mxu0 0.0
    %607 = vmatpush1.xpose.msra.mxu0 0.0
    %608 = vmatprep.subr.mxu0 0.0
    %609 = vmatpush1.xpose.msra.mxu0 0.0
    %610 = vmatprep.subr.mxu0 0.0
    %611 = vmatpush1.xpose.msra.mxu0 0.0
    %612 = vmatprep.subr.mxu0 0.0
    %613 = vmatpush1.xpose.msra.mxu0 0.0
    %614 = vmatprep.subr.mxu0 0.0
    %615 = vmatpush1.xpose.msra.mxu0 0.0
    %616 = vmatprep.subr.mxu0 0.0
    %617 = vmatpush1.xpose.msra.mxu0 0.0
    %618 = vmatprep.subr.mxu0 0.0
    %619 = vmatpush1.xpose.msra.mxu0 0.0
    %620 = vmatprep.subr.mxu0 0.0
    %621 = vmatpush1.xpose.msra.mxu0 0.0
    %622 = vmatprep.subr.mxu0 0.0
    %623 = vmatpush1.xpose.msra.mxu0 0.0
    %624 = vmatprep.subr.mxu0 0.0
    %625 = vmatpush1.xpose.msra.mxu0 0.0
    %626 = vmatprep.subr.mxu0 0.0
    %627 = vmatpush1.xpose.msra.mxu0 0.0
    %628 = vmatprep.subr.mxu0 0.0
    %629 = vmatpush1.xpose.msra.mxu0 0.0
    %630 = vmatprep.subr.mxu0 0.0
    %631 = vmatpush1.xpose.msra.mxu0 0.0
    %632 = vmatprep.subr.mxu0 0.0
    %633 = vmatpush1.xpose.msra.mxu0 0.0
    %634 = vmatprep.subr.mxu0 0.0
    %635 = vmatpush1.xpose.msra.mxu0 0.0
    %636 = vmatprep.subr.mxu0 0.0
    %637 = vmatpush1.xpose.msra.mxu0 0.0
    %638 = vmatprep.subr.mxu0 0.0
    %639 = vmatpush1.xpose.msra.mxu0 0.0
    %640 = vmatprep.subr.mxu0 0.0
    %641 = vmatpush1.xpose.msra.mxu0 0.0
    %642 = vmatprep.subr.mxu0 0.0
    %643 = vmatpush1.xpose.msra.mxu0 0.0
    %644 = vmatprep.subr.mxu0 0.0
    %645 = vmatpush1.xpose.msra.mxu0 0.0
    %646 = vmatprep.subr.mxu0 0.0
    %647 = vmatpush1.xpose.msra.mxu0 0.0
    %648 = vmatprep.mubr.f32.mxu0 0.0
    %649 = vmatmul.mubr.f32.gmra.mrb[0].mxu0 %v576
    %v650 = vpop.f32.mrb[0].mxu0
    %v651 = vadd.f32 %v300, %v650
    %v652 = vpop.f32.mrb[0].mxu0
    %653 = vmatprep.mubr.f32.mxu0 0.0
    %654 = vmatmul.mubr.f32.gmra.mrb[0].mxu0 %v578
    %v655 = vpop.f32.mrb[0].mxu0
    %v656 = vadd.f32 %v301, %v655
    %v657 = vpop.f32.mrb[0].mxu0
    %658 = vdwg.mxu0
    %661 = vrot.lane.b32.xlu0 %v262, 96
    %v662 = vpop.permute.xlu0 %661
    %663 = vrot.lane.b32.xlu0 %v267, 96
    %v664 = vpop.permute.xlu0 %663
    %v665 = vsel %vm308, %v262, 0
    %v667 = vsel %vm308, %v267, 0
    %v669 = vsel %vm308, %v662, 0
    %v671 = vsel %vm308, %v664, 0
    %673 = vmatprep.subr.mxu0 0.0
    %674 = vmatpush1.xpose.msra.mxu0 %v669
    %675 = vmatprep.subr.mxu0 0.0
    %676 = vmatpush1.xpose.msra.mxu0 %v671
    %677 = vmatprep.subr.mxu0 0.0
    %678 = vmatpush1.xpose.msra.mxu0 0.0
    %679 = vmatprep.subr.mxu0 0.0
    %680 = vmatpush1.xpose.msra.mxu0 0.0
    %681 = vmatprep.subr.mxu0 0.0
    %682 = vmatpush1.xpose.msra.mxu0 0.0
    %683 = vmatprep.subr.mxu0 0.0
    %684 = vmatpush1.xpose.msra.mxu0 0.0
    %685 = vmatprep.subr.mxu0 0.0
    %686 = vmatpush1.xpose.msra.mxu0 0.0
    %687 = vmatprep.subr.mxu0 0.0
    %688 = vmatpush1.xpose.msra.mxu0 0.0
    %689 = vmatprep.subr.mxu0 0.0
    %690 = vmatpush1.xpose.msra.mxu0 0.0
    %691 = vmatprep.subr.mxu0 0.0
    %692 = vmatpush1.xpose.msra.mxu0 0.0
    %693 = vmatprep.subr.mxu0 0.0
    %694 = vmatpush1.xpose.msra.mxu0 0.0
    %695 = vmatprep.subr.mxu0 0.0
    %696 = vmatpush1.xpose.msra.mxu0 0.0
    %697 = vmatprep.subr.mxu0 0.0
    %698 = vmatpush1.xpose.msra.mxu0 0.0
    %699 = vmatprep.subr.mxu0 0.0
    %700 = vmatpush1.xpose.msra.mxu0 0.0
    %701 = vmatprep.subr.mxu0 0.0
    %702 = vmatpush1.xpose.msra.mxu0 0.0
    %703 = vmatprep.subr.mxu0 0.0
    %704 = vmatpush1.xpose.msra.mxu0 0.0
    %705 = vmatprep.subr.mxu0 0.0
    %706 = vmatpush1.xpose.msra.mxu0 0.0
    %707 = vmatprep.subr.mxu0 0.0
    %708 = vmatpush1.xpose.msra.mxu0 0.0
    %709 = vmatprep.subr.mxu0 0.0
    %710 = vmatpush1.xpose.msra.mxu0 0.0
    %711 = vmatprep.subr.mxu0 0.0
    %712 = vmatpush1.xpose.msra.mxu0 0.0
    %713 = vmatprep.subr.mxu0 0.0
    %714 = vmatpush1.xpose.msra.mxu0 0.0
    %715 = vmatprep.subr.mxu0 0.0
    %716 = vmatpush1.xpose.msra.mxu0 0.0
    %717 = vmatprep.subr.mxu0 0.0
    %718 = vmatpush1.xpose.msra.mxu0 0.0
    %719 = vmatprep.subr.mxu0 0.0
    %720 = vmatpush1.xpose.msra.mxu0 0.0
    %721 = vmatprep.subr.mxu0 0.0
    %722 = vmatpush1.xpose.msra.mxu0 0.0
    %723 = vmatprep.subr.mxu0 0.0
    %724 = vmatpush1.xpose.msra.mxu0 0.0
    %725 = vmatprep.subr.mxu0 0.0
    %726 = vmatpush1.xpose.msra.mxu0 0.0
    %727 = vmatprep.subr.mxu0 0.0
    %728 = vmatpush1.xpose.msra.mxu0 0.0
    %729 = vmatprep.subr.mxu0 0.0
    %730 = vmatpush1.xpose.msra.mxu0 0.0
    %731 = vmatprep.subr.mxu0 0.0
    %732 = vmatpush1.xpose.msra.mxu0 0.0
    %733 = vmatprep.subr.mxu0 0.0
    %734 = vmatpush1.xpose.msra.mxu0 0.0
    %735 = vmatprep.subr.mxu0 0.0
    %736 = vmatpush1.xpose.msra.mxu0 0.0
    %737 = vmatprep.mubr.f32.mxu0 0.0
    %738 = vmatmul.mubr.f32.gmra.mrb[0].mxu0 %v665
    %v739 = vpop.f32.mrb[0].mxu0
    %v740 = vadd.f32 %v300, %v739
    %v741 = vpop.f32.mrb[0].mxu0
    %742 = vmatprep.mubr.f32.mxu0 0.0
    %743 = vmatmul.mubr.f32.gmra.mrb[0].mxu0 %v667
    %v744 = vpop.f32.mrb[0].mxu0
    %v745 = vadd.f32 %v301, %v744
    %v746 = vpop.f32.mrb[0].mxu0
    %747 = vdwg.mxu0
    %750 = vrot.lane.b32.xlu0 %v272, 96
    %v751 = vpop.permute.xlu0 %750
    %752 = vrot.lane.b32.xlu0 %v277, 96
    %v753 = vpop.permute.xlu0 %752
    %v754 = vsel %vm308, %v272, 0
    %v756 = vsel %vm308, %v277, 0
    %v758 = vsel %vm308, %v751, 0
    %v760 = vsel %vm308, %v753, 0
    %762 = vmatprep.subr.mxu0 0.0
    %763 = vmatpush1.xpose.msra.mxu0 %v758
    %764 = vmatprep.subr.mxu0 0.0
    %765 = vmatpush1.xpose.msra.mxu0 %v760
    %766 = vmatprep.subr.mxu0 0.0
    %767 = vmatpush1.xpose.msra.mxu0 0.0
    %768 = vmatprep.subr.mxu0 0.0
    %769 = vmatpush1.xpose.msra.mxu0 0.0
    %770 = vmatprep.subr.mxu0 0.0
    %771 = vmatpush1.xpose.msra.mxu0 0.0
    %772 = vmatprep.subr.mxu0 0.0
    %773 = vmatpush1.xpose.msra.mxu0 0.0
    %774 = vmatprep.subr.mxu0 0.0
    %775 = vmatpush1.xpose.msra.mxu0 0.0
    %776 = vmatprep.subr.mxu0 0.0
    %777 = vmatpush1.xpose.msra.mxu0 0.0
    %778 = vmatprep.subr.mxu0 0.0
    %779 = vmatpush1.xpose.msra.mxu0 0.0
    %780 = vmatprep.subr.mxu0 0.0
    %781 = vmatpush1.xpose.msra.mxu0 0.0
    %782 = vmatprep.subr.mxu0 0.0
    %783 = vmatpush1.xpose.msra.mxu0 0.0
    %784 = vmatprep.subr.mxu0 0.0
    %785 = vmatpush1.xpose.msra.mxu0 0.0
    %786 = vmatprep.subr.mxu0 0.0
    %787 = vmatpush1.xpose.msra.mxu0 0.0
    %788 = vmatprep.subr.mxu0 0.0
    %789 = vmatpush1.xpose.msra.mxu0 0.0
    %790 = vmatprep.subr.mxu0 0.0
    %791 = vmatpush1.xpose.msra.mxu0 0.0
    %792 = vmatprep.subr.mxu0 0.0
    %793 = vmatpush1.xpose.msra.mxu0 0.0
    %794 = vmatprep.subr.mxu0 0.0
    %795 = vmatpush1.xpose.msra.mxu0 0.0
    %796 = vmatprep.subr.mxu0 0.0
    %797 = vmatpush1.xpose.msra.mxu0 0.0
    %798 = vmatprep.subr.mxu0 0.0
    %799 = vmatpush1.xpose.msra.mxu0 0.0
    %800 = vmatprep.subr.mxu0 0.0
    %801 = vmatpush1.xpose.msra.mxu0 0.0
    %802 = vmatprep.subr.mxu0 0.0
    %803 = vmatpush1.xpose.msra.mxu0 0.0
    %804 = vmatprep.subr.mxu0 0.0
    %805 = vmatpush1.xpose.msra.mxu0 0.0
    %806 = vmatprep.subr.mxu0 0.0
    %807 = vmatpush1.xpose.msra.mxu0 0.0
    %808 = vmatprep.subr.mxu0 0.0
    %809 = vmatpush1.xpose.msra.mxu0 0.0
    %810 = vmatprep.subr.mxu0 0.0
    %811 = vmatpush1.xpose.msra.mxu0 0.0
    %812 = vmatprep.subr.mxu0 0.0
    %813 = vmatpush1.xpose.msra.mxu0 0.0
    %814 = vmatprep.subr.mxu0 0.0
    %815 = vmatpush1.xpose.msra.mxu0 0.0
    %816 = vmatprep.subr.mxu0 0.0
    %817 = vmatpush1.xpose.msra.mxu0 0.0
    %818 = vmatprep.subr.mxu0 0.0
    %819 = vmatpush1.xpose.msra.mxu0 0.0
    %820 = vmatprep.subr.mxu0 0.0
    %821 = vmatpush1.xpose.msra.mxu0 0.0
    %822 = vmatprep.subr.mxu0 0.0
    %823 = vmatpush1.xpose.msra.mxu0 0.0
    %824 = vmatprep.subr.mxu0 0.0
    %825 = vmatpush1.xpose.msra.mxu0 0.0
    %826 = vmatprep.mubr.f32.mxu0 0.0
    %827 = vmatmul.mubr.f32.gmra.mrb[0].mxu0 %v754
    %v828 = vpop.f32.mrb[0].mxu0
    %v829 = vadd.f32 %v300, %v828
    %v830 = vpop.f32.mrb[0].mxu0
    %831 = vmatprep.mubr.f32.mxu0 0.0
    %832 = vmatmul.mubr.f32.gmra.mrb[0].mxu0 %v756
    %v833 = vpop.f32.mrb[0].mxu0
    %v834 = vadd.f32 %v301, %v833
    %v835 = vpop.f32.mrb[0].mxu0
    %836 = vdwg.mxu0
    %839 = vrot.lane.b32.xlu0 %v282, 96
    %v840 = vpop.permute.xlu0 %839
    %841 = vrot.lane.b32.xlu0 %v287, 96
    %v842 = vpop.permute.xlu0 %841
    %v843 = vsel %vm308, %v282, 0
    %v845 = vsel %vm308, %v287, 0
    %v847 = vsel %vm308, %v840, 0
    %v849 = vsel %vm308, %v842, 0
    %851 = vmatprep.subr.mxu0 0.0
    %852 = vmatpush1.xpose.msra.mxu0 %v847
    %853 = vmatprep.subr.mxu0 0.0
    %854 = vmatpush1.xpose.msra.mxu0 %v849
    %855 = vmatprep.subr.mxu0 0.0
    %856 = vmatpush1.xpose.msra.mxu0 0.0
    %857 = vmatprep.subr.mxu0 0.0
    %858 = vmatpush1.xpose.msra.mxu0 0.0
    %859 = vmatprep.subr.mxu0 0.0
    %860 = vmatpush1.xpose.msra.mxu0 0.0
    %861 = vmatprep.subr.mxu0 0.0
    %862 = vmatpush1.xpose.msra.mxu0 0.0
    %863 = vmatprep.subr.mxu0 0.0
    %864 = vmatpush1.xpose.msra.mxu0 0.0
    %865 = vmatprep.subr.mxu0 0.0
    %866 = vmatpush1.xpose.msra.mxu0 0.0
    %867 = vmatprep.subr.mxu0 0.0
    %868 = vmatpush1.xpose.msra.mxu0 0.0
    %869 = vmatprep.subr.mxu0 0.0
    %870 = vmatpush1.xpose.msra.mxu0 0.0
    %871 = vmatprep.subr.mxu0 0.0
    %872 = vmatpush1.xpose.msra.mxu0 0.0
    %873 = vmatprep.subr.mxu0 0.0
    %874 = vmatpush1.xpose.msra.mxu0 0.0
    %875 = vmatprep.subr.mxu0 0.0
    %876 = vmatpush1.xpose.msra.mxu0 0.0
    %877 = vmatprep.subr.mxu0 0.0
    %878 = vmatpush1.xpose.msra.mxu0 0.0
    %879 = vmatprep.subr.mxu0 0.0
    %880 = vmatpush1.xpose.msra.mxu0 0.0
    %881 = vmatprep.subr.mxu0 0.0
    %882 = vmatpush1.xpose.msra.mxu0 0.0
    %883 = vmatprep.subr.mxu0 0.0
    %884 = vmatpush1.xpose.msra.mxu0 0.0
    %885 = vmatprep.subr.mxu0 0.0
    %886 = vmatpush1.xpose.msra.mxu0 0.0
    %887 = vmatprep.subr.mxu0 0.0
    %888 = vmatpush1.xpose.msra.mxu0 0.0
    %889 = vmatprep.subr.mxu0 0.0
    %890 = vmatpush1.xpose.msra.mxu0 0.0
    %891 = vmatprep.subr.mxu0 0.0
    %892 = vmatpush1.xpose.msra.mxu0 0.0
    %893 = vmatprep.subr.mxu0 0.0
    %894 = vmatpush1.xpose.msra.mxu0 0.0
    %895 = vmatprep.subr.mxu0 0.0
    %896 = vmatpush1.xpose.msra.mxu0 0.0
    %897 = vmatprep.subr.mxu0 0.0
    %898 = vmatpush1.xpose.msra.mxu0 0.0
    %899 = vmatprep.subr.mxu0 0.0
    %900 = vmatpush1.xpose.msra.mxu0 0.0
    %901 = vmatprep.subr.mxu0 0.0
    %902 = vmatpush1.xpose.msra.mxu0 0.0
    %903 = vmatprep.subr.mxu0 0.0
    %904 = vmatpush1.xpose.msra.mxu0 0.0
    %905 = vmatprep.subr.mxu0 0.0
    %906 = vmatpush1.xpose.msra.mxu0 0.0
    %907 = vmatprep.subr.mxu0 0.0
    %908 = vmatpush1.xpose.msra.mxu0 0.0
    %909 = vmatprep.subr.mxu0 0.0
    %910 = vmatpush1.xpose.msra.mxu0 0.0
    %911 = vmatprep.subr.mxu0 0.0
    %912 = vmatpush1.xpose.msra.mxu0 0.0
    %913 = vmatprep.subr.mxu0 0.0
    %914 = vmatpush1.xpose.msra.mxu0 0.0
    %915 = vmatprep.mubr.f32.mxu0 0.0
    %916 = vmatmul.mubr.f32.gmra.mrb[0].mxu0 %v843
    %v917 = vpop.f32.mrb[0].mxu0
    %v918 = vadd.f32 %v300, %v917
    %v919 = vpop.f32.mrb[0].mxu0
    %920 = vmatprep.mubr.f32.mxu0 0.0
    %921 = vmatmul.mubr.f32.gmra.mrb[0].mxu0 %v845
    %v922 = vpop.f32.mrb[0].mxu0
    %v923 = vadd.f32 %v301, %v922
    %v924 = vpop.f32.mrb[0].mxu0
    %925 = vdwg.mxu0
    %928 = vrot.lane.b32.xlu0 %v292, 96
    %v929 = vpop.permute.xlu0 %928
    %930 = vrot.lane.b32.xlu0 %v297, 96
    %v931 = vpop.permute.xlu0 %930
    %v932 = vsel %vm308, %v292, 0
    %v934 = vsel %vm308, %v297, 0
    %v936 = vsel %vm308, %v929, 0
    %v938 = vsel %vm308, %v931, 0
    %940 = vmatprep.subr.mxu0 0.0
    %941 = vmatpush1.xpose.msra.mxu0 %v936
    %942 = vmatprep.subr.mxu0 0.0
    %943 = vmatpush1.xpose.msra.mxu0 %v938
    %944 = vmatprep.subr.mxu0 0.0
    %945 = vmatpush1.xpose.msra.mxu0 0.0
    %946 = vmatprep.subr.mxu0 0.0
    %947 = vmatpush1.xpose.msra.mxu0 0.0
    %948 = vmatprep.subr.mxu0 0.0
    %949 = vmatpush1.xpose.msra.mxu0 0.0
    %950 = vmatprep.subr.mxu0 0.0
    %951 = vmatpush1.xpose.msra.mxu0 0.0
    %952 = vmatprep.subr.mxu0 0.0
    %953 = vmatpush1.xpose.msra.mxu0 0.0
    %954 = vmatprep.subr.mxu0 0.0
    %955 = vmatpush1.xpose.msra.mxu0 0.0
    %956 = vmatprep.subr.mxu0 0.0
    %957 = vmatpush1.xpose.msra.mxu0 0.0
    %958 = vmatprep.subr.mxu0 0.0
    %959 = vmatpush1.xpose.msra.mxu0 0.0
    %960 = vmatprep.subr.mxu0 0.0
    %961 = vmatpush1.xpose.msra.mxu0 0.0
    %962 = vmatprep.subr.mxu0 0.0
    %963 = vmatpush1.xpose.msra.mxu0 0.0
    %964 = vmatprep.subr.mxu0 0.0
    %965 = vmatpush1.xpose.msra.mxu0 0.0
    %966 = vmatprep.subr.mxu0 0.0
    %967 = vmatpush1.xpose.msra.mxu0 0.0
    %968 = vmatprep.subr.mxu0 0.0
    %969 = vmatpush1.xpose.msra.mxu0 0.0
    %970 = vmatprep.subr.mxu0 0.0
    %971 = vmatpush1.xpose.msra.mxu0 0.0
    %972 = vmatprep.subr.mxu0 0.0
    %973 = vmatpush1.xpose.msra.mxu0 0.0
    %974 = vmatprep.subr.mxu0 0.0
    %975 = vmatpush1.xpose.msra.mxu0 0.0
    %976 = vmatprep.subr.mxu0 0.0
    %977 = vmatpush1.xpose.msra.mxu0 0.0
    %978 = vmatprep.subr.mxu0 0.0
    %979 = vmatpush1.xpose.msra.mxu0 0.0
    %980 = vmatprep.subr.mxu0 0.0
    %981 = vmatpush1.xpose.msra.mxu0 0.0
    %982 = vmatprep.subr.mxu0 0.0
    %983 = vmatpush1.xpose.msra.mxu0 0.0
    %984 = vmatprep.subr.mxu0 0.0
    %985 = vmatpush1.xpose.msra.mxu0 0.0
    %986 = vmatprep.subr.mxu0 0.0
    %987 = vmatpush1.xpose.msra.mxu0 0.0
    %988 = vmatprep.subr.mxu0 0.0
    %989 = vmatpush1.xpose.msra.mxu0 0.0
    %990 = vmatprep.subr.mxu0 0.0
    %991 = vmatpush1.xpose.msra.mxu0 0.0
    %992 = vmatprep.subr.mxu0 0.0
    %993 = vmatpush1.xpose.msra.mxu0 0.0
    %994 = vmatprep.subr.mxu0 0.0
    %995 = vmatpush1.xpose.msra.mxu0 0.0
    %996 = vmatprep.subr.mxu0 0.0
    %997 = vmatpush1.xpose.msra.mxu0 0.0
    %998 = vmatprep.subr.mxu0 0.0
    %999 = vmatpush1.xpose.msra.mxu0 0.0
    %1000 = vmatprep.subr.mxu0 0.0
    %1001 = vmatpush1.xpose.msra.mxu0 0.0
    %1002 = vmatprep.subr.mxu0 0.0
    %1003 = vmatpush1.xpose.msra.mxu0 0.0
    %1004 = vmatprep.mubr.f32.mxu0 0.0
    %1005 = vmatmul.mubr.f32.gmra.mrb[0].mxu0 %v932
    %v1006 = vpop.f32.mrb[0].mxu0
    %v1007 = vadd.f32 %v300, %v1006
    %v1008 = vpop.f32.mrb[0].mxu0
    %1009 = vmatprep.mubr.f32.mxu0 0.0
    %1010 = vmatmul.mubr.f32.gmra.mrb[0].mxu0 %v934
    %v1011 = vpop.f32.mrb[0].mxu0
    %v1012 = vadd.f32 %v301, %v1011
    %v1013 = vpop.f32.mrb[0].mxu0
    %1014 = vdwg.mxu0
    %vm1015 = vcmask 130048
    %v1016 = vsel %vm1015, %v384, -inf
    %1017 = vmax.xlane.f32.xlu0 %v1016
    %v1018 = vpop.xlane.xlu0 %1017
    %v1019 = vsel %vm1015, %v389, -inf
    %1020 = vmax.xlane.f32.xlu0 %v1019
    %v1021 = vpop.xlane.xlu0 %1020
    %v1022 = vsel %vm1015, %v473, -inf
    %1023 = vmax.xlane.f32.xlu0 %v1022
    %v1024 = vpop.xlane.xlu0 %1023
    %v1025 = vsel %vm1015, %v478, -inf
    %1026 = vmax.xlane.f32.xlu0 %v1025
    %v1027 = vpop.xlane.xlu0 %1026
    %v1028 = vsel %vm1015, %v562, -inf
    %1029 = vmax.xlane.f32.xlu0 %v1028
    %v1030 = vpop.xlane.xlu0 %1029
    %v1031 = vsel %vm1015, %v567, -inf
    %1032 = vmax.xlane.f32.xlu0 %v1031
    %v1033 = vpop.xlane.xlu0 %1032
    %v1034 = vsel %vm1015, %v651, -inf
    %1035 = vmax.xlane.f32.xlu0 %v1034
    %v1036 = vpop.xlane.xlu0 %1035
    %v1037 = vsel %vm1015, %v656, -inf
    %1038 = vmax.xlane.f32.xlu0 %v1037
    %v1039 = vpop.xlane.xlu0 %1038
    %v1040 = vsel %vm1015, %v740, -inf
    %1041 = vmax.xlane.f32.xlu0 %v1040
    %v1042 = vpop.xlane.xlu0 %1041
    %v1043 = vsel %vm1015, %v745, -inf
    %1044 = vmax.xlane.f32.xlu0 %v1043
    %v1045 = vpop.xlane.xlu0 %1044
    %v1046 = vsel %vm1015, %v829, -inf
    %1047 = vmax.xlane.f32.xlu0 %v1046
    %v1048 = vpop.xlane.xlu0 %1047
    %v1049 = vsel %vm1015, %v834, -inf
    %1050 = vmax.xlane.f32.xlu0 %v1049
    %v1051 = vpop.xlane.xlu0 %1050
    %v1052 = vsel %vm1015, %v918, -inf
    %1053 = vmax.xlane.f32.xlu0 %v1052
    %v1054 = vpop.xlane.xlu0 %1053
    %v1055 = vsel %vm1015, %v923, -inf
    %1056 = vmax.xlane.f32.xlu0 %v1055
    %v1057 = vpop.xlane.xlu0 %1056
    %v1058 = vsel %vm1015, %v1007, -inf
    %1059 = vmax.xlane.f32.xlu0 %v1058
    %v1060 = vpop.xlane.xlu0 %1059
    %v1061 = vsel %vm1015, %v1012, -inf
    %1062 = vmax.xlane.f32.xlu0 %v1061
    %v1063 = vpop.xlane.xlu0 %1062
    %v1064 = vsub.f32 %v384, %v1018
    %v1065 = vsub.f32 %v389, %v1021
    %v1066 = vsub.f32 %v473, %v1024
    %v1067 = vsub.f32 %v478, %v1027
    %v1068 = vsub.f32 %v562, %v1030
    %v1069 = vsub.f32 %v567, %v1033
    %v1070 = vsub.f32 %v651, %v1036
    %v1071 = vsub.f32 %v656, %v1039
    %v1072 = vsub.f32 %v740, %v1042
    %v1073 = vsub.f32 %v745, %v1045
    %v1074 = vsub.f32 %v829, %v1048
    %v1075 = vsub.f32 %v834, %v1051
    %v1076 = vsub.f32 %v918, %v1054
    %v1077 = vsub.f32 %v923, %v1057
    %v1078 = vsub.f32 %v1007, %v1060
    %v1079 = vsub.f32 %v1012, %v1063
    %v1080 = vmul.f32 %v1064, 1.442695
    %v1081 = vpow.pop %v1080
    %v1082 = vmul.f32 %v1065, 1.442695
    %v1083 = vpow.pop %v1082
    %v1084 = vmul.f32 %v1066, 1.442695
    %v1085 = vpow.pop %v1084
    %v1086 = vmul.f32 %v1067, 1.442695
    %v1087 = vpow.pop %v1086
    %v1088 = vmul.f32 %v1068, 1.442695
    %v1089 = vpow.pop %v1088
    %v1090 = vmul.f32 %v1069, 1.442695
    %v1091 = vpow.pop %v1090
    %v1092 = vmul.f32 %v1070, 1.442695
    %v1093 = vpow.pop %v1092
    %v1094 = vmul.f32 %v1071, 1.442695
    %v1095 = vpow.pop %v1094
    %v1096 = vmul.f32 %v1072, 1.442695
    %v1097 = vpow.pop %v1096
    %v1098 = vmul.f32 %v1073, 1.442695
    %v1099 = vpow.pop %v1098
    %v1100 = vmul.f32 %v1074, 1.442695
    %v1101 = vpow.pop %v1100
    %v1102 = vmul.f32 %v1075, 1.442695
    %v1103 = vpow.pop %v1102
    %v1104 = vmul.f32 %v1076, 1.442695
    %v1105 = vpow.pop %v1104
    %v1106 = vmul.f32 %v1077, 1.442695
    %v1107 = vpow.pop %v1106
    %v1108 = vmul.f32 %v1078, 1.442695
    %v1109 = vpow.pop %v1108
    %v1110 = vmul.f32 %v1079, 1.442695
    %v1111 = vpow.pop %v1110
    %v1112 = vsel %vm1015, %v1081, 0.0
    %1113 = vadd.xlane.f32.xlu0 %v1112
    %v1114 = vpop.xlane.xlu0 %1113
    %v1115 = vsel %vm1015, %v1083, 0.0
    %1116 = vadd.xlane.f32.xlu0 %v1115
    %v1117 = vpop.xlane.xlu0 %1116
    %v1118 = vsel %vm1015, %v1085, 0.0
    %1119 = vadd.xlane.f32.xlu0 %v1118
    %v1120 = vpop.xlane.xlu0 %1119
    %v1121 = vsel %vm1015, %v1087, 0.0
    %1122 = vadd.xlane.f32.xlu0 %v1121
    %v1123 = vpop.xlane.xlu0 %1122
    %v1124 = vsel %vm1015, %v1089, 0.0
    %1125 = vadd.xlane.f32.xlu0 %v1124
    %v1126 = vpop.xlane.xlu0 %1125
    %v1127 = vsel %vm1015, %v1091, 0.0
    %1128 = vadd.xlane.f32.xlu0 %v1127
    %v1129 = vpop.xlane.xlu0 %1128
    %v1130 = vsel %vm1015, %v1093, 0.0
    %1131 = vadd.xlane.f32.xlu0 %v1130
    %v1132 = vpop.xlane.xlu0 %1131
    %v1133 = vsel %vm1015, %v1095, 0.0
    %1134 = vadd.xlane.f32.xlu0 %v1133
    %v1135 = vpop.xlane.xlu0 %1134
    %v1136 = vsel %vm1015, %v1097, 0.0
    %1137 = vadd.xlane.f32.xlu0 %v1136
    %v1138 = vpop.xlane.xlu0 %1137
    %v1139 = vsel %vm1015, %v1099, 0.0
    %1140 = vadd.xlane.f32.xlu0 %v1139
    %v1141 = vpop.xlane.xlu0 %1140
    %v1142 = vsel %vm1015, %v1101, 0.0
    %1143 = vadd.xlane.f32.xlu0 %v1142
    %v1144 = vpop.xlane.xlu0 %1143
    %v1145 = vsel %vm1015, %v1103, 0.0
    %1146 = vadd.xlane.f32.xlu0 %v1145
    %v1147 = vpop.xlane.xlu0 %1146
    %v1148 = vsel %vm1015, %v1105, 0.0
    %1149 = vadd.xlane.f32.xlu0 %v1148
    %v1150 = vpop.xlane.xlu0 %1149
    %v1151 = vsel %vm1015, %v1107, 0.0
    %1152 = vadd.xlane.f32.xlu0 %v1151
    %v1153 = vpop.xlane.xlu0 %1152
    %v1154 = vsel %vm1015, %v1109, 0.0
    %1155 = vadd.xlane.f32.xlu0 %v1154
    %v1156 = vpop.xlane.xlu0 %1155
    %v1157 = vsel %vm1015, %v1111, 0.0
    %1158 = vadd.xlane.f32.xlu0 %v1157
    %v1159 = vpop.xlane.xlu0 %1158
    %v1160 = vrcp.pop %v1114
    %v1161 = vrcp.pop %v1117
    %v1162 = vrcp.pop %v1120
    %v1163 = vrcp.pop %v1123
    %v1164 = vrcp.pop %v1126
    %v1165 = vrcp.pop %v1129
    %v1166 = vrcp.pop %v1132
    %v1167 = vrcp.pop %v1135
    %v1168 = vrcp.pop %v1138
    %v1169 = vrcp.pop %v1141
    %v1170 = vrcp.pop %v1144
    %v1171 = vrcp.pop %v1147
    %v1172 = vrcp.pop %v1150
    %v1173 = vrcp.pop %v1153
    %v1174 = vrcp.pop %v1156
    %v1175 = vrcp.pop %v1159
    %v1176 = vmul.f32 %v1081, %v1160
    %v1177 = vmul.f32 %v1083, %v1161
    %v1178 = vmul.f32 %v1085, %v1162
    %v1179 = vmul.f32 %v1087, %v1163
    %v1180 = vmul.f32 %v1089, %v1164
    %v1181 = vmul.f32 %v1091, %v1165
    %v1182 = vmul.f32 %v1093, %v1166
    %v1183 = vmul.f32 %v1095, %v1167
    %v1184 = vmul.f32 %v1097, %v1168
    %v1185 = vmul.f32 %v1099, %v1169
    %v1186 = vmul.f32 %v1101, %v1170
    %v1187 = vmul.f32 %v1103, %v1171
    %v1188 = vmul.f32 %v1105, %v1172
    %v1189 = vmul.f32 %v1107, %v1173
    %v1190 = vmul.f32 %v1109, %v1174
    %v1191 = vmul.f32 %v1111, %v1175
    %1192 = vrot.lane.b32.xlu0 %v222, 64
    %v1193 = vpop.permute.xlu0 %1192
    %1194 = vrot.lane.b32.xlu0 %v227, 64
    %v1195 = vpop.permute.xlu0 %1194
    %v1199 = vsel %vm1015, %v1176, 0
    %v1202 = vsel %vm1015, %v1177, 0
    %1204 = vmatprep.subr.mxu0 0.0
    %1205 = vmatpush1.msra.mxu0 %v1193
    %1206 = vmatprep.subr.mxu0 0.0
    %1207 = vmatpush1.msra.mxu0 %v1195
    %1208 = vmatprep.subr.mxu0 0.0
    %1209 = vmatpush1.msra.mxu0 0.0
    %1210 = vmatprep.subr.mxu0 0.0
    %1211 = vmatpush1.msra.mxu0 0.0
    %1212 = vmatprep.subr.mxu0 0.0
    %1213 = vmatpush1.msra.mxu0 0.0
    %1214 = vmatprep.subr.mxu0 0.0
    %1215 = vmatpush1.msra.mxu0 0.0
    %1216 = vmatprep.subr.mxu0 0.0
    %1217 = vmatpush1.msra.mxu0 0.0
    %1218 = vmatprep.subr.mxu0 0.0
    %1219 = vmatpush1.msra.mxu0 0.0
    %1220 = vmatprep.subr.mxu0 0.0
    %1221 = vmatpush1.msra.mxu0 0.0
    %1222 = vmatprep.subr.mxu0 0.0
    %1223 = vmatpush1.msra.mxu0 0.0
    %1224 = vmatprep.subr.mxu0 0.0
    %1225 = vmatpush1.msra.mxu0 0.0
    %1226 = vmatprep.subr.mxu0 0.0
    %1227 = vmatpush1.msra.mxu0 0.0
    %1228 = vmatprep.subr.mxu0 0.0
    %1229 = vmatpush1.msra.mxu0 0.0
    %1230 = vmatprep.subr.mxu0 0.0
    %1231 = vmatpush1.msra.mxu0 0.0
    %1232 = vmatprep.subr.mxu0 0.0
    %1233 = vmatpush1.msra.mxu0 0.0
    %1234 = vmatprep.subr.mxu0 0.0
    %1235 = vmatpush1.msra.mxu0 0.0
    %1236 = vmatprep.subr.mxu0 0.0
    %1237 = vmatpush1.msra.mxu0 0.0
    %1238 = vmatprep.subr.mxu0 0.0
    %1239 = vmatpush1.msra.mxu0 0.0
    %1240 = vmatprep.subr.mxu0 0.0
    %1241 = vmatpush1.msra.mxu0 0.0
    %1242 = vmatprep.subr.mxu0 0.0
    %1243 = vmatpush1.msra.mxu0 0.0
    %1244 = vmatprep.subr.mxu0 0.0
    %1245 = vmatpush1.msra.mxu0 0.0
    %1246 = vmatprep.subr.mxu0 0.0
    %1247 = vmatpush1.msra.mxu0 0.0
    %1248 = vmatprep.subr.mxu0 0.0
    %1249 = vmatpush1.msra.mxu0 0.0
    %1250 = vmatprep.subr.mxu0 0.0
    %1251 = vmatpush1.msra.mxu0 0.0
    %1252 = vmatprep.subr.mxu0 0.0
    %1253 = vmatpush1.msra.mxu0 0.0
    %1254 = vmatprep.subr.mxu0 0.0
    %1255 = vmatpush1.msra.mxu0 0.0
    %1256 = vmatprep.subr.mxu0 0.0
    %1257 = vmatpush1.msra.mxu0 0.0
    %1258 = vmatprep.subr.mxu0 0.0
    %1259 = vmatpush1.msra.mxu0 0.0
    %1260 = vmatprep.subr.mxu0 0.0
    %1261 = vmatpush1.msra.mxu0 0.0
    %1262 = vmatprep.subr.mxu0 0.0
    %1263 = vmatpush1.msra.mxu0 0.0
    %1264 = vmatprep.subr.mxu0 0.0
    %1265 = vmatpush1.msra.mxu0 0.0
    %1266 = vmatprep.subr.mxu0 0.0
    %1267 = vmatpush1.msra.mxu0 0.0
    %1268 = vmatprep.mubr.f32.mxu0 0.0
    %1269 = vmatmul.mubr.f32.gmra.mrb[0].mxu0 %v1199
    %v1270 = vpop.f32.mrb[0].mxu0
    %v1271 = vadd.f32 0.0, %v1270
    %v1272 = vpop.f32.mrb[0].mxu0
    %1273 = vmatprep.mubr.f32.mxu0 0.0
    %1274 = vmatmul.mubr.f32.gmra.mrb[0].mxu0 %v1202
    %v1275 = vpop.f32.mrb[0].mxu0
    %v1276 = vadd.f32 0.0, %v1275
    %v1277 = vpop.f32.mrb[0].mxu0
    %1278 = vdwg.mxu0
    %1279 = vrot.lane.b32.xlu0 %v232, 64
    %v1280 = vpop.permute.xlu0 %1279
    %1281 = vrot.lane.b32.xlu0 %v237, 64
    %v1282 = vpop.permute.xlu0 %1281
    %v1286 = vsel %vm1015, %v1178, 0
    %v1289 = vsel %vm1015, %v1179, 0
    %1291 = vmatprep.subr.mxu0 0.0
    %1292 = vmatpush1.msra.mxu0 %v1280
    %1293 = vmatprep.subr.mxu0 0.0
    %1294 = vmatpush1.msra.mxu0 %v1282
    %1295 = vmatprep.subr.mxu0 0.0
    %1296 = vmatpush1.msra.mxu0 0.0
    %1297 = vmatprep.subr.mxu0 0.0
    %1298 = vmatpush1.msra.mxu0 0.0
    %1299 = vmatprep.subr.mxu0 0.0
    %1300 = vmatpush1.msra.mxu0 0.0
    %1301 = vmatprep.subr.mxu0 0.0
    %1302 = vmatpush1.msra.mxu0 0.0
    %1303 = vmatprep.subr.mxu0 0.0
    %1304 = vmatpush1.msra.mxu0 0.0
    %1305 = vmatprep.subr.mxu0 0.0
    %1306 = vmatpush1.msra.mxu0 0.0
    %1307 = vmatprep.subr.mxu0 0.0
    %1308 = vmatpush1.msra.mxu0 0.0
    %1309 = vmatprep.subr.mxu0 0.0
    %1310 = vmatpush1.msra.mxu0 0.0
    %1311 = vmatprep.subr.mxu0 0.0
    %1312 = vmatpush1.msra.mxu0 0.0
    %1313 = vmatprep.subr.mxu0 0.0
    %1314 = vmatpush1.msra.mxu0 0.0
    %1315 = vmatprep.subr.mxu0 0.0
    %1316 = vmatpush1.msra.mxu0 0.0
    %1317 = vmatprep.subr.mxu0 0.0
    %1318 = vmatpush1.msra.mxu0 0.0
    %1319 = vmatprep.subr.mxu0 0.0
    %1320 = vmatpush1.msra.mxu0 0.0
    %1321 = vmatprep.subr.mxu0 0.0
    %1322 = vmatpush1.msra.mxu0 0.0
    %1323 = vmatprep.subr.mxu0 0.0
    %1324 = vmatpush1.msra.mxu0 0.0
    %1325 = vmatprep.subr.mxu0 0.0
    %1326 = vmatpush1.msra.mxu0 0.0
    %1327 = vmatprep.subr.mxu0 0.0
    %1328 = vmatpush1.msra.mxu0 0.0
    %1329 = vmatprep.subr.mxu0 0.0
    %1330 = vmatpush1.msra.mxu0 0.0
    %1331 = vmatprep.subr.mxu0 0.0
    %1332 = vmatpush1.msra.mxu0 0.0
    %1333 = vmatprep.subr.mxu0 0.0
    %1334 = vmatpush1.msra.mxu0 0.0
    %1335 = vmatprep.subr.mxu0 0.0
    %1336 = vmatpush1.msra.mxu0 0.0
    %1337 = vmatprep.subr.mxu0 0.0
    %1338 = vmatpush1.msra.mxu0 0.0
    %1339 = vmatprep.subr.mxu0 0.0
    %1340 = vmatpush1.msra.mxu0 0.0
    %1341 = vmatprep.subr.mxu0 0.0
    %1342 = vmatpush1.msra.mxu0 0.0
    %1343 = vmatprep.subr.mxu0 0.0
    %1344 = vmatpush1.msra.mxu0 0.0
    %1345 = vmatprep.subr.mxu0 0.0
    %1346 = vmatpush1.msra.mxu0 0.0
    %1347 = vmatprep.subr.mxu0 0.0
    %1348 = vmatpush1.msra.mxu0 0.0
    %1349 = vmatprep.subr.mxu0 0.0
    %1350 = vmatpush1.msra.mxu0 0.0
    %1351 = vmatprep.subr.mxu0 0.0
    %1352 = vmatpush1.msra.mxu0 0.0
    %1353 = vmatprep.subr.mxu0 0.0
    %1354 = vmatpush1.msra.mxu0 0.0
    %1355 = vmatprep.mubr.f32.mxu0 0.0
    %1356 = vmatmul.mubr.f32.gmra.mrb[0].mxu0 %v1286
    %v1357 = vpop.f32.mrb[0].mxu0
    %v1358 = vadd.f32 0.0, %v1357
    %v1359 = vpop.f32.mrb[0].mxu0
    %1360 = vmatprep.mubr.f32.mxu0 0.0
    %1361 = vmatmul.mubr.f32.gmra.mrb[0].mxu0 %v1289
    %v1362 = vpop.f32.mrb[0].mxu0
    %v1363 = vadd.f32 0.0, %v1362
    %v1364 = vpop.f32.mrb[0].mxu0
    %1365 = vdwg.mxu0
    %1366 = vrot.lane.b32.xlu0 %v242, 64
    %v1367 = vpop.permute.xlu0 %1366
    %1368 = vrot.lane.b32.xlu0 %v247, 64
    %v1369 = vpop.permute.xlu0 %1368
    %v1373 = vsel %vm1015, %v1180, 0
    %v1376 = vsel %vm1015, %v1181, 0
    %1378 = vmatprep.subr.mxu0 0.0
    %1379 = vmatpush1.msra.mxu0 %v1367
    %1380 = vmatprep.subr.mxu0 0.0
    %1381 = vmatpush1.msra.mxu0 %v1369
    %1382 = vmatprep.subr.mxu0 0.0
    %1383 = vmatpush1.msra.mxu0 0.0
    %1384 = vmatprep.subr.mxu0 0.0
    %1385 = vmatpush1.msra.mxu0 0.0
    %1386 = vmatprep.subr.mxu0 0.0
    %1387 = vmatpush1.msra.mxu0 0.0
    %1388 = vmatprep.subr.mxu0 0.0
    %1389 = vmatpush1.msra.mxu0 0.0
    %1390 = vmatprep.subr.mxu0 0.0
    %1391 = vmatpush1.msra.mxu0 0.0
    %1392 = vmatprep.subr.mxu0 0.0
    %1393 = vmatpush1.msra.mxu0 0.0
    %1394 = vmatprep.subr.mxu0 0.0
    %1395 = vmatpush1.msra.mxu0 0.0
    %1396 = vmatprep.subr.mxu0 0.0
    %1397 = vmatpush1.msra.mxu0 0.0
    %1398 = vmatprep.subr.mxu0 0.0
    %1399 = vmatpush1.msra.mxu0 0.0
    %1400 = vmatprep.subr.mxu0 0.0
    %1401 = vmatpush1.msra.mxu0 0.0
    %1402 = vmatprep.subr.mxu0 0.0
    %1403 = vmatpush1.msra.mxu0 0.0
    %1404 = vmatprep.subr.mxu0 0.0
    %1405 = vmatpush1.msra.mxu0 0.0
    %1406 = vmatprep.subr.mxu0 0.0
    %1407 = vmatpush1.msra.mxu0 0.0
    %1408 = vmatprep.subr.mxu0 0.0
    %1409 = vmatpush1.msra.mxu0 0.0
    %1410 = vmatprep.subr.mxu0 0.0
    %1411 = vmatpush1.msra.mxu0 0.0
    %1412 = vmatprep.subr.mxu0 0.0
    %1413 = vmatpush1.msra.mxu0 0.0
    %1414 = vmatprep.subr.mxu0 0.0
    %1415 = vmatpush1.msra.mxu0 0.0
    %1416 = vmatprep.subr.mxu0 0.0
    %1417 = vmatpush1.msra.mxu0 0.0
    %1418 = vmatprep.subr.mxu0 0.0
    %1419 = vmatpush1.msra.mxu0 0.0
    %1420 = vmatprep.subr.mxu0 0.0
    %1421 = vmatpush1.msra.mxu0 0.0
    %1422 = vmatprep.subr.mxu0 0.0
    %1423 = vmatpush1.msra.mxu0 0.0
    %1424 = vmatprep.subr.mxu0 0.0
    %1425 = vmatpush1.msra.mxu0 0.0
    %1426 = vmatprep.subr.mxu0 0.0
    %1427 = vmatpush1.msra.mxu0 0.0
    %1428 = vmatprep.subr.mxu0 0.0
    %1429 = vmatpush1.msra.mxu0 0.0
    %1430 = vmatprep.subr.mxu0 0.0
    %1431 = vmatpush1.msra.mxu0 0.0
    %1432 = vmatprep.subr.mxu0 0.0
    %1433 = vmatpush1.msra.mxu0 0.0
    %1434 = vmatprep.subr.mxu0 0.0
    %1435 = vmatpush1.msra.mxu0 0.0
    %1436 = vmatprep.subr.mxu0 0.0
    %1437 = vmatpush1.msra.mxu0 0.0
    %1438 = vmatprep.subr.mxu0 0.0
    %1439 = vmatpush1.msra.mxu0 0.0
    %1440 = vmatprep.subr.mxu0 0.0
    %1441 = vmatpush1.msra.mxu0 0.0
    %1442 = vmatprep.mubr.f32.mxu0 0.0
    %1443 = vmatmul.mubr.f32.gmra.mrb[0].mxu0 %v1373
    %v1444 = vpop.f32.mrb[0].mxu0
    %v1445 = vadd.f32 0.0, %v1444
    %v1446 = vpop.f32.mrb[0].mxu0
    %1447 = vmatprep.mubr.f32.mxu0 0.0
    %1448 = vmatmul.mubr.f32.gmra.mrb[0].mxu0 %v1376
    %v1449 = vpop.f32.mrb[0].mxu0
    %v1450 = vadd.f32 0.0, %v1449
    %v1451 = vpop.f32.mrb[0].mxu0
    %1452 = vdwg.mxu0
    %1453 = vrot.lane.b32.xlu0 %v252, 64
    %v1454 = vpop.permute.xlu0 %1453
    %1455 = vrot.lane.b32.xlu0 %v257, 64
    %v1456 = vpop.permute.xlu0 %1455
    %v1460 = vsel %vm1015, %v1182, 0
    %v1463 = vsel %vm1015, %v1183, 0
    %1465 = vmatprep.subr.mxu0 0.0
    %1466 = vmatpush1.msra.mxu0 %v1454
    %1467 = vmatprep.subr.mxu0 0.0
    %1468 = vmatpush1.msra.mxu0 %v1456
    %1469 = vmatprep.subr.mxu0 0.0
    %1470 = vmatpush1.msra.mxu0 0.0
    %1471 = vmatprep.subr.mxu0 0.0
    %1472 = vmatpush1.msra.mxu0 0.0
    %1473 = vmatprep.subr.mxu0 0.0
    %1474 = vmatpush1.msra.mxu0 0.0
    %1475 = vmatprep.subr.mxu0 0.0
    %1476 = vmatpush1.msra.mxu0 0.0
    %1477 = vmatprep.subr.mxu0 0.0
    %1478 = vmatpush1.msra.mxu0 0.0
    %1479 = vmatprep.subr.mxu0 0.0
    %1480 = vmatpush1.msra.mxu0 0.0
    %1481 = vmatprep.subr.mxu0 0.0
    %1482 = vmatpush1.msra.mxu0 0.0
    %1483 = vmatprep.subr.mxu0 0.0
    %1484 = vmatpush1.msra.mxu0 0.0
    %1485 = vmatprep.subr.mxu0 0.0
    %1486 = vmatpush1.msra.mxu0 0.0
    %1487 = vmatprep.subr.mxu0 0.0
    %1488 = vmatpush1.msra.mxu0 0.0
    %1489 = vmatprep.subr.mxu0 0.0
    %1490 = vmatpush1.msra.mxu0 0.0
    %1491 = vmatprep.subr.mxu0 0.0
    %1492 = vmatpush1.msra.mxu0 0.0
    %1493 = vmatprep.subr.mxu0 0.0
    %1494 = vmatpush1.msra.mxu0 0.0
    %1495 = vmatprep.subr.mxu0 0.0
    %1496 = vmatpush1.msra.mxu0 0.0
    %1497 = vmatprep.subr.mxu0 0.0
    %1498 = vmatpush1.msra.mxu0 0.0
    %1499 = vmatprep.subr.mxu0 0.0
    %1500 = vmatpush1.msra.mxu0 0.0
    %1501 = vmatprep.subr.mxu0 0.0
    %1502 = vmatpush1.msra.mxu0 0.0
    %1503 = vmatprep.subr.mxu0 0.0
    %1504 = vmatpush1.msra.mxu0 0.0
    %1505 = vmatprep.subr.mxu0 0.0
    %1506 = vmatpush1.msra.mxu0 0.0
    %1507 = vmatprep.subr.mxu0 0.0
    %1508 = vmatpush1.msra.mxu0 0.0
    %1509 = vmatprep.subr.mxu0 0.0
    %1510 = vmatpush1.msra.mxu0 0.0
    %1511 = vmatprep.subr.mxu0 0.0
    %1512 = vmatpush1.msra.mxu0 0.0
    %1513 = vmatprep.subr.mxu0 0.0
    %1514 = vmatpush1.msra.mxu0 0.0
    %1515 = vmatprep.subr.mxu0 0.0
    %1516 = vmatpush1.msra.mxu0 0.0
    %1517 = vmatprep.subr.mxu0 0.0
    %1518 = vmatpush1.msra.mxu0 0.0
    %1519 = vmatprep.subr.mxu0 0.0
    %1520 = vmatpush1.msra.mxu0 0.0
    %1521 = vmatprep.subr.mxu0 0.0
    %1522 = vmatpush1.msra.mxu0 0.0
    %1523 = vmatprep.subr.mxu0 0.0
    %1524 = vmatpush1.msra.mxu0 0.0
    %1525 = vmatprep.subr.mxu0 0.0
    %1526 = vmatpush1.msra.mxu0 0.0
    %1527 = vmatprep.subr.mxu0 0.0
    %1528 = vmatpush1.msra.mxu0 0.0
    %1529 = vmatprep.mubr.f32.mxu0 0.0
    %1530 = vmatmul.mubr.f32.gmra.mrb[0].mxu0 %v1460
    %v1531 = vpop.f32.mrb[0].mxu0
    %v1532 = vadd.f32 0.0, %v1531
    %v1533 = vpop.f32.mrb[0].mxu0
    %1534 = vmatprep.mubr.f32.mxu0 0.0
    %1535 = vmatmul.mubr.f32.gmra.mrb[0].mxu0 %v1463
    %v1536 = vpop.f32.mrb[0].mxu0
    %v1537 = vadd.f32 0.0, %v1536
    %v1538 = vpop.f32.mrb[0].mxu0
    %1539 = vdwg.mxu0
    %1540 = vrot.lane.b32.xlu0 %v262, 64
    %v1541 = vpop.permute.xlu0 %1540
    %1542 = vrot.lane.b32.xlu0 %v267, 64
    %v1543 = vpop.permute.xlu0 %1542
    %v1547 = vsel %vm1015, %v1184, 0
    %v1550 = vsel %vm1015, %v1185, 0
    %1552 = vmatprep.subr.mxu0 0.0
    %1553 = vmatpush1.msra.mxu0 %v1541
    %1554 = vmatprep.subr.mxu0 0.0
    %1555 = vmatpush1.msra.mxu0 %v1543
    %1556 = vmatprep.subr.mxu0 0.0
    %1557 = vmatpush1.msra.mxu0 0.0
    %1558 = vmatprep.subr.mxu0 0.0
    %1559 = vmatpush1.msra.mxu0 0.0
    %1560 = vmatprep.subr.mxu0 0.0
    %1561 = vmatpush1.msra.mxu0 0.0
    %1562 = vmatprep.subr.mxu0 0.0
    %1563 = vmatpush1.msra.mxu0 0.0
    %1564 = vmatprep.subr.mxu0 0.0
    %1565 = vmatpush1.msra.mxu0 0.0
    %1566 = vmatprep.subr.mxu0 0.0
    %1567 = vmatpush1.msra.mxu0 0.0
    %1568 = vmatprep.subr.mxu0 0.0
    %1569 = vmatpush1.msra.mxu0 0.0
    %1570 = vmatprep.subr.mxu0 0.0
    %1571 = vmatpush1.msra.mxu0 0.0
    %1572 = vmatprep.subr.mxu0 0.0
    %1573 = vmatpush1.msra.mxu0 0.0
    %1574 = vmatprep.subr.mxu0 0.0
    %1575 = vmatpush1.msra.mxu0 0.0
    %1576 = vmatprep.subr.mxu0 0.0
    %1577 = vmatpush1.msra.mxu0 0.0
    %1578 = vmatprep.subr.mxu0 0.0
    %1579 = vmatpush1.msra.mxu0 0.0
    %1580 = vmatprep.subr.mxu0 0.0
    %1581 = vmatpush1.msra.mxu0 0.0
    %1582 = vmatprep.subr.mxu0 0.0
    %1583 = vmatpush1.msra.mxu0 0.0
    %1584 = vmatprep.subr.mxu0 0.0
    %1585 = vmatpush1.msra.mxu0 0.0
    %1586 = vmatprep.subr.mxu0 0.0
    %1587 = vmatpush1.msra.mxu0 0.0
    %1588 = vmatprep.subr.mxu0 0.0
    %1589 = vmatpush1.msra.mxu0 0.0
    %1590 = vmatprep.subr.mxu0 0.0
    %1591 = vmatpush1.msra.mxu0 0.0
    %1592 = vmatprep.subr.mxu0 0.0
    %1593 = vmatpush1.msra.mxu0 0.0
    %1594 = vmatprep.subr.mxu0 0.0
    %1595 = vmatpush1.msra.mxu0 0.0
    %1596 = vmatprep.subr.mxu0 0.0
    %1597 = vmatpush1.msra.mxu0 0.0
    %1598 = vmatprep.subr.mxu0 0.0
    %1599 = vmatpush1.msra.mxu0 0.0
    %1600 = vmatprep.subr.mxu0 0.0
    %1601 = vmatpush1.msra.mxu0 0.0
    %1602 = vmatprep.subr.mxu0 0.0
    %1603 = vmatpush1.msra.mxu0 0.0
    %1604 = vmatprep.subr.mxu0 0.0
    %1605 = vmatpush1.msra.mxu0 0.0
    %1606 = vmatprep.subr.mxu0 0.0
    %1607 = vmatpush1.msra.mxu0 0.0
    %1608 = vmatprep.subr.mxu0 0.0
    %1609 = vmatpush1.msra.mxu0 0.0
    %1610 = vmatprep.subr.mxu0 0.0
    %1611 = vmatpush1.msra.mxu0 0.0
    %1612 = vmatprep.subr.mxu0 0.0
    %1613 = vmatpush1.msra.mxu0 0.0
    %1614 = vmatprep.subr.mxu0 0.0
    %1615 = vmatpush1.msra.mxu0 0.0
    %1616 = vmatprep.mubr.f32.mxu0 0.0
    %1617 = vmatmul.mubr.f32.gmra.mrb[0].mxu0 %v1547
    %v1618 = vpop.f32.mrb[0].mxu0
    %v1619 = vadd.f32 0.0, %v1618
    %v1620 = vpop.f32.mrb[0].mxu0
    %1621 = vmatprep.mubr.f32.mxu0 0.0
    %1622 = vmatmul.mubr.f32.gmra.mrb[0].mxu0 %v1550
    %v1623 = vpop.f32.mrb[0].mxu0
    %v1624 = vadd.f32 0.0, %v1623
    %v1625 = vpop.f32.mrb[0].mxu0
    %1626 = vdwg.mxu0
    %1627 = vrot.lane.b32.xlu0 %v272, 64
    %v1628 = vpop.permute.xlu0 %1627
    %1629 = vrot.lane.b32.xlu0 %v277, 64
    %v1630 = vpop.permute.xlu0 %1629
    %v1634 = vsel %vm1015, %v1186, 0
    %v1637 = vsel %vm1015, %v1187, 0
    %1639 = vmatprep.subr.mxu0 0.0
    %1640 = vmatpush1.msra.mxu0 %v1628
    %1641 = vmatprep.subr.mxu0 0.0
    %1642 = vmatpush1.msra.mxu0 %v1630
    %1643 = vmatprep.subr.mxu0 0.0
    %1644 = vmatpush1.msra.mxu0 0.0
    %1645 = vmatprep.subr.mxu0 0.0
    %1646 = vmatpush1.msra.mxu0 0.0
    %1647 = vmatprep.subr.mxu0 0.0
    %1648 = vmatpush1.msra.mxu0 0.0
    %1649 = vmatprep.subr.mxu0 0.0
    %1650 = vmatpush1.msra.mxu0 0.0
    %1651 = vmatprep.subr.mxu0 0.0
    %1652 = vmatpush1.msra.mxu0 0.0
    %1653 = vmatprep.subr.mxu0 0.0
    %1654 = vmatpush1.msra.mxu0 0.0
    %1655 = vmatprep.subr.mxu0 0.0
    %1656 = vmatpush1.msra.mxu0 0.0
    %1657 = vmatprep.subr.mxu0 0.0
    %1658 = vmatpush1.msra.mxu0 0.0
    %1659 = vmatprep.subr.mxu0 0.0
    %1660 = vmatpush1.msra.mxu0 0.0
    %1661 = vmatprep.subr.mxu0 0.0
    %1662 = vmatpush1.msra.mxu0 0.0
    %1663 = vmatprep.subr.mxu0 0.0
    %1664 = vmatpush1.msra.mxu0 0.0
    %1665 = vmatprep.subr.mxu0 0.0
    %1666 = vmatpush1.msra.mxu0 0.0
    %1667 = vmatprep.subr.mxu0 0.0
    %1668 = vmatpush1.msra.mxu0 0.0
    %1669 = vmatprep.subr.mxu0 0.0
    %1670 = vmatpush1.msra.mxu0 0.0
    %1671 = vmatprep.subr.mxu0 0.0
    %1672 = vmatpush1.msra.mxu0 0.0
    %1673 = vmatprep.subr.mxu0 0.0
    %1674 = vmatpush1.msra.mxu0 0.0
    %1675 = vmatprep.subr.mxu0 0.0
    %1676 = vmatpush1.msra.mxu0 0.0
    %1677 = vmatprep.subr.mxu0 0.0
    %1678 = vmatpush1.msra.mxu0 0.0
    %1679 = vmatprep.subr.mxu0 0.0
    %1680 = vmatpush1.msra.mxu0 0.0
    %1681 = vmatprep.subr.mxu0 0.0
    %1682 = vmatpush1.msra.mxu0 0.0
    %1683 = vmatprep.subr.mxu0 0.0
    %1684 = vmatpush1.msra.mxu0 0.0
    %1685 = vmatprep.subr.mxu0 0.0
    %1686 = vmatpush1.msra.mxu0 0.0
    %1687 = vmatprep.subr.mxu0 0.0
    %1688 = vmatpush1.msra.mxu0 0.0
    %1689 = vmatprep.subr.mxu0 0.0
    %1690 = vmatpush1.msra.mxu0 0.0
    %1691 = vmatprep.subr.mxu0 0.0
    %1692 = vmatpush1.msra.mxu0 0.0
    %1693 = vmatprep.subr.mxu0 0.0
    %1694 = vmatpush1.msra.mxu0 0.0
    %1695 = vmatprep.subr.mxu0 0.0
    %1696 = vmatpush1.msra.mxu0 0.0
    %1697 = vmatprep.subr.mxu0 0.0
    %1698 = vmatpush1.msra.mxu0 0.0
    %1699 = vmatprep.subr.mxu0 0.0
    %1700 = vmatpush1.msra.mxu0 0.0
    %1701 = vmatprep.subr.mxu0 0.0
    %1702 = vmatpush1.msra.mxu0 0.0
    %1703 = vmatprep.mubr.f32.mxu0 0.0
    %1704 = vmatmul.mubr.f32.gmra.mrb[0].mxu0 %v1634
    %v1705 = vpop.f32.mrb[0].mxu0
    %v1706 = vadd.f32 0.0, %v1705
    %v1707 = vpop.f32.mrb[0].mxu0
    %1708 = vmatprep.mubr.f32.mxu0 0.0
    %1709 = vmatmul.mubr.f32.gmra.mrb[0].mxu0 %v1637
    %v1710 = vpop.f32.mrb[0].mxu0
    %v1711 = vadd.f32 0.0, %v1710
    %v1712 = vpop.f32.mrb[0].mxu0
    %1713 = vdwg.mxu0
    %1714 = vrot.lane.b32.xlu0 %v282, 64
    %v1715 = vpop.permute.xlu0 %1714
    %1716 = vrot.lane.b32.xlu0 %v287, 64
    %v1717 = vpop.permute.xlu0 %1716
    %v1721 = vsel %vm1015, %v1188, 0
    %v1724 = vsel %vm1015, %v1189, 0
    %1726 = vmatprep.subr.mxu0 0.0
    %1727 = vmatpush1.msra.mxu0 %v1715
    %1728 = vmatprep.subr.mxu0 0.0
    %1729 = vmatpush1.msra.mxu0 %v1717
    %1730 = vmatprep.subr.mxu0 0.0
    %1731 = vmatpush1.msra.mxu0 0.0
    %1732 = vmatprep.subr.mxu0 0.0
    %1733 = vmatpush1.msra.mxu0 0.0
    %1734 = vmatprep.subr.mxu0 0.0
    %1735 = vmatpush1.msra.mxu0 0.0
    %1736 = vmatprep.subr.mxu0 0.0
    %1737 = vmatpush1.msra.mxu0 0.0
    %1738 = vmatprep.subr.mxu0 0.0
    %1739 = vmatpush1.msra.mxu0 0.0
    %1740 = vmatprep.subr.mxu0 0.0
    %1741 = vmatpush1.msra.mxu0 0.0
    %1742 = vmatprep.subr.mxu0 0.0
    %1743 = vmatpush1.msra.mxu0 0.0
    %1744 = vmatprep.subr.mxu0 0.0
    %1745 = vmatpush1.msra.mxu0 0.0
    %1746 = vmatprep.subr.mxu0 0.0
    %1747 = vmatpush1.msra.mxu0 0.0
    %1748 = vmatprep.subr.mxu0 0.0
    %1749 = vmatpush1.msra.mxu0 0.0
    %1750 = vmatprep.subr.mxu0 0.0
    %1751 = vmatpush1.msra.mxu0 0.0
    %1752 = vmatprep.subr.mxu0 0.0
    %1753 = vmatpush1.msra.mxu0 0.0
    %1754 = vmatprep.subr.mxu0 0.0
    %1755 = vmatpush1.msra.mxu0 0.0
    %1756 = vmatprep.subr.mxu0 0.0
    %1757 = vmatpush1.msra.mxu0 0.0
    %1758 = vmatprep.subr.mxu0 0.0
    %1759 = vmatpush1.msra.mxu0 0.0
    %1760 = vmatprep.subr.mxu0 0.0
    %1761 = vmatpush1.msra.mxu0 0.0
    %1762 = vmatprep.subr.mxu0 0.0
    %1763 = vmatpush1.msra.mxu0 0.0
    %1764 = vmatprep.subr.mxu0 0.0
    %1765 = vmatpush1.msra.mxu0 0.0
    %1766 = vmatprep.subr.mxu0 0.0
    %1767 = vmatpush1.msra.mxu0 0.0
    %1768 = vmatprep.subr.mxu0 0.0
    %1769 = vmatpush1.msra.mxu0 0.0
    %1770 = vmatprep.subr.mxu0 0.0
    %1771 = vmatpush1.msra.mxu0 0.0
    %1772 = vmatprep.subr.mxu0 0.0
    %1773 = vmatpush1.msra.mxu0 0.0
    %1774 = vmatprep.subr.mxu0 0.0
    %1775 = vmatpush1.msra.mxu0 0.0
    %1776 = vmatprep.subr.mxu0 0.0
    %1777 = vmatpush1.msra.mxu0 0.0
    %1778 = vmatprep.subr.mxu0 0.0
    %1779 = vmatpush1.msra.mxu0 0.0
    %1780 = vmatprep.subr.mxu0 0.0
    %1781 = vmatpush1.msra.mxu0 0.0
    %1782 = vmatprep.subr.mxu0 0.0
    %1783 = vmatpush1.msra.mxu0 0.0
    %1784 = vmatprep.subr.mxu0 0.0
    %1785 = vmatpush1.msra.mxu0 0.0
    %1786 = vmatprep.subr.mxu0 0.0
    %1787 = vmatpush1.msra.mxu0 0.0
    %1788 = vmatprep.subr.mxu0 0.0
    %1789 = vmatpush1.msra.mxu0 0.0
    %1790 = vmatprep.mubr.f32.mxu0 0.0
    %1791 = vmatmul.mubr.f32.gmra.mrb[0].mxu0 %v1721
    %v1792 = vpop.f32.mrb[0].mxu0
    %v1793 = vadd.f32 0.0, %v1792
    %v1794 = vpop.f32.mrb[0].mxu0
    %1795 = vmatprep.mubr.f32.mxu0 0.0
    %1796 = vmatmul.mubr.f32.gmra.mrb[0].mxu0 %v1724
    %v1797 = vpop.f32.mrb[0].mxu0
    %v1798 = vadd.f32 0.0, %v1797
    %v1799 = vpop.f32.mrb[0].mxu0
    %1800 = vdwg.mxu0
    %1801 = vrot.lane.b32.xlu0 %v292, 64
    %v1802 = vpop.permute.xlu0 %1801
    %1803 = vrot.lane.b32.xlu0 %v297, 64
    %v1804 = vpop.permute.xlu0 %1803
    %v1808 = vsel %vm1015, %v1190, 0
    %v1811 = vsel %vm1015, %v1191, 0
    %1813 = vmatprep.subr.mxu0 0.0
    %1814 = vmatpush1.msra.mxu0 %v1802
    %1815 = vmatprep.subr.mxu0 0.0
    %1816 = vmatpush1.msra.mxu0 %v1804
    %1817 = vmatprep.subr.mxu0 0.0
    %1818 = vmatpush1.msra.mxu0 0.0
    %1819 = vmatprep.subr.mxu0 0.0
    %1820 = vmatpush1.msra.mxu0 0.0
    %1821 = vmatprep.subr.mxu0 0.0
    %1822 = vmatpush1.msra.mxu0 0.0
    %1823 = vmatprep.subr.mxu0 0.0
    %1824 = vmatpush1.msra.mxu0 0.0
    %1825 = vmatprep.subr.mxu0 0.0
    %1826 = vmatpush1.msra.mxu0 0.0
    %1827 = vmatprep.subr.mxu0 0.0
    %1828 = vmatpush1.msra.mxu0 0.0
    %1829 = vmatprep.subr.mxu0 0.0
    %1830 = vmatpush1.msra.mxu0 0.0
    %1831 = vmatprep.subr.mxu0 0.0
    %1832 = vmatpush1.msra.mxu0 0.0
    %1833 = vmatprep.subr.mxu0 0.0
    %1834 = vmatpush1.msra.mxu0 0.0
    %1835 = vmatprep.subr.mxu0 0.0
    %1836 = vmatpush1.msra.mxu0 0.0
    %1837 = vmatprep.subr.mxu0 0.0
    %1838 = vmatpush1.msra.mxu0 0.0
    %1839 = vmatprep.subr.mxu0 0.0
    %1840 = vmatpush1.msra.mxu0 0.0
    %1841 = vmatprep.subr.mxu0 0.0
    %1842 = vmatpush1.msra.mxu0 0.0
    %1843 = vmatprep.subr.mxu0 0.0
    %1844 = vmatpush1.msra.mxu0 0.0
    %1845 = vmatprep.subr.mxu0 0.0
    %1846 = vmatpush1.msra.mxu0 0.0
    %1847 = vmatprep.subr.mxu0 0.0
    %1848 = vmatpush1.msra.mxu0 0.0
    %1849 = vmatprep.subr.mxu0 0.0
    %1850 = vmatpush1.msra.mxu0 0.0
    %1851 = vmatprep.subr.mxu0 0.0
    %1852 = vmatpush1.msra.mxu0 0.0
    %1853 = vmatprep.subr.mxu0 0.0
    %1854 = vmatpush1.msra.mxu0 0.0
    %1855 = vmatprep.subr.mxu0 0.0
    %1856 = vmatpush1.msra.mxu0 0.0
    %1857 = vmatprep.subr.mxu0 0.0
    %1858 = vmatpush1.msra.mxu0 0.0
    %1859 = vmatprep.subr.mxu0 0.0
    %1860 = vmatpush1.msra.mxu0 0.0
    %1861 = vmatprep.subr.mxu0 0.0
    %1862 = vmatpush1.msra.mxu0 0.0
    %1863 = vmatprep.subr.mxu0 0.0
    %1864 = vmatpush1.msra.mxu0 0.0
    %1865 = vmatprep.subr.mxu0 0.0
    %1866 = vmatpush1.msra.mxu0 0.0
    %1867 = vmatprep.subr.mxu0 0.0
    %1868 = vmatpush1.msra.mxu0 0.0
    %1869 = vmatprep.subr.mxu0 0.0
    %1870 = vmatpush1.msra.mxu0 0.0
    %1871 = vmatprep.subr.mxu0 0.0
    %1872 = vmatpush1.msra.mxu0 0.0
    %1873 = vmatprep.subr.mxu0 0.0
    %1874 = vmatpush1.msra.mxu0 0.0
    %1875 = vmatprep.subr.mxu0 0.0
    %1876 = vmatpush1.msra.mxu0 0.0
    %1877 = vmatprep.mubr.f32.mxu0 0.0
    %1878 = vmatmul.mubr.f32.gmra.mrb[0].mxu0 %v1808
    %v1879 = vpop.f32.mrb[0].mxu0
    %v1880 = vadd.f32 0.0, %v1879
    %v1881 = vpop.f32.mrb[0].mxu0
    %1882 = vmatprep.mubr.f32.mxu0 0.0
    %1883 = vmatmul.mubr.f32.gmra.mrb[0].mxu0 %v1811
    %v1884 = vpop.f32.mrb[0].mxu0
    %v1885 = vadd.f32 0.0, %v1884
    %v1886 = vpop.f32.mrb[0].mxu0
    %1887 = vdwg.mxu0
    %s1888 = scalar_lea.vmem [#allocation7], 16
    %v1889 = vld [vmem:[%s1888] sm:$0xff]
    %v1890 = vld [vmem:[%s1888 + $0x8] sm:$0xff]
    %1891 = vrot.lane.b32.xlu0 %v222, 120
    %v1892 = vpop.permute.xlu0 %1891
    %1893 = vrot.lane.b32.xlu0 %v227, 120
    %v1894 = vpop.permute.xlu0 %1893
    %1895 = vrot.lane.b32.xlu0 %v222, 88
    %v1896 = vpop.permute.xlu0 %1895
    %1897 = vrot.lane.b32.xlu0 %v227, 88
    %v1898 = vpop.permute.xlu0 %1897
    %v1899 = vsel %vm308, %v1892, 0
    %v1901 = vsel %vm308, %v1894, 0
    %v1903 = vsel %vm308, %v1896, 0
    %v1905 = vsel %vm308, %v1898, 0
    %1907 = vmatprep.subr.mxu0 0.0
    %1908 = vmatpush1.xpose.msra.mxu0 %v1903
    %1909 = vmatprep.subr.mxu0 0.0
    %1910 = vmatpush1.xpose.msra.mxu0 %v1905
    %1911 = vmatprep.subr.mxu0 0.0
    %1912 = vmatpush1.xpose.msra.mxu0 0.0
    %1913 = vmatprep.subr.mxu0 0.0
    %1914 = vmatpush1.xpose.msra.mxu0 0.0
    %1915 = vmatprep.subr.mxu0 0.0
    %1916 = vmatpush1.xpose.msra.mxu0 0.0
    %1917 = vmatprep.subr.mxu0 0.0
    %1918 = vmatpush1.xpose.msra.mxu0 0.0
    %1919 = vmatprep.subr.mxu0 0.0
    %1920 = vmatpush1.xpose.msra.mxu0 0.0
    %1921 = vmatprep.subr.mxu0 0.0
    %1922 = vmatpush1.xpose.msra.mxu0 0.0
    %1923 = vmatprep.subr.mxu0 0.0
    %1924 = vmatpush1.xpose.msra.mxu0 0.0
    %1925 = vmatprep.subr.mxu0 0.0
    %1926 = vmatpush1.xpose.msra.mxu0 0.0
    %1927 = vmatprep.subr.mxu0 0.0
    %1928 = vmatpush1.xpose.msra.mxu0 0.0
    %1929 = vmatprep.subr.mxu0 0.0
    %1930 = vmatpush1.xpose.msra.mxu0 0.0
    %1931 = vmatprep.subr.mxu0 0.0
    %1932 = vmatpush1.xpose.msra.mxu0 0.0
    %1933 = vmatprep.subr.mxu0 0.0
    %1934 = vmatpush1.xpose.msra.mxu0 0.0
    %1935 = vmatprep.subr.mxu0 0.0
    %1936 = vmatpush1.xpose.msra.mxu0 0.0
    %1937 = vmatprep.subr.mxu0 0.0
    %1938 = vmatpush1.xpose.msra.mxu0 0.0
    %1939 = vmatprep.subr.mxu0 0.0
    %1940 = vmatpush1.xpose.msra.mxu0 0.0
    %1941 = vmatprep.subr.mxu0 0.0
    %1942 = vmatpush1.xpose.msra.mxu0 0.0
    %1943 = vmatprep.subr.mxu0 0.0
    %1944 = vmatpush1.xpose.msra.mxu0 0.0
    %1945 = vmatprep.subr.mxu0 0.0
    %1946 = vmatpush1.xpose.msra.mxu0 0.0
    %1947 = vmatprep.subr.mxu0 0.0
    %1948 = vmatpush1.xpose.msra.mxu0 0.0
    %1949 = vmatprep.subr.mxu0 0.0
    %1950 = vmatpush1.xpose.msra.mxu0 0.0
    %1951 = vmatprep.subr.mxu0 0.0
    %1952 = vmatpush1.xpose.msra.mxu0 0.0
    %1953 = vmatprep.subr.mxu0 0.0
    %1954 = vmatpush1.xpose.msra.mxu0 0.0
    %1955 = vmatprep.subr.mxu0 0.0
    %1956 = vmatpush1.xpose.msra.mxu0 0.0
    %1957 = vmatprep.subr.mxu0 0.0
    %1958 = vmatpush1.xpose.msra.mxu0 0.0
    %1959 = vmatprep.subr.mxu0 0.0
    %1960 = vmatpush1.xpose.msra.mxu0 0.0
    %1961 = vmatprep.subr.mxu0 0.0
    %1962 = vmatpush1.xpose.msra.mxu0 0.0
    %1963 = vmatprep.subr.mxu0 0.0
    %1964 = vmatpush1.xpose.msra.mxu0 0.0
    %1965 = vmatprep.subr.mxu0 0.0
    %1966 = vmatpush1.xpose.msra.mxu0 0.0
    %1967 = vmatprep.subr.mxu0 0.0
    %1968 = vmatpush1.xpose.msra.mxu0 0.0
    %1969 = vmatprep.subr.mxu0 0.0
    %1970 = vmatpush1.xpose.msra.mxu0 0.0
    %1971 = vmatprep.mubr.f32.mxu0 0.0
    %1972 = vmatmul.mubr.f32.gmra.mrb[0].mxu0 %v1899
    %v1973 = vpop.f32.mrb[0].mxu0
    %v1974 = vadd.f32 %v1889, %v1973
    %v1975 = vpop.f32.mrb[0].mxu0
    %1976 = vmatprep.mubr.f32.mxu0 0.0
    %1977 = vmatmul.mubr.f32.gmra.mrb[0].mxu0 %v1901
    %v1978 = vpop.f32.mrb[0].mxu0
    %v1979 = vadd.f32 %v1890, %v1978
    %v1980 = vpop.f32.mrb[0].mxu0
    %1981 = vdwg.mxu0
    %1982 = vrot.lane.b32.xlu0 %v232, 120
    %v1983 = vpop.permute.xlu0 %1982
    %1984 = vrot.lane.b32.xlu0 %v237, 120
    %v1985 = vpop.permute.xlu0 %1984
    %1986 = vrot.lane.b32.xlu0 %v232, 88
    %v1987 = vpop.permute.xlu0 %1986
    %1988 = vrot.lane.b32.xlu0 %v237, 88
    %v1989 = vpop.permute.xlu0 %1988
    %v1990 = vsel %vm308, %v1983, 0
    %v1992 = vsel %vm308, %v1985, 0
    %v1994 = vsel %vm308, %v1987, 0
    %v1996 = vsel %vm308, %v1989, 0
    %1998 = vmatprep.subr.mxu0 0.0
    %1999 = vmatpush1.xpose.msra.mxu0 %v1994
    %2000 = vmatprep.subr.mxu0 0.0
    %2001 = vmatpush1.xpose.msra.mxu0 %v1996
    %2002 = vmatprep.subr.mxu0 0.0
    %2003 = vmatpush1.xpose.msra.mxu0 0.0
    %2004 = vmatprep.subr.mxu0 0.0
    %2005 = vmatpush1.xpose.msra.mxu0 0.0
    %2006 = vmatprep.subr.mxu0 0.0
    %2007 = vmatpush1.xpose.msra.mxu0 0.0
    %2008 = vmatprep.subr.mxu0 0.0
    %2009 = vmatpush1.xpose.msra.mxu0 0.0
    %2010 = vmatprep.subr.mxu0 0.0
    %2011 = vmatpush1.xpose.msra.mxu0 0.0
    %2012 = vmatprep.subr.mxu0 0.0
    %2013 = vmatpush1.xpose.msra.mxu0 0.0
    %2014 = vmatprep.subr.mxu0 0.0
    %2015 = vmatpush1.xpose.msra.mxu0 0.0
    %2016 = vmatprep.subr.mxu0 0.0
    %2017 = vmatpush1.xpose.msra.mxu0 0.0
    %2018 = vmatprep.subr.mxu0 0.0
    %2019 = vmatpush1.xpose.msra.mxu0 0.0
    %2020 = vmatprep.subr.mxu0 0.0
    %2021 = vmatpush1.xpose.msra.mxu0 0.0
    %2022 = vmatprep.subr.mxu0 0.0
    %2023 = vmatpush1.xpose.msra.mxu0 0.0
    %2024 = vmatprep.subr.mxu0 0.0
    %2025 = vmatpush1.xpose.msra.mxu0 0.0
    %2026 = vmatprep.subr.mxu0 0.0
    %2027 = vmatpush1.xpose.msra.mxu0 0.0
    %2028 = vmatprep.subr.mxu0 0.0
    %2029 = vmatpush1.xpose.msra.mxu0 0.0
    %2030 = vmatprep.subr.mxu0 0.0
    %2031 = vmatpush1.xpose.msra.mxu0 0.0
    %2032 = vmatprep.subr.mxu0 0.0
    %2033 = vmatpush1.xpose.msra.mxu0 0.0
    %2034 = vmatprep.subr.mxu0 0.0
    %2035 = vmatpush1.xpose.msra.mxu0 0.0
    %2036 = vmatprep.subr.mxu0 0.0
    %2037 = vmatpush1.xpose.msra.mxu0 0.0
    %2038 = vmatprep.subr.mxu0 0.0
    %2039 = vmatpush1.xpose.msra.mxu0 0.0
    %2040 = vmatprep.subr.mxu0 0.0
    %2041 = vmatpush1.xpose.msra.mxu0 0.0
    %2042 = vmatprep.subr.mxu0 0.0
    %2043 = vmatpush1.xpose.msra.mxu0 0.0
    %2044 = vmatprep.subr.mxu0 0.0
    %2045 = vmatpush1.xpose.msra.mxu0 0.0
    %2046 = vmatprep.subr.mxu0 0.0
    %2047 = vmatpush1.xpose.msra.mxu0 0.0
    %2048 = vmatprep.subr.mxu0 0.0
    %2049 = vmatpush1.xpose.msra.mxu0 0.0
    %2050 = vmatprep.subr.mxu0 0.0
    %2051 = vmatpush1.xpose.msra.mxu0 0.0
    %2052 = vmatprep.subr.mxu0 0.0
    %2053 = vmatpush1.xpose.msra.mxu0 0.0
    %2054 = vmatprep.subr.mxu0 0.0
    %2055 = vmatpush1.xpose.msra.mxu0 0.0
    %2056 = vmatprep.subr.mxu0 0.0
    %2057 = vmatpush1.xpose.msra.mxu0 0.0
    %2058 = vmatprep.subr.mxu0 0.0
    %2059 = vmatpush1.xpose.msra.mxu0 0.0
    %2060 = vmatprep.subr.mxu0 0.0
    %2061 = vmatpush1.xpose.msra.mxu0 0.0
    %2062 = vmatprep.mubr.f32.mxu0 0.0
    %2063 = vmatmul.mubr.f32.gmra.mrb[0].mxu0 %v1990
    %v2064 = vpop.f32.mrb[0].mxu0
    %v2065 = vadd.f32 %v1889, %v2064
    %v2066 = vpop.f32.mrb[0].mxu0
    %2067 = vmatprep.mubr.f32.mxu0 0.0
    %2068 = vmatmul.mubr.f32.gmra.mrb[0].mxu0 %v1992
    %v2069 = vpop.f32.mrb[0].mxu0
    %v2070 = vadd.f32 %v1890, %v2069
    %v2071 = vpop.f32.mrb[0].mxu0
    %2072 = vdwg.mxu0
    %2073 = vrot.lane.b32.xlu0 %v242, 120
    %v2074 = vpop.permute.xlu0 %2073
    %2075 = vrot.lane.b32.xlu0 %v247, 120
    %v2076 = vpop.permute.xlu0 %2075
    %2077 = vrot.lane.b32.xlu0 %v242, 88
    %v2078 = vpop.permute.xlu0 %2077
    %2079 = vrot.lane.b32.xlu0 %v247, 88
    %v2080 = vpop.permute.xlu0 %2079
    %v2081 = vsel %vm308, %v2074, 0
    %v2083 = vsel %vm308, %v2076, 0
    %v2085 = vsel %vm308, %v2078, 0
    %v2087 = vsel %vm308, %v2080, 0
    %2089 = vmatprep.subr.mxu0 0.0
    %2090 = vmatpush1.xpose.msra.mxu0 %v2085
    %2091 = vmatprep.subr.mxu0 0.0
    %2092 = vmatpush1.xpose.msra.mxu0 %v2087
    %2093 = vmatprep.subr.mxu0 0.0
    %2094 = vmatpush1.xpose.msra.mxu0 0.0
    %2095 = vmatprep.subr.mxu0 0.0
    %2096 = vmatpush1.xpose.msra.mxu0 0.0
    %2097 = vmatprep.subr.mxu0 0.0
    %2098 = vmatpush1.xpose.msra.mxu0 0.0
    %2099 = vmatprep.subr.mxu0 0.0
    %2100 = vmatpush1.xpose.msra.mxu0 0.0
    %2101 = vmatprep.subr.mxu0 0.0
    %2102 = vmatpush1.xpose.msra.mxu0 0.0
    %2103 = vmatprep.subr.mxu0 0.0
    %2104 = vmatpush1.xpose.msra.mxu0 0.0
    %2105 = vmatprep.subr.mxu0 0.0
    %2106 = vmatpush1.xpose.msra.mxu0 0.0
    %2107 = vmatprep.subr.mxu0 0.0
    %2108 = vmatpush1.xpose.msra.mxu0 0.0
    %2109 = vmatprep.subr.mxu0 0.0
    %2110 = vmatpush1.xpose.msra.mxu0 0.0
    %2111 = vmatprep.subr.mxu0 0.0
    %2112 = vmatpush1.xpose.msra.mxu0 0.0
    %2113 = vmatprep.subr.mxu0 0.0
    %2114 = vmatpush1.xpose.msra.mxu0 0.0
    %2115 = vmatprep.subr.mxu0 0.0
    %2116 = vmatpush1.xpose.msra.mxu0 0.0
    %2117 = vmatprep.subr.mxu0 0.0
    %2118 = vmatpush1.xpose.msra.mxu0 0.0
    %2119 = vmatprep.subr.mxu0 0.0
    %2120 = vmatpush1.xpose.msra.mxu0 0.0
    %2121 = vmatprep.subr.mxu0 0.0
    %2122 = vmatpush1.xpose.msra.mxu0 0.0
    %2123 = vmatprep.subr.mxu0 0.0
    %2124 = vmatpush1.xpose.msra.mxu0 0.0
    %2125 = vmatprep.subr.mxu0 0.0
    %2126 = vmatpush1.xpose.msra.mxu0 0.0
    %2127 = vmatprep.subr.mxu0 0.0
    %2128 = vmatpush1.xpose.msra.mxu0 0.0
    %2129 = vmatprep.subr.mxu0 0.0
    %2130 = vmatpush1.xpose.msra.mxu0 0.0
    %2131 = vmatprep.subr.mxu0 0.0
    %2132 = vmatpush1.xpose.msra.mxu0 0.0
    %2133 = vmatprep.subr.mxu0 0.0
    %2134 = vmatpush1.xpose.msra.mxu0 0.0
    %2135 = vmatprep.subr.mxu0 0.0
    %2136 = vmatpush1.xpose.msra.mxu0 0.0
    %2137 = vmatprep.subr.mxu0 0.0
    %2138 = vmatpush1.xpose.msra.mxu0 0.0
    %2139 = vmatprep.subr.mxu0 0.0
    %2140 = vmatpush1.xpose.msra.mxu0 0.0
    %2141 = vmatprep.subr.mxu0 0.0
    %2142 = vmatpush1.xpose.msra.mxu0 0.0
    %2143 = vmatprep.subr.mxu0 0.0
    %2144 = vmatpush1.xpose.msra.mxu0 0.0
    %2145 = vmatprep.subr.mxu0 0.0
    %2146 = vmatpush1.xpose.msra.mxu0 0.0
    %2147 = vmatprep.subr.mxu0 0.0
    %2148 = vmatpush1.xpose.msra.mxu0 0.0
    %2149 = vmatprep.subr.mxu0 0.0
    %2150 = vmatpush1.xpose.msra.mxu0 0.0
    %2151 = vmatprep.subr.mxu0 0.0
    %2152 = vmatpush1.xpose.msra.mxu0 0.0
    %2153 = vmatprep.mubr.f32.mxu0 0.0
    %2154 = vmatmul.mubr.f32.gmra.mrb[0].mxu0 %v2081
    %v2155 = vpop.f32.mrb[0].mxu0
    %v2156 = vadd.f32 %v1889, %v2155
    %v2157 = vpop.f32.mrb[0].mxu0
    %2158 = vmatprep.mubr.f32.mxu0 0.0
    %2159 = vmatmul.mubr.f32.gmra.mrb[0].mxu0 %v2083
    %v2160 = vpop.f32.mrb[0].mxu0
    %v2161 = vadd.f32 %v1890, %v2160
    %v2162 = vpop.f32.mrb[0].mxu0
    %2163 = vdwg.mxu0
    %2164 = vrot.lane.b32.xlu0 %v252, 120
    %v2165 = vpop.permute.xlu0 %2164
    %2166 = vrot.lane.b32.xlu0 %v257, 120
    %v2167 = vpop.permute.xlu0 %2166
    %2168 = vrot.lane.b32.xlu0 %v252, 88
    %v2169 = vpop.permute.xlu0 %2168
    %2170 = vrot.lane.b32.xlu0 %v257, 88
    %v2171 = vpop.permute.xlu0 %2170
    %v2172 = vsel %vm308, %v2165, 0
    %v2174 = vsel %vm308, %v2167, 0
    %v2176 = vsel %vm308, %v2169, 0
    %v2178 = vsel %vm308, %v2171, 0
    %2180 = vmatprep.subr.mxu0 0.0
    %2181 = vmatpush1.xpose.msra.mxu0 %v2176
    %2182 = vmatprep.subr.mxu0 0.0
    %2183 = vmatpush1.xpose.msra.mxu0 %v2178
    %2184 = vmatprep.subr.mxu0 0.0
    %2185 = vmatpush1.xpose.msra.mxu0 0.0
    %2186 = vmatprep.subr.mxu0 0.0
    %2187 = vmatpush1.xpose.msra.mxu0 0.0
    %2188 = vmatprep.subr.mxu0 0.0
    %2189 = vmatpush1.xpose.msra.mxu0 0.0
    %2190 = vmatprep.subr.mxu0 0.0
    %2191 = vmatpush1.xpose.msra.mxu0 0.0
    %2192 = vmatprep.subr.mxu0 0.0
    %2193 = vmatpush1.xpose.msra.mxu0 0.0
    %2194 = vmatprep.subr.mxu0 0.0
    %2195 = vmatpush1.xpose.msra.mxu0 0.0
    %2196 = vmatprep.subr.mxu0 0.0
    %2197 = vmatpush1.xpose.msra.mxu0 0.0
    %2198 = vmatprep.subr.mxu0 0.0
    %2199 = vmatpush1.xpose.msra.mxu0 0.0
    %2200 = vmatprep.subr.mxu0 0.0
    %2201 = vmatpush1.xpose.msra.mxu0 0.0
    %2202 = vmatprep.subr.mxu0 0.0
    %2203 = vmatpush1.xpose.msra.mxu0 0.0
    %2204 = vmatprep.subr.mxu0 0.0
    %2205 = vmatpush1.xpose.msra.mxu0 0.0
    %2206 = vmatprep.subr.mxu0 0.0
    %2207 = vmatpush1.xpose.msra.mxu0 0.0
    %2208 = vmatprep.subr.mxu0 0.0
    %2209 = vmatpush1.xpose.msra.mxu0 0.0
    %2210 = vmatprep.subr.mxu0 0.0
    %2211 = vmatpush1.xpose.msra.mxu0 0.0
    %2212 = vmatprep.subr.mxu0 0.0
    %2213 = vmatpush1.xpose.msra.mxu0 0.0
    %2214 = vmatprep.subr.mxu0 0.0
    %2215 = vmatpush1.xpose.msra.mxu0 0.0
    %2216 = vmatprep.subr.mxu0 0.0
    %2217 = vmatpush1.xpose.msra.mxu0 0.0
    %2218 = vmatprep.subr.mxu0 0.0
    %2219 = vmatpush1.xpose.msra.mxu0 0.0
    %2220 = vmatprep.subr.mxu0 0.0
    %2221 = vmatpush1.xpose.msra.mxu0 0.0
    %2222 = vmatprep.subr.mxu0 0.0
    %2223 = vmatpush1.xpose.msra.mxu0 0.0
    %2224 = vmatprep.subr.mxu0 0.0
    %2225 = vmatpush1.xpose.msra.mxu0 0.0
    %2226 = vmatprep.subr.mxu0 0.0
    %2227 = vmatpush1.xpose.msra.mxu0 0.0
    %2228 = vmatprep.subr.mxu0 0.0
    %2229 = vmatpush1.xpose.msra.mxu0 0.0
    %2230 = vmatprep.subr.mxu0 0.0
    %2231 = vmatpush1.xpose.msra.mxu0 0.0
    %2232 = vmatprep.subr.mxu0 0.0
    %2233 = vmatpush1.xpose.msra.mxu0 0.0
    %2234 = vmatprep.subr.mxu0 0.0
    %2235 = vmatpush1.xpose.msra.mxu0 0.0
    %2236 = vmatprep.subr.mxu0 0.0
    %2237 = vmatpush1.xpose.msra.mxu0 0.0
    %2238 = vmatprep.subr.mxu0 0.0
    %2239 = vmatpush1.xpose.msra.mxu0 0.0
    %2240 = vmatprep.subr.mxu0 0.0
    %2241 = vmatpush1.xpose.msra.mxu0 0.0
    %2242 = vmatprep.subr.mxu0 0.0
    %2243 = vmatpush1.xpose.msra.mxu0 0.0
    %2244 = vmatprep.mubr.f32.mxu0 0.0
    %2245 = vmatmul.mubr.f32.gmra.mrb[0].mxu0 %v2172
    %v2246 = vpop.f32.mrb[0].mxu0
    %v2247 = vadd.f32 %v1889, %v2246
    %v2248 = vpop.f32.mrb[0].mxu0
    %2249 = vmatprep.mubr.f32.mxu0 0.0
    %2250 = vmatmul.mubr.f32.gmra.mrb[0].mxu0 %v2174
    %v2251 = vpop.f32.mrb[0].mxu0
    %v2252 = vadd.f32 %v1890, %v2251
    %v2253 = vpop.f32.mrb[0].mxu0
    %2254 = vdwg.mxu0
    %2255 = vrot.lane.b32.xlu0 %v262, 120
    %v2256 = vpop.permute.xlu0 %2255
    %2257 = vrot.lane.b32.xlu0 %v267, 120
    %v2258 = vpop.permute.xlu0 %2257
    %2259 = vrot.lane.b32.xlu0 %v262, 88
    %v2260 = vpop.permute.xlu0 %2259
    %2261 = vrot.lane.b32.xlu0 %v267, 88
    %v2262 = vpop.permute.xlu0 %2261
    %v2263 = vsel %vm308, %v2256, 0
    %v2265 = vsel %vm308, %v2258, 0
    %v2267 = vsel %vm308, %v2260, 0
    %v2269 = vsel %vm308, %v2262, 0
    %2271 = vmatprep.subr.mxu0 0.0
    %2272 = vmatpush1.xpose.msra.mxu0 %v2267
    %2273 = vmatprep.subr.mxu0 0.0
    %2274 = vmatpush1.xpose.msra.mxu0 %v2269
    %2275 = vmatprep.subr.mxu0 0.0
    %2276 = vmatpush1.xpose.msra.mxu0 0.0
    %2277 = vmatprep.subr.mxu0 0.0
    %2278 = vmatpush1.xpose.msra.mxu0 0.0
    %2279 = vmatprep.subr.mxu0 0.0
    %2280 = vmatpush1.xpose.msra.mxu0 0.0
    %2281 = vmatprep.subr.mxu0 0.0
    %2282 = vmatpush1.xpose.msra.mxu0 0.0
    %2283 = vmatprep.subr.mxu0 0.0
    %2284 = vmatpush1.xpose.msra.mxu0 0.0
    %2285 = vmatprep.subr.mxu0 0.0
    %2286 = vmatpush1.xpose.msra.mxu0 0.0
    %2287 = vmatprep.subr.mxu0 0.0
    %2288 = vmatpush1.xpose.msra.mxu0 0.0
    %2289 = vmatprep.subr.mxu0 0.0
    %2290 = vmatpush1.xpose.msra.mxu0 0.0
    %2291 = vmatprep.subr.mxu0 0.0
    %2292 = vmatpush1.xpose.msra.mxu0 0.0
    %2293 = vmatprep.subr.mxu0 0.0
    %2294 = vmatpush1.xpose.msra.mxu0 0.0
    %2295 = vmatprep.subr.mxu0 0.0
    %2296 = vmatpush1.xpose.msra.mxu0 0.0
    %2297 = vmatprep.subr.mxu0 0.0
    %2298 = vmatpush1.xpose.msra.mxu0 0.0
    %2299 = vmatprep.subr.mxu0 0.0
    %2300 = vmatpush1.xpose.msra.mxu0 0.0
    %2301 = vmatprep.subr.mxu0 0.0
    %2302 = vmatpush1.xpose.msra.mxu0 0.0
    %2303 = vmatprep.subr.mxu0 0.0
    %2304 = vmatpush1.xpose.msra.mxu0 0.0
    %2305 = vmatprep.subr.mxu0 0.0
    %2306 = vmatpush1.xpose.msra.mxu0 0.0
    %2307 = vmatprep.subr.mxu0 0.0
    %2308 = vmatpush1.xpose.msra.mxu0 0.0
    %2309 = vmatprep.subr.mxu0 0.0
    %2310 = vmatpush1.xpose.msra.mxu0 0.0
    %2311 = vmatprep.subr.mxu0 0.0
    %2312 = vmatpush1.xpose.msra.mxu0 0.0
    %2313 = vmatprep.subr.mxu0 0.0
    %2314 = vmatpush1.xpose.msra.mxu0 0.0
    %2315 = vmatprep.subr.mxu0 0.0
    %2316 = vmatpush1.xpose.msra.mxu0 0.0
    %2317 = vmatprep.subr.mxu0 0.0
    %2318 = vmatpush1.xpose.msra.mxu0 0.0
    %2319 = vmatprep.subr.mxu0 0.0
    %2320 = vmatpush1.xpose.msra.mxu0 0.0
    %2321 = vmatprep.subr.mxu0 0.0
    %2322 = vmatpush1.xpose.msra.mxu0 0.0
    %2323 = vmatprep.subr.mxu0 0.0
    %2324 = vmatpush1.xpose.msra.mxu0 0.0
    %2325 = vmatprep.subr.mxu0 0.0
    %2326 = vmatpush1.xpose.msra.mxu0 0.0
    %2327 = vmatprep.subr.mxu0 0.0
    %2328 = vmatpush1.xpose.msra.mxu0 0.0
    %2329 = vmatprep.subr.mxu0 0.0
    %2330 = vmatpush1.xpose.msra.mxu0 0.0
    %2331 = vmatprep.subr.mxu0 0.0
    %2332 = vmatpush1.xpose.msra.mxu0 0.0
    %2333 = vmatprep.subr.mxu0 0.0
    %2334 = vmatpush1.xpose.msra.mxu0 0.0
    %2335 = vmatprep.mubr.f32.mxu0 0.0
    %2336 = vmatmul.mubr.f32.gmra.mrb[0].mxu0 %v2263
    %v2337 = vpop.f32.mrb[0].mxu0
    %v2338 = vadd.f32 %v1889, %v2337
    %v2339 = vpop.f32.mrb[0].mxu0
    %2340 = vmatprep.mubr.f32.mxu0 0.0
    %2341 = vmatmul.mubr.f32.gmra.mrb[0].mxu0 %v2265
    %v2342 = vpop.f32.mrb[0].mxu0
    %v2343 = vadd.f32 %v1890, %v2342
    %v2344 = vpop.f32.mrb[0].mxu0
    %2345 = vdwg.mxu0
    %2346 = vrot.lane.b32.xlu0 %v272, 120
    %v2347 = vpop.permute.xlu0 %2346
    %2348 = vrot.lane.b32.xlu0 %v277, 120
    %v2349 = vpop.permute.xlu0 %2348
    %2350 = vrot.lane.b32.xlu0 %v272, 88
    %v2351 = vpop.permute.xlu0 %2350
    %2352 = vrot.lane.b32.xlu0 %v277, 88
    %v2353 = vpop.permute.xlu0 %2352
    %v2354 = vsel %vm308, %v2347, 0
    %v2356 = vsel %vm308, %v2349, 0
    %v2358 = vsel %vm308, %v2351, 0
    %v2360 = vsel %vm308, %v2353, 0
    %2362 = vmatprep.subr.mxu0 0.0
    %2363 = vmatpush1.xpose.msra.mxu0 %v2358
    %2364 = vmatprep.subr.mxu0 0.0
    %2365 = vmatpush1.xpose.msra.mxu0 %v2360
    %2366 = vmatprep.subr.mxu0 0.0
    %2367 = vmatpush1.xpose.msra.mxu0 0.0
    %2368 = vmatprep.subr.mxu0 0.0
    %2369 = vmatpush1.xpose.msra.mxu0 0.0
    %2370 = vmatprep.subr.mxu0 0.0
    %2371 = vmatpush1.xpose.msra.mxu0 0.0
    %2372 = vmatprep.subr.mxu0 0.0
    %2373 = vmatpush1.xpose.msra.mxu0 0.0
    %2374 = vmatprep.subr.mxu0 0.0
    %2375 = vmatpush1.xpose.msra.mxu0 0.0
    %2376 = vmatprep.subr.mxu0 0.0
    %2377 = vmatpush1.xpose.msra.mxu0 0.0
    %2378 = vmatprep.subr.mxu0 0.0
    %2379 = vmatpush1.xpose.msra.mxu0 0.0
    %2380 = vmatprep.subr.mxu0 0.0
    %2381 = vmatpush1.xpose.msra.mxu0 0.0
    %2382 = vmatprep.subr.mxu0 0.0
    %2383 = vmatpush1.xpose.msra.mxu0 0.0
    %2384 = vmatprep.subr.mxu0 0.0
    %2385 = vmatpush1.xpose.msra.mxu0 0.0
    %2386 = vmatprep.subr.mxu0 0.0
    %2387 = vmatpush1.xpose.msra.mxu0 0.0
    %2388 = vmatprep.subr.mxu0 0.0
    %2389 = vmatpush1.xpose.msra.mxu0 0.0
    %2390 = vmatprep.subr.mxu0 0.0
    %2391 = vmatpush1.xpose.msra.mxu0 0.0
    %2392 = vmatprep.subr.mxu0 0.0
    %2393 = vmatpush1.xpose.msra.mxu0 0.0
    %2394 = vmatprep.subr.mxu0 0.0
    %2395 = vmatpush1.xpose.msra.mxu0 0.0
    %2396 = vmatprep.subr.mxu0 0.0
    %2397 = vmatpush1.xpose.msra.mxu0 0.0
    %2398 = vmatprep.subr.mxu0 0.0
    %2399 = vmatpush1.xpose.msra.mxu0 0.0
    %2400 = vmatprep.subr.mxu0 0.0
    %2401 = vmatpush1.xpose.msra.mxu0 0.0
    %2402 = vmatprep.subr.mxu0 0.0
    %2403 = vmatpush1.xpose.msra.mxu0 0.0
    %2404 = vmatprep.subr.mxu0 0.0
    %2405 = vmatpush1.xpose.msra.mxu0 0.0
    %2406 = vmatprep.subr.mxu0 0.0
    %2407 = vmatpush1.xpose.msra.mxu0 0.0
    %2408 = vmatprep.subr.mxu0 0.0
    %2409 = vmatpush1.xpose.msra.mxu0 0.0
    %2410 = vmatprep.subr.mxu0 0.0
    %2411 = vmatpush1.xpose.msra.mxu0 0.0
    %2412 = vmatprep.subr.mxu0 0.0
    %2413 = vmatpush1.xpose.msra.mxu0 0.0
    %2414 = vmatprep.subr.mxu0 0.0
    %2415 = vmatpush1.xpose.msra.mxu0 0.0
    %2416 = vmatprep.subr.mxu0 0.0
    %2417 = vmatpush1.xpose.msra.mxu0 0.0
    %2418 = vmatprep.subr.mxu0 0.0
    %2419 = vmatpush1.xpose.msra.mxu0 0.0
    %2420 = vmatprep.subr.mxu0 0.0
    %2421 = vmatpush1.xpose.msra.mxu0 0.0
    %2422 = vmatprep.subr.mxu0 0.0
    %2423 = vmatpush1.xpose.msra.mxu0 0.0
    %2424 = vmatprep.subr.mxu0 0.0
    %2425 = vmatpush1.xpose.msra.mxu0 0.0
    %2426 = vmatprep.mubr.f32.mxu0 0.0
    %2427 = vmatmul.mubr.f32.gmra.mrb[0].mxu0 %v2354
    %v2428 = vpop.f32.mrb[0].mxu0
    %v2429 = vadd.f32 %v1889, %v2428
    %v2430 = vpop.f32.mrb[0].mxu0
    %2431 = vmatprep.mubr.f32.mxu0 0.0
    %2432 = vmatmul.mubr.f32.gmra.mrb[0].mxu0 %v2356
    %v2433 = vpop.f32.mrb[0].mxu0
    %v2434 = vadd.f32 %v1890, %v2433
    %v2435 = vpop.f32.mrb[0].mxu0
    %2436 = vdwg.mxu0
    %2437 = vrot.lane.b32.xlu0 %v282, 120
    %v2438 = vpop.permute.xlu0 %2437
    %2439 = vrot.lane.b32.xlu0 %v287, 120
    %v2440 = vpop.permute.xlu0 %2439
    %2441 = vrot.lane.b32.xlu0 %v282, 88
    %v2442 = vpop.permute.xlu0 %2441
    %2443 = vrot.lane.b32.xlu0 %v287, 88
    %v2444 = vpop.permute.xlu0 %2443
    %v2445 = vsel %vm308, %v2438, 0
    %v2447 = vsel %vm308, %v2440, 0
    %v2449 = vsel %vm308, %v2442, 0
    %v2451 = vsel %vm308, %v2444, 0
    %2453 = vmatprep.subr.mxu0 0.0
    %2454 = vmatpush1.xpose.msra.mxu0 %v2449
    %2455 = vmatprep.subr.mxu0 0.0
    %2456 = vmatpush1.xpose.msra.mxu0 %v2451
    %2457 = vmatprep.subr.mxu0 0.0
    %2458 = vmatpush1.xpose.msra.mxu0 0.0
    %2459 = vmatprep.subr.mxu0 0.0
    %2460 = vmatpush1.xpose.msra.mxu0 0.0
    %2461 = vmatprep.subr.mxu0 0.0
    %2462 = vmatpush1.xpose.msra.mxu0 0.0
    %2463 = vmatprep.subr.mxu0 0.0
    %2464 = vmatpush1.xpose.msra.mxu0 0.0
    %2465 = vmatprep.subr.mxu0 0.0
    %2466 = vmatpush1.xpose.msra.mxu0 0.0
    %2467 = vmatprep.subr.mxu0 0.0
    %2468 = vmatpush1.xpose.msra.mxu0 0.0
    %2469 = vmatprep.subr.mxu0 0.0
    %2470 = vmatpush1.xpose.msra.mxu0 0.0
    %2471 = vmatprep.subr.mxu0 0.0
    %2472 = vmatpush1.xpose.msra.mxu0 0.0
    %2473 = vmatprep.subr.mxu0 0.0
    %2474 = vmatpush1.xpose.msra.mxu0 0.0
    %2475 = vmatprep.subr.mxu0 0.0
    %2476 = vmatpush1.xpose.msra.mxu0 0.0
    %2477 = vmatprep.subr.mxu0 0.0
    %2478 = vmatpush1.xpose.msra.mxu0 0.0
    %2479 = vmatprep.subr.mxu0 0.0
    %2480 = vmatpush1.xpose.msra.mxu0 0.0
    %2481 = vmatprep.subr.mxu0 0.0
    %2482 = vmatpush1.xpose.msra.mxu0 0.0
    %2483 = vmatprep.subr.mxu0 0.0
    %2484 = vmatpush1.xpose.msra.mxu0 0.0
    %2485 = vmatprep.subr.mxu0 0.0
    %2486 = vmatpush1.xpose.msra.mxu0 0.0
    %2487 = vmatprep.subr.mxu0 0.0
    %2488 = vmatpush1.xpose.msra.mxu0 0.0
    %2489 = vmatprep.subr.mxu0 0.0
    %2490 = vmatpush1.xpose.msra.mxu0 0.0
    %2491 = vmatprep.subr.mxu0 0.0
    %2492 = vmatpush1.xpose.msra.mxu0 0.0
    %2493 = vmatprep.subr.mxu0 0.0
    %2494 = vmatpush1.xpose.msra.mxu0 0.0
    %2495 = vmatprep.subr.mxu0 0.0
    %2496 = vmatpush1.xpose.msra.mxu0 0.0
    %2497 = vmatprep.subr.mxu0 0.0
    %2498 = vmatpush1.xpose.msra.mxu0 0.0
    %2499 = vmatprep.subr.mxu0 0.0
    %2500 = vmatpush1.xpose.msra.mxu0 0.0
    %2501 = vmatprep.subr.mxu0 0.0
    %2502 = vmatpush1.xpose.msra.mxu0 0.0
    %2503 = vmatprep.subr.mxu0 0.0
    %2504 = vmatpush1.xpose.msra.mxu0 0.0
    %2505 = vmatprep.subr.mxu0 0.0
    %2506 = vmatpush1.xpose.msra.mxu0 0.0
    %2507 = vmatprep.subr.mxu0 0.0
    %2508 = vmatpush1.xpose.msra.mxu0 0.0
    %2509 = vmatprep.subr.mxu0 0.0
    %2510 = vmatpush1.xpose.msra.mxu0 0.0
    %2511 = vmatprep.subr.mxu0 0.0
    %2512 = vmatpush1.xpose.msra.mxu0 0.0
    %2513 = vmatprep.subr.mxu0 0.0
    %2514 = vmatpush1.xpose.msra.mxu0 0.0
    %2515 = vmatprep.subr.mxu0 0.0
    %2516 = vmatpush1.xpose.msra.mxu0 0.0
    %2517 = vmatprep.mubr.f32.mxu0 0.0
    %2518 = vmatmul.mubr.f32.gmra.mrb[0].mxu0 %v2445
    %v2519 = vpop.f32.mrb[0].mxu0
    %v2520 = vadd.f32 %v1889, %v2519
    %v2521 = vpop.f32.mrb[0].mxu0
    %2522 = vmatprep.mubr.f32.mxu0 0.0
    %2523 = vmatmul.mubr.f32.gmra.mrb[0].mxu0 %v2447
    %v2524 = vpop.f32.mrb[0].mxu0
    %v2525 = vadd.f32 %v1890, %v2524
    %v2526 = vpop.f32.mrb[0].mxu0
    %2527 = vdwg.mxu0
    %2528 = vrot.lane.b32.xlu0 %v292, 120
    %v2529 = vpop.permute.xlu0 %2528
    %2530 = vrot.lane.b32.xlu0 %v297, 120
    %v2531 = vpop.permute.xlu0 %2530
    %2532 = vrot.lane.b32.xlu0 %v292, 88
    %v2533 = vpop.permute.xlu0 %2532
    %2534 = vrot.lane.b32.xlu0 %v297, 88
    %v2535 = vpop.permute.xlu0 %2534
    %v2536 = vsel %vm308, %v2529, 0
    %v2538 = vsel %vm308, %v2531, 0
    %v2540 = vsel %vm308, %v2533, 0
    %v2542 = vsel %vm308, %v2535, 0
    %2544 = vmatprep.subr.mxu0 0.0
    %2545 = vmatpush1.xpose.msra.mxu0 %v2540
    %2546 = vmatprep.subr.mxu0 0.0
    %2547 = vmatpush1.xpose.msra.mxu0 %v2542
    %2548 = vmatprep.subr.mxu0 0.0
    %2549 = vmatpush1.xpose.msra.mxu0 0.0
    %2550 = vmatprep.subr.mxu0 0.0
    %2551 = vmatpush1.xpose.msra.mxu0 0.0
    %2552 = vmatprep.subr.mxu0 0.0
    %2553 = vmatpush1.xpose.msra.mxu0 0.0
    %2554 = vmatprep.subr.mxu0 0.0
    %2555 = vmatpush1.xpose.msra.mxu0 0.0
    %2556 = vmatprep.subr.mxu0 0.0
    %2557 = vmatpush1.xpose.msra.mxu0 0.0
    %2558 = vmatprep.subr.mxu0 0.0
    %2559 = vmatpush1.xpose.msra.mxu0 0.0
    %2560 = vmatprep.subr.mxu0 0.0
    %2561 = vmatpush1.xpose.msra.mxu0 0.0
    %2562 = vmatprep.subr.mxu0 0.0
    %2563 = vmatpush1.xpose.msra.mxu0 0.0
    %2564 = vmatprep.subr.mxu0 0.0
    %2565 = vmatpush1.xpose.msra.mxu0 0.0
    %2566 = vmatprep.subr.mxu0 0.0
    %2567 = vmatpush1.xpose.msra.mxu0 0.0
    %2568 = vmatprep.subr.mxu0 0.0
    %2569 = vmatpush1.xpose.msra.mxu0 0.0
    %2570 = vmatprep.subr.mxu0 0.0
    %2571 = vmatpush1.xpose.msra.mxu0 0.0
    %2572 = vmatprep.subr.mxu0 0.0
    %2573 = vmatpush1.xpose.msra.mxu0 0.0
    %2574 = vmatprep.subr.mxu0 0.0
    %2575 = vmatpush1.xpose.msra.mxu0 0.0
    %2576 = vmatprep.subr.mxu0 0.0
    %2577 = vmatpush1.xpose.msra.mxu0 0.0
    %2578 = vmatprep.subr.mxu0 0.0
    %2579 = vmatpush1.xpose.msra.mxu0 0.0
    %2580 = vmatprep.subr.mxu0 0.0
    %2581 = vmatpush1.xpose.msra.mxu0 0.0
    %2582 = vmatprep.subr.mxu0 0.0
    %2583 = vmatpush1.xpose.msra.mxu0 0.0
    %2584 = vmatprep.subr.mxu0 0.0
    %2585 = vmatpush1.xpose.msra.mxu0 0.0
    %2586 = vmatprep.subr.mxu0 0.0
    %2587 = vmatpush1.xpose.msra.mxu0 0.0
    %2588 = vmatprep.subr.mxu0 0.0
    %2589 = vmatpush1.xpose.msra.mxu0 0.0
    %2590 = vmatprep.subr.mxu0 0.0
    %2591 = vmatpush1.xpose.msra.mxu0 0.0
    %2592 = vmatprep.subr.mxu0 0.0
    %2593 = vmatpush1.xpose.msra.mxu0 0.0
    %2594 = vmatprep.subr.mxu0 0.0
    %2595 = vmatpush1.xpose.msra.mxu0 0.0
    %2596 = vmatprep.subr.mxu0 0.0
    %2597 = vmatpush1.xpose.msra.mxu0 0.0
    %2598 = vmatprep.subr.mxu0 0.0
    %2599 = vmatpush1.xpose.msra.mxu0 0.0
    %2600 = vmatprep.subr.mxu0 0.0
    %2601 = vmatpush1.xpose.msra.mxu0 0.0
    %2602 = vmatprep.subr.mxu0 0.0
    %2603 = vmatpush1.xpose.msra.mxu0 0.0
    %2604 = vmatprep.subr.mxu0 0.0
    %2605 = vmatpush1.xpose.msra.mxu0 0.0
    %2606 = vmatprep.subr.mxu0 0.0
    %2607 = vmatpush1.xpose.msra.mxu0 0.0
    %2608 = vmatprep.mubr.f32.mxu0 0.0
    %2609 = vmatmul.mubr.f32.gmra.mrb[0].mxu0 %v2536
    %v2610 = vpop.f32.mrb[0].mxu0
    %v2611 = vadd.f32 %v1889, %v2610
    %v2612 = vpop.f32.mrb[0].mxu0
    %2613 = vmatprep.mubr.f32.mxu0 0.0
    %2614 = vmatmul.mubr.f32.gmra.mrb[0].mxu0 %v2538
    %v2615 = vpop.f32.mrb[0].mxu0
    %v2616 = vadd.f32 %v1890, %v2615
    %v2617 = vpop.f32.mrb[0].mxu0
    %2618 = vdwg.mxu0
    %v2619 = vsel %vm1015, %v1974, -inf
    %2620 = vmax.xlane.f32.xlu0 %v2619
    %v2621 = vpop.xlane.xlu0 %2620
    %v2622 = vsel %vm1015, %v1979, -inf
    %2623 = vmax.xlane.f32.xlu0 %v2622
    %v2624 = vpop.xlane.xlu0 %2623
    %v2625 = vsel %vm1015, %v2065, -inf
    %2626 = vmax.xlane.f32.xlu0 %v2625
    %v2627 = vpop.xlane.xlu0 %2626
    %v2628 = vsel %vm1015, %v2070, -inf
    %2629 = vmax.xlane.f32.xlu0 %v2628
    %v2630 = vpop.xlane.xlu0 %2629
    %v2631 = vsel %vm1015, %v2156, -inf
    %2632 = vmax.xlane.f32.xlu0 %v2631
    %v2633 = vpop.xlane.xlu0 %2632
    %v2634 = vsel %vm1015, %v2161, -inf
    %2635 = vmax.xlane.f32.xlu0 %v2634
    %v2636 = vpop.xlane.xlu0 %2635
    %v2637 = vsel %vm1015, %v2247, -inf
    %2638 = vmax.xlane.f32.xlu0 %v2637
    %v2639 = vpop.xlane.xlu0 %2638
    %v2640 = vsel %vm1015, %v2252, -inf
    %2641 = vmax.xlane.f32.xlu0 %v2640
    %v2642 = vpop.xlane.xlu0 %2641
    %v2643 = vsel %vm1015, %v2338, -inf
    %2644 = vmax.xlane.f32.xlu0 %v2643
    %v2645 = vpop.xlane.xlu0 %2644
    %v2646 = vsel %vm1015, %v2343, -inf
    %2647 = vmax.xlane.f32.xlu0 %v2646
    %v2648 = vpop.xlane.xlu0 %2647
    %v2649 = vsel %vm1015, %v2429, -inf
    %2650 = vmax.xlane.f32.xlu0 %v2649
    %v2651 = vpop.xlane.xlu0 %2650
    %v2652 = vsel %vm1015, %v2434, -inf
    %2653 = vmax.xlane.f32.xlu0 %v2652
    %v2654 = vpop.xlane.xlu0 %2653
    %v2655 = vsel %vm1015, %v2520, -inf
    %2656 = vmax.xlane.f32.xlu0 %v2655
    %v2657 = vpop.xlane.xlu0 %2656
    %v2658 = vsel %vm1015, %v2525, -inf
    %2659 = vmax.xlane.f32.xlu0 %v2658
    %v2660 = vpop.xlane.xlu0 %2659
    %v2661 = vsel %vm1015, %v2611, -inf
    %2662 = vmax.xlane.f32.xlu0 %v2661
    %v2663 = vpop.xlane.xlu0 %2662
    %v2664 = vsel %vm1015, %v2616, -inf
    %2665 = vmax.xlane.f32.xlu0 %v2664
    %v2666 = vpop.xlane.xlu0 %2665
    %v2667 = vsub.f32 %v1974, %v2621
    %v2668 = vsub.f32 %v1979, %v2624
    %v2669 = vsub.f32 %v2065, %v2627
    %v2670 = vsub.f32 %v2070, %v2630
    %v2671 = vsub.f32 %v2156, %v2633
    %v2672 = vsub.f32 %v2161, %v2636
    %v2673 = vsub.f32 %v2247, %v2639
    %v2674 = vsub.f32 %v2252, %v2642
    %v2675 = vsub.f32 %v2338, %v2645
    %v2676 = vsub.f32 %v2343, %v2648
    %v2677 = vsub.f32 %v2429, %v2651
    %v2678 = vsub.f32 %v2434, %v2654
    %v2679 = vsub.f32 %v2520, %v2657
    %v2680 = vsub.f32 %v2525, %v2660
    %v2681 = vsub.f32 %v2611, %v2663
    %v2682 = vsub.f32 %v2616, %v2666
    %v2683 = vmul.f32 %v2667, 1.442695
    %v2684 = vpow.pop %v2683
    %v2685 = vmul.f32 %v2668, 1.442695
    %v2686 = vpow.pop %v2685
    %v2687 = vmul.f32 %v2669, 1.442695
    %v2688 = vpow.pop %v2687
    %v2689 = vmul.f32 %v2670, 1.442695
    %v2690 = vpow.pop %v2689
    %v2691 = vmul.f32 %v2671, 1.442695
    %v2692 = vpow.pop %v2691
    %v2693 = vmul.f32 %v2672, 1.442695
    %v2694 = vpow.pop %v2693
    %v2695 = vmul.f32 %v2673, 1.442695
    %v2696 = vpow.pop %v2695
    %v2697 = vmul.f32 %v2674, 1.442695
    %v2698 = vpow.pop %v2697
    %v2699 = vmul.f32 %v2675, 1.442695
    %v2700 = vpow.pop %v2699
    %v2701 = vmul.f32 %v2676, 1.442695
    %v2702 = vpow.pop %v2701
    %v2703 = vmul.f32 %v2677, 1.442695
    %v2704 = vpow.pop %v2703
    %v2705 = vmul.f32 %v2678, 1.442695
    %v2706 = vpow.pop %v2705
    %v2707 = vmul.f32 %v2679, 1.442695
    %v2708 = vpow.pop %v2707
    %v2709 = vmul.f32 %v2680, 1.442695
    %v2710 = vpow.pop %v2709
    %v2711 = vmul.f32 %v2681, 1.442695
    %v2712 = vpow.pop %v2711
    %v2713 = vmul.f32 %v2682, 1.442695
    %v2714 = vpow.pop %v2713
    %v2715 = vsel %vm1015, %v2684, 0.0
    %2716 = vadd.xlane.f32.xlu0 %v2715
    %v2717 = vpop.xlane.xlu0 %2716
    %v2718 = vsel %vm1015, %v2686, 0.0
    %2719 = vadd.xlane.f32.xlu0 %v2718
    %v2720 = vpop.xlane.xlu0 %2719
    %v2721 = vsel %vm1015, %v2688, 0.0
    %2722 = vadd.xlane.f32.xlu0 %v2721
    %v2723 = vpop.xlane.xlu0 %2722
    %v2724 = vsel %vm1015, %v2690, 0.0
    %2725 = vadd.xlane.f32.xlu0 %v2724
    %v2726 = vpop.xlane.xlu0 %2725
    %v2727 = vsel %vm1015, %v2692, 0.0
    %2728 = vadd.xlane.f32.xlu0 %v2727
    %v2729 = vpop.xlane.xlu0 %2728
    %v2730 = vsel %vm1015, %v2694, 0.0
    %2731 = vadd.xlane.f32.xlu0 %v2730
    %v2732 = vpop.xlane.xlu0 %2731
    %v2733 = vsel %vm1015, %v2696, 0.0
    %2734 = vadd.xlane.f32.xlu0 %v2733
    %v2735 = vpop.xlane.xlu0 %2734
    %v2736 = vsel %vm1015, %v2698, 0.0
    %2737 = vadd.xlane.f32.xlu0 %v2736
    %v2738 = vpop.xlane.xlu0 %2737
    %v2739 = vsel %vm1015, %v2700, 0.0
    %2740 = vadd.xlane.f32.xlu0 %v2739
    %v2741 = vpop.xlane.xlu0 %2740
    %v2742 = vsel %vm1015, %v2702, 0.0
    %2743 = vadd.xlane.f32.xlu0 %v2742
    %v2744 = vpop.xlane.xlu0 %2743
    %v2745 = vsel %vm1015, %v2704, 0.0
    %2746 = vadd.xlane.f32.xlu0 %v2745
    %v2747 = vpop.xlane.xlu0 %2746
    %v2748 = vsel %vm1015, %v2706, 0.0
    %2749 = vadd.xlane.f32.xlu0 %v2748
    %v2750 = vpop.xlane.xlu0 %2749
    %v2751 = vsel %vm1015, %v2708, 0.0
    %2752 = vadd.xlane.f32.xlu0 %v2751
    %v2753 = vpop.xlane.xlu0 %2752
    %v2754 = vsel %vm1015, %v2710, 0.0
    %2755 = vadd.xlane.f32.xlu0 %v2754
    %v2756 = vpop.xlane.xlu0 %2755
    %v2757 = vsel %vm1015, %v2712, 0.0
    %2758 = vadd.xlane.f32.xlu0 %v2757
    %v2759 = vpop.xlane.xlu0 %2758
    %v2760 = vsel %vm1015, %v2714, 0.0
    %2761 = vadd.xlane.f32.xlu0 %v2760
    %v2762 = vpop.xlane.xlu0 %2761
    %v2763 = vrcp.pop %v2717
    %v2764 = vrcp.pop %v2720
    %v2765 = vrcp.pop %v2723
    %v2766 = vrcp.pop %v2726
    %v2767 = vrcp.pop %v2729
    %v2768 = vrcp.pop %v2732
    %v2769 = vrcp.pop %v2735
    %v2770 = vrcp.pop %v2738
    %v2771 = vrcp.pop %v2741
    %v2772 = vrcp.pop %v2744
    %v2773 = vrcp.pop %v2747
    %v2774 = vrcp.pop %v2750
    %v2775 = vrcp.pop %v2753
    %v2776 = vrcp.pop %v2756
    %v2777 = vrcp.pop %v2759
    %v2778 = vrcp.pop %v2762
    %v2779 = vmul.f32 %v2684, %v2763
    %v2780 = vmul.f32 %v2686, %v2764
    %v2781 = vmul.f32 %v2688, %v2765
    %v2782 = vmul.f32 %v2690, %v2766
    %v2783 = vmul.f32 %v2692, %v2767
    %v2784 = vmul.f32 %v2694, %v2768
    %v2785 = vmul.f32 %v2696, %v2769
    %v2786 = vmul.f32 %v2698, %v2770
    %v2787 = vmul.f32 %v2700, %v2771
    %v2788 = vmul.f32 %v2702, %v2772
    %v2789 = vmul.f32 %v2704, %v2773
    %v2790 = vmul.f32 %v2706, %v2774
    %v2791 = vmul.f32 %v2708, %v2775
    %v2792 = vmul.f32 %v2710, %v2776
    %v2793 = vmul.f32 %v2712, %v2777
    %v2794 = vmul.f32 %v2714, %v2778
    %2795 = vrot.lane.b32.xlu0 %v222, 56
    %v2796 = vpop.permute.xlu0 %2795
    %2797 = vrot.lane.b32.xlu0 %v227, 56
    %v2798 = vpop.permute.xlu0 %2797
    %v2802 = vsel %vm1015, %v2779, 0
    %v2805 = vsel %vm1015, %v2780, 0
    %2807 = vmatprep.subr.mxu0 0.0
    %2808 = vmatpush1.msra.mxu0 %v2796
    %2809 = vmatprep.subr.mxu0 0.0
    %2810 = vmatpush1.msra.mxu0 %v2798
    %2811 = vmatprep.subr.mxu0 0.0
    %2812 = vmatpush1.msra.mxu0 0.0
    %2813 = vmatprep.subr.mxu0 0.0
    %2814 = vmatpush1.msra.mxu0 0.0
    %2815 = vmatprep.subr.mxu0 0.0
    %2816 = vmatpush1.msra.mxu0 0.0
    %2817 = vmatprep.subr.mxu0 0.0
    %2818 = vmatpush1.msra.mxu0 0.0
    %2819 = vmatprep.subr.mxu0 0.0
    %2820 = vmatpush1.msra.mxu0 0.0
    %2821 = vmatprep.subr.mxu0 0.0
    %2822 = vmatpush1.msra.mxu0 0.0
    %2823 = vmatprep.subr.mxu0 0.0
    %2824 = vmatpush1.msra.mxu0 0.0
    %2825 = vmatprep.subr.mxu0 0.0
    %2826 = vmatpush1.msra.mxu0 0.0
    %2827 = vmatprep.subr.mxu0 0.0
    %2828 = vmatpush1.msra.mxu0 0.0
    %2829 = vmatprep.subr.mxu0 0.0
    %2830 = vmatpush1.msra.mxu0 0.0
    %2831 = vmatprep.subr.mxu0 0.0
    %2832 = vmatpush1.msra.mxu0 0.0
    %2833 = vmatprep.subr.mxu0 0.0
    %2834 = vmatpush1.msra.mxu0 0.0
    %2835 = vmatprep.subr.mxu0 0.0
    %2836 = vmatpush1.msra.mxu0 0.0
    %2837 = vmatprep.subr.mxu0 0.0
    %2838 = vmatpush1.msra.mxu0 0.0
    %2839 = vmatprep.subr.mxu0 0.0
    %2840 = vmatpush1.msra.mxu0 0.0
    %2841 = vmatprep.subr.mxu0 0.0
    %2842 = vmatpush1.msra.mxu0 0.0
    %2843 = vmatprep.subr.mxu0 0.0
    %2844 = vmatpush1.msra.mxu0 0.0
    %2845 = vmatprep.subr.mxu0 0.0
    %2846 = vmatpush1.msra.mxu0 0.0
    %2847 = vmatprep.subr.mxu0 0.0
    %2848 = vmatpush1.msra.mxu0 0.0
    %2849 = vmatprep.subr.mxu0 0.0
    %2850 = vmatpush1.msra.mxu0 0.0
    %2851 = vmatprep.subr.mxu0 0.0
    %2852 = vmatpush1.msra.mxu0 0.0
    %2853 = vmatprep.subr.mxu0 0.0
    %2854 = vmatpush1.msra.mxu0 0.0
    %2855 = vmatprep.subr.mxu0 0.0
    %2856 = vmatpush1.msra.mxu0 0.0
    %2857 = vmatprep.subr.mxu0 0.0
    %2858 = vmatpush1.msra.mxu0 0.0
    %2859 = vmatprep.subr.mxu0 0.0
    %2860 = vmatpush1.msra.mxu0 0.0
    %2861 = vmatprep.subr.mxu0 0.0
    %2862 = vmatpush1.msra.mxu0 0.0
    %2863 = vmatprep.subr.mxu0 0.0
    %2864 = vmatpush1.msra.mxu0 0.0
    %2865 = vmatprep.subr.mxu0 0.0
    %2866 = vmatpush1.msra.mxu0 0.0
    %2867 = vmatprep.subr.mxu0 0.0
    %2868 = vmatpush1.msra.mxu0 0.0
    %2869 = vmatprep.subr.mxu0 0.0
    %2870 = vmatpush1.msra.mxu0 0.0
    %2871 = vmatprep.mubr.f32.mxu0 0.0
    %2872 = vmatmul.mubr.f32.gmra.mrb[0].mxu0 %v2802
    %v2873 = vpop.f32.mrb[0].mxu0
    %v2874 = vadd.f32 0.0, %v2873
    %v2875 = vpop.f32.mrb[0].mxu0
    %2876 = vmatprep.mubr.f32.mxu0 0.0
    %2877 = vmatmul.mubr.f32.gmra.mrb[0].mxu0 %v2805
    %v2878 = vpop.f32.mrb[0].mxu0
    %v2879 = vadd.f32 0.0, %v2878
    %v2880 = vpop.f32.mrb[0].mxu0
    %2881 = vdwg.mxu0
    %2882 = vrot.lane.b32.xlu0 %v232, 56
    %v2883 = vpop.permute.xlu0 %2882
    %2884 = vrot.lane.b32.xlu0 %v237, 56
    %v2885 = vpop.permute.xlu0 %2884
    %v2889 = vsel %vm1015, %v2781, 0
    %v2892 = vsel %vm1015, %v2782, 0
    %2894 = vmatprep.subr.mxu0 0.0
    %2895 = vmatpush1.msra.mxu0 %v2883
    %2896 = vmatprep.subr.mxu0 0.0
    %2897 = vmatpush1.msra.mxu0 %v2885
    %2898 = vmatprep.subr.mxu0 0.0
    %2899 = vmatpush1.msra.mxu0 0.0
    %2900 = vmatprep.subr.mxu0 0.0
    %2901 = vmatpush1.msra.mxu0 0.0
    %2902 = vmatprep.subr.mxu0 0.0
    %2903 = vmatpush1.msra.mxu0 0.0
    %2904 = vmatprep.subr.mxu0 0.0
    %2905 = vmatpush1.msra.mxu0 0.0
    %2906 = vmatprep.subr.mxu0 0.0
    %2907 = vmatpush1.msra.mxu0 0.0
    %2908 = vmatprep.subr.mxu0 0.0
    %2909 = vmatpush1.msra.mxu0 0.0
    %2910 = vmatprep.subr.mxu0 0.0
    %2911 = vmatpush1.msra.mxu0 0.0
    %2912 = vmatprep.subr.mxu0 0.0
    %2913 = vmatpush1.msra.mxu0 0.0
    %2914 = vmatprep.subr.mxu0 0.0
    %2915 = vmatpush1.msra.mxu0 0.0
    %2916 = vmatprep.subr.mxu0 0.0
    %2917 = vmatpush1.msra.mxu0 0.0
    %2918 = vmatprep.subr.mxu0 0.0
    %2919 = vmatpush1.msra.mxu0 0.0
    %2920 = vmatprep.subr.mxu0 0.0
    %2921 = vmatpush1.msra.mxu0 0.0
    %2922 = vmatprep.subr.mxu0 0.0
    %2923 = vmatpush1.msra.mxu0 0.0
    %2924 = vmatprep.subr.mxu0 0.0
    %2925 = vmatpush1.msra.mxu0 0.0
    %2926 = vmatprep.subr.mxu0 0.0
    %2927 = vmatpush1.msra.mxu0 0.0
    %2928 = vmatprep.subr.mxu0 0.0
    %2929 = vmatpush1.msra.mxu0 0.0
    %2930 = vmatprep.subr.mxu0 0.0
    %2931 = vmatpush1.msra.mxu0 0.0
    %2932 = vmatprep.subr.mxu0 0.0
    %2933 = vmatpush1.msra.mxu0 0.0
    %2934 = vmatprep.subr.mxu0 0.0
    %2935 = vmatpush1.msra.mxu0 0.0
    %2936 = vmatprep.subr.mxu0 0.0
    %2937 = vmatpush1.msra.mxu0 0.0
    %2938 = vmatprep.subr.mxu0 0.0
    %2939 = vmatpush1.msra.mxu0 0.0
    %2940 = vmatprep.subr.mxu0 0.0
    %2941 = vmatpush1.msra.mxu0 0.0
    %2942 = vmatprep.subr.mxu0 0.0
    %2943 = vmatpush1.msra.mxu0 0.0
    %2944 = vmatprep.subr.mxu0 0.0
    %2945 = vmatpush1.msra.mxu0 0.0
    %2946 = vmatprep.subr.mxu0 0.0
    %2947 = vmatpush1.msra.mxu0 0.0
    %2948 = vmatprep.subr.mxu0 0.0
    %2949 = vmatpush1.msra.mxu0 0.0
    %2950 = vmatprep.subr.mxu0 0.0
    %2951 = vmatpush1.msra.mxu0 0.0
    %2952 = vmatprep.subr.mxu0 0.0
    %2953 = vmatpush1.msra.mxu0 0.0
    %2954 = vmatprep.subr.mxu0 0.0
    %2955 = vmatpush1.msra.mxu0 0.0
    %2956 = vmatprep.subr.mxu0 0.0
    %2957 = vmatpush1.msra.mxu0 0.0
    %2958 = vmatprep.mubr.f32.mxu0 0.0
    %2959 = vmatmul.mubr.f32.gmra.mrb[0].mxu0 %v2889
    %v2960 = vpop.f32.mrb[0].mxu0
    %v2961 = vadd.f32 0.0, %v2960
    %v2962 = vpop.f32.mrb[0].mxu0
    %2963 = vmatprep.mubr.f32.mxu0 0.0
    %2964 = vmatmul.mubr.f32.gmra.mrb[0].mxu0 %v2892
    %v2965 = vpop.f32.mrb[0].mxu0
    %v2966 = vadd.f32 0.0, %v2965
    %v2967 = vpop.f32.mrb[0].mxu0
    %2968 = vdwg.mxu0
    %2969 = vrot.lane.b32.xlu0 %v242, 56
    %v2970 = vpop.permute.xlu0 %2969
    %2971 = vrot.lane.b32.xlu0 %v247, 56
    %v2972 = vpop.permute.xlu0 %2971
    %v2976 = vsel %vm1015, %v2783, 0
    %v2979 = vsel %vm1015, %v2784, 0
    %2981 = vmatprep.subr.mxu0 0.0
    %2982 = vmatpush1.msra.mxu0 %v2970
    %2983 = vmatprep.subr.mxu0 0.0
    %2984 = vmatpush1.msra.mxu0 %v2972
    %2985 = vmatprep.subr.mxu0 0.0
    %2986 = vmatpush1.msra.mxu0 0.0
    %2987 = vmatprep.subr.mxu0 0.0
    %2988 = vmatpush1.msra.mxu0 0.0
    %2989 = vmatprep.subr.mxu0 0.0
    %2990 = vmatpush1.msra.mxu0 0.0
    %2991 = vmatprep.subr.mxu0 0.0
    %2992 = vmatpush1.msra.mxu0 0.0
    %2993 = vmatprep.subr.mxu0 0.0
    %2994 = vmatpush1.msra.mxu0 0.0
    %2995 = vmatprep.subr.mxu0 0.0
    %2996 = vmatpush1.msra.mxu0 0.0
    %2997 = vmatprep.subr.mxu0 0.0
    %2998 = vmatpush1.msra.mxu0 0.0
    %2999 = vmatprep.subr.mxu0 0.0
    %3000 = vmatpush1.msra.mxu0 0.0
    %3001 = vmatprep.subr.mxu0 0.0
    %3002 = vmatpush1.msra.mxu0 0.0
    %3003 = vmatprep.subr.mxu0 0.0
    %3004 = vmatpush1.msra.mxu0 0.0
    %3005 = vmatprep.subr.mxu0 0.0
    %3006 = vmatpush1.msra.mxu0 0.0
    %3007 = vmatprep.subr.mxu0 0.0
    %3008 = vmatpush1.msra.mxu0 0.0
    %3009 = vmatprep.subr.mxu0 0.0
    %3010 = vmatpush1.msra.mxu0 0.0
    %3011 = vmatprep.subr.mxu0 0.0
    %3012 = vmatpush1.msra.mxu0 0.0
    %3013 = vmatprep.subr.mxu0 0.0
    %3014 = vmatpush1.msra.mxu0 0.0
    %3015 = vmatprep.subr.mxu0 0.0
    %3016 = vmatpush1.msra.mxu0 0.0
    %3017 = vmatprep.subr.mxu0 0.0
    %3018 = vmatpush1.msra.mxu0 0.0
    %3019 = vmatprep.subr.mxu0 0.0
    %3020 = vmatpush1.msra.mxu0 0.0
    %3021 = vmatprep.subr.mxu0 0.0
    %3022 = vmatpush1.msra.mxu0 0.0
    %3023 = vmatprep.subr.mxu0 0.0
    %3024 = vmatpush1.msra.mxu0 0.0
    %3025 = vmatprep.subr.mxu0 0.0
    %3026 = vmatpush1.msra.mxu0 0.0
    %3027 = vmatprep.subr.mxu0 0.0
    %3028 = vmatpush1.msra.mxu0 0.0
    %3029 = vmatprep.subr.mxu0 0.0
    %3030 = vmatpush1.msra.mxu0 0.0
    %3031 = vmatprep.subr.mxu0 0.0
    %3032 = vmatpush1.msra.mxu0 0.0
    %3033 = vmatprep.subr.mxu0 0.0
    %3034 = vmatpush1.msra.mxu0 0.0
    %3035 = vmatprep.subr.mxu0 0.0
    %3036 = vmatpush1.msra.mxu0 0.0
    %3037 = vmatprep.subr.mxu0 0.0
    %3038 = vmatpush1.msra.mxu0 0.0
    %3039 = vmatprep.subr.mxu0 0.0
    %3040 = vmatpush1.msra.mxu0 0.0
    %3041 = vmatprep.subr.mxu0 0.0
    %3042 = vmatpush1.msra.mxu0 0.0
    %3043 = vmatprep.subr.mxu0 0.0
    %3044 = vmatpush1.msra.mxu0 0.0
    %3045 = vmatprep.mubr.f32.mxu0 0.0
    %3046 = vmatmul.mubr.f32.gmra.mrb[0].mxu0 %v2976
    %v3047 = vpop.f32.mrb[0].mxu0
    %v3048 = vadd.f32 0.0, %v3047
    %v3049 = vpop.f32.mrb[0].mxu0
    %3050 = vmatprep.mubr.f32.mxu0 0.0
    %3051 = vmatmul.mubr.f32.gmra.mrb[0].mxu0 %v2979
    %v3052 = vpop.f32.mrb[0].mxu0
    %v3053 = vadd.f32 0.0, %v3052
    %v3054 = vpop.f32.mrb[0].mxu0
    %3055 = vdwg.mxu0
    %3056 = vrot.lane.b32.xlu0 %v252, 56
    %v3057 = vpop.permute.xlu0 %3056
    %3058 = vrot.lane.b32.xlu0 %v257, 56
    %v3059 = vpop.permute.xlu0 %3058
    %v3063 = vsel %vm1015, %v2785, 0
    %v3066 = vsel %vm1015, %v2786, 0
    %3068 = vmatprep.subr.mxu0 0.0
    %3069 = vmatpush1.msra.mxu0 %v3057
    %3070 = vmatprep.subr.mxu0 0.0
    %3071 = vmatpush1.msra.mxu0 %v3059
    %3072 = vmatprep.subr.mxu0 0.0
    %3073 = vmatpush1.msra.mxu0 0.0
    %3074 = vmatprep.subr.mxu0 0.0
    %3075 = vmatpush1.msra.mxu0 0.0
    %3076 = vmatprep.subr.mxu0 0.0
    %3077 = vmatpush1.msra.mxu0 0.0
    %3078 = vmatprep.subr.mxu0 0.0
    %3079 = vmatpush1.msra.mxu0 0.0
    %3080 = vmatprep.subr.mxu0 0.0
    %3081 = vmatpush1.msra.mxu0 0.0
    %3082 = vmatprep.subr.mxu0 0.0
    %3083 = vmatpush1.msra.mxu0 0.0
    %3084 = vmatprep.subr.mxu0 0.0
    %3085 = vmatpush1.msra.mxu0 0.0
    %3086 = vmatprep.subr.mxu0 0.0
    %3087 = vmatpush1.msra.mxu0 0.0
    %3088 = vmatprep.subr.mxu0 0.0
    %3089 = vmatpush1.msra.mxu0 0.0
    %3090 = vmatprep.subr.mxu0 0.0
    %3091 = vmatpush1.msra.mxu0 0.0
    %3092 = vmatprep.subr.mxu0 0.0
    %3093 = vmatpush1.msra.mxu0 0.0
    %3094 = vmatprep.subr.mxu0 0.0
    %3095 = vmatpush1.msra.mxu0 0.0
    %3096 = vmatprep.subr.mxu0 0.0
    %3097 = vmatpush1.msra.mxu0 0.0
    %3098 = vmatprep.subr.mxu0 0.0
    %3099 = vmatpush1.msra.mxu0 0.0
    %3100 = vmatprep.subr.mxu0 0.0
    %3101 = vmatpush1.msra.mxu0 0.0
    %3102 = vmatprep.subr.mxu0 0.0
    %3103 = vmatpush1.msra.mxu0 0.0
    %3104 = vmatprep.subr.mxu0 0.0
    %3105 = vmatpush1.msra.mxu0 0.0
    %3106 = vmatprep.subr.mxu0 0.0
    %3107 = vmatpush1.msra.mxu0 0.0
    %3108 = vmatprep.subr.mxu0 0.0
    %3109 = vmatpush1.msra.mxu0 0.0
    %3110 = vmatprep.subr.mxu0 0.0
    %3111 = vmatpush1.msra.mxu0 0.0
    %3112 = vmatprep.subr.mxu0 0.0
    %3113 = vmatpush1.msra.mxu0 0.0
    %3114 = vmatprep.subr.mxu0 0.0
    %3115 = vmatpush1.msra.mxu0 0.0
    %3116 = vmatprep.subr.mxu0 0.0
    %3117 = vmatpush1.msra.mxu0 0.0
    %3118 = vmatprep.subr.mxu0 0.0
    %3119 = vmatpush1.msra.mxu0 0.0
    %3120 = vmatprep.subr.mxu0 0.0
    %3121 = vmatpush1.msra.mxu0 0.0
    %3122 = vmatprep.subr.mxu0 0.0
    %3123 = vmatpush1.msra.mxu0 0.0
    %3124 = vmatprep.subr.mxu0 0.0
    %3125 = vmatpush1.msra.mxu0 0.0
    %3126 = vmatprep.subr.mxu0 0.0
    %3127 = vmatpush1.msra.mxu0 0.0
    %3128 = vmatprep.subr.mxu0 0.0
    %3129 = vmatpush1.msra.mxu0 0.0
    %3130 = vmatprep.subr.mxu0 0.0
    %3131 = vmatpush1.msra.mxu0 0.0
    %3132 = vmatprep.mubr.f32.mxu0 0.0
    %3133 = vmatmul.mubr.f32.gmra.mrb[0].mxu0 %v3063
    %v3134 = vpop.f32.mrb[0].mxu0
    %v3135 = vadd.f32 0.0, %v3134
    %v3136 = vpop.f32.mrb[0].mxu0
    %3137 = vmatprep.mubr.f32.mxu0 0.0
    %3138 = vmatmul.mubr.f32.gmra.mrb[0].mxu0 %v3066
    %v3139 = vpop.f32.mrb[0].mxu0
    %v3140 = vadd.f32 0.0, %v3139
    %v3141 = vpop.f32.mrb[0].mxu0
    %3142 = vdwg.mxu0
    %3143 = vrot.lane.b32.xlu0 %v262, 56
    %v3144 = vpop.permute.xlu0 %3143
    %3145 = vrot.lane.b32.xlu0 %v267, 56
    %v3146 = vpop.permute.xlu0 %3145
    %v3150 = vsel %vm1015, %v2787, 0
    %v3153 = vsel %vm1015, %v2788, 0
    %3155 = vmatprep.subr.mxu0 0.0
    %3156 = vmatpush1.msra.mxu0 %v3144
    %3157 = vmatprep.subr.mxu0 0.0
    %3158 = vmatpush1.msra.mxu0 %v3146
    %3159 = vmatprep.subr.mxu0 0.0
    %3160 = vmatpush1.msra.mxu0 0.0
    %3161 = vmatprep.subr.mxu0 0.0
    %3162 = vmatpush1.msra.mxu0 0.0
    %3163 = vmatprep.subr.mxu0 0.0
    %3164 = vmatpush1.msra.mxu0 0.0
    %3165 = vmatprep.subr.mxu0 0.0
    %3166 = vmatpush1.msra.mxu0 0.0
    %3167 = vmatprep.subr.mxu0 0.0
    %3168 = vmatpush1.msra.mxu0 0.0
    %3169 = vmatprep.subr.mxu0 0.0
    %3170 = vmatpush1.msra.mxu0 0.0
    %3171 = vmatprep.subr.mxu0 0.0
    %3172 = vmatpush1.msra.mxu0 0.0
    %3173 = vmatprep.subr.mxu0 0.0
    %3174 = vmatpush1.msra.mxu0 0.0
    %3175 = vmatprep.subr.mxu0 0.0
    %3176 = vmatpush1.msra.mxu0 0.0
    %3177 = vmatprep.subr.mxu0 0.0
    %3178 = vmatpush1.msra.mxu0 0.0
    %3179 = vmatprep.subr.mxu0 0.0
    %3180 = vmatpush1.msra.mxu0 0.0
    %3181 = vmatprep.subr.mxu0 0.0
    %3182 = vmatpush1.msra.mxu0 0.0
    %3183 = vmatprep.subr.mxu0 0.0
    %3184 = vmatpush1.msra.mxu0 0.0
    %3185 = vmatprep.subr.mxu0 0.0
    %3186 = vmatpush1.msra.mxu0 0.0
    %3187 = vmatprep.subr.mxu0 0.0
    %3188 = vmatpush1.msra.mxu0 0.0
    %3189 = vmatprep.subr.mxu0 0.0
    %3190 = vmatpush1.msra.mxu0 0.0
    %3191 = vmatprep.subr.mxu0 0.0
    %3192 = vmatpush1.msra.mxu0 0.0
    %3193 = vmatprep.subr.mxu0 0.0
    %3194 = vmatpush1.msra.mxu0 0.0
    %3195 = vmatprep.subr.mxu0 0.0
    %3196 = vmatpush1.msra.mxu0 0.0
    %3197 = vmatprep.subr.mxu0 0.0
    %3198 = vmatpush1.msra.mxu0 0.0
    %3199 = vmatprep.subr.mxu0 0.0
    %3200 = vmatpush1.msra.mxu0 0.0
    %3201 = vmatprep.subr.mxu0 0.0
    %3202 = vmatpush1.msra.mxu0 0.0
    %3203 = vmatprep.subr.mxu0 0.0
    %3204 = vmatpush1.msra.mxu0 0.0
    %3205 = vmatprep.subr.mxu0 0.0
    %3206 = vmatpush1.msra.mxu0 0.0
    %3207 = vmatprep.subr.mxu0 0.0
    %3208 = vmatpush1.msra.mxu0 0.0
    %3209 = vmatprep.subr.mxu0 0.0
    %3210 = vmatpush1.msra.mxu0 0.0
    %3211 = vmatprep.subr.mxu0 0.0
    %3212 = vmatpush1.msra.mxu0 0.0
    %3213 = vmatprep.subr.mxu0 0.0
    %3214 = vmatpush1.msra.mxu0 0.0
    %3215 = vmatprep.subr.mxu0 0.0
    %3216 = vmatpush1.msra.mxu0 0.0
    %3217 = vmatprep.subr.mxu0 0.0
    %3218 = vmatpush1.msra.mxu0 0.0
    %3219 = vmatprep.mubr.f32.mxu0 0.0
    %3220 = vmatmul.mubr.f32.gmra.mrb[0].mxu0 %v3150
    %v3221 = vpop.f32.mrb[0].mxu0
    %v3222 = vadd.f32 0.0, %v3221
    %v3223 = vpop.f32.mrb[0].mxu0
    %3224 = vmatprep.mubr.f32.mxu0 0.0
    %3225 = vmatmul.mubr.f32.gmra.mrb[0].mxu0 %v3153
    %v3226 = vpop.f32.mrb[0].mxu0
    %v3227 = vadd.f32 0.0, %v3226
    %v3228 = vpop.f32.mrb[0].mxu0
    %3229 = vdwg.mxu0
    %3230 = vrot.lane.b32.xlu0 %v272, 56
    %v3231 = vpop.permute.xlu0 %3230
    %3232 = vrot.lane.b32.xlu0 %v277, 56
    %v3233 = vpop.permute.xlu0 %3232
    %v3237 = vsel %vm1015, %v2789, 0
    %v3240 = vsel %vm1015, %v2790, 0
    %3242 = vmatprep.subr.mxu0 0.0
    %3243 = vmatpush1.msra.mxu0 %v3231
    %3244 = vmatprep.subr.mxu0 0.0
    %3245 = vmatpush1.msra.mxu0 %v3233
    %3246 = vmatprep.subr.mxu0 0.0
    %3247 = vmatpush1.msra.mxu0 0.0
    %3248 = vmatprep.subr.mxu0 0.0
    %3249 = vmatpush1.msra.mxu0 0.0
    %3250 = vmatprep.subr.mxu0 0.0
    %3251 = vmatpush1.msra.mxu0 0.0
    %3252 = vmatprep.subr.mxu0 0.0
    %3253 = vmatpush1.msra.mxu0 0.0
    %3254 = vmatprep.subr.mxu0 0.0
    %3255 = vmatpush1.msra.mxu0 0.0
    %3256 = vmatprep.subr.mxu0 0.0
    %3257 = vmatpush1.msra.mxu0 0.0
    %3258 = vmatprep.subr.mxu0 0.0
    %3259 = vmatpush1.msra.mxu0 0.0
    %3260 = vmatprep.subr.mxu0 0.0
    %3261 = vmatpush1.msra.mxu0 0.0
    %3262 = vmatprep.subr.mxu0 0.0
    %3263 = vmatpush1.msra.mxu0 0.0
    %3264 = vmatprep.subr.mxu0 0.0
    %3265 = vmatpush1.msra.mxu0 0.0
    %3266 = vmatprep.subr.mxu0 0.0
    %3267 = vmatpush1.msra.mxu0 0.0
    %3268 = vmatprep.subr.mxu0 0.0
    %3269 = vmatpush1.msra.mxu0 0.0
    %3270 = vmatprep.subr.mxu0 0.0
    %3271 = vmatpush1.msra.mxu0 0.0
    %3272 = vmatprep.subr.mxu0 0.0
    %3273 = vmatpush1.msra.mxu0 0.0
    %3274 = vmatprep.subr.mxu0 0.0
    %3275 = vmatpush1.msra.mxu0 0.0
    %3276 = vmatprep.subr.mxu0 0.0
    %3277 = vmatpush1.msra.mxu0 0.0
    %3278 = vmatprep.subr.mxu0 0.0
    %3279 = vmatpush1.msra.mxu0 0.0
    %3280 = vmatprep.subr.mxu0 0.0
    %3281 = vmatpush1.msra.mxu0 0.0
    %3282 = vmatprep.subr.mxu0 0.0
    %3283 = vmatpush1.msra.mxu0 0.0
    %3284 = vmatprep.subr.mxu0 0.0
    %3285 = vmatpush1.msra.mxu0 0.0
    %3286 = vmatprep.subr.mxu0 0.0
    %3287 = vmatpush1.msra.mxu0 0.0
    %3288 = vmatprep.subr.mxu0 0.0
    %3289 = vmatpush1.msra.mxu0 0.0
    %3290 = vmatprep.subr.mxu0 0.0
    %3291 = vmatpush1.msra.mxu0 0.0
    %3292 = vmatprep.subr.mxu0 0.0
    %3293 = vmatpush1.msra.mxu0 0.0
    %3294 = vmatprep.subr.mxu0 0.0
    %3295 = vmatpush1.msra.mxu0 0.0
    %3296 = vmatprep.subr.mxu0 0.0
    %3297 = vmatpush1.msra.mxu0 0.0
    %3298 = vmatprep.subr.mxu0 0.0
    %3299 = vmatpush1.msra.mxu0 0.0
    %3300 = vmatprep.subr.mxu0 0.0
    %3301 = vmatpush1.msra.mxu0 0.0
    %3302 = vmatprep.subr.mxu0 0.0
    %3303 = vmatpush1.msra.mxu0 0.0
    %3304 = vmatprep.subr.mxu0 0.0
    %3305 = vmatpush1.msra.mxu0 0.0
    %3306 = vmatprep.mubr.f32.mxu0 0.0
    %3307 = vmatmul.mubr.f32.gmra.mrb[0].mxu0 %v3237
    %v3308 = vpop.f32.mrb[0].mxu0
    %v3309 = vadd.f32 0.0, %v3308
    %v3310 = vpop.f32.mrb[0].mxu0
    %3311 = vmatprep.mubr.f32.mxu0 0.0
    %3312 = vmatmul.mubr.f32.gmra.mrb[0].mxu0 %v3240
    %v3313 = vpop.f32.mrb[0].mxu0
    %v3314 = vadd.f32 0.0, %v3313
    %v3315 = vpop.f32.mrb[0].mxu0
    %3316 = vdwg.mxu0
    %3317 = vrot.lane.b32.xlu0 %v282, 56
    %v3318 = vpop.permute.xlu0 %3317
    %3319 = vrot.lane.b32.xlu0 %v287, 56
    %v3320 = vpop.permute.xlu0 %3319
    %v3324 = vsel %vm1015, %v2791, 0
    %v3327 = vsel %vm1015, %v2792, 0
    %3329 = vmatprep.subr.mxu0 0.0
    %3330 = vmatpush1.msra.mxu0 %v3318
    %3331 = vmatprep.subr.mxu0 0.0
    %3332 = vmatpush1.msra.mxu0 %v3320
    %3333 = vmatprep.subr.mxu0 0.0
    %3334 = vmatpush1.msra.mxu0 0.0
    %3335 = vmatprep.subr.mxu0 0.0
    %3336 = vmatpush1.msra.mxu0 0.0
    %3337 = vmatprep.subr.mxu0 0.0
    %3338 = vmatpush1.msra.mxu0 0.0
    %3339 = vmatprep.subr.mxu0 0.0
    %3340 = vmatpush1.msra.mxu0 0.0
    %3341 = vmatprep.subr.mxu0 0.0
    %3342 = vmatpush1.msra.mxu0 0.0
    %3343 = vmatprep.subr.mxu0 0.0
    %3344 = vmatpush1.msra.mxu0 0.0
    %3345 = vmatprep.subr.mxu0 0.0
    %3346 = vmatpush1.msra.mxu0 0.0
    %3347 = vmatprep.subr.mxu0 0.0
    %3348 = vmatpush1.msra.mxu0 0.0
    %3349 = vmatprep.subr.mxu0 0.0
    %3350 = vmatpush1.msra.mxu0 0.0
    %3351 = vmatprep.subr.mxu0 0.0
    %3352 = vmatpush1.msra.mxu0 0.0
    %3353 = vmatprep.subr.mxu0 0.0
    %3354 = vmatpush1.msra.mxu0 0.0
    %3355 = vmatprep.subr.mxu0 0.0
    %3356 = vmatpush1.msra.mxu0 0.0
    %3357 = vmatprep.subr.mxu0 0.0
    %3358 = vmatpush1.msra.mxu0 0.0
    %3359 = vmatprep.subr.mxu0 0.0
    %3360 = vmatpush1.msra.mxu0 0.0
    %3361 = vmatprep.subr.mxu0 0.0
    %3362 = vmatpush1.msra.mxu0 0.0
    %3363 = vmatprep.subr.mxu0 0.0
    %3364 = vmatpush1.msra.mxu0 0.0
    %3365 = vmatprep.subr.mxu0 0.0
    %3366 = vmatpush1.msra.mxu0 0.0
    %3367 = vmatprep.subr.mxu0 0.0
    %3368 = vmatpush1.msra.mxu0 0.0
    %3369 = vmatprep.subr.mxu0 0.0
    %3370 = vmatpush1.msra.mxu0 0.0
    %3371 = vmatprep.subr.mxu0 0.0
    %3372 = vmatpush1.msra.mxu0 0.0
    %3373 = vmatprep.subr.mxu0 0.0
    %3374 = vmatpush1.msra.mxu0 0.0
    %3375 = vmatprep.subr.mxu0 0.0
    %3376 = vmatpush1.msra.mxu0 0.0
    %3377 = vmatprep.subr.mxu0 0.0
    %3378 = vmatpush1.msra.mxu0 0.0
    %3379 = vmatprep.subr.mxu0 0.0
    %3380 = vmatpush1.msra.mxu0 0.0
    %3381 = vmatprep.subr.mxu0 0.0
    %3382 = vmatpush1.msra.mxu0 0.0
    %3383 = vmatprep.subr.mxu0 0.0
    %3384 = vmatpush1.msra.mxu0 0.0
    %3385 = vmatprep.subr.mxu0 0.0
    %3386 = vmatpush1.msra.mxu0 0.0
    %3387 = vmatprep.subr.mxu0 0.0
    %3388 = vmatpush1.msra.mxu0 0.0
    %3389 = vmatprep.subr.mxu0 0.0
    %3390 = vmatpush1.msra.mxu0 0.0
    %3391 = vmatprep.subr.mxu0 0.0
    %3392 = vmatpush1.msra.mxu0 0.0
    %3393 = vmatprep.mubr.f32.mxu0 0.0
    %3394 = vmatmul.mubr.f32.gmra.mrb[0].mxu0 %v3324
    %v3395 = vpop.f32.mrb[0].mxu0
    %v3396 = vadd.f32 0.0, %v3395
    %v3397 = vpop.f32.mrb[0].mxu0
    %3398 = vmatprep.mubr.f32.mxu0 0.0
    %3399 = vmatmul.mubr.f32.gmra.mrb[0].mxu0 %v3327
    %v3400 = vpop.f32.mrb[0].mxu0
    %v3401 = vadd.f32 0.0, %v3400
    %v3402 = vpop.f32.mrb[0].mxu0
    %3403 = vdwg.mxu0
    %3404 = vrot.lane.b32.xlu0 %v292, 56
    %v3405 = vpop.permute.xlu0 %3404
    %3406 = vrot.lane.b32.xlu0 %v297, 56
    %v3407 = vpop.permute.xlu0 %3406
    %v3411 = vsel %vm1015, %v2793, 0
    %v3414 = vsel %vm1015, %v2794, 0
    %3416 = vmatprep.subr.mxu0 0.0
    %3417 = vmatpush1.msra.mxu0 %v3405
    %3418 = vmatprep.subr.mxu0 0.0
    %3419 = vmatpush1.msra.mxu0 %v3407
    %3420 = vmatprep.subr.mxu0 0.0
    %3421 = vmatpush1.msra.mxu0 0.0
    %3422 = vmatprep.subr.mxu0 0.0
    %3423 = vmatpush1.msra.mxu0 0.0
    %3424 = vmatprep.subr.mxu0 0.0
    %3425 = vmatpush1.msra.mxu0 0.0
    %3426 = vmatprep.subr.mxu0 0.0
    %3427 = vmatpush1.msra.mxu0 0.0
    %3428 = vmatprep.subr.mxu0 0.0
    %3429 = vmatpush1.msra.mxu0 0.0
    %3430 = vmatprep.subr.mxu0 0.0
    %3431 = vmatpush1.msra.mxu0 0.0
    %3432 = vmatprep.subr.mxu0 0.0
    %3433 = vmatpush1.msra.mxu0 0.0
    %3434 = vmatprep.subr.mxu0 0.0
    %3435 = vmatpush1.msra.mxu0 0.0
    %3436 = vmatprep.subr.mxu0 0.0
    %3437 = vmatpush1.msra.mxu0 0.0
    %3438 = vmatprep.subr.mxu0 0.0
    %3439 = vmatpush1.msra.mxu0 0.0
    %3440 = vmatprep.subr.mxu0 0.0
    %3441 = vmatpush1.msra.mxu0 0.0
    %3442 = vmatprep.subr.mxu0 0.0
    %3443 = vmatpush1.msra.mxu0 0.0
    %3444 = vmatprep.subr.mxu0 0.0
    %3445 = vmatpush1.msra.mxu0 0.0
    %3446 = vmatprep.subr.mxu0 0.0
    %3447 = vmatpush1.msra.mxu0 0.0
    %3448 = vmatprep.subr.mxu0 0.0
    %3449 = vmatpush1.msra.mxu0 0.0
    %3450 = vmatprep.subr.mxu0 0.0
    %3451 = vmatpush1.msra.mxu0 0.0
    %3452 = vmatprep.subr.mxu0 0.0
    %3453 = vmatpush1.msra.mxu0 0.0
    %3454 = vmatprep.subr.mxu0 0.0
    %3455 = vmatpush1.msra.mxu0 0.0
    %3456 = vmatprep.subr.mxu0 0.0
    %3457 = vmatpush1.msra.mxu0 0.0
    %3458 = vmatprep.subr.mxu0 0.0
    %3459 = vmatpush1.msra.mxu0 0.0
    %3460 = vmatprep.subr.mxu0 0.0
    %3461 = vmatpush1.msra.mxu0 0.0
    %3462 = vmatprep.subr.mxu0 0.0
    %3463 = vmatpush1.msra.mxu0 0.0
    %3464 = vmatprep.subr.mxu0 0.0
    %3465 = vmatpush1.msra.mxu0 0.0
    %3466 = vmatprep.subr.mxu0 0.0
    %3467 = vmatpush1.msra.mxu0 0.0
    %3468 = vmatprep.subr.mxu0 0.0
    %3469 = vmatpush1.msra.mxu0 0.0
    %3470 = vmatprep.subr.mxu0 0.0
    %3471 = vmatpush1.msra.mxu0 0.0
    %3472 = vmatprep.subr.mxu0 0.0
    %3473 = vmatpush1.msra.mxu0 0.0
    %3474 = vmatprep.subr.mxu0 0.0
    %3475 = vmatpush1.msra.mxu0 0.0
    %3476 = vmatprep.subr.mxu0 0.0
    %3477 = vmatpush1.msra.mxu0 0.0
    %3478 = vmatprep.subr.mxu0 0.0
    %3479 = vmatpush1.msra.mxu0 0.0
    %3480 = vmatprep.mubr.f32.mxu0 0.0
    %3481 = vmatmul.mubr.f32.gmra.mrb[0].mxu0 %v3411
    %v3482 = vpop.f32.mrb[0].mxu0
    %v3483 = vadd.f32 0.0, %v3482
    %v3484 = vpop.f32.mrb[0].mxu0
    %3485 = vmatprep.mubr.f32.mxu0 0.0
    %3486 = vmatmul.mubr.f32.gmra.mrb[0].mxu0 %v3414
    %v3487 = vpop.f32.mrb[0].mxu0
    %v3488 = vadd.f32 0.0, %v3487
    %v3489 = vpop.f32.mrb[0].mxu0
    %3490 = vdwg.mxu0
    %s3491 = scalar_lea.vmem [#allocation7], 32
    %v3492 = vld [vmem:[%s3491] sm:$0xff]
    %v3493 = vld [vmem:[%s3491 + $0x8] sm:$0xff]
    %3494 = vrot.lane.b32.xlu0 %v222, 112
    %v3495 = vpop.permute.xlu0 %3494
    %3496 = vrot.lane.b32.xlu0 %v227, 112
    %v3497 = vpop.permute.xlu0 %3496
    %3498 = vrot.lane.b32.xlu0 %v222, 80
    %v3499 = vpop.permute.xlu0 %3498
    %3500 = vrot.lane.b32.xlu0 %v227, 80
    %v3501 = vpop.permute.xlu0 %3500
    %v3502 = vsel %vm308, %v3495, 0
    %v3504 = vsel %vm308, %v3497, 0
    %v3506 = vsel %vm308, %v3499, 0
    %v3508 = vsel %vm308, %v3501, 0
    %3510 = vmatprep.subr.mxu0 0.0
    %3511 = vmatpush1.xpose.msra.mxu0 %v3506
    %3512 = vmatprep.subr.mxu0 0.0
    %3513 = vmatpush1.xpose.msra.mxu0 %v3508
    %3514 = vmatprep.subr.mxu0 0.0
    %3515 = vmatpush1.xpose.msra.mxu0 0.0
    %3516 = vmatprep.subr.mxu0 0.0
    %3517 = vmatpush1.xpose.msra.mxu0 0.0
    %3518 = vmatprep.subr.mxu0 0.0
    %3519 = vmatpush1.xpose.msra.mxu0 0.0
    %3520 = vmatprep.subr.mxu0 0.0
    %3521 = vmatpush1.xpose.msra.mxu0 0.0
    %3522 = vmatprep.subr.mxu0 0.0
    %3523 = vmatpush1.xpose.msra.mxu0 0.0
    %3524 = vmatprep.subr.mxu0 0.0
    %3525 = vmatpush1.xpose.msra.mxu0 0.0
    %3526 = vmatprep.subr.mxu0 0.0
    %3527 = vmatpush1.xpose.msra.mxu0 0.0
    %3528 = vmatprep.subr.mxu0 0.0
    %3529 = vmatpush1.xpose.msra.mxu0 0.0
    %3530 = vmatprep.subr.mxu0 0.0
    %3531 = vmatpush1.xpose.msra.mxu0 0.0
    %3532 = vmatprep.subr.mxu0 0.0
    %3533 = vmatpush1.xpose.msra.mxu0 0.0
    %3534 = vmatprep.subr.mxu0 0.0
    %3535 = vmatpush1.xpose.msra.mxu0 0.0
    %3536 = vmatprep.subr.mxu0 0.0
    %3537 = vmatpush1.xpose.msra.mxu0 0.0
    %3538 = vmatprep.subr.mxu0 0.0
    %3539 = vmatpush1.xpose.msra.mxu0 0.0
    %3540 = vmatprep.subr.mxu0 0.0
    %3541 = vmatpush1.xpose.msra.mxu0 0.0
    %3542 = vmatprep.subr.mxu0 0.0
    %3543 = vmatpush1.xpose.msra.mxu0 0.0
    %3544 = vmatprep.subr.mxu0 0.0
    %3545 = vmatpush1.xpose.msra.mxu0 0.0
    %3546 = vmatprep.subr.mxu0 0.0
    %3547 = vmatpush1.xpose.msra.mxu0 0.0
    %3548 = vmatprep.subr.mxu0 0.0
    %3549 = vmatpush1.xpose.msra.mxu0 0.0
    %3550 = vmatprep.subr.mxu0 0.0
    %3551 = vmatpush1.xpose.msra.mxu0 0.0
    %3552 = vmatprep.subr.mxu0 0.0
    %3553 = vmatpush1.xpose.msra.mxu0 0.0
    %3554 = vmatprep.subr.mxu0 0.0
    %3555 = vmatpush1.xpose.msra.mxu0 0.0
    %3556 = vmatprep.subr.mxu0 0.0
    %3557 = vmatpush1.xpose.msra.mxu0 0.0
    %3558 = vmatprep.subr.mxu0 0.0
    %3559 = vmatpush1.xpose.msra.mxu0 0.0
    %3560 = vmatprep.subr.mxu0 0.0
    %3561 = vmatpush1.xpose.msra.mxu0 0.0
    %3562 = vmatprep.subr.mxu0 0.0
    %3563 = vmatpush1.xpose.msra.mxu0 0.0
    %3564 = vmatprep.subr.mxu0 0.0
    %3565 = vmatpush1.xpose.msra.mxu0 0.0
    %3566 = vmatprep.subr.mxu0 0.0
    %3567 = vmatpush1.xpose.msra.mxu0 0.0
    %3568 = vmatprep.subr.mxu0 0.0
    %3569 = vmatpush1.xpose.msra.mxu0 0.0
    %3570 = vmatprep.subr.mxu0 0.0
    %3571 = vmatpush1.xpose.msra.mxu0 0.0
    %3572 = vmatprep.subr.mxu0 0.0
    %3573 = vmatpush1.xpose.msra.mxu0 0.0
    %3574 = vmatprep.mubr.f32.mxu0 0.0
    %3575 = vmatmul.mubr.f32.gmra.mrb[0].mxu0 %v3502
    %v3576 = vpop.f32.mrb[0].mxu0
    %v3577 = vadd.f32 %v3492, %v3576
    %v3578 = vpop.f32.mrb[0].mxu0
    %3579 = vmatprep.mubr.f32.mxu0 0.0
    %3580 = vmatmul.mubr.f32.gmra.mrb[0].mxu0 %v3504
    %v3581 = vpop.f32.mrb[0].mxu0
    %v3582 = vadd.f32 %v3493, %v3581
    %v3583 = vpop.f32.mrb[0].mxu0
    %3584 = vdwg.mxu0
    %3585 = vrot.lane.b32.xlu0 %v232, 112
    %v3586 = vpop.permute.xlu0 %3585
    %3587 = vrot.lane.b32.xlu0 %v237, 112
    %v3588 = vpop.permute.xlu0 %3587
    %3589 = vrot.lane.b32.xlu0 %v232, 80
    %v3590 = vpop.permute.xlu0 %3589
    %3591 = vrot.lane.b32.xlu0 %v237, 80
    %v3592 = vpop.permute.xlu0 %3591
    %v3593 = vsel %vm308, %v3586, 0
    %v3595 = vsel %vm308, %v3588, 0
    %v3597 = vsel %vm308, %v3590, 0
    %v3599 = vsel %vm308, %v3592, 0
    %3601 = vmatprep.subr.mxu0 0.0
    %3602 = vmatpush1.xpose.msra.mxu0 %v3597
    %3603 = vmatprep.subr.mxu0 0.0
    %3604 = vmatpush1.xpose.msra.mxu0 %v3599
    %3605 = vmatprep.subr.mxu0 0.0
    %3606 = vmatpush1.xpose.msra.mxu0 0.0
    %3607 = vmatprep.subr.mxu0 0.0
    %3608 = vmatpush1.xpose.msra.mxu0 0.0
    %3609 = vmatprep.subr.mxu0 0.0
    %3610 = vmatpush1.xpose.msra.mxu0 0.0
    %3611 = vmatprep.subr.mxu0 0.0
    %3612 = vmatpush1.xpose.msra.mxu0 0.0
    %3613 = vmatprep.subr.mxu0 0.0
    %3614 = vmatpush1.xpose.msra.mxu0 0.0
    %3615 = vmatprep.subr.mxu0 0.0
    %3616 = vmatpush1.xpose.msra.mxu0 0.0
    %3617 = vmatprep.subr.mxu0 0.0
    %3618 = vmatpush1.xpose.msra.mxu0 0.0
    %3619 = vmatprep.subr.mxu0 0.0
    %3620 = vmatpush1.xpose.msra.mxu0 0.0
    %3621 = vmatprep.subr.mxu0 0.0
    %3622 = vmatpush1.xpose.msra.mxu0 0.0
    %3623 = vmatprep.subr.mxu0 0.0
    %3624 = vmatpush1.xpose.msra.mxu0 0.0
    %3625 = vmatprep.subr.mxu0 0.0
    %3626 = vmatpush1.xpose.msra.mxu0 0.0
    %3627 = vmatprep.subr.mxu0 0.0
    %3628 = vmatpush1.xpose.msra.mxu0 0.0
    %3629 = vmatprep.subr.mxu0 0.0
    %3630 = vmatpush1.xpose.msra.mxu0 0.0
    %3631 = vmatprep.subr.mxu0 0.0
    %3632 = vmatpush1.xpose.msra.mxu0 0.0
    %3633 = vmatprep.subr.mxu0 0.0
    %3634 = vmatpush1.xpose.msra.mxu0 0.0
    %3635 = vmatprep.subr.mxu0 0.0
    %3636 = vmatpush1.xpose.msra.mxu0 0.0
    %3637 = vmatprep.subr.mxu0 0.0
    %3638 = vmatpush1.xpose.msra.mxu0 0.0
    %3639 = vmatprep.subr.mxu0 0.0
    %3640 = vmatpush1.xpose.msra.mxu0 0.0
    %3641 = vmatprep.subr.mxu0 0.0
    %3642 = vmatpush1.xpose.msra.mxu0 0.0
    %3643 = vmatprep.subr.mxu0 0.0
    %3644 = vmatpush1.xpose.msra.mxu0 0.0
    %3645 = vmatprep.subr.mxu0 0.0
    %3646 = vmatpush1.xpose.msra.mxu0 0.0
    %3647 = vmatprep.subr.mxu0 0.0
    %3648 = vmatpush1.xpose.msra.mxu0 0.0
    %3649 = vmatprep.subr.mxu0 0.0
    %3650 = vmatpush1.xpose.msra.mxu0 0.0
    %3651 = vmatprep.subr.mxu0 0.0
    %3652 = vmatpush1.xpose.msra.mxu0 0.0
    %3653 = vmatprep.subr.mxu0 0.0
    %3654 = vmatpush1.xpose.msra.mxu0 0.0
    %3655 = vmatprep.subr.mxu0 0.0
    %3656 = vmatpush1.xpose.msra.mxu0 0.0
    %3657 = vmatprep.subr.mxu0 0.0
    %3658 = vmatpush1.xpose.msra.mxu0 0.0
    %3659 = vmatprep.subr.mxu0 0.0
    %3660 = vmatpush1.xpose.msra.mxu0 0.0
    %3661 = vmatprep.subr.mxu0 0.0
    %3662 = vmatpush1.xpose.msra.mxu0 0.0
    %3663 = vmatprep.subr.mxu0 0.0
    %3664 = vmatpush1.xpose.msra.mxu0 0.0
    %3665 = vmatprep.mubr.f32.mxu0 0.0
    %3666 = vmatmul.mubr.f32.gmra.mrb[0].mxu0 %v3593
    %v3667 = vpop.f32.mrb[0].mxu0
    %v3668 = vadd.f32 %v3492, %v3667
    %v3669 = vpop.f32.mrb[0].mxu0
    %3670 = vmatprep.mubr.f32.mxu0 0.0
    %3671 = vmatmul.mubr.f32.gmra.mrb[0].mxu0 %v3595
    %v3672 = vpop.f32.mrb[0].mxu0
    %v3673 = vadd.f32 %v3493, %v3672
    %v3674 = vpop.f32.mrb[0].mxu0
    %3675 = vdwg.mxu0
    %3676 = vrot.lane.b32.xlu0 %v242, 112
    %v3677 = vpop.permute.xlu0 %3676
    %3678 = vrot.lane.b32.xlu0 %v247, 112
    %v3679 = vpop.permute.xlu0 %3678
    %3680 = vrot.lane.b32.xlu0 %v242, 80
    %v3681 = vpop.permute.xlu0 %3680
    %3682 = vrot.lane.b32.xlu0 %v247, 80
    %v3683 = vpop.permute.xlu0 %3682
    %v3684 = vsel %vm308, %v3677, 0
    %v3686 = vsel %vm308, %v3679, 0
    %v3688 = vsel %vm308, %v3681, 0
    %v3690 = vsel %vm308, %v3683, 0
    %3692 = vmatprep.subr.mxu0 0.0
    %3693 = vmatpush1.xpose.msra.mxu0 %v3688
    %3694 = vmatprep.subr.mxu0 0.0
    %3695 = vmatpush1.xpose.msra.mxu0 %v3690
    %3696 = vmatprep.subr.mxu0 0.0
    %3697 = vmatpush1.xpose.msra.mxu0 0.0
    %3698 = vmatprep.subr.mxu0 0.0
    %3699 = vmatpush1.xpose.msra.mxu0 0.0
    %3700 = vmatprep.subr.mxu0 0.0
    %3701 = vmatpush1.xpose.msra.mxu0 0.0
    %3702 = vmatprep.subr.mxu0 0.0
    %3703 = vmatpush1.xpose.msra.mxu0 0.0
    %3704 = vmatprep.subr.mxu0 0.0
    %3705 = vmatpush1.xpose.msra.mxu0 0.0
    %3706 = vmatprep.subr.mxu0 0.0
    %3707 = vmatpush1.xpose.msra.mxu0 0.0
    %3708 = vmatprep.subr.mxu0 0.0
    %3709 = vmatpush1.xpose.msra.mxu0 0.0
    %3710 = vmatprep.subr.mxu0 0.0
    %3711 = vmatpush1.xpose.msra.mxu0 0.0
    %3712 = vmatprep.subr.mxu0 0.0
    %3713 = vmatpush1.xpose.msra.mxu0 0.0
    %3714 = vmatprep.subr.mxu0 0.0
    %3715 = vmatpush1.xpose.msra.mxu0 0.0
    %3716 = vmatprep.subr.mxu0 0.0
    %3717 = vmatpush1.xpose.msra.mxu0 0.0
    %3718 = vmatprep.subr.mxu0 0.0
    %3719 = vmatpush1.xpose.msra.mxu0 0.0
    %3720 = vmatprep.subr.mxu0 0.0
    %3721 = vmatpush1.xpose.msra.mxu0 0.0
    %3722 = vmatprep.subr.mxu0 0.0
    %3723 = vmatpush1.xpose.msra.mxu0 0.0
    %3724 = vmatprep.subr.mxu0 0.0
    %3725 = vmatpush1.xpose.msra.mxu0 0.0
    %3726 = vmatprep.subr.mxu0 0.0
    %3727 = vmatpush1.xpose.msra.mxu0 0.0
    %3728 = vmatprep.subr.mxu0 0.0
    %3729 = vmatpush1.xpose.msra.mxu0 0.0
    %3730 = vmatprep.subr.mxu0 0.0
    %3731 = vmatpush1.xpose.msra.mxu0 0.0
    %3732 = vmatprep.subr.mxu0 0.0
    %3733 = vmatpush1.xpose.msra.mxu0 0.0
    %3734 = vmatprep.subr.mxu0 0.0
    %3735 = vmatpush1.xpose.msra.mxu0 0.0
    %3736 = vmatprep.subr.mxu0 0.0
    %3737 = vmatpush1.xpose.msra.mxu0 0.0
    %3738 = vmatprep.subr.mxu0 0.0
    %3739 = vmatpush1.xpose.msra.mxu0 0.0
    %3740 = vmatprep.subr.mxu0 0.0
    %3741 = vmatpush1.xpose.msra.mxu0 0.0
    %3742 = vmatprep.subr.mxu0 0.0
    %3743 = vmatpush1.xpose.msra.mxu0 0.0
    %3744 = vmatprep.subr.mxu0 0.0
    %3745 = vmatpush1.xpose.msra.mxu0 0.0
    %3746 = vmatprep.subr.mxu0 0.0
    %3747 = vmatpush1.xpose.msra.mxu0 0.0
    %3748 = vmatprep.subr.mxu0 0.0
    %3749 = vmatpush1.xpose.msra.mxu0 0.0
    %3750 = vmatprep.subr.mxu0 0.0
    %3751 = vmatpush1.xpose.msra.mxu0 0.0
    %3752 = vmatprep.subr.mxu0 0.0
    %3753 = vmatpush1.xpose.msra.mxu0 0.0
    %3754 = vmatprep.subr.mxu0 0.0
    %3755 = vmatpush1.xpose.msra.mxu0 0.0
    %3756 = vmatprep.mubr.f32.mxu0 0.0
    %3757 = vmatmul.mubr.f32.gmra.mrb[0].mxu0 %v3684
    %v3758 = vpop.f32.mrb[0].mxu0
    %v3759 = vadd.f32 %v3492, %v3758
    %v3760 = vpop.f32.mrb[0].mxu0
    %3761 = vmatprep.mubr.f32.mxu0 0.0
    %3762 = vmatmul.mubr.f32.gmra.mrb[0].mxu0 %v3686
    %v3763 = vpop.f32.mrb[0].mxu0
    %v3764 = vadd.f32 %v3493, %v3763
    %v3765 = vpop.f32.mrb[0].mxu0
    %3766 = vdwg.mxu0
    %3767 = vrot.lane.b32.xlu0 %v252, 112
    %v3768 = vpop.permute.xlu0 %3767
    %3769 = vrot.lane.b32.xlu0 %v257, 112
    %v3770 = vpop.permute.xlu0 %3769
    %3771 = vrot.lane.b32.xlu0 %v252, 80
    %v3772 = vpop.permute.xlu0 %3771
    %3773 = vrot.lane.b32.xlu0 %v257, 80
    %v3774 = vpop.permute.xlu0 %3773
    %v3775 = vsel %vm308, %v3768, 0
    %v3777 = vsel %vm308, %v3770, 0
    %v3779 = vsel %vm308, %v3772, 0
    %v3781 = vsel %vm308, %v3774, 0
    %3783 = vmatprep.subr.mxu0 0.0
    %3784 = vmatpush1.xpose.msra.mxu0 %v3779
    %3785 = vmatprep.subr.mxu0 0.0
    %3786 = vmatpush1.xpose.msra.mxu0 %v3781
    %3787 = vmatprep.subr.mxu0 0.0
    %3788 = vmatpush1.xpose.msra.mxu0 0.0
    %3789 = vmatprep.subr.mxu0 0.0
    %3790 = vmatpush1.xpose.msra.mxu0 0.0
    %3791 = vmatprep.subr.mxu0 0.0
    %3792 = vmatpush1.xpose.msra.mxu0 0.0
    %3793 = vmatprep.subr.mxu0 0.0
    %3794 = vmatpush1.xpose.msra.mxu0 0.0
    %3795 = vmatprep.subr.mxu0 0.0
    %3796 = vmatpush1.xpose.msra.mxu0 0.0
    %3797 = vmatprep.subr.mxu0 0.0
    %3798 = vmatpush1.xpose.msra.mxu0 0.0
    %3799 = vmatprep.subr.mxu0 0.0
    %3800 = vmatpush1.xpose.msra.mxu0 0.0
    %3801 = vmatprep.subr.mxu0 0.0
    %3802 = vmatpush1.xpose.msra.mxu0 0.0
    %3803 = vmatprep.subr.mxu0 0.0
    %3804 = vmatpush1.xpose.msra.mxu0 0.0
    %3805 = vmatprep.subr.mxu0 0.0
    %3806 = vmatpush1.xpose.msra.mxu0 0.0
    %3807 = vmatprep.subr.mxu0 0.0
    %3808 = vmatpush1.xpose.msra.mxu0 0.0
    %3809 = vmatprep.subr.mxu0 0.0
    %3810 = vmatpush1.xpose.msra.mxu0 0.0
    %3811 = vmatprep.subr.mxu0 0.0
    %3812 = vmatpush1.xpose.msra.mxu0 0.0
    %3813 = vmatprep.subr.mxu0 0.0
    %3814 = vmatpush1.xpose.msra.mxu0 0.0
    %3815 = vmatprep.subr.mxu0 0.0
    %3816 = vmatpush1.xpose.msra.mxu0 0.0
    %3817 = vmatprep.subr.mxu0 0.0
    %3818 = vmatpush1.xpose.msra.mxu0 0.0
    %3819 = vmatprep.subr.mxu0 0.0
    %3820 = vmatpush1.xpose.msra.mxu0 0.0
    %3821 = vmatprep.subr.mxu0 0.0
    %3822 = vmatpush1.xpose.msra.mxu0 0.0
    %3823 = vmatprep.subr.mxu0 0.0
    %3824 = vmatpush1.xpose.msra.mxu0 0.0
    %3825 = vmatprep.subr.mxu0 0.0
    %3826 = vmatpush1.xpose.msra.mxu0 0.0
    %3827 = vmatprep.subr.mxu0 0.0
    %3828 = vmatpush1.xpose.msra.mxu0 0.0
    %3829 = vmatprep.subr.mxu0 0.0
    %3830 = vmatpush1.xpose.msra.mxu0 0.0
    %3831 = vmatprep.subr.mxu0 0.0
    %3832 = vmatpush1.xpose.msra.mxu0 0.0
    %3833 = vmatprep.subr.mxu0 0.0
    %3834 = vmatpush1.xpose.msra.mxu0 0.0
    %3835 = vmatprep.subr.mxu0 0.0
    %3836 = vmatpush1.xpose.msra.mxu0 0.0
    %3837 = vmatprep.subr.mxu0 0.0
    %3838 = vmatpush1.xpose.msra.mxu0 0.0
    %3839 = vmatprep.subr.mxu0 0.0
    %3840 = vmatpush1.xpose.msra.mxu0 0.0
    %3841 = vmatprep.subr.mxu0 0.0
    %3842 = vmatpush1.xpose.msra.mxu0 0.0
    %3843 = vmatprep.subr.mxu0 0.0
    %3844 = vmatpush1.xpose.msra.mxu0 0.0
    %3845 = vmatprep.subr.mxu0 0.0
    %3846 = vmatpush1.xpose.msra.mxu0 0.0
    %3847 = vmatprep.mubr.f32.mxu0 0.0
    %3848 = vmatmul.mubr.f32.gmra.mrb[0].mxu0 %v3775
    %v3849 = vpop.f32.mrb[0].mxu0
    %v3850 = vadd.f32 %v3492, %v3849
    %v3851 = vpop.f32.mrb[0].mxu0
    %3852 = vmatprep.mubr.f32.mxu0 0.0
    %3853 = vmatmul.mubr.f32.gmra.mrb[0].mxu0 %v3777
    %v3854 = vpop.f32.mrb[0].mxu0
    %v3855 = vadd.f32 %v3493, %v3854
    %v3856 = vpop.f32.mrb[0].mxu0
    %3857 = vdwg.mxu0
    %3858 = vrot.lane.b32.xlu0 %v262, 112
    %v3859 = vpop.permute.xlu0 %3858
    %3860 = vrot.lane.b32.xlu0 %v267, 112
    %v3861 = vpop.permute.xlu0 %3860
    %3862 = vrot.lane.b32.xlu0 %v262, 80
    %v3863 = vpop.permute.xlu0 %3862
    %3864 = vrot.lane.b32.xlu0 %v267, 80
    %v3865 = vpop.permute.xlu0 %3864
    %v3866 = vsel %vm308, %v3859, 0
    %v3868 = vsel %vm308, %v3861, 0
    %v3870 = vsel %vm308, %v3863, 0
    %v3872 = vsel %vm308, %v3865, 0
    %3874 = vmatprep.subr.mxu0 0.0
    %3875 = vmatpush1.xpose.msra.mxu0 %v3870
    %3876 = vmatprep.subr.mxu0 0.0
    %3877 = vmatpush1.xpose.msra.mxu0 %v3872
    %3878 = vmatprep.subr.mxu0 0.0
    %3879 = vmatpush1.xpose.msra.mxu0 0.0
    %3880 = vmatprep.subr.mxu0 0.0
    %3881 = vmatpush1.xpose.msra.mxu0 0.0
    %3882 = vmatprep.subr.mxu0 0.0
    %3883 = vmatpush1.xpose.msra.mxu0 0.0
    %3884 = vmatprep.subr.mxu0 0.0
    %3885 = vmatpush1.xpose.msra.mxu0 0.0
    %3886 = vmatprep.subr.mxu0 0.0
    %3887 = vmatpush1.xpose.msra.mxu0 0.0
    %3888 = vmatprep.subr.mxu0 0.0
    %3889 = vmatpush1.xpose.msra.mxu0 0.0
    %3890 = vmatprep.subr.mxu0 0.0
    %3891 = vmatpush1.xpose.msra.mxu0 0.0
    %3892 = vmatprep.subr.mxu0 0.0
    %3893 = vmatpush1.xpose.msra.mxu0 0.0
    %3894 = vmatprep.subr.mxu0 0.0
    %3895 = vmatpush1.xpose.msra.mxu0 0.0
    %3896 = vmatprep.subr.mxu0 0.0
    %3897 = vmatpush1.xpose.msra.mxu0 0.0
    %3898 = vmatprep.subr.mxu0 0.0
    %3899 = vmatpush1.xpose.msra.mxu0 0.0
    %3900 = vmatprep.subr.mxu0 0.0
    %3901 = vmatpush1.xpose.msra.mxu0 0.0
    %3902 = vmatprep.subr.mxu0 0.0
    %3903 = vmatpush1.xpose.msra.mxu0 0.0
    %3904 = vmatprep.subr.mxu0 0.0
    %3905 = vmatpush1.xpose.msra.mxu0 0.0
    %3906 = vmatprep.subr.mxu0 0.0
    %3907 = vmatpush1.xpose.msra.mxu0 0.0
    %3908 = vmatprep.subr.mxu0 0.0
    %3909 = vmatpush1.xpose.msra.mxu0 0.0
    %3910 = vmatprep.subr.mxu0 0.0
    %3911 = vmatpush1.xpose.msra.mxu0 0.0
    %3912 = vmatprep.subr.mxu0 0.0
    %3913 = vmatpush1.xpose.msra.mxu0 0.0
    %3914 = vmatprep.subr.mxu0 0.0
    %3915 = vmatpush1.xpose.msra.mxu0 0.0
    %3916 = vmatprep.subr.mxu0 0.0
    %3917 = vmatpush1.xpose.msra.mxu0 0.0
    %3918 = vmatprep.subr.mxu0 0.0
    %3919 = vmatpush1.xpose.msra.mxu0 0.0
    %3920 = vmatprep.subr.mxu0 0.0
    %3921 = vmatpush1.xpose.msra.mxu0 0.0
    %3922 = vmatprep.subr.mxu0 0.0
    %3923 = vmatpush1.xpose.msra.mxu0 0.0
    %3924 = vmatprep.subr.mxu0 0.0
    %3925 = vmatpush1.xpose.msra.mxu0 0.0
    %3926 = vmatprep.subr.mxu0 0.0
    %3927 = vmatpush1.xpose.msra.mxu0 0.0
    %3928 = vmatprep.subr.mxu0 0.0
    %3929 = vmatpush1.xpose.msra.mxu0 0.0
    %3930 = vmatprep.subr.mxu0 0.0
    %3931 = vmatpush1.xpose.msra.mxu0 0.0
    %3932 = vmatprep.subr.mxu0 0.0
    %3933 = vmatpush1.xpose.msra.mxu0 0.0
    %3934 = vmatprep.subr.mxu0 0.0
    %3935 = vmatpush1.xpose.msra.mxu0 0.0
    %3936 = vmatprep.subr.mxu0 0.0
    %3937 = vmatpush1.xpose.msra.mxu0 0.0
    %3938 = vmatprep.mubr.f32.mxu0 0.0
    %3939 = vmatmul.mubr.f32.gmra.mrb[0].mxu0 %v3866
    %v3940 = vpop.f32.mrb[0].mxu0
    %v3941 = vadd.f32 %v3492, %v3940
    %v3942 = vpop.f32.mrb[0].mxu0
    %3943 = vmatprep.mubr.f32.mxu0 0.0
    %3944 = vmatmul.mubr.f32.gmra.mrb[0].mxu0 %v3868
    %v3945 = vpop.f32.mrb[0].mxu0
    %v3946 = vadd.f32 %v3493, %v3945
    %v3947 = vpop.f32.mrb[0].mxu0
    %3948 = vdwg.mxu0
    %3949 = vrot.lane.b32.xlu0 %v272, 112
    %v3950 = vpop.permute.xlu0 %3949
    %3951 = vrot.lane.b32.xlu0 %v277, 112
    %v3952 = vpop.permute.xlu0 %3951
    %3953 = vrot.lane.b32.xlu0 %v272, 80
    %v3954 = vpop.permute.xlu0 %3953
    %3955 = vrot.lane.b32.xlu0 %v277, 80
    %v3956 = vpop.permute.xlu0 %3955
    %v3957 = vsel %vm308, %v3950, 0
    %v3959 = vsel %vm308, %v3952, 0
    %v3961 = vsel %vm308, %v3954, 0
    %v3963 = vsel %vm308, %v3956, 0
    %3965 = vmatprep.subr.mxu0 0.0
    %3966 = vmatpush1.xpose.msra.mxu0 %v3961
    %3967 = vmatprep.subr.mxu0 0.0
    %3968 = vmatpush1.xpose.msra.mxu0 %v3963
    %3969 = vmatprep.subr.mxu0 0.0
    %3970 = vmatpush1.xpose.msra.mxu0 0.0
    %3971 = vmatprep.subr.mxu0 0.0
    %3972 = vmatpush1.xpose.msra.mxu0 0.0
    %3973 = vmatprep.subr.mxu0 0.0
    %3974 = vmatpush1.xpose.msra.mxu0 0.0
    %3975 = vmatprep.subr.mxu0 0.0
    %3976 = vmatpush1.xpose.msra.mxu0 0.0
    %3977 = vmatprep.subr.mxu0 0.0
    %3978 = vmatpush1.xpose.msra.mxu0 0.0
    %3979 = vmatprep.subr.mxu0 0.0
    %3980 = vmatpush1.xpose.msra.mxu0 0.0
    %3981 = vmatprep.subr.mxu0 0.0
    %3982 = vmatpush1.xpose.msra.mxu0 0.0
    %3983 = vmatprep.subr.mxu0 0.0
    %3984 = vmatpush1.xpose.msra.mxu0 0.0
    %3985 = vmatprep.subr.mxu0 0.0
    %3986 = vmatpush1.xpose.msra.mxu0 0.0
    %3987 = vmatprep.subr.mxu0 0.0
    %3988 = vmatpush1.xpose.msra.mxu0 0.0
    %3989 = vmatprep.subr.mxu0 0.0
    %3990 = vmatpush1.xpose.msra.mxu0 0.0
    %3991 = vmatprep.subr.mxu0 0.0
    %3992 = vmatpush1.xpose.msra.mxu0 0.0
    %3993 = vmatprep.subr.mxu0 0.0
    %3994 = vmatpush1.xpose.msra.mxu0 0.0
    %3995 = vmatprep.subr.mxu0 0.0
    %3996 = vmatpush1.xpose.msra.mxu0 0.0
    %3997 = vmatprep.subr.mxu0 0.0
    %3998 = vmatpush1.xpose.msra.mxu0 0.0
    %3999 = vmatprep.subr.mxu0 0.0
    %4000 = vmatpush1.xpose.msra.mxu0 0.0
    %4001 = vmatprep.subr.mxu0 0.0
    %4002 = vmatpush1.xpose.msra.mxu0 0.0
    %4003 = vmatprep.subr.mxu0 0.0
    %4004 = vmatpush1.xpose.msra.mxu0 0.0
    %4005 = vmatprep.subr.mxu0 0.0
    %4006 = vmatpush1.xpose.msra.mxu0 0.0
    %4007 = vmatprep.subr.mxu0 0.0
    %4008 = vmatpush1.xpose.msra.mxu0 0.0
    %4009 = vmatprep.subr.mxu0 0.0
    %4010 = vmatpush1.xpose.msra.mxu0 0.0
    %4011 = vmatprep.subr.mxu0 0.0
    %4012 = vmatpush1.xpose.msra.mxu0 0.0
    %4013 = vmatprep.subr.mxu0 0.0
    %4014 = vmatpush1.xpose.msra.mxu0 0.0
    %4015 = vmatprep.subr.mxu0 0.0
    %4016 = vmatpush1.xpose.msra.mxu0 0.0
    %4017 = vmatprep.subr.mxu0 0.0
    %4018 = vmatpush1.xpose.msra.mxu0 0.0
    %4019 = vmatprep.subr.mxu0 0.0
    %4020 = vmatpush1.xpose.msra.mxu0 0.0
    %4021 = vmatprep.subr.mxu0 0.0
    %4022 = vmatpush1.xpose.msra.mxu0 0.0
    %4023 = vmatprep.subr.mxu0 0.0
    %4024 = vmatpush1.xpose.msra.mxu0 0.0
    %4025 = vmatprep.subr.mxu0 0.0
    %4026 = vmatpush1.xpose.msra.mxu0 0.0
    %4027 = vmatprep.subr.mxu0 0.0
    %4028 = vmatpush1.xpose.msra.mxu0 0.0
    %4029 = vmatprep.mubr.f32.mxu0 0.0
    %4030 = vmatmul.mubr.f32.gmra.mrb[0].mxu0 %v3957
    %v4031 = vpop.f32.mrb[0].mxu0
    %v4032 = vadd.f32 %v3492, %v4031
    %v4033 = vpop.f32.mrb[0].mxu0
    %4034 = vmatprep.mubr.f32.mxu0 0.0
    %4035 = vmatmul.mubr.f32.gmra.mrb[0].mxu0 %v3959
    %v4036 = vpop.f32.mrb[0].mxu0
    %v4037 = vadd.f32 %v3493, %v4036
    %v4038 = vpop.f32.mrb[0].mxu0
    %4039 = vdwg.mxu0
    %4040 = vrot.lane.b32.xlu0 %v282, 112
    %v4041 = vpop.permute.xlu0 %4040
    %4042 = vrot.lane.b32.xlu0 %v287, 112
    %v4043 = vpop.permute.xlu0 %4042
    %4044 = vrot.lane.b32.xlu0 %v282, 80
    %v4045 = vpop.permute.xlu0 %4044
    %4046 = vrot.lane.b32.xlu0 %v287, 80
    %v4047 = vpop.permute.xlu0 %4046
    %v4048 = vsel %vm308, %v4041, 0
    %v4050 = vsel %vm308, %v4043, 0
    %v4052 = vsel %vm308, %v4045, 0
    %v4054 = vsel %vm308, %v4047, 0
    %4056 = vmatprep.subr.mxu0 0.0
    %4057 = vmatpush1.xpose.msra.mxu0 %v4052
    %4058 = vmatprep.subr.mxu0 0.0
    %4059 = vmatpush1.xpose.msra.mxu0 %v4054
    %4060 = vmatprep.subr.mxu0 0.0
    %4061 = vmatpush1.xpose.msra.mxu0 0.0
    %4062 = vmatprep.subr.mxu0 0.0
    %4063 = vmatpush1.xpose.msra.mxu0 0.0
    %4064 = vmatprep.subr.mxu0 0.0
    %4065 = vmatpush1.xpose.msra.mxu0 0.0
    %4066 = vmatprep.subr.mxu0 0.0
    %4067 = vmatpush1.xpose.msra.mxu0 0.0
    %4068 = vmatprep.subr.mxu0 0.0
    %4069 = vmatpush1.xpose.msra.mxu0 0.0
    %4070 = vmatprep.subr.mxu0 0.0
    %4071 = vmatpush1.xpose.msra.mxu0 0.0
    %4072 = vmatprep.subr.mxu0 0.0
    %4073 = vmatpush1.xpose.msra.mxu0 0.0
    %4074 = vmatprep.subr.mxu0 0.0
    %4075 = vmatpush1.xpose.msra.mxu0 0.0
    %4076 = vmatprep.subr.mxu0 0.0
    %4077 = vmatpush1.xpose.msra.mxu0 0.0
    %4078 = vmatprep.subr.mxu0 0.0
    %4079 = vmatpush1.xpose.msra.mxu0 0.0
    %4080 = vmatprep.subr.mxu0 0.0
    %4081 = vmatpush1.xpose.msra.mxu0 0.0
    %4082 = vmatprep.subr.mxu0 0.0
    %4083 = vmatpush1.xpose.msra.mxu0 0.0
    %4084 = vmatprep.subr.mxu0 0.0
    %4085 = vmatpush1.xpose.msra.mxu0 0.0
    %4086 = vmatprep.subr.mxu0 0.0
    %4087 = vmatpush1.xpose.msra.mxu0 0.0
    %4088 = vmatprep.subr.mxu0 0.0
    %4089 = vmatpush1.xpose.msra.mxu0 0.0
    %4090 = vmatprep.subr.mxu0 0.0
    %4091 = vmatpush1.xpose.msra.mxu0 0.0
    %4092 = vmatprep.subr.mxu0 0.0
    %4093 = vmatpush1.xpose.msra.mxu0 0.0
    %4094 = vmatprep.subr.mxu0 0.0
    %4095 = vmatpush1.xpose.msra.mxu0 0.0
    %4096 = vmatprep.subr.mxu0 0.0
    %4097 = vmatpush1.xpose.msra.mxu0 0.0
    %4098 = vmatprep.subr.mxu0 0.0
    %4099 = vmatpush1.xpose.msra.mxu0 0.0
    %4100 = vmatprep.subr.mxu0 0.0
    %4101 = vmatpush1.xpose.msra.mxu0 0.0
    %4102 = vmatprep.subr.mxu0 0.0
    %4103 = vmatpush1.xpose.msra.mxu0 0.0
    %4104 = vmatprep.subr.mxu0 0.0
    %4105 = vmatpush1.xpose.msra.mxu0 0.0
    %4106 = vmatprep.subr.mxu0 0.0
    %4107 = vmatpush1.xpose.msra.mxu0 0.0
    %4108 = vmatprep.subr.mxu0 0.0
    %4109 = vmatpush1.xpose.msra.mxu0 0.0
    %4110 = vmatprep.subr.mxu0 0.0
    %4111 = vmatpush1.xpose.msra.mxu0 0.0
    %4112 = vmatprep.subr.mxu0 0.0
    %4113 = vmatpush1.xpose.msra.mxu0 0.0
    %4114 = vmatprep.subr.mxu0 0.0
    %4115 = vmatpush1.xpose.msra.mxu0 0.0
    %4116 = vmatprep.subr.mxu0 0.0
    %4117 = vmatpush1.xpose.msra.mxu0 0.0
    %4118 = vmatprep.subr.mxu0 0.0
    %4119 = vmatpush1.xpose.msra.mxu0 0.0
    %4120 = vmatprep.mubr.f32.mxu0 0.0
    %4121 = vmatmul.mubr.f32.gmra.mrb[0].mxu0 %v4048
    %v4122 = vpop.f32.mrb[0].mxu0
    %v4123 = vadd.f32 %v3492, %v4122
    %v4124 = vpop.f32.mrb[0].mxu0
    %4125 = vmatprep.mubr.f32.mxu0 0.0
    %4126 = vmatmul.mubr.f32.gmra.mrb[0].mxu0 %v4050
    %v4127 = vpop.f32.mrb[0].mxu0
    %v4128 = vadd.f32 %v3493, %v4127
    %v4129 = vpop.f32.mrb[0].mxu0
    %4130 = vdwg.mxu0
    %4131 = vrot.lane.b32.xlu0 %v292, 112
    %v4132 = vpop.permute.xlu0 %4131
    %4133 = vrot.lane.b32.xlu0 %v297, 112
    %v4134 = vpop.permute.xlu0 %4133
    %4135 = vrot.lane.b32.xlu0 %v292, 80
    %v4136 = vpop.permute.xlu0 %4135
    %4137 = vrot.lane.b32.xlu0 %v297, 80
    %v4138 = vpop.permute.xlu0 %4137
    %v4139 = vsel %vm308, %v4132, 0
    %v4141 = vsel %vm308, %v4134, 0
    %v4143 = vsel %vm308, %v4136, 0
    %v4145 = vsel %vm308, %v4138, 0
    %4147 = vmatprep.subr.mxu0 0.0
    %4148 = vmatpush1.xpose.msra.mxu0 %v4143
    %4149 = vmatprep.subr.mxu0 0.0
    %4150 = vmatpush1.xpose.msra.mxu0 %v4145
    %4151 = vmatprep.subr.mxu0 0.0
    %4152 = vmatpush1.xpose.msra.mxu0 0.0
    %4153 = vmatprep.subr.mxu0 0.0
    %4154 = vmatpush1.xpose.msra.mxu0 0.0
    %4155 = vmatprep.subr.mxu0 0.0
    %4156 = vmatpush1.xpose.msra.mxu0 0.0
    %4157 = vmatprep.subr.mxu0 0.0
    %4158 = vmatpush1.xpose.msra.mxu0 0.0
    %4159 = vmatprep.subr.mxu0 0.0
    %4160 = vmatpush1.xpose.msra.mxu0 0.0
    %4161 = vmatprep.subr.mxu0 0.0
    %4162 = vmatpush1.xpose.msra.mxu0 0.0
    %4163 = vmatprep.subr.mxu0 0.0
    %4164 = vmatpush1.xpose.msra.mxu0 0.0
    %4165 = vmatprep.subr.mxu0 0.0
    %4166 = vmatpush1.xpose.msra.mxu0 0.0
    %4167 = vmatprep.subr.mxu0 0.0
    %4168 = vmatpush1.xpose.msra.mxu0 0.0
    %4169 = vmatprep.subr.mxu0 0.0
    %4170 = vmatpush1.xpose.msra.mxu0 0.0
    %4171 = vmatprep.subr.mxu0 0.0
    %4172 = vmatpush1.xpose.msra.mxu0 0.0
    %4173 = vmatprep.subr.mxu0 0.0
    %4174 = vmatpush1.xpose.msra.mxu0 0.0
    %4175 = vmatprep.subr.mxu0 0.0
    %4176 = vmatpush1.xpose.msra.mxu0 0.0
    %4177 = vmatprep.subr.mxu0 0.0
    %4178 = vmatpush1.xpose.msra.mxu0 0.0
    %4179 = vmatprep.subr.mxu0 0.0
    %4180 = vmatpush1.xpose.msra.mxu0 0.0
    %4181 = vmatprep.subr.mxu0 0.0
    %4182 = vmatpush1.xpose.msra.mxu0 0.0
    %4183 = vmatprep.subr.mxu0 0.0
    %4184 = vmatpush1.xpose.msra.mxu0 0.0
    %4185 = vmatprep.subr.mxu0 0.0
    %4186 = vmatpush1.xpose.msra.mxu0 0.0
    %4187 = vmatprep.subr.mxu0 0.0
    %4188 = vmatpush1.xpose.msra.mxu0 0.0
    %4189 = vmatprep.subr.mxu0 0.0
    %4190 = vmatpush1.xpose.msra.mxu0 0.0
    %4191 = vmatprep.subr.mxu0 0.0
    %4192 = vmatpush1.xpose.msra.mxu0 0.0
    %4193 = vmatprep.subr.mxu0 0.0
    %4194 = vmatpush1.xpose.msra.mxu0 0.0
    %4195 = vmatprep.subr.mxu0 0.0
    %4196 = vmatpush1.xpose.msra.mxu0 0.0
    %4197 = vmatprep.subr.mxu0 0.0
    %4198 = vmatpush1.xpose.msra.mxu0 0.0
    %4199 = vmatprep.subr.mxu0 0.0
    %4200 = vmatpush1.xpose.msra.mxu0 0.0
    %4201 = vmatprep.subr.mxu0 0.0
    %4202 = vmatpush1.xpose.msra.mxu0 0.0
    %4203 = vmatprep.subr.mxu0 0.0
    %4204 = vmatpush1.xpose.msra.mxu0 0.0
    %4205 = vmatprep.subr.mxu0 0.0
    %4206 = vmatpush1.xpose.msra.mxu0 0.0
    %4207 = vmatprep.subr.mxu0 0.0
    %4208 = vmatpush1.xpose.msra.mxu0 0.0
    %4209 = vmatprep.subr.mxu0 0.0
    %4210 = vmatpush1.xpose.msra.mxu0 0.0
    %4211 = vmatprep.mubr.f32.mxu0 0.0
    %4212 = vmatmul.mubr.f32.gmra.mrb[0].mxu0 %v4139
    %v4213 = vpop.f32.mrb[0].mxu0
    %v4214 = vadd.f32 %v3492, %v4213
    %v4215 = vpop.f32.mrb[0].mxu0
    %4216 = vmatprep.mubr.f32.mxu0 0.0
    %4217 = vmatmul.mubr.f32.gmra.mrb[0].mxu0 %v4141
    %v4218 = vpop.f32.mrb[0].mxu0
    %v4219 = vadd.f32 %v3493, %v4218
    %v4220 = vpop.f32.mrb[0].mxu0
    %4221 = vdwg.mxu0
    %v4222 = vsel %vm1015, %v3577, -inf
    %4223 = vmax.xlane.f32.xlu0 %v4222
    %v4224 = vpop.xlane.xlu0 %4223
    %v4225 = vsel %vm1015, %v3582, -inf
    %4226 = vmax.xlane.f32.xlu0 %v4225
    %v4227 = vpop.xlane.xlu0 %4226
    %v4228 = vsel %vm1015, %v3668, -inf
    %4229 = vmax.xlane.f32.xlu0 %v4228
    %v4230 = vpop.xlane.xlu0 %4229
    %v4231 = vsel %vm1015, %v3673, -inf
    %4232 = vmax.xlane.f32.xlu0 %v4231
    %v4233 = vpop.xlane.xlu0 %4232
    %v4234 = vsel %vm1015, %v3759, -inf
    %4235 = vmax.xlane.f32.xlu0 %v4234
    %v4236 = vpop.xlane.xlu0 %4235
    %v4237 = vsel %vm1015, %v3764, -inf
    %4238 = vmax.xlane.f32.xlu0 %v4237
    %v4239 = vpop.xlane.xlu0 %4238
    %v4240 = vsel %vm1015, %v3850, -inf
    %4241 = vmax.xlane.f32.xlu0 %v4240
    %v4242 = vpop.xlane.xlu0 %4241
    %v4243 = vsel %vm1015, %v3855, -inf
    %4244 = vmax.xlane.f32.xlu0 %v4243
    %v4245 = vpop.xlane.xlu0 %4244
    %v4246 = vsel %vm1015, %v3941, -inf
    %4247 = vmax.xlane.f32.xlu0 %v4246
    %v4248 = vpop.xlane.xlu0 %4247
    %v4249 = vsel %vm1015, %v3946, -inf
    %4250 = vmax.xlane.f32.xlu0 %v4249
    %v4251 = vpop.xlane.xlu0 %4250
    %v4252 = vsel %vm1015, %v4032, -inf
    %4253 = vmax.xlane.f32.xlu0 %v4252
    %v4254 = vpop.xlane.xlu0 %4253
    %v4255 = vsel %vm1015, %v4037, -inf
    %4256 = vmax.xlane.f32.xlu0 %v4255
    %v4257 = vpop.xlane.xlu0 %4256
    %v4258 = vsel %vm1015, %v4123, -inf
    %4259 = vmax.xlane.f32.xlu0 %v4258
    %v4260 = vpop.xlane.xlu0 %4259
    %v4261 = vsel %vm1015, %v4128, -inf
    %4262 = vmax.xlane.f32.xlu0 %v4261
    %v4263 = vpop.xlane.xlu0 %4262
    %v4264 = vsel %vm1015, %v4214, -inf
    %4265 = vmax.xlane.f32.xlu0 %v4264
    %v4266 = vpop.xlane.xlu0 %4265
    %v4267 = vsel %vm1015, %v4219, -inf
    %4268 = vmax.xlane.f32.xlu0 %v4267
    %v4269 = vpop.xlane.xlu0 %4268
    %v4270 = vsub.f32 %v3577, %v4224
    %v4271 = vsub.f32 %v3582, %v4227
    %v4272 = vsub.f32 %v3668, %v4230
    %v4273 = vsub.f32 %v3673, %v4233
    %v4274 = vsub.f32 %v3759, %v4236
    %v4275 = vsub.f32 %v3764, %v4239
    %v4276 = vsub.f32 %v3850, %v4242
    %v4277 = vsub.f32 %v3855, %v4245
    %v4278 = vsub.f32 %v3941, %v4248
    %v4279 = vsub.f32 %v3946, %v4251
    %v4280 = vsub.f32 %v4032, %v4254
    %v4281 = vsub.f32 %v4037, %v4257
    %v4282 = vsub.f32 %v4123, %v4260
    %v4283 = vsub.f32 %v4128, %v4263
    %v4284 = vsub.f32 %v4214, %v4266
    %v4285 = vsub.f32 %v4219, %v4269
    %v4286 = vmul.f32 %v4270, 1.442695
    %v4287 = vpow.pop %v4286
    %v4288 = vmul.f32 %v4271, 1.442695
    %v4289 = vpow.pop %v4288
    %v4290 = vmul.f32 %v4272, 1.442695
    %v4291 = vpow.pop %v4290
    %v4292 = vmul.f32 %v4273, 1.442695
    %v4293 = vpow.pop %v4292
    %v4294 = vmul.f32 %v4274, 1.442695
    %v4295 = vpow.pop %v4294
    %v4296 = vmul.f32 %v4275, 1.442695
    %v4297 = vpow.pop %v4296
    %v4298 = vmul.f32 %v4276, 1.442695
    %v4299 = vpow.pop %v4298
    %v4300 = vmul.f32 %v4277, 1.442695
    %v4301 = vpow.pop %v4300
    %v4302 = vmul.f32 %v4278, 1.442695
    %v4303 = vpow.pop %v4302
    %v4304 = vmul.f32 %v4279, 1.442695
    %v4305 = vpow.pop %v4304
    %v4306 = vmul.f32 %v4280, 1.442695
    %v4307 = vpow.pop %v4306
    %v4308 = vmul.f32 %v4281, 1.442695
    %v4309 = vpow.pop %v4308
    %v4310 = vmul.f32 %v4282, 1.442695
    %v4311 = vpow.pop %v4310
    %v4312 = vmul.f32 %v4283, 1.442695
    %v4313 = vpow.pop %v4312
    %v4314 = vmul.f32 %v4284, 1.442695
    %v4315 = vpow.pop %v4314
    %v4316 = vmul.f32 %v4285, 1.442695
    %v4317 = vpow.pop %v4316
    %v4318 = vsel %vm1015, %v4287, 0.0
    %4319 = vadd.xlane.f32.xlu0 %v4318
    %v4320 = vpop.xlane.xlu0 %4319
    %v4321 = vsel %vm1015, %v4289, 0.0
    %4322 = vadd.xlane.f32.xlu0 %v4321
    %v4323 = vpop.xlane.xlu0 %4322
    %v4324 = vsel %vm1015, %v4291, 0.0
    %4325 = vadd.xlane.f32.xlu0 %v4324
    %v4326 = vpop.xlane.xlu0 %4325
    %v4327 = vsel %vm1015, %v4293, 0.0
    %4328 = vadd.xlane.f32.xlu0 %v4327
    %v4329 = vpop.xlane.xlu0 %4328
    %v4330 = vsel %vm1015, %v4295, 0.0
    %4331 = vadd.xlane.f32.xlu0 %v4330
    %v4332 = vpop.xlane.xlu0 %4331
    %v4333 = vsel %vm1015, %v4297, 0.0
    %4334 = vadd.xlane.f32.xlu0 %v4333
    %v4335 = vpop.xlane.xlu0 %4334
    %v4336 = vsel %vm1015, %v4299, 0.0
    %4337 = vadd.xlane.f32.xlu0 %v4336
    %v4338 = vpop.xlane.xlu0 %4337
    %v4339 = vsel %vm1015, %v4301, 0.0
    %4340 = vadd.xlane.f32.xlu0 %v4339
    %v4341 = vpop.xlane.xlu0 %4340
    %v4342 = vsel %vm1015, %v4303, 0.0
    %4343 = vadd.xlane.f32.xlu0 %v4342
    %v4344 = vpop.xlane.xlu0 %4343
    %v4345 = vsel %vm1015, %v4305, 0.0
    %4346 = vadd.xlane.f32.xlu0 %v4345
    %v4347 = vpop.xlane.xlu0 %4346
    %v4348 = vsel %vm1015, %v4307, 0.0
    %4349 = vadd.xlane.f32.xlu0 %v4348
    %v4350 = vpop.xlane.xlu0 %4349
    %v4351 = vsel %vm1015, %v4309, 0.0
    %4352 = vadd.xlane.f32.xlu0 %v4351
    %v4353 = vpop.xlane.xlu0 %4352
    %v4354 = vsel %vm1015, %v4311, 0.0
    %4355 = vadd.xlane.f32.xlu0 %v4354
    %v4356 = vpop.xlane.xlu0 %4355
    %v4357 = vsel %vm1015, %v4313, 0.0
    %4358 = vadd.xlane.f32.xlu0 %v4357
    %v4359 = vpop.xlane.xlu0 %4358
    %v4360 = vsel %vm1015, %v4315, 0.0
    %4361 = vadd.xlane.f32.xlu0 %v4360
    %v4362 = vpop.xlane.xlu0 %4361
    %v4363 = vsel %vm1015, %v4317, 0.0
    %4364 = vadd.xlane.f32.xlu0 %v4363
    %v4365 = vpop.xlane.xlu0 %4364
    %v4366 = vrcp.pop %v4320
    %v4367 = vrcp.pop %v4323
    %v4368 = vrcp.pop %v4326
    %v4369 = vrcp.pop %v4329
    %v4370 = vrcp.pop %v4332
    %v4371 = vrcp.pop %v4335
    %v4372 = vrcp.pop %v4338
    %v4373 = vrcp.pop %v4341
    %v4374 = vrcp.pop %v4344
    %v4375 = vrcp.pop %v4347
    %v4376 = vrcp.pop %v4350
    %v4377 = vrcp.pop %v4353
    %v4378 = vrcp.pop %v4356
    %v4379 = vrcp.pop %v4359
    %v4380 = vrcp.pop %v4362
    %v4381 = vrcp.pop %v4365
    %v4382 = vmul.f32 %v4287, %v4366
    %v4383 = vmul.f32 %v4289, %v4367
    %v4384 = vmul.f32 %v4291, %v4368
    %v4385 = vmul.f32 %v4293, %v4369
    %v4386 = vmul.f32 %v4295, %v4370
    %v4387 = vmul.f32 %v4297, %v4371
    %v4388 = vmul.f32 %v4299, %v4372
    %v4389 = vmul.f32 %v4301, %v4373
    %v4390 = vmul.f32 %v4303, %v4374
    %v4391 = vmul.f32 %v4305, %v4375
    %v4392 = vmul.f32 %v4307, %v4376
    %v4393 = vmul.f32 %v4309, %v4377
    %v4394 = vmul.f32 %v4311, %v4378
    %v4395 = vmul.f32 %v4313, %v4379
    %v4396 = vmul.f32 %v4315, %v4380
    %v4397 = vmul.f32 %v4317, %v4381
    %4398 = vrot.lane.b32.xlu0 %v222, 48
    %v4399 = vpop.permute.xlu0 %4398
    %4400 = vrot.lane.b32.xlu0 %v227, 48
    %v4401 = vpop.permute.xlu0 %4400
    %v4405 = vsel %vm1015, %v4382, 0
    %v4408 = vsel %vm1015, %v4383, 0
    %4410 = vmatprep.subr.mxu0 0.0
    %4411 = vmatpush1.msra.mxu0 %v4399
    %4412 = vmatprep.subr.mxu0 0.0
    %4413 = vmatpush1.msra.mxu0 %v4401
    %4414 = vmatprep.subr.mxu0 0.0
    %4415 = vmatpush1.msra.mxu0 0.0
    %4416 = vmatprep.subr.mxu0 0.0
    %4417 = vmatpush1.msra.mxu0 0.0
    %4418 = vmatprep.subr.mxu0 0.0
    %4419 = vmatpush1.msra.mxu0 0.0
    %4420 = vmatprep.subr.mxu0 0.0
    %4421 = vmatpush1.msra.mxu0 0.0
    %4422 = vmatprep.subr.mxu0 0.0
    %4423 = vmatpush1.msra.mxu0 0.0
    %4424 = vmatprep.subr.mxu0 0.0
    %4425 = vmatpush1.msra.mxu0 0.0
    %4426 = vmatprep.subr.mxu0 0.0
    %4427 = vmatpush1.msra.mxu0 0.0
    %4428 = vmatprep.subr.mxu0 0.0
    %4429 = vmatpush1.msra.mxu0 0.0
    %4430 = vmatprep.subr.mxu0 0.0
    %4431 = vmatpush1.msra.mxu0 0.0
    %4432 = vmatprep.subr.mxu0 0.0
    %4433 = vmatpush1.msra.mxu0 0.0
    %4434 = vmatprep.subr.mxu0 0.0
    %4435 = vmatpush1.msra.mxu0 0.0
    %4436 = vmatprep.subr.mxu0 0.0
    %4437 = vmatpush1.msra.mxu0 0.0
    %4438 = vmatprep.subr.mxu0 0.0
    %4439 = vmatpush1.msra.mxu0 0.0
    %4440 = vmatprep.subr.mxu0 0.0
    %4441 = vmatpush1.msra.mxu0 0.0
    %4442 = vmatprep.subr.mxu0 0.0
    %4443 = vmatpush1.msra.mxu0 0.0
    %4444 = vmatprep.subr.mxu0 0.0
    %4445 = vmatpush1.msra.mxu0 0.0
    %4446 = vmatprep.subr.mxu0 0.0
    %4447 = vmatpush1.msra.mxu0 0.0
    %4448 = vmatprep.subr.mxu0 0.0
    %4449 = vmatpush1.msra.mxu0 0.0
    %4450 = vmatprep.subr.mxu0 0.0
    %4451 = vmatpush1.msra.mxu0 0.0
    %4452 = vmatprep.subr.mxu0 0.0
    %4453 = vmatpush1.msra.mxu0 0.0
    %4454 = vmatprep.subr.mxu0 0.0
    %4455 = vmatpush1.msra.mxu0 0.0
    %4456 = vmatprep.subr.mxu0 0.0
    %4457 = vmatpush1.msra.mxu0 0.0
    %4458 = vmatprep.subr.mxu0 0.0
    %4459 = vmatpush1.msra.mxu0 0.0
    %4460 = vmatprep.subr.mxu0 0.0
    %4461 = vmatpush1.msra.mxu0 0.0
    %4462 = vmatprep.subr.mxu0 0.0
    %4463 = vmatpush1.msra.mxu0 0.0
    %4464 = vmatprep.subr.mxu0 0.0
    %4465 = vmatpush1.msra.mxu0 0.0
    %4466 = vmatprep.subr.mxu0 0.0
    %4467 = vmatpush1.msra.mxu0 0.0
    %4468 = vmatprep.subr.mxu0 0.0
    %4469 = vmatpush1.msra.mxu0 0.0
    %4470 = vmatprep.subr.mxu0 0.0
    %4471 = vmatpush1.msra.mxu0 0.0
    %4472 = vmatprep.subr.mxu0 0.0
    %4473 = vmatpush1.msra.mxu0 0.0
    %4474 = vmatprep.mubr.f32.mxu0 0.0
    %4475 = vmatmul.mubr.f32.gmra.mrb[0].mxu0 %v4405
    %v4476 = vpop.f32.mrb[0].mxu0
    %v4477 = vadd.f32 0.0, %v4476
    %v4478 = vpop.f32.mrb[0].mxu0
    %4479 = vmatprep.mubr.f32.mxu0 0.0
    %4480 = vmatmul.mubr.f32.gmra.mrb[0].mxu0 %v4408
    %v4481 = vpop.f32.mrb[0].mxu0
    %v4482 = vadd.f32 0.0, %v4481
    %v4483 = vpop.f32.mrb[0].mxu0
    %4484 = vdwg.mxu0
    %4485 = vrot.lane.b32.xlu0 %v232, 48
    %v4486 = vpop.permute.xlu0 %4485
    %4487 = vrot.lane.b32.xlu0 %v237, 48
    %v4488 = vpop.permute.xlu0 %4487
    %v4492 = vsel %vm1015, %v4384, 0
    %v4495 = vsel %vm1015, %v4385, 0
    %4497 = vmatprep.subr.mxu0 0.0
    %4498 = vmatpush1.msra.mxu0 %v4486
    %4499 = vmatprep.subr.mxu0 0.0
    %4500 = vmatpush1.msra.mxu0 %v4488
    %4501 = vmatprep.subr.mxu0 0.0
    %4502 = vmatpush1.msra.mxu0 0.0
    %4503 = vmatprep.subr.mxu0 0.0
    %4504 = vmatpush1.msra.mxu0 0.0
    %4505 = vmatprep.subr.mxu0 0.0
    %4506 = vmatpush1.msra.mxu0 0.0
    %4507 = vmatprep.subr.mxu0 0.0
    %4508 = vmatpush1.msra.mxu0 0.0
    %4509 = vmatprep.subr.mxu0 0.0
    %4510 = vmatpush1.msra.mxu0 0.0
    %4511 = vmatprep.subr.mxu0 0.0
    %4512 = vmatpush1.msra.mxu0 0.0
    %4513 = vmatprep.subr.mxu0 0.0
    %4514 = vmatpush1.msra.mxu0 0.0
    %4515 = vmatprep.subr.mxu0 0.0
    %4516 = vmatpush1.msra.mxu0 0.0
    %4517 = vmatprep.subr.mxu0 0.0
    %4518 = vmatpush1.msra.mxu0 0.0
    %4519 = vmatprep.subr.mxu0 0.0
    %4520 = vmatpush1.msra.mxu0 0.0
    %4521 = vmatprep.subr.mxu0 0.0
    %4522 = vmatpush1.msra.mxu0 0.0
    %4523 = vmatprep.subr.mxu0 0.0
    %4524 = vmatpush1.msra.mxu0 0.0
    %4525 = vmatprep.subr.mxu0 0.0
    %4526 = vmatpush1.msra.mxu0 0.0
    %4527 = vmatprep.subr.mxu0 0.0
    %4528 = vmatpush1.msra.mxu0 0.0
    %4529 = vmatprep.subr.mxu0 0.0
    %4530 = vmatpush1.msra.mxu0 0.0
    %4531 = vmatprep.subr.mxu0 0.0
    %4532 = vmatpush1.msra.mxu0 0.0
    %4533 = vmatprep.subr.mxu0 0.0
    %4534 = vmatpush1.msra.mxu0 0.0
    %4535 = vmatprep.subr.mxu0 0.0
    %4536 = vmatpush1.msra.mxu0 0.0
    %4537 = vmatprep.subr.mxu0 0.0
    %4538 = vmatpush1.msra.mxu0 0.0
    %4539 = vmatprep.subr.mxu0 0.0
    %4540 = vmatpush1.msra.mxu0 0.0
    %4541 = vmatprep.subr.mxu0 0.0
    %4542 = vmatpush1.msra.mxu0 0.0
    %4543 = vmatprep.subr.mxu0 0.0
    %4544 = vmatpush1.msra.mxu0 0.0
    %4545 = vmatprep.subr.mxu0 0.0
    %4546 = vmatpush1.msra.mxu0 0.0
    %4547 = vmatprep.subr.mxu0 0.0
    %4548 = vmatpush1.msra.mxu0 0.0
    %4549 = vmatprep.subr.mxu0 0.0
    %4550 = vmatpush1.msra.mxu0 0.0
    %4551 = vmatprep.subr.mxu0 0.0
    %4552 = vmatpush1.msra.mxu0 0.0
    %4553 = vmatprep.subr.mxu0 0.0
    %4554 = vmatpush1.msra.mxu0 0.0
    %4555 = vmatprep.subr.mxu0 0.0
    %4556 = vmatpush1.msra.mxu0 0.0
    %4557 = vmatprep.subr.mxu0 0.0
    %4558 = vmatpush1.msra.mxu0 0.0
    %4559 = vmatprep.subr.mxu0 0.0
    %4560 = vmatpush1.msra.mxu0 0.0
    %4561 = vmatprep.mubr.f32.mxu0 0.0
    %4562 = vmatmul.mubr.f32.gmra.mrb[0].mxu0 %v4492
    %v4563 = vpop.f32.mrb[0].mxu0
    %v4564 = vadd.f32 0.0, %v4563
    %v4565 = vpop.f32.mrb[0].mxu0
    %4566 = vmatprep.mubr.f32.mxu0 0.0
    %4567 = vmatmul.mubr.f32.gmra.mrb[0].mxu0 %v4495
    %v4568 = vpop.f32.mrb[0].mxu0
    %v4569 = vadd.f32 0.0, %v4568
    %v4570 = vpop.f32.mrb[0].mxu0
    %4571 = vdwg.mxu0
    %4572 = vrot.lane.b32.xlu0 %v242, 48
    %v4573 = vpop.permute.xlu0 %4572
    %4574 = vrot.lane.b32.xlu0 %v247, 48
    %v4575 = vpop.permute.xlu0 %4574
    %v4579 = vsel %vm1015, %v4386, 0
    %v4582 = vsel %vm1015, %v4387, 0
    %4584 = vmatprep.subr.mxu0 0.0
    %4585 = vmatpush1.msra.mxu0 %v4573
    %4586 = vmatprep.subr.mxu0 0.0
    %4587 = vmatpush1.msra.mxu0 %v4575
    %4588 = vmatprep.subr.mxu0 0.0
    %4589 = vmatpush1.msra.mxu0 0.0
    %4590 = vmatprep.subr.mxu0 0.0
    %4591 = vmatpush1.msra.mxu0 0.0
    %4592 = vmatprep.subr.mxu0 0.0
    %4593 = vmatpush1.msra.mxu0 0.0
    %4594 = vmatprep.subr.mxu0 0.0
    %4595 = vmatpush1.msra.mxu0 0.0
    %4596 = vmatprep.subr.mxu0 0.0
    %4597 = vmatpush1.msra.mxu0 0.0
    %4598 = vmatprep.subr.mxu0 0.0
    %4599 = vmatpush1.msra.mxu0 0.0
    %4600 = vmatprep.subr.mxu0 0.0
    %4601 = vmatpush1.msra.mxu0 0.0
    %4602 = vmatprep.subr.mxu0 0.0
    %4603 = vmatpush1.msra.mxu0 0.0
    %4604 = vmatprep.subr.mxu0 0.0
    %4605 = vmatpush1.msra.mxu0 0.0
    %4606 = vmatprep.subr.mxu0 0.0
    %4607 = vmatpush1.msra.mxu0 0.0
    %4608 = vmatprep.subr.mxu0 0.0
    %4609 = vmatpush1.msra.mxu0 0.0
    %4610 = vmatprep.subr.mxu0 0.0
    %4611 = vmatpush1.msra.mxu0 0.0
    %4612 = vmatprep.subr.mxu0 0.0
    %4613 = vmatpush1.msra.mxu0 0.0
    %4614 = vmatprep.subr.mxu0 0.0
    %4615 = vmatpush1.msra.mxu0 0.0
    %4616 = vmatprep.subr.mxu0 0.0
    %4617 = vmatpush1.msra.mxu0 0.0
    %4618 = vmatprep.subr.mxu0 0.0
    %4619 = vmatpush1.msra.mxu0 0.0
    %4620 = vmatprep.subr.mxu0 0.0
    %4621 = vmatpush1.msra.mxu0 0.0
    %4622 = vmatprep.subr.mxu0 0.0
    %4623 = vmatpush1.msra.mxu0 0.0
    %4624 = vmatprep.subr.mxu0 0.0
    %4625 = vmatpush1.msra.mxu0 0.0
    %4626 = vmatprep.subr.mxu0 0.0
    %4627 = vmatpush1.msra.mxu0 0.0
    %4628 = vmatprep.subr.mxu0 0.0
    %4629 = vmatpush1.msra.mxu0 0.0
    %4630 = vmatprep.subr.mxu0 0.0
    %4631 = vmatpush1.msra.mxu0 0.0
    %4632 = vmatprep.subr.mxu0 0.0
    %4633 = vmatpush1.msra.mxu0 0.0
    %4634 = vmatprep.subr.mxu0 0.0
    %4635 = vmatpush1.msra.mxu0 0.0
    %4636 = vmatprep.subr.mxu0 0.0
    %4637 = vmatpush1.msra.mxu0 0.0
    %4638 = vmatprep.subr.mxu0 0.0
    %4639 = vmatpush1.msra.mxu0 0.0
    %4640 = vmatprep.subr.mxu0 0.0
    %4641 = vmatpush1.msra.mxu0 0.0
    %4642 = vmatprep.subr.mxu0 0.0
    %4643 = vmatpush1.msra.mxu0 0.0
    %4644 = vmatprep.subr.mxu0 0.0
    %4645 = vmatpush1.msra.mxu0 0.0
    %4646 = vmatprep.subr.mxu0 0.0
    %4647 = vmatpush1.msra.mxu0 0.0
    %4648 = vmatprep.mubr.f32.mxu0 0.0
    %4649 = vmatmul.mubr.f32.gmra.mrb[0].mxu0 %v4579
    %v4650 = vpop.f32.mrb[0].mxu0
    %v4651 = vadd.f32 0.0, %v4650
    %v4652 = vpop.f32.mrb[0].mxu0
    %4653 = vmatprep.mubr.f32.mxu0 0.0
    %4654 = vmatmul.mubr.f32.gmra.mrb[0].mxu0 %v4582
    %v4655 = vpop.f32.mrb[0].mxu0
    %v4656 = vadd.f32 0.0, %v4655
    %v4657 = vpop.f32.mrb[0].mxu0
    %4658 = vdwg.mxu0
    %4659 = vrot.lane.b32.xlu0 %v252, 48
    %v4660 = vpop.permute.xlu0 %4659
    %4661 = vrot.lane.b32.xlu0 %v257, 48
    %v4662 = vpop.permute.xlu0 %4661
    %v4666 = vsel %vm1015, %v4388, 0
    %v4669 = vsel %vm1015, %v4389, 0
    %4671 = vmatprep.subr.mxu0 0.0
    %4672 = vmatpush1.msra.mxu0 %v4660
    %4673 = vmatprep.subr.mxu0 0.0
    %4674 = vmatpush1.msra.mxu0 %v4662
    %4675 = vmatprep.subr.mxu0 0.0
    %4676 = vmatpush1.msra.mxu0 0.0
    %4677 = vmatprep.subr.mxu0 0.0
    %4678 = vmatpush1.msra.mxu0 0.0
    %4679 = vmatprep.subr.mxu0 0.0
    %4680 = vmatpush1.msra.mxu0 0.0
    %4681 = vmatprep.subr.mxu0 0.0
    %4682 = vmatpush1.msra.mxu0 0.0
    %4683 = vmatprep.subr.mxu0 0.0
    %4684 = vmatpush1.msra.mxu0 0.0
    %4685 = vmatprep.subr.mxu0 0.0
    %4686 = vmatpush1.msra.mxu0 0.0
    %4687 = vmatprep.subr.mxu0 0.0
    %4688 = vmatpush1.msra.mxu0 0.0
    %4689 = vmatprep.subr.mxu0 0.0
    %4690 = vmatpush1.msra.mxu0 0.0
    %4691 = vmatprep.subr.mxu0 0.0
    %4692 = vmatpush1.msra.mxu0 0.0
    %4693 = vmatprep.subr.mxu0 0.0
    %4694 = vmatpush1.msra.mxu0 0.0
    %4695 = vmatprep.subr.mxu0 0.0
    %4696 = vmatpush1.msra.mxu0 0.0
    %4697 = vmatprep.subr.mxu0 0.0
    %4698 = vmatpush1.msra.mxu0 0.0
    %4699 = vmatprep.subr.mxu0 0.0
    %4700 = vmatpush1.msra.mxu0 0.0
    %4701 = vmatprep.subr.mxu0 0.0
    %4702 = vmatpush1.msra.mxu0 0.0
    %4703 = vmatprep.subr.mxu0 0.0
    %4704 = vmatpush1.msra.mxu0 0.0
    %4705 = vmatprep.subr.mxu0 0.0
    %4706 = vmatpush1.msra.mxu0 0.0
    %4707 = vmatprep.subr.mxu0 0.0
    %4708 = vmatpush1.msra.mxu0 0.0
    %4709 = vmatprep.subr.mxu0 0.0
    %4710 = vmatpush1.msra.mxu0 0.0
    %4711 = vmatprep.subr.mxu0 0.0
    %4712 = vmatpush1.msra.mxu0 0.0
    %4713 = vmatprep.subr.mxu0 0.0
    %4714 = vmatpush1.msra.mxu0 0.0
    %4715 = vmatprep.subr.mxu0 0.0
    %4716 = vmatpush1.msra.mxu0 0.0
    %4717 = vmatprep.subr.mxu0 0.0
    %4718 = vmatpush1.msra.mxu0 0.0
    %4719 = vmatprep.subr.mxu0 0.0
    %4720 = vmatpush1.msra.mxu0 0.0
    %4721 = vmatprep.subr.mxu0 0.0
    %4722 = vmatpush1.msra.mxu0 0.0
    %4723 = vmatprep.subr.mxu0 0.0
    %4724 = vmatpush1.msra.mxu0 0.0
    %4725 = vmatprep.subr.mxu0 0.0
    %4726 = vmatpush1.msra.mxu0 0.0
    %4727 = vmatprep.subr.mxu0 0.0
    %4728 = vmatpush1.msra.mxu0 0.0
    %4729 = vmatprep.subr.mxu0 0.0
    %4730 = vmatpush1.msra.mxu0 0.0
    %4731 = vmatprep.subr.mxu0 0.0
    %4732 = vmatpush1.msra.mxu0 0.0
    %4733 = vmatprep.subr.mxu0 0.0
    %4734 = vmatpush1.msra.mxu0 0.0
    %4735 = vmatprep.mubr.f32.mxu0 0.0
    %4736 = vmatmul.mubr.f32.gmra.mrb[0].mxu0 %v4666
    %v4737 = vpop.f32.mrb[0].mxu0
    %v4738 = vadd.f32 0.0, %v4737
    %v4739 = vpop.f32.mrb[0].mxu0
    %4740 = vmatprep.mubr.f32.mxu0 0.0
    %4741 = vmatmul.mubr.f32.gmra.mrb[0].mxu0 %v4669
    %v4742 = vpop.f32.mrb[0].mxu0
    %v4743 = vadd.f32 0.0, %v4742
    %v4744 = vpop.f32.mrb[0].mxu0
    %4745 = vdwg.mxu0
    %4746 = vrot.lane.b32.xlu0 %v262, 48
    %v4747 = vpop.permute.xlu0 %4746
    %4748 = vrot.lane.b32.xlu0 %v267, 48
    %v4749 = vpop.permute.xlu0 %4748
    %v4753 = vsel %vm1015, %v4390, 0
    %v4756 = vsel %vm1015, %v4391, 0
    %4758 = vmatprep.subr.mxu0 0.0
    %4759 = vmatpush1.msra.mxu0 %v4747
    %4760 = vmatprep.subr.mxu0 0.0
    %4761 = vmatpush1.msra.mxu0 %v4749
    %4762 = vmatprep.subr.mxu0 0.0
    %4763 = vmatpush1.msra.mxu0 0.0
    %4764 = vmatprep.subr.mxu0 0.0
    %4765 = vmatpush1.msra.mxu0 0.0
    %4766 = vmatprep.subr.mxu0 0.0
    %4767 = vmatpush1.msra.mxu0 0.0
    %4768 = vmatprep.subr.mxu0 0.0
    %4769 = vmatpush1.msra.mxu0 0.0
    %4770 = vmatprep.subr.mxu0 0.0
    %4771 = vmatpush1.msra.mxu0 0.0
    %4772 = vmatprep.subr.mxu0 0.0
    %4773 = vmatpush1.msra.mxu0 0.0
    %4774 = vmatprep.subr.mxu0 0.0
    %4775 = vmatpush1.msra.mxu0 0.0
    %4776 = vmatprep.subr.mxu0 0.0
    %4777 = vmatpush1.msra.mxu0 0.0
    %4778 = vmatprep.subr.mxu0 0.0
    %4779 = vmatpush1.msra.mxu0 0.0
    %4780 = vmatprep.subr.mxu0 0.0
    %4781 = vmatpush1.msra.mxu0 0.0
    %4782 = vmatprep.subr.mxu0 0.0
    %4783 = vmatpush1.msra.mxu0 0.0
    %4784 = vmatprep.subr.mxu0 0.0
    %4785 = vmatpush1.msra.mxu0 0.0
    %4786 = vmatprep.subr.mxu0 0.0
    %4787 = vmatpush1.msra.mxu0 0.0
    %4788 = vmatprep.subr.mxu0 0.0
    %4789 = vmatpush1.msra.mxu0 0.0
    %4790 = vmatprep.subr.mxu0 0.0
    %4791 = vmatpush1.msra.mxu0 0.0
    %4792 = vmatprep.subr.mxu0 0.0
    %4793 = vmatpush1.msra.mxu0 0.0
    %4794 = vmatprep.subr.mxu0 0.0
    %4795 = vmatpush1.msra.mxu0 0.0
    %4796 = vmatprep.subr.mxu0 0.0
    %4797 = vmatpush1.msra.mxu0 0.0
    %4798 = vmatprep.subr.mxu0 0.0
    %4799 = vmatpush1.msra.mxu0 0.0
    %4800 = vmatprep.subr.mxu0 0.0
    %4801 = vmatpush1.msra.mxu0 0.0
    %4802 = vmatprep.subr.mxu0 0.0
    %4803 = vmatpush1.msra.mxu0 0.0
    %4804 = vmatprep.subr.mxu0 0.0
    %4805 = vmatpush1.msra.mxu0 0.0
    %4806 = vmatprep.subr.mxu0 0.0
    %4807 = vmatpush1.msra.mxu0 0.0
    %4808 = vmatprep.subr.mxu0 0.0
    %4809 = vmatpush1.msra.mxu0 0.0
    %4810 = vmatprep.subr.mxu0 0.0
    %4811 = vmatpush1.msra.mxu0 0.0
    %4812 = vmatprep.subr.mxu0 0.0
    %4813 = vmatpush1.msra.mxu0 0.0
    %4814 = vmatprep.subr.mxu0 0.0
    %4815 = vmatpush1.msra.mxu0 0.0
    %4816 = vmatprep.subr.mxu0 0.0
    %4817 = vmatpush1.msra.mxu0 0.0
    %4818 = vmatprep.subr.mxu0 0.0
    %4819 = vmatpush1.msra.mxu0 0.0
    %4820 = vmatprep.subr.mxu0 0.0
    %4821 = vmatpush1.msra.mxu0 0.0
    %4822 = vmatprep.mubr.f32.mxu0 0.0
    %4823 = vmatmul.mubr.f32.gmra.mrb[0].mxu0 %v4753
    %v4824 = vpop.f32.mrb[0].mxu0
    %v4825 = vadd.f32 0.0, %v4824
    %v4826 = vpop.f32.mrb[0].mxu0
    %4827 = vmatprep.mubr.f32.mxu0 0.0
    %4828 = vmatmul.mubr.f32.gmra.mrb[0].mxu0 %v4756
    %v4829 = vpop.f32.mrb[0].mxu0
    %v4830 = vadd.f32 0.0, %v4829
    %v4831 = vpop.f32.mrb[0].mxu0
    %4832 = vdwg.mxu0
    %4833 = vrot.lane.b32.xlu0 %v272, 48
    %v4834 = vpop.permute.xlu0 %4833
    %4835 = vrot.lane.b32.xlu0 %v277, 48
    %v4836 = vpop.permute.xlu0 %4835
    %v4840 = vsel %vm1015, %v4392, 0
    %v4843 = vsel %vm1015, %v4393, 0
    %4845 = vmatprep.subr.mxu0 0.0
    %4846 = vmatpush1.msra.mxu0 %v4834
    %4847 = vmatprep.subr.mxu0 0.0
    %4848 = vmatpush1.msra.mxu0 %v4836
    %4849 = vmatprep.subr.mxu0 0.0
    %4850 = vmatpush1.msra.mxu0 0.0
    %4851 = vmatprep.subr.mxu0 0.0
    %4852 = vmatpush1.msra.mxu0 0.0
    %4853 = vmatprep.subr.mxu0 0.0
    %4854 = vmatpush1.msra.mxu0 0.0
    %4855 = vmatprep.subr.mxu0 0.0
    %4856 = vmatpush1.msra.mxu0 0.0
    %4857 = vmatprep.subr.mxu0 0.0
    %4858 = vmatpush1.msra.mxu0 0.0
    %4859 = vmatprep.subr.mxu0 0.0
    %4860 = vmatpush1.msra.mxu0 0.0
    %4861 = vmatprep.subr.mxu0 0.0
    %4862 = vmatpush1.msra.mxu0 0.0
    %4863 = vmatprep.subr.mxu0 0.0
    %4864 = vmatpush1.msra.mxu0 0.0
    %4865 = vmatprep.subr.mxu0 0.0
    %4866 = vmatpush1.msra.mxu0 0.0
    %4867 = vmatprep.subr.mxu0 0.0
    %4868 = vmatpush1.msra.mxu0 0.0
    %4869 = vmatprep.subr.mxu0 0.0
    %4870 = vmatpush1.msra.mxu0 0.0
    %4871 = vmatprep.subr.mxu0 0.0
    %4872 = vmatpush1.msra.mxu0 0.0
    %4873 = vmatprep.subr.mxu0 0.0
    %4874 = vmatpush1.msra.mxu0 0.0
    %4875 = vmatprep.subr.mxu0 0.0
    %4876 = vmatpush1.msra.mxu0 0.0
    %4877 = vmatprep.subr.mxu0 0.0
    %4878 = vmatpush1.msra.mxu0 0.0
    %4879 = vmatprep.subr.mxu0 0.0
    %4880 = vmatpush1.msra.mxu0 0.0
    %4881 = vmatprep.subr.mxu0 0.0
    %4882 = vmatpush1.msra.mxu0 0.0
    %4883 = vmatprep.subr.mxu0 0.0
    %4884 = vmatpush1.msra.mxu0 0.0
    %4885 = vmatprep.subr.mxu0 0.0
    %4886 = vmatpush1.msra.mxu0 0.0
    %4887 = vmatprep.subr.mxu0 0.0
    %4888 = vmatpush1.msra.mxu0 0.0
    %4889 = vmatprep.subr.mxu0 0.0
    %4890 = vmatpush1.msra.mxu0 0.0
    %4891 = vmatprep.subr.mxu0 0.0
    %4892 = vmatpush1.msra.mxu0 0.0
    %4893 = vmatprep.subr.mxu0 0.0
    %4894 = vmatpush1.msra.mxu0 0.0
    %4895 = vmatprep.subr.mxu0 0.0
    %4896 = vmatpush1.msra.mxu0 0.0
    %4897 = vmatprep.subr.mxu0 0.0
    %4898 = vmatpush1.msra.mxu0 0.0
    %4899 = vmatprep.subr.mxu0 0.0
    %4900 = vmatpush1.msra.mxu0 0.0
    %4901 = vmatprep.subr.mxu0 0.0
    %4902 = vmatpush1.msra.mxu0 0.0
    %4903 = vmatprep.subr.mxu0 0.0
    %4904 = vmatpush1.msra.mxu0 0.0
    %4905 = vmatprep.subr.mxu0 0.0
    %4906 = vmatpush1.msra.mxu0 0.0
    %4907 = vmatprep.subr.mxu0 0.0
    %4908 = vmatpush1.msra.mxu0 0.0
    %4909 = vmatprep.mubr.f32.mxu0 0.0
    %4910 = vmatmul.mubr.f32.gmra.mrb[0].mxu0 %v4840
    %v4911 = vpop.f32.mrb[0].mxu0
    %v4912 = vadd.f32 0.0, %v4911
    %v4913 = vpop.f32.mrb[0].mxu0
    %4914 = vmatprep.mubr.f32.mxu0 0.0
    %4915 = vmatmul.mubr.f32.gmra.mrb[0].mxu0 %v4843
    %v4916 = vpop.f32.mrb[0].mxu0
    %v4917 = vadd.f32 0.0, %v4916
    %v4918 = vpop.f32.mrb[0].mxu0
    %4919 = vdwg.mxu0
    %4920 = vrot.lane.b32.xlu0 %v282, 48
    %v4921 = vpop.permute.xlu0 %4920
    %4922 = vrot.lane.b32.xlu0 %v287, 48
    %v4923 = vpop.permute.xlu0 %4922
    %v4927 = vsel %vm1015, %v4394, 0
    %v4930 = vsel %vm1015, %v4395, 0
    %4932 = vmatprep.subr.mxu0 0.0
    %4933 = vmatpush1.msra.mxu0 %v4921
    %4934 = vmatprep.subr.mxu0 0.0
    %4935 = vmatpush1.msra.mxu0 %v4923
    %4936 = vmatprep.subr.mxu0 0.0
    %4937 = vmatpush1.msra.mxu0 0.0
    %4938 = vmatprep.subr.mxu0 0.0
    %4939 = vmatpush1.msra.mxu0 0.0
    %4940 = vmatprep.subr.mxu0 0.0
    %4941 = vmatpush1.msra.mxu0 0.0
    %4942 = vmatprep.subr.mxu0 0.0
    %4943 = vmatpush1.msra.mxu0 0.0
    %4944 = vmatprep.subr.mxu0 0.0
    %4945 = vmatpush1.msra.mxu0 0.0
    %4946 = vmatprep.subr.mxu0 0.0
    %4947 = vmatpush1.msra.mxu0 0.0
    %4948 = vmatprep.subr.mxu0 0.0
    %4949 = vmatpush1.msra.mxu0 0.0
    %4950 = vmatprep.subr.mxu0 0.0
    %4951 = vmatpush1.msra.mxu0 0.0
    %4952 = vmatprep.subr.mxu0 0.0
    %4953 = vmatpush1.msra.mxu0 0.0
    %4954 = vmatprep.subr.mxu0 0.0
    %4955 = vmatpush1.msra.mxu0 0.0
    %4956 = vmatprep.subr.mxu0 0.0
    %4957 = vmatpush1.msra.mxu0 0.0
    %4958 = vmatprep.subr.mxu0 0.0
    %4959 = vmatpush1.msra.mxu0 0.0
    %4960 = vmatprep.subr.mxu0 0.0
    %4961 = vmatpush1.msra.mxu0 0.0
    %4962 = vmatprep.subr.mxu0 0.0
    %4963 = vmatpush1.msra.mxu0 0.0
    %4964 = vmatprep.subr.mxu0 0.0
    %4965 = vmatpush1.msra.mxu0 0.0
    %4966 = vmatprep.subr.mxu0 0.0
    %4967 = vmatpush1.msra.mxu0 0.0
    %4968 = vmatprep.subr.mxu0 0.0
    %4969 = vmatpush1.msra.mxu0 0.0
    %4970 = vmatprep.subr.mxu0 0.0
    %4971 = vmatpush1.msra.mxu0 0.0
    %4972 = vmatprep.subr.mxu0 0.0
    %4973 = vmatpush1.msra.mxu0 0.0
    %4974 = vmatprep.subr.mxu0 0.0
    %4975 = vmatpush1.msra.mxu0 0.0
    %4976 = vmatprep.subr.mxu0 0.0
    %4977 = vmatpush1.msra.mxu0 0.0
    %4978 = vmatprep.subr.mxu0 0.0
    %4979 = vmatpush1.msra.mxu0 0.0
    %4980 = vmatprep.subr.mxu0 0.0
    %4981 = vmatpush1.msra.mxu0 0.0
    %4982 = vmatprep.subr.mxu0 0.0
    %4983 = vmatpush1.msra.mxu0 0.0
    %4984 = vmatprep.subr.mxu0 0.0
    %4985 = vmatpush1.msra.mxu0 0.0
    %4986 = vmatprep.subr.mxu0 0.0
    %4987 = vmatpush1.msra.mxu0 0.0
    %4988 = vmatprep.subr.mxu0 0.0
    %4989 = vmatpush1.msra.mxu0 0.0
    %4990 = vmatprep.subr.mxu0 0.0
    %4991 = vmatpush1.msra.mxu0 0.0
    %4992 = vmatprep.subr.mxu0 0.0
    %4993 = vmatpush1.msra.mxu0 0.0
    %4994 = vmatprep.subr.mxu0 0.0
    %4995 = vmatpush1.msra.mxu0 0.0
    %4996 = vmatprep.mubr.f32.mxu0 0.0
    %4997 = vmatmul.mubr.f32.gmra.mrb[0].mxu0 %v4927
    %v4998 = vpop.f32.mrb[0].mxu0
    %v4999 = vadd.f32 0.0, %v4998
    %v5000 = vpop.f32.mrb[0].mxu0
    %5001 = vmatprep.mubr.f32.mxu0 0.0
    %5002 = vmatmul.mubr.f32.gmra.mrb[0].mxu0 %v4930
    %v5003 = vpop.f32.mrb[0].mxu0
    %v5004 = vadd.f32 0.0, %v5003
    %v5005 = vpop.f32.mrb[0].mxu0
    %5006 = vdwg.mxu0
    %5007 = vrot.lane.b32.xlu0 %v292, 48
    %v5008 = vpop.permute.xlu0 %5007
    %5009 = vrot.lane.b32.xlu0 %v297, 48
    %v5010 = vpop.permute.xlu0 %5009
    %v5014 = vsel %vm1015, %v4396, 0
    %v5017 = vsel %vm1015, %v4397, 0
    %5019 = vmatprep.subr.mxu0 0.0
    %5020 = vmatpush1.msra.mxu0 %v5008
    %5021 = vmatprep.subr.mxu0 0.0
    %5022 = vmatpush1.msra.mxu0 %v5010
    %5023 = vmatprep.subr.mxu0 0.0
    %5024 = vmatpush1.msra.mxu0 0.0
    %5025 = vmatprep.subr.mxu0 0.0
    %5026 = vmatpush1.msra.mxu0 0.0
    %5027 = vmatprep.subr.mxu0 0.0
    %5028 = vmatpush1.msra.mxu0 0.0
    %5029 = vmatprep.subr.mxu0 0.0
    %5030 = vmatpush1.msra.mxu0 0.0
    %5031 = vmatprep.subr.mxu0 0.0
    %5032 = vmatpush1.msra.mxu0 0.0
    %5033 = vmatprep.subr.mxu0 0.0
    %5034 = vmatpush1.msra.mxu0 0.0
    %5035 = vmatprep.subr.mxu0 0.0
    %5036 = vmatpush1.msra.mxu0 0.0
    %5037 = vmatprep.subr.mxu0 0.0
    %5038 = vmatpush1.msra.mxu0 0.0
    %5039 = vmatprep.subr.mxu0 0.0
    %5040 = vmatpush1.msra.mxu0 0.0
    %5041 = vmatprep.subr.mxu0 0.0
    %5042 = vmatpush1.msra.mxu0 0.0
    %5043 = vmatprep.subr.mxu0 0.0
    %5044 = vmatpush1.msra.mxu0 0.0
    %5045 = vmatprep.subr.mxu0 0.0
    %5046 = vmatpush1.msra.mxu0 0.0
    %5047 = vmatprep.subr.mxu0 0.0
    %5048 = vmatpush1.msra.mxu0 0.0
    %5049 = vmatprep.subr.mxu0 0.0
    %5050 = vmatpush1.msra.mxu0 0.0
    %5051 = vmatprep.subr.mxu0 0.0
    %5052 = vmatpush1.msra.mxu0 0.0
    %5053 = vmatprep.subr.mxu0 0.0
    %5054 = vmatpush1.msra.mxu0 0.0
    %5055 = vmatprep.subr.mxu0 0.0
    %5056 = vmatpush1.msra.mxu0 0.0
    %5057 = vmatprep.subr.mxu0 0.0
    %5058 = vmatpush1.msra.mxu0 0.0
    %5059 = vmatprep.subr.mxu0 0.0
    %5060 = vmatpush1.msra.mxu0 0.0
    %5061 = vmatprep.subr.mxu0 0.0
    %5062 = vmatpush1.msra.mxu0 0.0
    %5063 = vmatprep.subr.mxu0 0.0
    %5064 = vmatpush1.msra.mxu0 0.0
    %5065 = vmatprep.subr.mxu0 0.0
    %5066 = vmatpush1.msra.mxu0 0.0
    %5067 = vmatprep.subr.mxu0 0.0
    %5068 = vmatpush1.msra.mxu0 0.0
    %5069 = vmatprep.subr.mxu0 0.0
    %5070 = vmatpush1.msra.mxu0 0.0
    %5071 = vmatprep.subr.mxu0 0.0
    %5072 = vmatpush1.msra.mxu0 0.0
    %5073 = vmatprep.subr.mxu0 0.0
    %5074 = vmatpush1.msra.mxu0 0.0
    %5075 = vmatprep.subr.mxu0 0.0
    %5076 = vmatpush1.msra.mxu0 0.0
    %5077 = vmatprep.subr.mxu0 0.0
    %5078 = vmatpush1.msra.mxu0 0.0
    %5079 = vmatprep.subr.mxu0 0.0
    %5080 = vmatpush1.msra.mxu0 0.0
    %5081 = vmatprep.subr.mxu0 0.0
    %5082 = vmatpush1.msra.mxu0 0.0
    %5083 = vmatprep.mubr.f32.mxu0 0.0
    %5084 = vmatmul.mubr.f32.gmra.mrb[0].mxu0 %v5014
    %v5085 = vpop.f32.mrb[0].mxu0
    %v5086 = vadd.f32 0.0, %v5085
    %v5087 = vpop.f32.mrb[0].mxu0
    %5088 = vmatprep.mubr.f32.mxu0 0.0
    %5089 = vmatmul.mubr.f32.gmra.mrb[0].mxu0 %v5017
    %v5090 = vpop.f32.mrb[0].mxu0
    %v5091 = vadd.f32 0.0, %v5090
    %v5092 = vpop.f32.mrb[0].mxu0
    %5093 = vdwg.mxu0
    %s5094 = scalar_lea.vmem [#allocation7], 48
    %v5095 = vld [vmem:[%s5094] sm:$0xff]
    %v5096 = vld [vmem:[%s5094 + $0x8] sm:$0xff]
    %5097 = vrot.lane.b32.xlu0 %v222, 104
    %v5098 = vpop.permute.xlu0 %5097
    %5099 = vrot.lane.b32.xlu0 %v227, 104
    %v5100 = vpop.permute.xlu0 %5099
    %5101 = vrot.lane.b32.xlu0 %v222, 72
    %v5102 = vpop.permute.xlu0 %5101
    %5103 = vrot.lane.b32.xlu0 %v227, 72
    %v5104 = vpop.permute.xlu0 %5103
    %v5105 = vsel %vm308, %v5098, 0
    %v5107 = vsel %vm308, %v5100, 0
    %v5109 = vsel %vm308, %v5102, 0
    %v5111 = vsel %vm308, %v5104, 0
    %5113 = vmatprep.subr.mxu0 0.0
    %5114 = vmatpush1.xpose.msra.mxu0 %v5109
    %5115 = vmatprep.subr.mxu0 0.0
    %5116 = vmatpush1.xpose.msra.mxu0 %v5111
    %5117 = vmatprep.subr.mxu0 0.0
    %5118 = vmatpush1.xpose.msra.mxu0 0.0
    %5119 = vmatprep.subr.mxu0 0.0
    %5120 = vmatpush1.xpose.msra.mxu0 0.0
    %5121 = vmatprep.subr.mxu0 0.0
    %5122 = vmatpush1.xpose.msra.mxu0 0.0
    %5123 = vmatprep.subr.mxu0 0.0
    %5124 = vmatpush1.xpose.msra.mxu0 0.0
    %5125 = vmatprep.subr.mxu0 0.0
    %5126 = vmatpush1.xpose.msra.mxu0 0.0
    %5127 = vmatprep.subr.mxu0 0.0
    %5128 = vmatpush1.xpose.msra.mxu0 0.0
    %5129 = vmatprep.subr.mxu0 0.0
    %5130 = vmatpush1.xpose.msra.mxu0 0.0
    %5131 = vmatprep.subr.mxu0 0.0
    %5132 = vmatpush1.xpose.msra.mxu0 0.0
    %5133 = vmatprep.subr.mxu0 0.0
    %5134 = vmatpush1.xpose.msra.mxu0 0.0
    %5135 = vmatprep.subr.mxu0 0.0
    %5136 = vmatpush1.xpose.msra.mxu0 0.0
    %5137 = vmatprep.subr.mxu0 0.0
    %5138 = vmatpush1.xpose.msra.mxu0 0.0
    %5139 = vmatprep.subr.mxu0 0.0
    %5140 = vmatpush1.xpose.msra.mxu0 0.0
    %5141 = vmatprep.subr.mxu0 0.0
    %5142 = vmatpush1.xpose.msra.mxu0 0.0
    %5143 = vmatprep.subr.mxu0 0.0
    %5144 = vmatpush1.xpose.msra.mxu0 0.0
    %5145 = vmatprep.subr.mxu0 0.0
    %5146 = vmatpush1.xpose.msra.mxu0 0.0
    %5147 = vmatprep.subr.mxu0 0.0
    %5148 = vmatpush1.xpose.msra.mxu0 0.0
    %5149 = vmatprep.subr.mxu0 0.0
    %5150 = vmatpush1.xpose.msra.mxu0 0.0
    %5151 = vmatprep.subr.mxu0 0.0
    %5152 = vmatpush1.xpose.msra.mxu0 0.0
    %5153 = vmatprep.subr.mxu0 0.0
    %5154 = vmatpush1.xpose.msra.mxu0 0.0
    %5155 = vmatprep.subr.mxu0 0.0
    %5156 = vmatpush1.xpose.msra.mxu0 0.0
    %5157 = vmatprep.subr.mxu0 0.0
    %5158 = vmatpush1.xpose.msra.mxu0 0.0
    %5159 = vmatprep.subr.mxu0 0.0
    %5160 = vmatpush1.xpose.msra.mxu0 0.0
    %5161 = vmatprep.subr.mxu0 0.0
    %5162 = vmatpush1.xpose.msra.mxu0 0.0
    %5163 = vmatprep.subr.mxu0 0.0
    %5164 = vmatpush1.xpose.msra.mxu0 0.0
    %5165 = vmatprep.subr.mxu0 0.0
    %5166 = vmatpush1.xpose.msra.mxu0 0.0
    %5167 = vmatprep.subr.mxu0 0.0
    %5168 = vmatpush1.xpose.msra.mxu0 0.0
    %5169 = vmatprep.subr.mxu0 0.0
    %5170 = vmatpush1.xpose.msra.mxu0 0.0
    %5171 = vmatprep.subr.mxu0 0.0
    %5172 = vmatpush1.xpose.msra.mxu0 0.0
    %5173 = vmatprep.subr.mxu0 0.0
    %5174 = vmatpush1.xpose.msra.mxu0 0.0
    %5175 = vmatprep.subr.mxu0 0.0
    %5176 = vmatpush1.xpose.msra.mxu0 0.0
    %5177 = vmatprep.mubr.f32.mxu0 0.0
    %5178 = vmatmul.mubr.f32.gmra.mrb[0].mxu0 %v5105
    %v5179 = vpop.f32.mrb[0].mxu0
    %v5180 = vadd.f32 %v5095, %v5179
    %v5181 = vpop.f32.mrb[0].mxu0
    %5182 = vmatprep.mubr.f32.mxu0 0.0
    %5183 = vmatmul.mubr.f32.gmra.mrb[0].mxu0 %v5107
    %v5184 = vpop.f32.mrb[0].mxu0
    %v5185 = vadd.f32 %v5096, %v5184
    %v5186 = vpop.f32.mrb[0].mxu0
    %5187 = vdwg.mxu0
    %5188 = vrot.lane.b32.xlu0 %v232, 104
    %v5189 = vpop.permute.xlu0 %5188
    %5190 = vrot.lane.b32.xlu0 %v237, 104
    %v5191 = vpop.permute.xlu0 %5190
    %5192 = vrot.lane.b32.xlu0 %v232, 72
    %v5193 = vpop.permute.xlu0 %5192
    %5194 = vrot.lane.b32.xlu0 %v237, 72
    %v5195 = vpop.permute.xlu0 %5194
    %v5196 = vsel %vm308, %v5189, 0
    %v5198 = vsel %vm308, %v5191, 0
    %v5200 = vsel %vm308, %v5193, 0
    %v5202 = vsel %vm308, %v5195, 0
    %5204 = vmatprep.subr.mxu0 0.0
    %5205 = vmatpush1.xpose.msra.mxu0 %v5200
    %5206 = vmatprep.subr.mxu0 0.0
    %5207 = vmatpush1.xpose.msra.mxu0 %v5202
    %5208 = vmatprep.subr.mxu0 0.0
    %5209 = vmatpush1.xpose.msra.mxu0 0.0
    %5210 = vmatprep.subr.mxu0 0.0
    %5211 = vmatpush1.xpose.msra.mxu0 0.0
    %5212 = vmatprep.subr.mxu0 0.0
    %5213 = vmatpush1.xpose.msra.mxu0 0.0
    %5214 = vmatprep.subr.mxu0 0.0
    %5215 = vmatpush1.xpose.msra.mxu0 0.0
    %5216 = vmatprep.subr.mxu0 0.0
    %5217 = vmatpush1.xpose.msra.mxu0 0.0
    %5218 = vmatprep.subr.mxu0 0.0
    %5219 = vmatpush1.xpose.msra.mxu0 0.0
    %5220 = vmatprep.subr.mxu0 0.0
    %5221 = vmatpush1.xpose.msra.mxu0 0.0
    %5222 = vmatprep.subr.mxu0 0.0
    %5223 = vmatpush1.xpose.msra.mxu0 0.0
    %5224 = vmatprep.subr.mxu0 0.0
    %5225 = vmatpush1.xpose.msra.mxu0 0.0
    %5226 = vmatprep.subr.mxu0 0.0
    %5227 = vmatpush1.xpose.msra.mxu0 0.0
    %5228 = vmatprep.subr.mxu0 0.0
    %5229 = vmatpush1.xpose.msra.mxu0 0.0
    %5230 = vmatprep.subr.mxu0 0.0
    %5231 = vmatpush1.xpose.msra.mxu0 0.0
    %5232 = vmatprep.subr.mxu0 0.0
    %5233 = vmatpush1.xpose.msra.mxu0 0.0
    %5234 = vmatprep.subr.mxu0 0.0
    %5235 = vmatpush1.xpose.msra.mxu0 0.0
    %5236 = vmatprep.subr.mxu0 0.0
    %5237 = vmatpush1.xpose.msra.mxu0 0.0
    %5238 = vmatprep.subr.mxu0 0.0
    %5239 = vmatpush1.xpose.msra.mxu0 0.0
    %5240 = vmatprep.subr.mxu0 0.0
    %5241 = vmatpush1.xpose.msra.mxu0 0.0
    %5242 = vmatprep.subr.mxu0 0.0
    %5243 = vmatpush1.xpose.msra.mxu0 0.0
    %5244 = vmatprep.subr.mxu0 0.0
    %5245 = vmatpush1.xpose.msra.mxu0 0.0
    %5246 = vmatprep.subr.mxu0 0.0
    %5247 = vmatpush1.xpose.msra.mxu0 0.0
    %5248 = vmatprep.subr.mxu0 0.0
    %5249 = vmatpush1.xpose.msra.mxu0 0.0
    %5250 = vmatprep.subr.mxu0 0.0
    %5251 = vmatpush1.xpose.msra.mxu0 0.0
    %5252 = vmatprep.subr.mxu0 0.0
    %5253 = vmatpush1.xpose.msra.mxu0 0.0
    %5254 = vmatprep.subr.mxu0 0.0
    %5255 = vmatpush1.xpose.msra.mxu0 0.0
    %5256 = vmatprep.subr.mxu0 0.0
    %5257 = vmatpush1.xpose.msra.mxu0 0.0
    %5258 = vmatprep.subr.mxu0 0.0
    %5259 = vmatpush1.xpose.msra.mxu0 0.0
    %5260 = vmatprep.subr.mxu0 0.0
    %5261 = vmatpush1.xpose.msra.mxu0 0.0
    %5262 = vmatprep.subr.mxu0 0.0
    %5263 = vmatpush1.xpose.msra.mxu0 0.0
    %5264 = vmatprep.subr.mxu0 0.0
    %5265 = vmatpush1.xpose.msra.mxu0 0.0
    %5266 = vmatprep.subr.mxu0 0.0
    %5267 = vmatpush1.xpose.msra.mxu0 0.0
    %5268 = vmatprep.mubr.f32.mxu0 0.0
    %5269 = vmatmul.mubr.f32.gmra.mrb[0].mxu0 %v5196
    %v5270 = vpop.f32.mrb[0].mxu0
    %v5271 = vadd.f32 %v5095, %v5270
    %v5272 = vpop.f32.mrb[0].mxu0
    %5273 = vmatprep.mubr.f32.mxu0 0.0
    %5274 = vmatmul.mubr.f32.gmra.mrb[0].mxu0 %v5198
    %v5275 = vpop.f32.mrb[0].mxu0
    %v5276 = vadd.f32 %v5096, %v5275
    %v5277 = vpop.f32.mrb[0].mxu0
    %5278 = vdwg.mxu0
    %5279 = vrot.lane.b32.xlu0 %v242, 104
    %v5280 = vpop.permute.xlu0 %5279
    %5281 = vrot.lane.b32.xlu0 %v247, 104
    %v5282 = vpop.permute.xlu0 %5281
    %5283 = vrot.lane.b32.xlu0 %v242, 72
    %v5284 = vpop.permute.xlu0 %5283
    %5285 = vrot.lane.b32.xlu0 %v247, 72
    %v5286 = vpop.permute.xlu0 %5285
    %v5287 = vsel %vm308, %v5280, 0
    %v5289 = vsel %vm308, %v5282, 0
    %v5291 = vsel %vm308, %v5284, 0
    %v5293 = vsel %vm308, %v5286, 0
    %5295 = vmatprep.subr.mxu0 0.0
    %5296 = vmatpush1.xpose.msra.mxu0 %v5291
    %5297 = vmatprep.subr.mxu0 0.0
    %5298 = vmatpush1.xpose.msra.mxu0 %v5293
    %5299 = vmatprep.subr.mxu0 0.0
    %5300 = vmatpush1.xpose.msra.mxu0 0.0
    %5301 = vmatprep.subr.mxu0 0.0
    %5302 = vmatpush1.xpose.msra.mxu0 0.0
    %5303 = vmatprep.subr.mxu0 0.0
    %5304 = vmatpush1.xpose.msra.mxu0 0.0
    %5305 = vmatprep.subr.mxu0 0.0
    %5306 = vmatpush1.xpose.msra.mxu0 0.0
    %5307 = vmatprep.subr.mxu0 0.0
    %5308 = vmatpush1.xpose.msra.mxu0 0.0
    %5309 = vmatprep.subr.mxu0 0.0
    %5310 = vmatpush1.xpose.msra.mxu0 0.0
    %5311 = vmatprep.subr.mxu0 0.0
    %5312 = vmatpush1.xpose.msra.mxu0 0.0
    %5313 = vmatprep.subr.mxu0 0.0
    %5314 = vmatpush1.xpose.msra.mxu0 0.0
    %5315 = vmatprep.subr.mxu0 0.0
    %5316 = vmatpush1.xpose.msra.mxu0 0.0
    %5317 = vmatprep.subr.mxu0 0.0
    %5318 = vmatpush1.xpose.msra.mxu0 0.0
    %5319 = vmatprep.subr.mxu0 0.0
    %5320 = vmatpush1.xpose.msra.mxu0 0.0
    %5321 = vmatprep.subr.mxu0 0.0
    %5322 = vmatpush1.xpose.msra.mxu0 0.0
    %5323 = vmatprep.subr.mxu0 0.0
    %5324 = vmatpush1.xpose.msra.mxu0 0.0
    %5325 = vmatprep.subr.mxu0 0.0
    %5326 = vmatpush1.xpose.msra.mxu0 0.0
    %5327 = vmatprep.subr.mxu0 0.0
    %5328 = vmatpush1.xpose.msra.mxu0 0.0
    %5329 = vmatprep.subr.mxu0 0.0
    %5330 = vmatpush1.xpose.msra.mxu0 0.0
    %5331 = vmatprep.subr.mxu0 0.0
    %5332 = vmatpush1.xpose.msra.mxu0 0.0
    %5333 = vmatprep.subr.mxu0 0.0
    %5334 = vmatpush1.xpose.msra.mxu0 0.0
    %5335 = vmatprep.subr.mxu0 0.0
    %5336 = vmatpush1.xpose.msra.mxu0 0.0
    %5337 = vmatprep.subr.mxu0 0.0
    %5338 = vmatpush1.xpose.msra.mxu0 0.0
    %5339 = vmatprep.subr.mxu0 0.0
    %5340 = vmatpush1.xpose.msra.mxu0 0.0
    %5341 = vmatprep.subr.mxu0 0.0
    %5342 = vmatpush1.xpose.msra.mxu0 0.0
    %5343 = vmatprep.subr.mxu0 0.0
    %5344 = vmatpush1.xpose.msra.mxu0 0.0
    %5345 = vmatprep.subr.mxu0 0.0
    %5346 = vmatpush1.xpose.msra.mxu0 0.0
    %5347 = vmatprep.subr.mxu0 0.0
    %5348 = vmatpush1.xpose.msra.mxu0 0.0
    %5349 = vmatprep.subr.mxu0 0.0
    %5350 = vmatpush1.xpose.msra.mxu0 0.0
    %5351 = vmatprep.subr.mxu0 0.0
    %5352 = vmatpush1.xpose.msra.mxu0 0.0
    %5353 = vmatprep.subr.mxu0 0.0
    %5354 = vmatpush1.xpose.msra.mxu0 0.0
    %5355 = vmatprep.subr.mxu0 0.0
    %5356 = vmatpush1.xpose.msra.mxu0 0.0
    %5357 = vmatprep.subr.mxu0 0.0
    %5358 = vmatpush1.xpose.msra.mxu0 0.0
    %5359 = vmatprep.mubr.f32.mxu0 0.0
    %5360 = vmatmul.mubr.f32.gmra.mrb[0].mxu0 %v5287
    %v5361 = vpop.f32.mrb[0].mxu0
    %v5362 = vadd.f32 %v5095, %v5361
    %v5363 = vpop.f32.mrb[0].mxu0
    %5364 = vmatprep.mubr.f32.mxu0 0.0
    %5365 = vmatmul.mubr.f32.gmra.mrb[0].mxu0 %v5289
    %v5366 = vpop.f32.mrb[0].mxu0
    %v5367 = vadd.f32 %v5096, %v5366
    %v5368 = vpop.f32.mrb[0].mxu0
    %5369 = vdwg.mxu0
    %5370 = vrot.lane.b32.xlu0 %v252, 104
    %v5371 = vpop.permute.xlu0 %5370
    %5372 = vrot.lane.b32.xlu0 %v257, 104
    %v5373 = vpop.permute.xlu0 %5372
    %5374 = vrot.lane.b32.xlu0 %v252, 72
    %v5375 = vpop.permute.xlu0 %5374
    %5376 = vrot.lane.b32.xlu0 %v257, 72
    %v5377 = vpop.permute.xlu0 %5376
    %v5378 = vsel %vm308, %v5371, 0
    %v5380 = vsel %vm308, %v5373, 0
    %v5382 = vsel %vm308, %v5375, 0
    %v5384 = vsel %vm308, %v5377, 0
    %5386 = vmatprep.subr.mxu0 0.0
    %5387 = vmatpush1.xpose.msra.mxu0 %v5382
    %5388 = vmatprep.subr.mxu0 0.0
    %5389 = vmatpush1.xpose.msra.mxu0 %v5384
    %5390 = vmatprep.subr.mxu0 0.0
    %5391 = vmatpush1.xpose.msra.mxu0 0.0
    %5392 = vmatprep.subr.mxu0 0.0
    %5393 = vmatpush1.xpose.msra.mxu0 0.0
    %5394 = vmatprep.subr.mxu0 0.0
    %5395 = vmatpush1.xpose.msra.mxu0 0.0
    %5396 = vmatprep.subr.mxu0 0.0
    %5397 = vmatpush1.xpose.msra.mxu0 0.0
    %5398 = vmatprep.subr.mxu0 0.0
    %5399 = vmatpush1.xpose.msra.mxu0 0.0
    %5400 = vmatprep.subr.mxu0 0.0
    %5401 = vmatpush1.xpose.msra.mxu0 0.0
    %5402 = vmatprep.subr.mxu0 0.0
    %5403 = vmatpush1.xpose.msra.mxu0 0.0
    %5404 = vmatprep.subr.mxu0 0.0
    %5405 = vmatpush1.xpose.msra.mxu0 0.0
    %5406 = vmatprep.subr.mxu0 0.0
    %5407 = vmatpush1.xpose.msra.mxu0 0.0
    %5408 = vmatprep.subr.mxu0 0.0
    %5409 = vmatpush1.xpose.msra.mxu0 0.0
    %5410 = vmatprep.subr.mxu0 0.0
    %5411 = vmatpush1.xpose.msra.mxu0 0.0
    %5412 = vmatprep.subr.mxu0 0.0
    %5413 = vmatpush1.xpose.msra.mxu0 0.0
    %5414 = vmatprep.subr.mxu0 0.0
    %5415 = vmatpush1.xpose.msra.mxu0 0.0
    %5416 = vmatprep.subr.mxu0 0.0
    %5417 = vmatpush1.xpose.msra.mxu0 0.0
    %5418 = vmatprep.subr.mxu0 0.0
    %5419 = vmatpush1.xpose.msra.mxu0 0.0
    %5420 = vmatprep.subr.mxu0 0.0
    %5421 = vmatpush1.xpose.msra.mxu0 0.0
    %5422 = vmatprep.subr.mxu0 0.0
    %5423 = vmatpush1.xpose.msra.mxu0 0.0
    %5424 = vmatprep.subr.mxu0 0.0
    %5425 = vmatpush1.xpose.msra.mxu0 0.0
    %5426 = vmatprep.subr.mxu0 0.0
    %5427 = vmatpush1.xpose.msra.mxu0 0.0
    %5428 = vmatprep.subr.mxu0 0.0
    %5429 = vmatpush1.xpose.msra.mxu0 0.0
    %5430 = vmatprep.subr.mxu0 0.0
    %5431 = vmatpush1.xpose.msra.mxu0 0.0
    %5432 = vmatprep.subr.mxu0 0.0
    %5433 = vmatpush1.xpose.msra.mxu0 0.0
    %5434 = vmatprep.subr.mxu0 0.0
    %5435 = vmatpush1.xpose.msra.mxu0 0.0
    %5436 = vmatprep.subr.mxu0 0.0
    %5437 = vmatpush1.xpose.msra.mxu0 0.0
    %5438 = vmatprep.subr.mxu0 0.0
    %5439 = vmatpush1.xpose.msra.mxu0 0.0
    %5440 = vmatprep.subr.mxu0 0.0
    %5441 = vmatpush1.xpose.msra.mxu0 0.0
    %5442 = vmatprep.subr.mxu0 0.0
    %5443 = vmatpush1.xpose.msra.mxu0 0.0
    %5444 = vmatprep.subr.mxu0 0.0
    %5445 = vmatpush1.xpose.msra.mxu0 0.0
    %5446 = vmatprep.subr.mxu0 0.0
    %5447 = vmatpush1.xpose.msra.mxu0 0.0
    %5448 = vmatprep.subr.mxu0 0.0
    %5449 = vmatpush1.xpose.msra.mxu0 0.0
    %5450 = vmatprep.mubr.f32.mxu0 0.0
    %5451 = vmatmul.mubr.f32.gmra.mrb[0].mxu0 %v5378
    %v5452 = vpop.f32.mrb[0].mxu0
    %v5453 = vadd.f32 %v5095, %v5452
    %v5454 = vpop.f32.mrb[0].mxu0
    %5455 = vmatprep.mubr.f32.mxu0 0.0
    %5456 = vmatmul.mubr.f32.gmra.mrb[0].mxu0 %v5380
    %v5457 = vpop.f32.mrb[0].mxu0
    %v5458 = vadd.f32 %v5096, %v5457
    %v5459 = vpop.f32.mrb[0].mxu0
    %5460 = vdwg.mxu0
    %5461 = vrot.lane.b32.xlu0 %v262, 104
    %v5462 = vpop.permute.xlu0 %5461
    %5463 = vrot.lane.b32.xlu0 %v267, 104
    %v5464 = vpop.permute.xlu0 %5463
    %5465 = vrot.lane.b32.xlu0 %v262, 72
    %v5466 = vpop.permute.xlu0 %5465
    %5467 = vrot.lane.b32.xlu0 %v267, 72
    %v5468 = vpop.permute.xlu0 %5467
    %v5469 = vsel %vm308, %v5462, 0
    %v5471 = vsel %vm308, %v5464, 0
    %v5473 = vsel %vm308, %v5466, 0
    %v5475 = vsel %vm308, %v5468, 0
    %5477 = vmatprep.subr.mxu0 0.0
    %5478 = vmatpush1.xpose.msra.mxu0 %v5473
    %5479 = vmatprep.subr.mxu0 0.0
    %5480 = vmatpush1.xpose.msra.mxu0 %v5475
    %5481 = vmatprep.subr.mxu0 0.0
    %5482 = vmatpush1.xpose.msra.mxu0 0.0
    %5483 = vmatprep.subr.mxu0 0.0
    %5484 = vmatpush1.xpose.msra.mxu0 0.0
    %5485 = vmatprep.subr.mxu0 0.0
    %5486 = vmatpush1.xpose.msra.mxu0 0.0
    %5487 = vmatprep.subr.mxu0 0.0
    %5488 = vmatpush1.xpose.msra.mxu0 0.0
    %5489 = vmatprep.subr.mxu0 0.0
    %5490 = vmatpush1.xpose.msra.mxu0 0.0
    %5491 = vmatprep.subr.mxu0 0.0
    %5492 = vmatpush1.xpose.msra.mxu0 0.0
    %5493 = vmatprep.subr.mxu0 0.0
    %5494 = vmatpush1.xpose.msra.mxu0 0.0
    %5495 = vmatprep.subr.mxu0 0.0
    %5496 = vmatpush1.xpose.msra.mxu0 0.0
    %5497 = vmatprep.subr.mxu0 0.0
    %5498 = vmatpush1.xpose.msra.mxu0 0.0
    %5499 = vmatprep.subr.mxu0 0.0
    %5500 = vmatpush1.xpose.msra.mxu0 0.0
    %5501 = vmatprep.subr.mxu0 0.0
    %5502 = vmatpush1.xpose.msra.mxu0 0.0
    %5503 = vmatprep.subr.mxu0 0.0
    %5504 = vmatpush1.xpose.msra.mxu0 0.0
    %5505 = vmatprep.subr.mxu0 0.0
    %5506 = vmatpush1.xpose.msra.mxu0 0.0
    %5507 = vmatprep.subr.mxu0 0.0
    %5508 = vmatpush1.xpose.msra.mxu0 0.0
    %5509 = vmatprep.subr.mxu0 0.0
    %5510 = vmatpush1.xpose.msra.mxu0 0.0
    %5511 = vmatprep.subr.mxu0 0.0
    %5512 = vmatpush1.xpose.msra.mxu0 0.0
    %5513 = vmatprep.subr.mxu0 0.0
    %5514 = vmatpush1.xpose.msra.mxu0 0.0
    %5515 = vmatprep.subr.mxu0 0.0
    %5516 = vmatpush1.xpose.msra.mxu0 0.0
    %5517 = vmatprep.subr.mxu0 0.0
    %5518 = vmatpush1.xpose.msra.mxu0 0.0
    %5519 = vmatprep.subr.mxu0 0.0
    %5520 = vmatpush1.xpose.msra.mxu0 0.0
    %5521 = vmatprep.subr.mxu0 0.0
    %5522 = vmatpush1.xpose.msra.mxu0 0.0
    %5523 = vmatprep.subr.mxu0 0.0
    %5524 = vmatpush1.xpose.msra.mxu0 0.0
    %5525 = vmatprep.subr.mxu0 0.0
    %5526 = vmatpush1.xpose.msra.mxu0 0.0
    %5527 = vmatprep.subr.mxu0 0.0
    %5528 = vmatpush1.xpose.msra.mxu0 0.0
    %5529 = vmatprep.subr.mxu0 0.0
    %5530 = vmatpush1.xpose.msra.mxu0 0.0
    %5531 = vmatprep.subr.mxu0 0.0
    %5532 = vmatpush1.xpose.msra.mxu0 0.0
    %5533 = vmatprep.subr.mxu0 0.0
    %5534 = vmatpush1.xpose.msra.mxu0 0.0
    %5535 = vmatprep.subr.mxu0 0.0
    %5536 = vmatpush1.xpose.msra.mxu0 0.0
    %5537 = vmatprep.subr.mxu0 0.0
    %5538 = vmatpush1.xpose.msra.mxu0 0.0
    %5539 = vmatprep.subr.mxu0 0.0
    %5540 = vmatpush1.xpose.msra.mxu0 0.0
    %5541 = vmatprep.mubr.f32.mxu0 0.0
    %5542 = vmatmul.mubr.f32.gmra.mrb[0].mxu0 %v5469
    %v5543 = vpop.f32.mrb[0].mxu0
    %v5544 = vadd.f32 %v5095, %v5543
    %v5545 = vpop.f32.mrb[0].mxu0
    %5546 = vmatprep.mubr.f32.mxu0 0.0
    %5547 = vmatmul.mubr.f32.gmra.mrb[0].mxu0 %v5471
    %v5548 = vpop.f32.mrb[0].mxu0
    %v5549 = vadd.f32 %v5096, %v5548
    %v5550 = vpop.f32.mrb[0].mxu0
    %5551 = vdwg.mxu0
    %5552 = vrot.lane.b32.xlu0 %v272, 104
    %v5553 = vpop.permute.xlu0 %5552
    %5554 = vrot.lane.b32.xlu0 %v277, 104
    %v5555 = vpop.permute.xlu0 %5554
    %5556 = vrot.lane.b32.xlu0 %v272, 72
    %v5557 = vpop.permute.xlu0 %5556
    %5558 = vrot.lane.b32.xlu0 %v277, 72
    %v5559 = vpop.permute.xlu0 %5558
    %v5560 = vsel %vm308, %v5553, 0
    %v5562 = vsel %vm308, %v5555, 0
    %v5564 = vsel %vm308, %v5557, 0
    %v5566 = vsel %vm308, %v5559, 0
    %5568 = vmatprep.subr.mxu0 0.0
    %5569 = vmatpush1.xpose.msra.mxu0 %v5564
    %5570 = vmatprep.subr.mxu0 0.0
    %5571 = vmatpush1.xpose.msra.mxu0 %v5566
    %5572 = vmatprep.subr.mxu0 0.0
    %5573 = vmatpush1.xpose.msra.mxu0 0.0
    %5574 = vmatprep.subr.mxu0 0.0
    %5575 = vmatpush1.xpose.msra.mxu0 0.0
    %5576 = vmatprep.subr.mxu0 0.0
    %5577 = vmatpush1.xpose.msra.mxu0 0.0
    %5578 = vmatprep.subr.mxu0 0.0
    %5579 = vmatpush1.xpose.msra.mxu0 0.0
    %5580 = vmatprep.subr.mxu0 0.0
    %5581 = vmatpush1.xpose.msra.mxu0 0.0
    %5582 = vmatprep.subr.mxu0 0.0
    %5583 = vmatpush1.xpose.msra.mxu0 0.0
    %5584 = vmatprep.subr.mxu0 0.0
    %5585 = vmatpush1.xpose.msra.mxu0 0.0
    %5586 = vmatprep.subr.mxu0 0.0
    %5587 = vmatpush1.xpose.msra.mxu0 0.0
    %5588 = vmatprep.subr.mxu0 0.0
    %5589 = vmatpush1.xpose.msra.mxu0 0.0
    %5590 = vmatprep.subr.mxu0 0.0
    %5591 = vmatpush1.xpose.msra.mxu0 0.0
    %5592 = vmatprep.subr.mxu0 0.0
    %5593 = vmatpush1.xpose.msra.mxu0 0.0
    %5594 = vmatprep.subr.mxu0 0.0
    %5595 = vmatpush1.xpose.msra.mxu0 0.0
    %5596 = vmatprep.subr.mxu0 0.0
    %5597 = vmatpush1.xpose.msra.mxu0 0.0
    %5598 = vmatprep.subr.mxu0 0.0
    %5599 = vmatpush1.xpose.msra.mxu0 0.0
    %5600 = vmatprep.subr.mxu0 0.0
    %5601 = vmatpush1.xpose.msra.mxu0 0.0
    %5602 = vmatprep.subr.mxu0 0.0
    %5603 = vmatpush1.xpose.msra.mxu0 0.0
    %5604 = vmatprep.subr.mxu0 0.0
    %5605 = vmatpush1.xpose.msra.mxu0 0.0
    %5606 = vmatprep.subr.mxu0 0.0
    %5607 = vmatpush1.xpose.msra.mxu0 0.0
    %5608 = vmatprep.subr.mxu0 0.0
    %5609 = vmatpush1.xpose.msra.mxu0 0.0
    %5610 = vmatprep.subr.mxu0 0.0
    %5611 = vmatpush1.xpose.msra.mxu0 0.0
    %5612 = vmatprep.subr.mxu0 0.0
    %5613 = vmatpush1.xpose.msra.mxu0 0.0
    %5614 = vmatprep.subr.mxu0 0.0
    %5615 = vmatpush1.xpose.msra.mxu0 0.0
    %5616 = vmatprep.subr.mxu0 0.0
    %5617 = vmatpush1.xpose.msra.mxu0 0.0
    %5618 = vmatprep.subr.mxu0 0.0
    %5619 = vmatpush1.xpose.msra.mxu0 0.0
    %5620 = vmatprep.subr.mxu0 0.0
    %5621 = vmatpush1.xpose.msra.mxu0 0.0
    %5622 = vmatprep.subr.mxu0 0.0
    %5623 = vmatpush1.xpose.msra.mxu0 0.0
    %5624 = vmatprep.subr.mxu0 0.0
    %5625 = vmatpush1.xpose.msra.mxu0 0.0
    %5626 = vmatprep.subr.mxu0 0.0
    %5627 = vmatpush1.xpose.msra.mxu0 0.0
    %5628 = vmatprep.subr.mxu0 0.0
    %5629 = vmatpush1.xpose.msra.mxu0 0.0
    %5630 = vmatprep.subr.mxu0 0.0
    %5631 = vmatpush1.xpose.msra.mxu0 0.0
    %5632 = vmatprep.mubr.f32.mxu0 0.0
    %5633 = vmatmul.mubr.f32.gmra.mrb[0].mxu0 %v5560
    %v5634 = vpop.f32.mrb[0].mxu0
    %v5635 = vadd.f32 %v5095, %v5634
    %v5636 = vpop.f32.mrb[0].mxu0
    %5637 = vmatprep.mubr.f32.mxu0 0.0
    %5638 = vmatmul.mubr.f32.gmra.mrb[0].mxu0 %v5562
    %v5639 = vpop.f32.mrb[0].mxu0
    %v5640 = vadd.f32 %v5096, %v5639
    %v5641 = vpop.f32.mrb[0].mxu0
    %5642 = vdwg.mxu0
    %5643 = vrot.lane.b32.xlu0 %v282, 104
    %v5644 = vpop.permute.xlu0 %5643
    %5645 = vrot.lane.b32.xlu0 %v287, 104
    %v5646 = vpop.permute.xlu0 %5645
    %5647 = vrot.lane.b32.xlu0 %v282, 72
    %v5648 = vpop.permute.xlu0 %5647
    %5649 = vrot.lane.b32.xlu0 %v287, 72
    %v5650 = vpop.permute.xlu0 %5649
    %v5651 = vsel %vm308, %v5644, 0
    %v5653 = vsel %vm308, %v5646, 0
    %v5655 = vsel %vm308, %v5648, 0
    %v5657 = vsel %vm308, %v5650, 0
    %5659 = vmatprep.subr.mxu0 0.0
    %5660 = vmatpush1.xpose.msra.mxu0 %v5655
    %5661 = vmatprep.subr.mxu0 0.0
    %5662 = vmatpush1.xpose.msra.mxu0 %v5657
    %5663 = vmatprep.subr.mxu0 0.0
    %5664 = vmatpush1.xpose.msra.mxu0 0.0
    %5665 = vmatprep.subr.mxu0 0.0
    %5666 = vmatpush1.xpose.msra.mxu0 0.0
    %5667 = vmatprep.subr.mxu0 0.0
    %5668 = vmatpush1.xpose.msra.mxu0 0.0
    %5669 = vmatprep.subr.mxu0 0.0
    %5670 = vmatpush1.xpose.msra.mxu0 0.0
    %5671 = vmatprep.subr.mxu0 0.0
    %5672 = vmatpush1.xpose.msra.mxu0 0.0
    %5673 = vmatprep.subr.mxu0 0.0
    %5674 = vmatpush1.xpose.msra.mxu0 0.0
    %5675 = vmatprep.subr.mxu0 0.0
    %5676 = vmatpush1.xpose.msra.mxu0 0.0
    %5677 = vmatprep.subr.mxu0 0.0
    %5678 = vmatpush1.xpose.msra.mxu0 0.0
    %5679 = vmatprep.subr.mxu0 0.0
    %5680 = vmatpush1.xpose.msra.mxu0 0.0
    %5681 = vmatprep.subr.mxu0 0.0
    %5682 = vmatpush1.xpose.msra.mxu0 0.0
    %5683 = vmatprep.subr.mxu0 0.0
    %5684 = vmatpush1.xpose.msra.mxu0 0.0
    %5685 = vmatprep.subr.mxu0 0.0
    %5686 = vmatpush1.xpose.msra.mxu0 0.0
    %5687 = vmatprep.subr.mxu0 0.0
    %5688 = vmatpush1.xpose.msra.mxu0 0.0
    %5689 = vmatprep.subr.mxu0 0.0
    %5690 = vmatpush1.xpose.msra.mxu0 0.0
    %5691 = vmatprep.subr.mxu0 0.0
    %5692 = vmatpush1.xpose.msra.mxu0 0.0
    %5693 = vmatprep.subr.mxu0 0.0
    %5694 = vmatpush1.xpose.msra.mxu0 0.0
    %5695 = vmatprep.subr.mxu0 0.0
    %5696 = vmatpush1.xpose.msra.mxu0 0.0
    %5697 = vmatprep.subr.mxu0 0.0
    %5698 = vmatpush1.xpose.msra.mxu0 0.0
    %5699 = vmatprep.subr.mxu0 0.0
    %5700 = vmatpush1.xpose.msra.mxu0 0.0
    %5701 = vmatprep.subr.mxu0 0.0
    %5702 = vmatpush1.xpose.msra.mxu0 0.0
    %5703 = vmatprep.subr.mxu0 0.0
    %5704 = vmatpush1.xpose.msra.mxu0 0.0
    %5705 = vmatprep.subr.mxu0 0.0
    %5706 = vmatpush1.xpose.msra.mxu0 0.0
    %5707 = vmatprep.subr.mxu0 0.0
    %5708 = vmatpush1.xpose.msra.mxu0 0.0
    %5709 = vmatprep.subr.mxu0 0.0
    %5710 = vmatpush1.xpose.msra.mxu0 0.0
    %5711 = vmatprep.subr.mxu0 0.0
    %5712 = vmatpush1.xpose.msra.mxu0 0.0
    %5713 = vmatprep.subr.mxu0 0.0
    %5714 = vmatpush1.xpose.msra.mxu0 0.0
    %5715 = vmatprep.subr.mxu0 0.0
    %5716 = vmatpush1.xpose.msra.mxu0 0.0
    %5717 = vmatprep.subr.mxu0 0.0
    %5718 = vmatpush1.xpose.msra.mxu0 0.0
    %5719 = vmatprep.subr.mxu0 0.0
    %5720 = vmatpush1.xpose.msra.mxu0 0.0
    %5721 = vmatprep.subr.mxu0 0.0
    %5722 = vmatpush1.xpose.msra.mxu0 0.0
    %5723 = vmatprep.mubr.f32.mxu0 0.0
    %5724 = vmatmul.mubr.f32.gmra.mrb[0].mxu0 %v5651
    %v5725 = vpop.f32.mrb[0].mxu0
    %v5726 = vadd.f32 %v5095, %v5725
    %v5727 = vpop.f32.mrb[0].mxu0
    %5728 = vmatprep.mubr.f32.mxu0 0.0
    %5729 = vmatmul.mubr.f32.gmra.mrb[0].mxu0 %v5653
    %v5730 = vpop.f32.mrb[0].mxu0
    %v5731 = vadd.f32 %v5096, %v5730
    %v5732 = vpop.f32.mrb[0].mxu0
    %5733 = vdwg.mxu0
    %5734 = vrot.lane.b32.xlu0 %v292, 104
    %v5735 = vpop.permute.xlu0 %5734
    %5736 = vrot.lane.b32.xlu0 %v297, 104
    %v5737 = vpop.permute.xlu0 %5736
    %5738 = vrot.lane.b32.xlu0 %v292, 72
    %v5739 = vpop.permute.xlu0 %5738
    %5740 = vrot.lane.b32.xlu0 %v297, 72
    %v5741 = vpop.permute.xlu0 %5740
    %v5742 = vsel %vm308, %v5735, 0
    %v5744 = vsel %vm308, %v5737, 0
    %v5746 = vsel %vm308, %v5739, 0
    %v5748 = vsel %vm308, %v5741, 0
    %5750 = vmatprep.subr.mxu0 0.0
    %5751 = vmatpush1.xpose.msra.mxu0 %v5746
    %5752 = vmatprep.subr.mxu0 0.0
    %5753 = vmatpush1.xpose.msra.mxu0 %v5748
    %5754 = vmatprep.subr.mxu0 0.0
    %5755 = vmatpush1.xpose.msra.mxu0 0.0
    %5756 = vmatprep.subr.mxu0 0.0
    %5757 = vmatpush1.xpose.msra.mxu0 0.0
    %5758 = vmatprep.subr.mxu0 0.0
    %5759 = vmatpush1.xpose.msra.mxu0 0.0
    %5760 = vmatprep.subr.mxu0 0.0
    %5761 = vmatpush1.xpose.msra.mxu0 0.0
    %5762 = vmatprep.subr.mxu0 0.0
    %5763 = vmatpush1.xpose.msra.mxu0 0.0
    %5764 = vmatprep.subr.mxu0 0.0
    %5765 = vmatpush1.xpose.msra.mxu0 0.0
    %5766 = vmatprep.subr.mxu0 0.0
    %5767 = vmatpush1.xpose.msra.mxu0 0.0
    %5768 = vmatprep.subr.mxu0 0.0
    %5769 = vmatpush1.xpose.msra.mxu0 0.0
    %5770 = vmatprep.subr.mxu0 0.0
    %5771 = vmatpush1.xpose.msra.mxu0 0.0
    %5772 = vmatprep.subr.mxu0 0.0
    %5773 = vmatpush1.xpose.msra.mxu0 0.0
    %5774 = vmatprep.subr.mxu0 0.0
    %5775 = vmatpush1.xpose.msra.mxu0 0.0
    %5776 = vmatprep.subr.mxu0 0.0
    %5777 = vmatpush1.xpose.msra.mxu0 0.0
    %5778 = vmatprep.subr.mxu0 0.0
    %5779 = vmatpush1.xpose.msra.mxu0 0.0
    %5780 = vmatprep.subr.mxu0 0.0
    %5781 = vmatpush1.xpose.msra.mxu0 0.0
    %5782 = vmatprep.subr.mxu0 0.0
    %5783 = vmatpush1.xpose.msra.mxu0 0.0
    %5784 = vmatprep.subr.mxu0 0.0
    %5785 = vmatpush1.xpose.msra.mxu0 0.0
    %5786 = vmatprep.subr.mxu0 0.0
    %5787 = vmatpush1.xpose.msra.mxu0 0.0
    %5788 = vmatprep.subr.mxu0 0.0
    %5789 = vmatpush1.xpose.msra.mxu0 0.0
    %5790 = vmatprep.subr.mxu0 0.0
    %5791 = vmatpush1.xpose.msra.mxu0 0.0
    %5792 = vmatprep.subr.mxu0 0.0
    %5793 = vmatpush1.xpose.msra.mxu0 0.0
    %5794 = vmatprep.subr.mxu0 0.0
    %5795 = vmatpush1.xpose.msra.mxu0 0.0
    %5796 = vmatprep.subr.mxu0 0.0
    %5797 = vmatpush1.xpose.msra.mxu0 0.0
    %5798 = vmatprep.subr.mxu0 0.0
    %5799 = vmatpush1.xpose.msra.mxu0 0.0
    %5800 = vmatprep.subr.mxu0 0.0
    %5801 = vmatpush1.xpose.msra.mxu0 0.0
    %5802 = vmatprep.subr.mxu0 0.0
    %5803 = vmatpush1.xpose.msra.mxu0 0.0
    %5804 = vmatprep.subr.mxu0 0.0
    %5805 = vmatpush1.xpose.msra.mxu0 0.0
    %5806 = vmatprep.subr.mxu0 0.0
    %5807 = vmatpush1.xpose.msra.mxu0 0.0
    %5808 = vmatprep.subr.mxu0 0.0
    %5809 = vmatpush1.xpose.msra.mxu0 0.0
    %5810 = vmatprep.subr.mxu0 0.0
    %5811 = vmatpush1.xpose.msra.mxu0 0.0
    %5812 = vmatprep.subr.mxu0 0.0
    %5813 = vmatpush1.xpose.msra.mxu0 0.0
    %5814 = vmatprep.mubr.f32.mxu0 0.0
    %5815 = vmatmul.mubr.f32.gmra.mrb[0].mxu0 %v5742
    %v5816 = vpop.f32.mrb[0].mxu0
    %v5817 = vadd.f32 %v5095, %v5816
    %v5818 = vpop.f32.mrb[0].mxu0
    %5819 = vmatprep.mubr.f32.mxu0 0.0
    %5820 = vmatmul.mubr.f32.gmra.mrb[0].mxu0 %v5744
    %v5821 = vpop.f32.mrb[0].mxu0
    %v5822 = vadd.f32 %v5096, %v5821
    %v5823 = vpop.f32.mrb[0].mxu0
    %5824 = vdwg.mxu0
    %v5825 = vsel %vm1015, %v5180, -inf
    %5826 = vmax.xlane.f32.xlu0 %v5825
    %v5827 = vpop.xlane.xlu0 %5826
    %v5828 = vsel %vm1015, %v5185, -inf
    %5829 = vmax.xlane.f32.xlu0 %v5828
    %v5830 = vpop.xlane.xlu0 %5829
    %v5831 = vsel %vm1015, %v5271, -inf
    %5832 = vmax.xlane.f32.xlu0 %v5831
    %v5833 = vpop.xlane.xlu0 %5832
    %v5834 = vsel %vm1015, %v5276, -inf
    %5835 = vmax.xlane.f32.xlu0 %v5834
    %v5836 = vpop.xlane.xlu0 %5835
    %v5837 = vsel %vm1015, %v5362, -inf
    %5838 = vmax.xlane.f32.xlu0 %v5837
    %v5839 = vpop.xlane.xlu0 %5838
    %v5840 = vsel %vm1015, %v5367, -inf
    %5841 = vmax.xlane.f32.xlu0 %v5840
    %v5842 = vpop.xlane.xlu0 %5841
    %v5843 = vsel %vm1015, %v5453, -inf
    %5844 = vmax.xlane.f32.xlu0 %v5843
    %v5845 = vpop.xlane.xlu0 %5844
    %v5846 = vsel %vm1015, %v5458, -inf
    %5847 = vmax.xlane.f32.xlu0 %v5846
    %v5848 = vpop.xlane.xlu0 %5847
    %v5849 = vsel %vm1015, %v5544, -inf
    %5850 = vmax.xlane.f32.xlu0 %v5849
    %v5851 = vpop.xlane.xlu0 %5850
    %v5852 = vsel %vm1015, %v5549, -inf
    %5853 = vmax.xlane.f32.xlu0 %v5852
    %v5854 = vpop.xlane.xlu0 %5853
    %v5855 = vsel %vm1015, %v5635, -inf
    %5856 = vmax.xlane.f32.xlu0 %v5855
    %v5857 = vpop.xlane.xlu0 %5856
    %v5858 = vsel %vm1015, %v5640, -inf
    %5859 = vmax.xlane.f32.xlu0 %v5858
    %v5860 = vpop.xlane.xlu0 %5859
    %v5861 = vsel %vm1015, %v5726, -inf
    %5862 = vmax.xlane.f32.xlu0 %v5861
    %v5863 = vpop.xlane.xlu0 %5862
    %v5864 = vsel %vm1015, %v5731, -inf
    %5865 = vmax.xlane.f32.xlu0 %v5864
    %v5866 = vpop.xlane.xlu0 %5865
    %v5867 = vsel %vm1015, %v5817, -inf
    %5868 = vmax.xlane.f32.xlu0 %v5867
    %v5869 = vpop.xlane.xlu0 %5868
    %v5870 = vsel %vm1015, %v5822, -inf
    %5871 = vmax.xlane.f32.xlu0 %v5870
    %v5872 = vpop.xlane.xlu0 %5871
    %v5873 = vsub.f32 %v5180, %v5827
    %v5874 = vsub.f32 %v5185, %v5830
    %v5875 = vsub.f32 %v5271, %v5833
    %v5876 = vsub.f32 %v5276, %v5836
    %v5877 = vsub.f32 %v5362, %v5839
    %v5878 = vsub.f32 %v5367, %v5842
    %v5879 = vsub.f32 %v5453, %v5845
    %v5880 = vsub.f32 %v5458, %v5848
    %v5881 = vsub.f32 %v5544, %v5851
    %v5882 = vsub.f32 %v5549, %v5854
    %v5883 = vsub.f32 %v5635, %v5857
    %v5884 = vsub.f32 %v5640, %v5860
    %v5885 = vsub.f32 %v5726, %v5863
    %v5886 = vsub.f32 %v5731, %v5866
    %v5887 = vsub.f32 %v5817, %v5869
    %v5888 = vsub.f32 %v5822, %v5872
    %v5889 = vmul.f32 %v5873, 1.442695
    %v5890 = vpow.pop %v5889
    %v5891 = vmul.f32 %v5874, 1.442695
    %v5892 = vpow.pop %v5891
    %v5893 = vmul.f32 %v5875, 1.442695
    %v5894 = vpow.pop %v5893
    %v5895 = vmul.f32 %v5876, 1.442695
    %v5896 = vpow.pop %v5895
    %v5897 = vmul.f32 %v5877, 1.442695
    %v5898 = vpow.pop %v5897
    %v5899 = vmul.f32 %v5878, 1.442695
    %v5900 = vpow.pop %v5899
    %v5901 = vmul.f32 %v5879, 1.442695
    %v5902 = vpow.pop %v5901
    %v5903 = vmul.f32 %v5880, 1.442695
    %v5904 = vpow.pop %v5903
    %v5905 = vmul.f32 %v5881, 1.442695
    %v5906 = vpow.pop %v5905
    %v5907 = vmul.f32 %v5882, 1.442695
    %v5908 = vpow.pop %v5907
    %v5909 = vmul.f32 %v5883, 1.442695
    %v5910 = vpow.pop %v5909
    %v5911 = vmul.f32 %v5884, 1.442695
    %v5912 = vpow.pop %v5911
    %v5913 = vmul.f32 %v5885, 1.442695
    %v5914 = vpow.pop %v5913
    %v5915 = vmul.f32 %v5886, 1.442695
    %v5916 = vpow.pop %v5915
    %v5917 = vmul.f32 %v5887, 1.442695
    %v5918 = vpow.pop %v5917
    %v5919 = vmul.f32 %v5888, 1.442695
    %v5920 = vpow.pop %v5919
    %v5921 = vsel %vm1015, %v5890, 0.0
    %5922 = vadd.xlane.f32.xlu0 %v5921
    %v5923 = vpop.xlane.xlu0 %5922
    %v5924 = vsel %vm1015, %v5892, 0.0
    %5925 = vadd.xlane.f32.xlu0 %v5924
    %v5926 = vpop.xlane.xlu0 %5925
    %v5927 = vsel %vm1015, %v5894, 0.0
    %5928 = vadd.xlane.f32.xlu0 %v5927
    %v5929 = vpop.xlane.xlu0 %5928
    %v5930 = vsel %vm1015, %v5896, 0.0
    %5931 = vadd.xlane.f32.xlu0 %v5930
    %v5932 = vpop.xlane.xlu0 %5931
    %v5933 = vsel %vm1015, %v5898, 0.0
    %5934 = vadd.xlane.f32.xlu0 %v5933
    %v5935 = vpop.xlane.xlu0 %5934
    %v5936 = vsel %vm1015, %v5900, 0.0
    %5937 = vadd.xlane.f32.xlu0 %v5936
    %v5938 = vpop.xlane.xlu0 %5937
    %v5939 = vsel %vm1015, %v5902, 0.0
    %5940 = vadd.xlane.f32.xlu0 %v5939
    %v5941 = vpop.xlane.xlu0 %5940
    %v5942 = vsel %vm1015, %v5904, 0.0
    %5943 = vadd.xlane.f32.xlu0 %v5942
    %v5944 = vpop.xlane.xlu0 %5943
    %v5945 = vsel %vm1015, %v5906, 0.0
    %5946 = vadd.xlane.f32.xlu0 %v5945
    %v5947 = vpop.xlane.xlu0 %5946
    %v5948 = vsel %vm1015, %v5908, 0.0
    %5949 = vadd.xlane.f32.xlu0 %v5948
    %v5950 = vpop.xlane.xlu0 %5949
    %v5951 = vsel %vm1015, %v5910, 0.0
    %5952 = vadd.xlane.f32.xlu0 %v5951
    %v5953 = vpop.xlane.xlu0 %5952
    %v5954 = vsel %vm1015, %v5912, 0.0
    %5955 = vadd.xlane.f32.xlu0 %v5954
    %v5956 = vpop.xlane.xlu0 %5955
    %v5957 = vsel %vm1015, %v5914, 0.0
    %5958 = vadd.xlane.f32.xlu0 %v5957
    %v5959 = vpop.xlane.xlu0 %5958
    %v5960 = vsel %vm1015, %v5916, 0.0
    %5961 = vadd.xlane.f32.xlu0 %v5960
    %v5962 = vpop.xlane.xlu0 %5961
    %v5963 = vsel %vm1015, %v5918, 0.0
    %5964 = vadd.xlane.f32.xlu0 %v5963
    %v5965 = vpop.xlane.xlu0 %5964
    %v5966 = vsel %vm1015, %v5920, 0.0
    %5967 = vadd.xlane.f32.xlu0 %v5966
    %v5968 = vpop.xlane.xlu0 %5967
    %v5969 = vrcp.pop %v5923
    %v5970 = vrcp.pop %v5926
    %v5971 = vrcp.pop %v5929
    %v5972 = vrcp.pop %v5932
    %v5973 = vrcp.pop %v5935
    %v5974 = vrcp.pop %v5938
    %v5975 = vrcp.pop %v5941
    %v5976 = vrcp.pop %v5944
    %v5977 = vrcp.pop %v5947
    %v5978 = vrcp.pop %v5950
    %v5979 = vrcp.pop %v5953
    %v5980 = vrcp.pop %v5956
    %v5981 = vrcp.pop %v5959
    %v5982 = vrcp.pop %v5962
    %v5983 = vrcp.pop %v5965
    %v5984 = vrcp.pop %v5968
    %v5985 = vmul.f32 %v5890, %v5969
    %v5986 = vmul.f32 %v5892, %v5970
    %v5987 = vmul.f32 %v5894, %v5971
    %v5988 = vmul.f32 %v5896, %v5972
    %v5989 = vmul.f32 %v5898, %v5973
    %v5990 = vmul.f32 %v5900, %v5974
    %v5991 = vmul.f32 %v5902, %v5975
    %v5992 = vmul.f32 %v5904, %v5976
    %v5993 = vmul.f32 %v5906, %v5977
    %v5994 = vmul.f32 %v5908, %v5978
    %v5995 = vmul.f32 %v5910, %v5979
    %v5996 = vmul.f32 %v5912, %v5980
    %v5997 = vmul.f32 %v5914, %v5981
    %v5998 = vmul.f32 %v5916, %v5982
    %v5999 = vmul.f32 %v5918, %v5983
    %v6000 = vmul.f32 %v5920, %v5984
    %6001 = vrot.lane.b32.xlu0 %v222, 40
    %v6002 = vpop.permute.xlu0 %6001
    %6003 = vrot.lane.b32.xlu0 %v227, 40
    %v6004 = vpop.permute.xlu0 %6003
    %v6008 = vsel %vm1015, %v5985, 0
    %v6011 = vsel %vm1015, %v5986, 0
    %6013 = vmatprep.subr.mxu0 0.0
    %6014 = vmatpush1.msra.mxu0 %v6002
    %6015 = vmatprep.subr.mxu0 0.0
    %6016 = vmatpush1.msra.mxu0 %v6004
    %6017 = vmatprep.subr.mxu0 0.0
    %6018 = vmatpush1.msra.mxu0 0.0
    %6019 = vmatprep.subr.mxu0 0.0
    %6020 = vmatpush1.msra.mxu0 0.0
    %6021 = vmatprep.subr.mxu0 0.0
    %6022 = vmatpush1.msra.mxu0 0.0
    %6023 = vmatprep.subr.mxu0 0.0
    %6024 = vmatpush1.msra.mxu0 0.0
    %6025 = vmatprep.subr.mxu0 0.0
    %6026 = vmatpush1.msra.mxu0 0.0
    %6027 = vmatprep.subr.mxu0 0.0
    %6028 = vmatpush1.msra.mxu0 0.0
    %6029 = vmatprep.subr.mxu0 0.0
    %6030 = vmatpush1.msra.mxu0 0.0
    %6031 = vmatprep.subr.mxu0 0.0
    %6032 = vmatpush1.msra.mxu0 0.0
    %6033 = vmatprep.subr.mxu0 0.0
    %6034 = vmatpush1.msra.mxu0 0.0
    %6035 = vmatprep.subr.mxu0 0.0
    %6036 = vmatpush1.msra.mxu0 0.0
    %6037 = vmatprep.subr.mxu0 0.0
    %6038 = vmatpush1.msra.mxu0 0.0
    %6039 = vmatprep.subr.mxu0 0.0
    %6040 = vmatpush1.msra.mxu0 0.0
    %6041 = vmatprep.subr.mxu0 0.0
    %6042 = vmatpush1.msra.mxu0 0.0
    %6043 = vmatprep.subr.mxu0 0.0
    %6044 = vmatpush1.msra.mxu0 0.0
    %6045 = vmatprep.subr.mxu0 0.0
    %6046 = vmatpush1.msra.mxu0 0.0
    %6047 = vmatprep.subr.mxu0 0.0
    %6048 = vmatpush1.msra.mxu0 0.0
    %6049 = vmatprep.subr.mxu0 0.0
    %6050 = vmatpush1.msra.mxu0 0.0
    %6051 = vmatprep.subr.mxu0 0.0
    %6052 = vmatpush1.msra.mxu0 0.0
    %6053 = vmatprep.subr.mxu0 0.0
    %6054 = vmatpush1.msra.mxu0 0.0
    %6055 = vmatprep.subr.mxu0 0.0
    %6056 = vmatpush1.msra.mxu0 0.0
    %6057 = vmatprep.subr.mxu0 0.0
    %6058 = vmatpush1.msra.mxu0 0.0
    %6059 = vmatprep.subr.mxu0 0.0
    %6060 = vmatpush1.msra.mxu0 0.0
    %6061 = vmatprep.subr.mxu0 0.0
    %6062 = vmatpush1.msra.mxu0 0.0
    %6063 = vmatprep.subr.mxu0 0.0
    %6064 = vmatpush1.msra.mxu0 0.0
    %6065 = vmatprep.subr.mxu0 0.0
    %6066 = vmatpush1.msra.mxu0 0.0
    %6067 = vmatprep.subr.mxu0 0.0
    %6068 = vmatpush1.msra.mxu0 0.0
    %6069 = vmatprep.subr.mxu0 0.0
    %6070 = vmatpush1.msra.mxu0 0.0
    %6071 = vmatprep.subr.mxu0 0.0
    %6072 = vmatpush1.msra.mxu0 0.0
    %6073 = vmatprep.subr.mxu0 0.0
    %6074 = vmatpush1.msra.mxu0 0.0
    %6075 = vmatprep.subr.mxu0 0.0
    %6076 = vmatpush1.msra.mxu0 0.0
    %6077 = vmatprep.mubr.f32.mxu0 0.0
    %6078 = vmatmul.mubr.f32.gmra.mrb[0].mxu0 %v6008
    %v6079 = vpop.f32.mrb[0].mxu0
    %v6080 = vadd.f32 0.0, %v6079
    %v6081 = vpop.f32.mrb[0].mxu0
    %6082 = vmatprep.mubr.f32.mxu0 0.0
    %6083 = vmatmul.mubr.f32.gmra.mrb[0].mxu0 %v6011
    %v6084 = vpop.f32.mrb[0].mxu0
    %v6085 = vadd.f32 0.0, %v6084
    %v6086 = vpop.f32.mrb[0].mxu0
    %6087 = vdwg.mxu0
    %6088 = vrot.lane.b32.xlu0 %v232, 40
    %v6089 = vpop.permute.xlu0 %6088
    %6090 = vrot.lane.b32.xlu0 %v237, 40
    %v6091 = vpop.permute.xlu0 %6090
    %v6095 = vsel %vm1015, %v5987, 0
    %v6098 = vsel %vm1015, %v5988, 0
    %6100 = vmatprep.subr.mxu0 0.0
    %6101 = vmatpush1.msra.mxu0 %v6089
    %6102 = vmatprep.subr.mxu0 0.0
    %6103 = vmatpush1.msra.mxu0 %v6091
    %6104 = vmatprep.subr.mxu0 0.0
    %6105 = vmatpush1.msra.mxu0 0.0
    %6106 = vmatprep.subr.mxu0 0.0
    %6107 = vmatpush1.msra.mxu0 0.0
    %6108 = vmatprep.subr.mxu0 0.0
    %6109 = vmatpush1.msra.mxu0 0.0
    %6110 = vmatprep.subr.mxu0 0.0
    %6111 = vmatpush1.msra.mxu0 0.0
    %6112 = vmatprep.subr.mxu0 0.0
    %6113 = vmatpush1.msra.mxu0 0.0
    %6114 = vmatprep.subr.mxu0 0.0
    %6115 = vmatpush1.msra.mxu0 0.0
    %6116 = vmatprep.subr.mxu0 0.0
    %6117 = vmatpush1.msra.mxu0 0.0
    %6118 = vmatprep.subr.mxu0 0.0
    %6119 = vmatpush1.msra.mxu0 0.0
    %6120 = vmatprep.subr.mxu0 0.0
    %6121 = vmatpush1.msra.mxu0 0.0
    %6122 = vmatprep.subr.mxu0 0.0
    %6123 = vmatpush1.msra.mxu0 0.0
    %6124 = vmatprep.subr.mxu0 0.0
    %6125 = vmatpush1.msra.mxu0 0.0
    %6126 = vmatprep.subr.mxu0 0.0
    %6127 = vmatpush1.msra.mxu0 0.0
    %6128 = vmatprep.subr.mxu0 0.0
    %6129 = vmatpush1.msra.mxu0 0.0
    %6130 = vmatprep.subr.mxu0 0.0
    %6131 = vmatpush1.msra.mxu0 0.0
    %6132 = vmatprep.subr.mxu0 0.0
    %6133 = vmatpush1.msra.mxu0 0.0
    %6134 = vmatprep.subr.mxu0 0.0
    %6135 = vmatpush1.msra.mxu0 0.0
    %6136 = vmatprep.subr.mxu0 0.0
    %6137 = vmatpush1.msra.mxu0 0.0
    %6138 = vmatprep.subr.mxu0 0.0
    %6139 = vmatpush1.msra.mxu0 0.0
    %6140 = vmatprep.subr.mxu0 0.0
    %6141 = vmatpush1.msra.mxu0 0.0
    %6142 = vmatprep.subr.mxu0 0.0
    %6143 = vmatpush1.msra.mxu0 0.0
    %6144 = vmatprep.subr.mxu0 0.0
    %6145 = vmatpush1.msra.mxu0 0.0
    %6146 = vmatprep.subr.mxu0 0.0
    %6147 = vmatpush1.msra.mxu0 0.0
    %6148 = vmatprep.subr.mxu0 0.0
    %6149 = vmatpush1.msra.mxu0 0.0
    %6150 = vmatprep.subr.mxu0 0.0
    %6151 = vmatpush1.msra.mxu0 0.0
    %6152 = vmatprep.subr.mxu0 0.0
    %6153 = vmatpush1.msra.mxu0 0.0
    %6154 = vmatprep.subr.mxu0 0.0
    %6155 = vmatpush1.msra.mxu0 0.0
    %6156 = vmatprep.subr.mxu0 0.0
    %6157 = vmatpush1.msra.mxu0 0.0
    %6158 = vmatprep.subr.mxu0 0.0
    %6159 = vmatpush1.msra.mxu0 0.0
    %6160 = vmatprep.subr.mxu0 0.0
    %6161 = vmatpush1.msra.mxu0 0.0
    %6162 = vmatprep.subr.mxu0 0.0
    %6163 = vmatpush1.msra.mxu0 0.0
    %6164 = vmatprep.mubr.f32.mxu0 0.0
    %6165 = vmatmul.mubr.f32.gmra.mrb[0].mxu0 %v6095
    %v6166 = vpop.f32.mrb[0].mxu0
    %v6167 = vadd.f32 0.0, %v6166
    %v6168 = vpop.f32.mrb[0].mxu0
    %6169 = vmatprep.mubr.f32.mxu0 0.0
    %6170 = vmatmul.mubr.f32.gmra.mrb[0].mxu0 %v6098
    %v6171 = vpop.f32.mrb[0].mxu0
    %v6172 = vadd.f32 0.0, %v6171
    %v6173 = vpop.f32.mrb[0].mxu0
    %6174 = vdwg.mxu0
    %6175 = vrot.lane.b32.xlu0 %v242, 40
    %v6176 = vpop.permute.xlu0 %6175
    %6177 = vrot.lane.b32.xlu0 %v247, 40
    %v6178 = vpop.permute.xlu0 %6177
    %v6182 = vsel %vm1015, %v5989, 0
    %v6185 = vsel %vm1015, %v5990, 0
    %6187 = vmatprep.subr.mxu0 0.0
    %6188 = vmatpush1.msra.mxu0 %v6176
    %6189 = vmatprep.subr.mxu0 0.0
    %6190 = vmatpush1.msra.mxu0 %v6178
    %6191 = vmatprep.subr.mxu0 0.0
    %6192 = vmatpush1.msra.mxu0 0.0
    %6193 = vmatprep.subr.mxu0 0.0
    %6194 = vmatpush1.msra.mxu0 0.0
    %6195 = vmatprep.subr.mxu0 0.0
    %6196 = vmatpush1.msra.mxu0 0.0
    %6197 = vmatprep.subr.mxu0 0.0
    %6198 = vmatpush1.msra.mxu0 0.0
    %6199 = vmatprep.subr.mxu0 0.0
    %6200 = vmatpush1.msra.mxu0 0.0
    %6201 = vmatprep.subr.mxu0 0.0
    %6202 = vmatpush1.msra.mxu0 0.0
    %6203 = vmatprep.subr.mxu0 0.0
    %6204 = vmatpush1.msra.mxu0 0.0
    %6205 = vmatprep.subr.mxu0 0.0
    %6206 = vmatpush1.msra.mxu0 0.0
    %6207 = vmatprep.subr.mxu0 0.0
    %6208 = vmatpush1.msra.mxu0 0.0
    %6209 = vmatprep.subr.mxu0 0.0
    %6210 = vmatpush1.msra.mxu0 0.0
    %6211 = vmatprep.subr.mxu0 0.0
    %6212 = vmatpush1.msra.mxu0 0.0
    %6213 = vmatprep.subr.mxu0 0.0
    %6214 = vmatpush1.msra.mxu0 0.0
    %6215 = vmatprep.subr.mxu0 0.0
    %6216 = vmatpush1.msra.mxu0 0.0
    %6217 = vmatprep.subr.mxu0 0.0
    %6218 = vmatpush1.msra.mxu0 0.0
    %6219 = vmatprep.subr.mxu0 0.0
    %6220 = vmatpush1.msra.mxu0 0.0
    %6221 = vmatprep.subr.mxu0 0.0
    %6222 = vmatpush1.msra.mxu0 0.0
    %6223 = vmatprep.subr.mxu0 0.0
    %6224 = vmatpush1.msra.mxu0 0.0
    %6225 = vmatprep.subr.mxu0 0.0
    %6226 = vmatpush1.msra.mxu0 0.0
    %6227 = vmatprep.subr.mxu0 0.0
    %6228 = vmatpush1.msra.mxu0 0.0
    %6229 = vmatprep.subr.mxu0 0.0
    %6230 = vmatpush1.msra.mxu0 0.0
    %6231 = vmatprep.subr.mxu0 0.0
    %6232 = vmatpush1.msra.mxu0 0.0
    %6233 = vmatprep.subr.mxu0 0.0
    %6234 = vmatpush1.msra.mxu0 0.0
    %6235 = vmatprep.subr.mxu0 0.0
    %6236 = vmatpush1.msra.mxu0 0.0
    %6237 = vmatprep.subr.mxu0 0.0
    %6238 = vmatpush1.msra.mxu0 0.0
    %6239 = vmatprep.subr.mxu0 0.0
    %6240 = vmatpush1.msra.mxu0 0.0
    %6241 = vmatprep.subr.mxu0 0.0
    %6242 = vmatpush1.msra.mxu0 0.0
    %6243 = vmatprep.subr.mxu0 0.0
    %6244 = vmatpush1.msra.mxu0 0.0
    %6245 = vmatprep.subr.mxu0 0.0
    %6246 = vmatpush1.msra.mxu0 0.0
    %6247 = vmatprep.subr.mxu0 0.0
    %6248 = vmatpush1.msra.mxu0 0.0
    %6249 = vmatprep.subr.mxu0 0.0
    %6250 = vmatpush1.msra.mxu0 0.0
    %6251 = vmatprep.mubr.f32.mxu0 0.0
    %6252 = vmatmul.mubr.f32.gmra.mrb[0].mxu0 %v6182
    %v6253 = vpop.f32.mrb[0].mxu0
    %v6254 = vadd.f32 0.0, %v6253
    %v6255 = vpop.f32.mrb[0].mxu0
    %6256 = vmatprep.mubr.f32.mxu0 0.0
    %6257 = vmatmul.mubr.f32.gmra.mrb[0].mxu0 %v6185
    %v6258 = vpop.f32.mrb[0].mxu0
    %v6259 = vadd.f32 0.0, %v6258
    %v6260 = vpop.f32.mrb[0].mxu0
    %6261 = vdwg.mxu0
    %6262 = vrot.lane.b32.xlu0 %v252, 40
    %v6263 = vpop.permute.xlu0 %6262
    %6264 = vrot.lane.b32.xlu0 %v257, 40
    %v6265 = vpop.permute.xlu0 %6264
    %v6269 = vsel %vm1015, %v5991, 0
    %v6272 = vsel %vm1015, %v5992, 0
    %6274 = vmatprep.subr.mxu0 0.0
    %6275 = vmatpush1.msra.mxu0 %v6263
    %6276 = vmatprep.subr.mxu0 0.0
    %6277 = vmatpush1.msra.mxu0 %v6265
    %6278 = vmatprep.subr.mxu0 0.0
    %6279 = vmatpush1.msra.mxu0 0.0
    %6280 = vmatprep.subr.mxu0 0.0
    %6281 = vmatpush1.msra.mxu0 0.0
    %6282 = vmatprep.subr.mxu0 0.0
    %6283 = vmatpush1.msra.mxu0 0.0
    %6284 = vmatprep.subr.mxu0 0.0
    %6285 = vmatpush1.msra.mxu0 0.0
    %6286 = vmatprep.subr.mxu0 0.0
    %6287 = vmatpush1.msra.mxu0 0.0
    %6288 = vmatprep.subr.mxu0 0.0
    %6289 = vmatpush1.msra.mxu0 0.0
    %6290 = vmatprep.subr.mxu0 0.0
    %6291 = vmatpush1.msra.mxu0 0.0
    %6292 = vmatprep.subr.mxu0 0.0
    %6293 = vmatpush1.msra.mxu0 0.0
    %6294 = vmatprep.subr.mxu0 0.0
    %6295 = vmatpush1.msra.mxu0 0.0
    %6296 = vmatprep.subr.mxu0 0.0
    %6297 = vmatpush1.msra.mxu0 0.0
    %6298 = vmatprep.subr.mxu0 0.0
    %6299 = vmatpush1.msra.mxu0 0.0
    %6300 = vmatprep.subr.mxu0 0.0
    %6301 = vmatpush1.msra.mxu0 0.0
    %6302 = vmatprep.subr.mxu0 0.0
    %6303 = vmatpush1.msra.mxu0 0.0
    %6304 = vmatprep.subr.mxu0 0.0
    %6305 = vmatpush1.msra.mxu0 0.0
    %6306 = vmatprep.subr.mxu0 0.0
    %6307 = vmatpush1.msra.mxu0 0.0
    %6308 = vmatprep.subr.mxu0 0.0
    %6309 = vmatpush1.msra.mxu0 0.0
    %6310 = vmatprep.subr.mxu0 0.0
    %6311 = vmatpush1.msra.mxu0 0.0
    %6312 = vmatprep.subr.mxu0 0.0
    %6313 = vmatpush1.msra.mxu0 0.0
    %6314 = vmatprep.subr.mxu0 0.0
    %6315 = vmatpush1.msra.mxu0 0.0
    %6316 = vmatprep.subr.mxu0 0.0
    %6317 = vmatpush1.msra.mxu0 0.0
    %6318 = vmatprep.subr.mxu0 0.0
    %6319 = vmatpush1.msra.mxu0 0.0
    %6320 = vmatprep.subr.mxu0 0.0
    %6321 = vmatpush1.msra.mxu0 0.0
    %6322 = vmatprep.subr.mxu0 0.0
    %6323 = vmatpush1.msra.mxu0 0.0
    %6324 = vmatprep.subr.mxu0 0.0
    %6325 = vmatpush1.msra.mxu0 0.0
    %6326 = vmatprep.subr.mxu0 0.0
    %6327 = vmatpush1.msra.mxu0 0.0
    %6328 = vmatprep.subr.mxu0 0.0
    %6329 = vmatpush1.msra.mxu0 0.0
    %6330 = vmatprep.subr.mxu0 0.0
    %6331 = vmatpush1.msra.mxu0 0.0
    %6332 = vmatprep.subr.mxu0 0.0
    %6333 = vmatpush1.msra.mxu0 0.0
    %6334 = vmatprep.subr.mxu0 0.0
    %6335 = vmatpush1.msra.mxu0 0.0
    %6336 = vmatprep.subr.mxu0 0.0
    %6337 = vmatpush1.msra.mxu0 0.0
    %6338 = vmatprep.mubr.f32.mxu0 0.0
    %6339 = vmatmul.mubr.f32.gmra.mrb[0].mxu0 %v6269
    %v6340 = vpop.f32.mrb[0].mxu0
    %v6341 = vadd.f32 0.0, %v6340
    %v6342 = vpop.f32.mrb[0].mxu0
    %6343 = vmatprep.mubr.f32.mxu0 0.0
    %6344 = vmatmul.mubr.f32.gmra.mrb[0].mxu0 %v6272
    %v6345 = vpop.f32.mrb[0].mxu0
    %v6346 = vadd.f32 0.0, %v6345
    %v6347 = vpop.f32.mrb[0].mxu0
    %6348 = vdwg.mxu0
    %6349 = vrot.lane.b32.xlu0 %v262, 40
    %v6350 = vpop.permute.xlu0 %6349
    %6351 = vrot.lane.b32.xlu0 %v267, 40
    %v6352 = vpop.permute.xlu0 %6351
    %v6356 = vsel %vm1015, %v5993, 0
    %v6359 = vsel %vm1015, %v5994, 0
    %6361 = vmatprep.subr.mxu0 0.0
    %6362 = vmatpush1.msra.mxu0 %v6350
    %6363 = vmatprep.subr.mxu0 0.0
    %6364 = vmatpush1.msra.mxu0 %v6352
    %6365 = vmatprep.subr.mxu0 0.0
    %6366 = vmatpush1.msra.mxu0 0.0
    %6367 = vmatprep.subr.mxu0 0.0
    %6368 = vmatpush1.msra.mxu0 0.0
    %6369 = vmatprep.subr.mxu0 0.0
    %6370 = vmatpush1.msra.mxu0 0.0
    %6371 = vmatprep.subr.mxu0 0.0
    %6372 = vmatpush1.msra.mxu0 0.0
    %6373 = vmatprep.subr.mxu0 0.0
    %6374 = vmatpush1.msra.mxu0 0.0
    %6375 = vmatprep.subr.mxu0 0.0
    %6376 = vmatpush1.msra.mxu0 0.0
    %6377 = vmatprep.subr.mxu0 0.0
    %6378 = vmatpush1.msra.mxu0 0.0
    %6379 = vmatprep.subr.mxu0 0.0
    %6380 = vmatpush1.msra.mxu0 0.0
    %6381 = vmatprep.subr.mxu0 0.0
    %6382 = vmatpush1.msra.mxu0 0.0
    %6383 = vmatprep.subr.mxu0 0.0
    %6384 = vmatpush1.msra.mxu0 0.0
    %6385 = vmatprep.subr.mxu0 0.0
    %6386 = vmatpush1.msra.mxu0 0.0
    %6387 = vmatprep.subr.mxu0 0.0
    %6388 = vmatpush1.msra.mxu0 0.0
    %6389 = vmatprep.subr.mxu0 0.0
    %6390 = vmatpush1.msra.mxu0 0.0
    %6391 = vmatprep.subr.mxu0 0.0
    %6392 = vmatpush1.msra.mxu0 0.0
    %6393 = vmatprep.subr.mxu0 0.0
    %6394 = vmatpush1.msra.mxu0 0.0
    %6395 = vmatprep.subr.mxu0 0.0
    %6396 = vmatpush1.msra.mxu0 0.0
    %6397 = vmatprep.subr.mxu0 0.0
    %6398 = vmatpush1.msra.mxu0 0.0
    %6399 = vmatprep.subr.mxu0 0.0
    %6400 = vmatpush1.msra.mxu0 0.0
    %6401 = vmatprep.subr.mxu0 0.0
    %6402 = vmatpush1.msra.mxu0 0.0
    %6403 = vmatprep.subr.mxu0 0.0
    %6404 = vmatpush1.msra.mxu0 0.0
    %6405 = vmatprep.subr.mxu0 0.0
    %6406 = vmatpush1.msra.mxu0 0.0
    %6407 = vmatprep.subr.mxu0 0.0
    %6408 = vmatpush1.msra.mxu0 0.0
    %6409 = vmatprep.subr.mxu0 0.0
    %6410 = vmatpush1.msra.mxu0 0.0
    %6411 = vmatprep.subr.mxu0 0.0
    %6412 = vmatpush1.msra.mxu0 0.0
    %6413 = vmatprep.subr.mxu0 0.0
    %6414 = vmatpush1.msra.mxu0 0.0
    %6415 = vmatprep.subr.mxu0 0.0
    %6416 = vmatpush1.msra.mxu0 0.0
    %6417 = vmatprep.subr.mxu0 0.0
    %6418 = vmatpush1.msra.mxu0 0.0
    %6419 = vmatprep.subr.mxu0 0.0
    %6420 = vmatpush1.msra.mxu0 0.0
    %6421 = vmatprep.subr.mxu0 0.0
    %6422 = vmatpush1.msra.mxu0 0.0
    %6423 = vmatprep.subr.mxu0 0.0
    %6424 = vmatpush1.msra.mxu0 0.0
    %6425 = vmatprep.mubr.f32.mxu0 0.0
    %6426 = vmatmul.mubr.f32.gmra.mrb[0].mxu0 %v6356
    %v6427 = vpop.f32.mrb[0].mxu0
    %v6428 = vadd.f32 0.0, %v6427
    %v6429 = vpop.f32.mrb[0].mxu0
    %6430 = vmatprep.mubr.f32.mxu0 0.0
    %6431 = vmatmul.mubr.f32.gmra.mrb[0].mxu0 %v6359
    %v6432 = vpop.f32.mrb[0].mxu0
    %v6433 = vadd.f32 0.0, %v6432
    %v6434 = vpop.f32.mrb[0].mxu0
    %6435 = vdwg.mxu0
    %6436 = vrot.lane.b32.xlu0 %v272, 40
    %v6437 = vpop.permute.xlu0 %6436
    %6438 = vrot.lane.b32.xlu0 %v277, 40
    %v6439 = vpop.permute.xlu0 %6438
    %v6443 = vsel %vm1015, %v5995, 0
    %v6446 = vsel %vm1015, %v5996, 0
    %6448 = vmatprep.subr.mxu0 0.0
    %6449 = vmatpush1.msra.mxu0 %v6437
    %6450 = vmatprep.subr.mxu0 0.0
    %6451 = vmatpush1.msra.mxu0 %v6439
    %6452 = vmatprep.subr.mxu0 0.0
    %6453 = vmatpush1.msra.mxu0 0.0
    %6454 = vmatprep.subr.mxu0 0.0
    %6455 = vmatpush1.msra.mxu0 0.0
    %6456 = vmatprep.subr.mxu0 0.0
    %6457 = vmatpush1.msra.mxu0 0.0
    %6458 = vmatprep.subr.mxu0 0.0
    %6459 = vmatpush1.msra.mxu0 0.0
    %6460 = vmatprep.subr.mxu0 0.0
    %6461 = vmatpush1.msra.mxu0 0.0
    %6462 = vmatprep.subr.mxu0 0.0
    %6463 = vmatpush1.msra.mxu0 0.0
    %6464 = vmatprep.subr.mxu0 0.0
    %6465 = vmatpush1.msra.mxu0 0.0
    %6466 = vmatprep.subr.mxu0 0.0
    %6467 = vmatpush1.msra.mxu0 0.0
    %6468 = vmatprep.subr.mxu0 0.0
    %6469 = vmatpush1.msra.mxu0 0.0
    %6470 = vmatprep.subr.mxu0 0.0
    %6471 = vmatpush1.msra.mxu0 0.0
    %6472 = vmatprep.subr.mxu0 0.0
    %6473 = vmatpush1.msra.mxu0 0.0
    %6474 = vmatprep.subr.mxu0 0.0
    %6475 = vmatpush1.msra.mxu0 0.0
    %6476 = vmatprep.subr.mxu0 0.0
    %6477 = vmatpush1.msra.mxu0 0.0
    %6478 = vmatprep.subr.mxu0 0.0
    %6479 = vmatpush1.msra.mxu0 0.0
    %6480 = vmatprep.subr.mxu0 0.0
    %6481 = vmatpush1.msra.mxu0 0.0
    %6482 = vmatprep.subr.mxu0 0.0
    %6483 = vmatpush1.msra.mxu0 0.0
    %6484 = vmatprep.subr.mxu0 0.0
    %6485 = vmatpush1.msra.mxu0 0.0
    %6486 = vmatprep.subr.mxu0 0.0
    %6487 = vmatpush1.msra.mxu0 0.0
    %6488 = vmatprep.subr.mxu0 0.0
    %6489 = vmatpush1.msra.mxu0 0.0
    %6490 = vmatprep.subr.mxu0 0.0
    %6491 = vmatpush1.msra.mxu0 0.0
    %6492 = vmatprep.subr.mxu0 0.0
    %6493 = vmatpush1.msra.mxu0 0.0
    %6494 = vmatprep.subr.mxu0 0.0
    %6495 = vmatpush1.msra.mxu0 0.0
    %6496 = vmatprep.subr.mxu0 0.0
    %6497 = vmatpush1.msra.mxu0 0.0
    %6498 = vmatprep.subr.mxu0 0.0
    %6499 = vmatpush1.msra.mxu0 0.0
    %6500 = vmatprep.subr.mxu0 0.0
    %6501 = vmatpush1.msra.mxu0 0.0
    %6502 = vmatprep.subr.mxu0 0.0
    %6503 = vmatpush1.msra.mxu0 0.0
    %6504 = vmatprep.subr.mxu0 0.0
    %6505 = vmatpush1.msra.mxu0 0.0
    %6506 = vmatprep.subr.mxu0 0.0
    %6507 = vmatpush1.msra.mxu0 0.0
    %6508 = vmatprep.subr.mxu0 0.0
    %6509 = vmatpush1.msra.mxu0 0.0
    %6510 = vmatprep.subr.mxu0 0.0
    %6511 = vmatpush1.msra.mxu0 0.0
    %6512 = vmatprep.mubr.f32.mxu0 0.0
    %6513 = vmatmul.mubr.f32.gmra.mrb[0].mxu0 %v6443
    %v6514 = vpop.f32.mrb[0].mxu0
    %v6515 = vadd.f32 0.0, %v6514
    %v6516 = vpop.f32.mrb[0].mxu0
    %6517 = vmatprep.mubr.f32.mxu0 0.0
    %6518 = vmatmul.mubr.f32.gmra.mrb[0].mxu0 %v6446
    %v6519 = vpop.f32.mrb[0].mxu0
    %v6520 = vadd.f32 0.0, %v6519
    %v6521 = vpop.f32.mrb[0].mxu0
    %6522 = vdwg.mxu0
    %6523 = vrot.lane.b32.xlu0 %v282, 40
    %v6524 = vpop.permute.xlu0 %6523
    %6525 = vrot.lane.b32.xlu0 %v287, 40
    %v6526 = vpop.permute.xlu0 %6525
    %v6530 = vsel %vm1015, %v5997, 0
    %v6533 = vsel %vm1015, %v5998, 0
    %6535 = vmatprep.subr.mxu0 0.0
    %6536 = vmatpush1.msra.mxu0 %v6524
    %6537 = vmatprep.subr.mxu0 0.0
    %6538 = vmatpush1.msra.mxu0 %v6526
    %6539 = vmatprep.subr.mxu0 0.0
    %6540 = vmatpush1.msra.mxu0 0.0
    %6541 = vmatprep.subr.mxu0 0.0
    %6542 = vmatpush1.msra.mxu0 0.0
    %6543 = vmatprep.subr.mxu0 0.0
    %6544 = vmatpush1.msra.mxu0 0.0
    %6545 = vmatprep.subr.mxu0 0.0
    %6546 = vmatpush1.msra.mxu0 0.0
    %6547 = vmatprep.subr.mxu0 0.0
    %6548 = vmatpush1.msra.mxu0 0.0
    %6549 = vmatprep.subr.mxu0 0.0
    %6550 = vmatpush1.msra.mxu0 0.0
    %6551 = vmatprep.subr.mxu0 0.0
    %6552 = vmatpush1.msra.mxu0 0.0
    %6553 = vmatprep.subr.mxu0 0.0
    %6554 = vmatpush1.msra.mxu0 0.0
    %6555 = vmatprep.subr.mxu0 0.0
    %6556 = vmatpush1.msra.mxu0 0.0
    %6557 = vmatprep.subr.mxu0 0.0
    %6558 = vmatpush1.msra.mxu0 0.0
    %6559 = vmatprep.subr.mxu0 0.0
    %6560 = vmatpush1.msra.mxu0 0.0
    %6561 = vmatprep.subr.mxu0 0.0
    %6562 = vmatpush1.msra.mxu0 0.0
    %6563 = vmatprep.subr.mxu0 0.0
    %6564 = vmatpush1.msra.mxu0 0.0
    %6565 = vmatprep.subr.mxu0 0.0
    %6566 = vmatpush1.msra.mxu0 0.0
    %6567 = vmatprep.subr.mxu0 0.0
    %6568 = vmatpush1.msra.mxu0 0.0
    %6569 = vmatprep.subr.mxu0 0.0
    %6570 = vmatpush1.msra.mxu0 0.0
    %6571 = vmatprep.subr.mxu0 0.0
    %6572 = vmatpush1.msra.mxu0 0.0
    %6573 = vmatprep.subr.mxu0 0.0
    %6574 = vmatpush1.msra.mxu0 0.0
    %6575 = vmatprep.subr.mxu0 0.0
    %6576 = vmatpush1.msra.mxu0 0.0
    %6577 = vmatprep.subr.mxu0 0.0
    %6578 = vmatpush1.msra.mxu0 0.0
    %6579 = vmatprep.subr.mxu0 0.0
    %6580 = vmatpush1.msra.mxu0 0.0
    %6581 = vmatprep.subr.mxu0 0.0
    %6582 = vmatpush1.msra.mxu0 0.0
    %6583 = vmatprep.subr.mxu0 0.0
    %6584 = vmatpush1.msra.mxu0 0.0
    %6585 = vmatprep.subr.mxu0 0.0
    %6586 = vmatpush1.msra.mxu0 0.0
    %6587 = vmatprep.subr.mxu0 0.0
    %6588 = vmatpush1.msra.mxu0 0.0
    %6589 = vmatprep.subr.mxu0 0.0
    %6590 = vmatpush1.msra.mxu0 0.0
    %6591 = vmatprep.subr.mxu0 0.0
    %6592 = vmatpush1.msra.mxu0 0.0
    %6593 = vmatprep.subr.mxu0 0.0
    %6594 = vmatpush1.msra.mxu0 0.0
    %6595 = vmatprep.subr.mxu0 0.0
    %6596 = vmatpush1.msra.mxu0 0.0
    %6597 = vmatprep.subr.mxu0 0.0
    %6598 = vmatpush1.msra.mxu0 0.0
    %6599 = vmatprep.mubr.f32.mxu0 0.0
    %6600 = vmatmul.mubr.f32.gmra.mrb[0].mxu0 %v6530
    %v6601 = vpop.f32.mrb[0].mxu0
    %v6602 = vadd.f32 0.0, %v6601
    %v6603 = vpop.f32.mrb[0].mxu0
    %6604 = vmatprep.mubr.f32.mxu0 0.0
    %6605 = vmatmul.mubr.f32.gmra.mrb[0].mxu0 %v6533
    %v6606 = vpop.f32.mrb[0].mxu0
    %v6607 = vadd.f32 0.0, %v6606
    %v6608 = vpop.f32.mrb[0].mxu0
    %6609 = vdwg.mxu0
    %6610 = vrot.lane.b32.xlu0 %v292, 40
    %v6611 = vpop.permute.xlu0 %6610
    %6612 = vrot.lane.b32.xlu0 %v297, 40
    %v6613 = vpop.permute.xlu0 %6612
    %v6617 = vsel %vm1015, %v5999, 0
    %v6620 = vsel %vm1015, %v6000, 0
    %6622 = vmatprep.subr.mxu0 0.0
    %6623 = vmatpush1.msra.mxu0 %v6611
    %6624 = vmatprep.subr.mxu0 0.0
    %6625 = vmatpush1.msra.mxu0 %v6613
    %6626 = vmatprep.subr.mxu0 0.0
    %6627 = vmatpush1.msra.mxu0 0.0
    %6628 = vmatprep.subr.mxu0 0.0
    %6629 = vmatpush1.msra.mxu0 0.0
    %6630 = vmatprep.subr.mxu0 0.0
    %6631 = vmatpush1.msra.mxu0 0.0
    %6632 = vmatprep.subr.mxu0 0.0
    %6633 = vmatpush1.msra.mxu0 0.0
    %6634 = vmatprep.subr.mxu0 0.0
    %6635 = vmatpush1.msra.mxu0 0.0
    %6636 = vmatprep.subr.mxu0 0.0
    %6637 = vmatpush1.msra.mxu0 0.0
    %6638 = vmatprep.subr.mxu0 0.0
    %6639 = vmatpush1.msra.mxu0 0.0
    %6640 = vmatprep.subr.mxu0 0.0
    %6641 = vmatpush1.msra.mxu0 0.0
    %6642 = vmatprep.subr.mxu0 0.0
    %6643 = vmatpush1.msra.mxu0 0.0
    %6644 = vmatprep.subr.mxu0 0.0
    %6645 = vmatpush1.msra.mxu0 0.0
    %6646 = vmatprep.subr.mxu0 0.0
    %6647 = vmatpush1.msra.mxu0 0.0
    %6648 = vmatprep.subr.mxu0 0.0
    %6649 = vmatpush1.msra.mxu0 0.0
    %6650 = vmatprep.subr.mxu0 0.0
    %6651 = vmatpush1.msra.mxu0 0.0
    %6652 = vmatprep.subr.mxu0 0.0
    %6653 = vmatpush1.msra.mxu0 0.0
    %6654 = vmatprep.subr.mxu0 0.0
    %6655 = vmatpush1.msra.mxu0 0.0
    %6656 = vmatprep.subr.mxu0 0.0
    %6657 = vmatpush1.msra.mxu0 0.0
    %6658 = vmatprep.subr.mxu0 0.0
    %6659 = vmatpush1.msra.mxu0 0.0
    %6660 = vmatprep.subr.mxu0 0.0
    %6661 = vmatpush1.msra.mxu0 0.0
    %6662 = vmatprep.subr.mxu0 0.0
    %6663 = vmatpush1.msra.mxu0 0.0
    %6664 = vmatprep.subr.mxu0 0.0
    %6665 = vmatpush1.msra.mxu0 0.0
    %6666 = vmatprep.subr.mxu0 0.0
    %6667 = vmatpush1.msra.mxu0 0.0
    %6668 = vmatprep.subr.mxu0 0.0
    %6669 = vmatpush1.msra.mxu0 0.0
    %6670 = vmatprep.subr.mxu0 0.0
    %6671 = vmatpush1.msra.mxu0 0.0
    %6672 = vmatprep.subr.mxu0 0.0
    %6673 = vmatpush1.msra.mxu0 0.0
    %6674 = vmatprep.subr.mxu0 0.0
    %6675 = vmatpush1.msra.mxu0 0.0
    %6676 = vmatprep.subr.mxu0 0.0
    %6677 = vmatpush1.msra.mxu0 0.0
    %6678 = vmatprep.subr.mxu0 0.0
    %6679 = vmatpush1.msra.mxu0 0.0
    %6680 = vmatprep.subr.mxu0 0.0
    %6681 = vmatpush1.msra.mxu0 0.0
    %6682 = vmatprep.subr.mxu0 0.0
    %6683 = vmatpush1.msra.mxu0 0.0
    %6684 = vmatprep.subr.mxu0 0.0
    %6685 = vmatpush1.msra.mxu0 0.0
    %6686 = vmatprep.mubr.f32.mxu0 0.0
    %6687 = vmatmul.mubr.f32.gmra.mrb[0].mxu0 %v6617
    %v6688 = vpop.f32.mrb[0].mxu0
    %v6689 = vadd.f32 0.0, %v6688
    %v6690 = vpop.f32.mrb[0].mxu0
    %6691 = vmatprep.mubr.f32.mxu0 0.0
    %6692 = vmatmul.mubr.f32.gmra.mrb[0].mxu0 %v6620
    %v6693 = vpop.f32.mrb[0].mxu0
    %v6694 = vadd.f32 0.0, %v6693
    %v6695 = vpop.f32.mrb[0].mxu0
    %6696 = vdwg.mxu0
    %6713 = vrot.lane.b32.xlu0 %v2874, 8
    %v6714 = vpop.permute.xlu0 %6713
    %6715 = vrot.lane.b32.xlu0 %v2879, 8
    %v6716 = vpop.permute.xlu0 %6715
    %6717 = vrot.lane.b32.xlu0 %v2961, 8
    %v6718 = vpop.permute.xlu0 %6717
    %6719 = vrot.lane.b32.xlu0 %v2966, 8
    %v6720 = vpop.permute.xlu0 %6719
    %6721 = vrot.lane.b32.xlu0 %v3048, 8
    %v6722 = vpop.permute.xlu0 %6721
    %6723 = vrot.lane.b32.xlu0 %v3053, 8
    %v6724 = vpop.permute.xlu0 %6723
    %6725 = vrot.lane.b32.xlu0 %v3135, 8
    %v6726 = vpop.permute.xlu0 %6725
    %6727 = vrot.lane.b32.xlu0 %v3140, 8
    %v6728 = vpop.permute.xlu0 %6727
    %6729 = vrot.lane.b32.xlu0 %v3222, 8
    %v6730 = vpop.permute.xlu0 %6729
    %6731 = vrot.lane.b32.xlu0 %v3227, 8
    %v6732 = vpop.permute.xlu0 %6731
    %6733 = vrot.lane.b32.xlu0 %v3309, 8
    %v6734 = vpop.permute.xlu0 %6733
    %6735 = vrot.lane.b32.xlu0 %v3314, 8
    %v6736 = vpop.permute.xlu0 %6735
    %6737 = vrot.lane.b32.xlu0 %v3396, 8
    %v6738 = vpop.permute.xlu0 %6737
    %6739 = vrot.lane.b32.xlu0 %v3401, 8
    %v6740 = vpop.permute.xlu0 %6739
    %6741 = vrot.lane.b32.xlu0 %v3483, 8
    %v6742 = vpop.permute.xlu0 %6741
    %6743 = vrot.lane.b32.xlu0 %v3488, 8
    %v6744 = vpop.permute.xlu0 %6743
    %6777 = vrot.lane.b32.xlu0 %v4477, 16
    %v6778 = vpop.permute.xlu0 %6777
    %6779 = vrot.lane.b32.xlu0 %v4482, 16
    %v6780 = vpop.permute.xlu0 %6779
    %6781 = vrot.lane.b32.xlu0 %v4564, 16
    %v6782 = vpop.permute.xlu0 %6781
    %6783 = vrot.lane.b32.xlu0 %v4569, 16
    %v6784 = vpop.permute.xlu0 %6783
    %6785 = vrot.lane.b32.xlu0 %v4651, 16
    %v6786 = vpop.permute.xlu0 %6785
    %6787 = vrot.lane.b32.xlu0 %v4656, 16
    %v6788 = vpop.permute.xlu0 %6787
    %6789 = vrot.lane.b32.xlu0 %v4738, 16
    %v6790 = vpop.permute.xlu0 %6789
    %6791 = vrot.lane.b32.xlu0 %v4743, 16
    %v6792 = vpop.permute.xlu0 %6791
    %6793 = vrot.lane.b32.xlu0 %v4825, 16
    %v6794 = vpop.permute.xlu0 %6793
    %6795 = vrot.lane.b32.xlu0 %v4830, 16
    %v6796 = vpop.permute.xlu0 %6795
    %6797 = vrot.lane.b32.xlu0 %v4912, 16
    %v6798 = vpop.permute.xlu0 %6797
    %6799 = vrot.lane.b32.xlu0 %v4917, 16
    %v6800 = vpop.permute.xlu0 %6799
    %6801 = vrot.lane.b32.xlu0 %v4999, 16
    %v6802 = vpop.permute.xlu0 %6801
    %6803 = vrot.lane.b32.xlu0 %v5004, 16
    %v6804 = vpop.permute.xlu0 %6803
    %6805 = vrot.lane.b32.xlu0 %v5086, 16
    %v6806 = vpop.permute.xlu0 %6805
    %6807 = vrot.lane.b32.xlu0 %v5091, 16
    %v6808 = vpop.permute.xlu0 %6807
    %6841 = vrot.lane.b32.xlu0 %v6080, 24
    %v6842 = vpop.permute.xlu0 %6841
    %6843 = vrot.lane.b32.xlu0 %v6085, 24
    %v6844 = vpop.permute.xlu0 %6843
    %6845 = vrot.lane.b32.xlu0 %v6167, 24
    %v6846 = vpop.permute.xlu0 %6845
    %6847 = vrot.lane.b32.xlu0 %v6172, 24
    %v6848 = vpop.permute.xlu0 %6847
    %6849 = vrot.lane.b32.xlu0 %v6254, 24
    %v6850 = vpop.permute.xlu0 %6849
    %6851 = vrot.lane.b32.xlu0 %v6259, 24
    %v6852 = vpop.permute.xlu0 %6851
    %6853 = vrot.lane.b32.xlu0 %v6341, 24
    %v6854 = vpop.permute.xlu0 %6853
    %6855 = vrot.lane.b32.xlu0 %v6346, 24
    %v6856 = vpop.permute.xlu0 %6855
    %6857 = vrot.lane.b32.xlu0 %v6428, 24
    %v6858 = vpop.permute.xlu0 %6857
    %6859 = vrot.lane.b32.xlu0 %v6433, 24
    %v6860 = vpop.permute.xlu0 %6859
    %6861 = vrot.lane.b32.xlu0 %v6515, 24
    %v6862 = vpop.permute.xlu0 %6861
    %6863 = vrot.lane.b32.xlu0 %v6520, 24
    %v6864 = vpop.permute.xlu0 %6863
    %6865 = vrot.lane.b32.xlu0 %v6602, 24
    %v6866 = vpop.permute.xlu0 %6865
    %6867 = vrot.lane.b32.xlu0 %v6607, 24
    %v6868 = vpop.permute.xlu0 %6867
    %6869 = vrot.lane.b32.xlu0 %v6689, 24
    %v6870 = vpop.permute.xlu0 %6869
    %6871 = vrot.lane.b32.xlu0 %v6694, 24
    %v6872 = vpop.permute.xlu0 %6871
    %v6889 = vsel %vm308, %v1271, %v6714
    %v6890 = vsel %vm308, %v1276, %v6716
    %v6891 = vsel %vm308, %v1358, %v6718
    %v6892 = vsel %vm308, %v1363, %v6720
    %v6893 = vsel %vm308, %v1445, %v6722
    %v6894 = vsel %vm308, %v1450, %v6724
    %v6895 = vsel %vm308, %v1532, %v6726
    %v6896 = vsel %vm308, %v1537, %v6728
    %v6897 = vsel %vm308, %v1619, %v6730
    %v6898 = vsel %vm308, %v1624, %v6732
    %v6899 = vsel %vm308, %v1706, %v6734
    %v6900 = vsel %vm308, %v1711, %v6736
    %v6901 = vsel %vm308, %v1793, %v6738
    %v6902 = vsel %vm308, %v1798, %v6740
    %v6903 = vsel %vm308, %v1880, %v6742
    %v6904 = vsel %vm308, %v1885, %v6744
    %v6905 = vsel %vm1015, %v6889, %v6778
    %v6906 = vsel %vm1015, %v6890, %v6780
    %v6907 = vsel %vm1015, %v6891, %v6782
    %v6908 = vsel %vm1015, %v6892, %v6784
    %v6909 = vsel %vm1015, %v6893, %v6786
    %v6910 = vsel %vm1015, %v6894, %v6788
    %v6911 = vsel %vm1015, %v6895, %v6790
    %v6912 = vsel %vm1015, %v6896, %v6792
    %v6913 = vsel %vm1015, %v6897, %v6794
    %v6914 = vsel %vm1015, %v6898, %v6796
    %v6915 = vsel %vm1015, %v6899, %v6798
    %v6916 = vsel %vm1015, %v6900, %v6800
    %v6917 = vsel %vm1015, %v6901, %v6802
    %v6918 = vsel %vm1015, %v6902, %v6804
    %v6919 = vsel %vm1015, %v6903, %v6806
    %v6920 = vsel %vm1015, %v6904, %v6808
    %vm6921 = vcmask 195584
    %v6922 = vsel %vm6921, %v6905, %v6842
    %v6923 = vsel %vm6921, %v6906, %v6844
    %v6924 = vsel %vm6921, %v6907, %v6846
    %v6925 = vsel %vm6921, %v6908, %v6848
    %v6926 = vsel %vm6921, %v6909, %v6850
    %v6927 = vsel %vm6921, %v6910, %v6852
    %v6928 = vsel %vm6921, %v6911, %v6854
    %v6929 = vsel %vm6921, %v6912, %v6856
    %v6930 = vsel %vm6921, %v6913, %v6858
    %v6931 = vsel %vm6921, %v6914, %v6860
    %v6932 = vsel %vm6921, %v6915, %v6862
    %v6933 = vsel %vm6921, %v6916, %v6864
    %v6934 = vsel %vm6921, %v6917, %v6866
    %v6935 = vsel %vm6921, %v6918, %v6868
    %v6936 = vsel %vm6921, %v6919, %v6870
    %v6937 = vsel %vm6921, %v6920, %v6872
    %v6938 = vld [vmem:[#allocation8] sm:$0xff]
    %v6939 = vld [vmem:[#allocation8 + $0x8] sm:$0xff]
    %v6940 = vld [vmem:[#allocation8 + $0x10] sm:$0xff]
    %v6941 = vld [vmem:[#allocation8 + $0x18] sm:$0xff]
    %v6942 = vld [vmem:[%s5] sm:$0x1]
    %v6944 = vlaneseq
    %v6945 = vshrl.u32 %v6944, 7
    %v6946 = vsub.s32 0, %v6945
    %v6947 = vrot.slane %v6942, %v6946
    %v6950 = vsel %vm106, %v6922, 0
    %v6953 = vsel %vm106, %v6923, 0
    %v6956 = vsel %vm106, %v6924, 0
    %v6959 = vsel %vm106, %v6925, 0
    %v6962 = vsel %vm106, %v6926, 0
    %v6965 = vsel %vm106, %v6927, 0
    %v6968 = vsel %vm106, %v6928, 0
    %v6971 = vsel %vm106, %v6929, 0
    %v6974 = vsel %vm106, %v6930, 0
    %v6977 = vsel %vm106, %v6931, 0
    %v6980 = vsel %vm106, %v6932, 0
    %v6983 = vsel %vm106, %v6933, 0
    %v6986 = vsel %vm106, %v6934, 0
    %v6989 = vsel %vm106, %v6935, 0
    %v6992 = vsel %vm106, %v6936, 0
    %v6995 = vsel %vm106, %v6937, 0
    %6997 = vmatprep.subr.mxu0 0.0
    %6998 = vmatpush1.msra.mxu0 %v6938
    %6999 = vmatprep.subr.mxu0 0.0
    %7000 = vmatpush1.msra.mxu0 %v6939
    %7001 = vmatprep.subr.mxu0 0.0
    %7002 = vmatpush1.msra.mxu0 %v6940
    %7003 = vmatprep.subr.mxu0 0.0
    %7004 = vmatpush1.msra.mxu0 %v6941
    %7005 = vmatprep.subr.mxu0 0.0
    %7006 = vmatpush1.msra.mxu0 0.0
    %7007 = vmatprep.subr.mxu0 0.0
    %7008 = vmatpush1.msra.mxu0 0.0
    %7009 = vmatprep.subr.mxu0 0.0
    %7010 = vmatpush1.msra.mxu0 0.0
    %7011 = vmatprep.subr.mxu0 0.0
    %7012 = vmatpush1.msra.mxu0 0.0
    %7013 = vmatprep.subr.mxu0 0.0
    %7014 = vmatpush1.msra.mxu0 0.0
    %7015 = vmatprep.subr.mxu0 0.0
    %7016 = vmatpush1.msra.mxu0 0.0
    %7017 = vmatprep.subr.mxu0 0.0
    %7018 = vmatpush1.msra.mxu0 0.0
    %7019 = vmatprep.subr.mxu0 0.0
    %7020 = vmatpush1.msra.mxu0 0.0
    %7021 = vmatprep.subr.mxu0 0.0
    %7022 = vmatpush1.msra.mxu0 0.0
    %7023 = vmatprep.subr.mxu0 0.0
    %7024 = vmatpush1.msra.mxu0 0.0
    %7025 = vmatprep.subr.mxu0 0.0
    %7026 = vmatpush1.msra.mxu0 0.0
    %7027 = vmatprep.subr.mxu0 0.0
    %7028 = vmatpush1.msra.mxu0 0.0
    %7029 = vmatprep.subr.mxu0 0.0
    %7030 = vmatpush1.msra.mxu0 0.0
    %7031 = vmatprep.subr.mxu0 0.0
    %7032 = vmatpush1.msra.mxu0 0.0
    %7033 = vmatprep.subr.mxu0 0.0
    %7034 = vmatpush1.msra.mxu0 0.0
    %7035 = vmatprep.subr.mxu0 0.0
    %7036 = vmatpush1.msra.mxu0 0.0
    %7037 = vmatprep.subr.mxu0 0.0
    %7038 = vmatpush1.msra.mxu0 0.0
    %7039 = vmatprep.subr.mxu0 0.0
    %7040 = vmatpush1.msra.mxu0 0.0
    %7041 = vmatprep.subr.mxu0 0.0
    %7042 = vmatpush1.msra.mxu0 0.0
    %7043 = vmatprep.subr.mxu0 0.0
    %7044 = vmatpush1.msra.mxu0 0.0
    %7045 = vmatprep.subr.mxu0 0.0
    %7046 = vmatpush1.msra.mxu0 0.0
    %7047 = vmatprep.subr.mxu0 0.0
    %7048 = vmatpush1.msra.mxu0 0.0
    %7049 = vmatprep.subr.mxu0 0.0
    %7050 = vmatpush1.msra.mxu0 0.0
    %7051 = vmatprep.subr.mxu0 0.0
    %7052 = vmatpush1.msra.mxu0 0.0
    %7053 = vmatprep.subr.mxu0 0.0
    %7054 = vmatpush1.msra.mxu0 0.0
    %7055 = vmatprep.subr.mxu0 0.0
    %7056 = vmatpush1.msra.mxu0 0.0
    %7057 = vmatprep.subr.mxu0 0.0
    %7058 = vmatpush1.msra.mxu0 0.0
    %7059 = vmatprep.subr.mxu0 0.0
    %7060 = vmatpush1.msra.mxu0 0.0
    %7061 = vmatprep.mubr.f32.mxu0 0.0
    %7062 = vmatmul.mubr.f32.gmra.mrb[0].mxu0 %v6950
    %v7063 = vpop.f32.mrb[0].mxu0
    %v7064 = vadd.f32 %v6947, %v7063
    %v7065 = vpop.f32.mrb[0].mxu0
    %7066 = vmatprep.mubr.f32.mxu0 0.0
    %7067 = vmatmul.mubr.f32.gmra.mrb[0].mxu0 %v6953
    %v7068 = vpop.f32.mrb[0].mxu0
    %v7069 = vadd.f32 %v6947, %v7068
    %v7070 = vpop.f32.mrb[0].mxu0
    %7071 = vmatprep.mubr.f32.mxu0 0.0
    %7072 = vmatmul.mubr.f32.gmra.mrb[0].mxu0 %v6956
    %v7073 = vpop.f32.mrb[0].mxu0
    %v7074 = vadd.f32 %v6947, %v7073
    %v7075 = vpop.f32.mrb[0].mxu0
    %7076 = vmatprep.mubr.f32.mxu0 0.0
    %7077 = vmatmul.mubr.f32.gmra.mrb[0].mxu0 %v6959
    %v7078 = vpop.f32.mrb[0].mxu0
    %v7079 = vadd.f32 %v6947, %v7078
    %v7080 = vpop.f32.mrb[0].mxu0
    %7081 = vmatprep.mubr.f32.mxu0 0.0
    %7082 = vmatmul.mubr.f32.gmra.mrb[0].mxu0 %v6962
    %v7083 = vpop.f32.mrb[0].mxu0
    %v7084 = vadd.f32 %v6947, %v7083
    %v7085 = vpop.f32.mrb[0].mxu0
    %7086 = vmatprep.mubr.f32.mxu0 0.0
    %7087 = vmatmul.mubr.f32.gmra.mrb[0].mxu0 %v6965
    %v7088 = vpop.f32.mrb[0].mxu0
    %v7089 = vadd.f32 %v6947, %v7088
    %v7090 = vpop.f32.mrb[0].mxu0
    %7091 = vmatprep.mubr.f32.mxu0 0.0
    %7092 = vmatmul.mubr.f32.gmra.mrb[0].mxu0 %v6968
    %v7093 = vpop.f32.mrb[0].mxu0
    %v7094 = vadd.f32 %v6947, %v7093
    %v7095 = vpop.f32.mrb[0].mxu0
    %7096 = vmatprep.mubr.f32.mxu0 0.0
    %7097 = vmatmul.mubr.f32.gmra.mrb[0].mxu0 %v6971
    %v7098 = vpop.f32.mrb[0].mxu0
    %v7099 = vadd.f32 %v6947, %v7098
    %v7100 = vpop.f32.mrb[0].mxu0
    %7101 = vmatprep.mubr.f32.mxu0 0.0
    %7102 = vmatmul.mubr.f32.gmra.mrb[0].mxu0 %v6974
    %v7103 = vpop.f32.mrb[0].mxu0
    %v7104 = vadd.f32 %v6947, %v7103
    %v7105 = vpop.f32.mrb[0].mxu0
    %7106 = vmatprep.mubr.f32.mxu0 0.0
    %7107 = vmatmul.mubr.f32.gmra.mrb[0].mxu0 %v6977
    %v7108 = vpop.f32.mrb[0].mxu0
    %v7109 = vadd.f32 %v6947, %v7108
    %v7110 = vpop.f32.mrb[0].mxu0
    %7111 = vmatprep.mubr.f32.mxu0 0.0
    %7112 = vmatmul.mubr.f32.gmra.mrb[0].mxu0 %v6980
    %v7113 = vpop.f32.mrb[0].mxu0
    %v7114 = vadd.f32 %v6947, %v7113
    %v7115 = vpop.f32.mrb[0].mxu0
    %7116 = vmatprep.mubr.f32.mxu0 0.0
    %7117 = vmatmul.mubr.f32.gmra.mrb[0].mxu0 %v6983
    %v7118 = vpop.f32.mrb[0].mxu0
    %v7119 = vadd.f32 %v6947, %v7118
    %v7120 = vpop.f32.mrb[0].mxu0
    %7121 = vmatprep.mubr.f32.mxu0 0.0
    %7122 = vmatmul.mubr.f32.gmra.mrb[0].mxu0 %v6986
    %v7123 = vpop.f32.mrb[0].mxu0
    %v7124 = vadd.f32 %v6947, %v7123
    %v7125 = vpop.f32.mrb[0].mxu0
    %7126 = vmatprep.mubr.f32.mxu0 0.0
    %7127 = vmatmul.mubr.f32.gmra.mrb[0].mxu0 %v6989
    %v7128 = vpop.f32.mrb[0].mxu0
    %v7129 = vadd.f32 %v6947, %v7128
    %v7130 = vpop.f32.mrb[0].mxu0
    %7131 = vmatprep.mubr.f32.mxu0 0.0
    %7132 = vmatmul.mubr.f32.gmra.mrb[0].mxu0 %v6992
    %v7133 = vpop.f32.mrb[0].mxu0
    %v7134 = vadd.f32 %v6947, %v7133
    %v7135 = vpop.f32.mrb[0].mxu0
    %7136 = vmatprep.mubr.f32.mxu0 0.0
    %7137 = vmatmul.mubr.f32.gmra.mrb[0].mxu0 %v6995
    %v7138 = vpop.f32.mrb[0].mxu0
    %v7139 = vadd.f32 %v6947, %v7138
    %v7140 = vpop.f32.mrb[0].mxu0
    %7141 = vdwg.mxu0
    %7142 = vst.msk [vmem:[#allocation10] sm:$0xff] %vm106, %v7064
    %7143 = vst.msk [vmem:[#allocation10 + $0x8] sm:$0xff] %vm106, %v7069
    %7144 = vst.msk [vmem:[#allocation10 + $0x10] sm:$0xff] %vm106, %v7074
    %7145 = vst.msk [vmem:[#allocation10 + $0x18] sm:$0xff] %vm106, %v7079
    %7146 = vst.msk [vmem:[#allocation10 + $0x20] sm:$0xff] %vm106, %v7084
    %7147 = vst.msk [vmem:[#allocation10 + $0x28] sm:$0xff] %vm106, %v7089
    %7148 = vst.msk [vmem:[#allocation10 + $0x30] sm:$0xff] %vm106, %v7094
    %7149 = vst.msk [vmem:[#allocation10 + $0x38] sm:$0xff] %vm106, %v7099
    %7150 = vst.msk [vmem:[#allocation10 + $0x40] sm:$0xff] %vm106, %v7104
    %7151 = vst.msk [vmem:[#allocation10 + $0x48] sm:$0xff] %vm106, %v7109
    %7152 = vst.msk [vmem:[#allocation10 + $0x50] sm:$0xff] %vm106, %v7114
    %7153 = vst.msk [vmem:[#allocation10 + $0x58] sm:$0xff] %vm106, %v7119
    %7154 = vst.msk [vmem:[#allocation10 + $0x60] sm:$0xff] %vm106, %v7124
    %7155 = vst.msk [vmem:[#allocation10 + $0x68] sm:$0xff] %vm106, %v7129
    %7156 = vst.msk [vmem:[#allocation10 + $0x70] sm:$0xff] %vm106, %v7134
    %7157 = vst.msk [vmem:[#allocation10 + $0x78] sm:$0xff] %vm106, %v7139
    // Predicated region
    $region42: #{tpu_custom_call.1} parent=1 // pred_check
      _
    $region43: #{tpu_custom_call.1} parent=1 // pred_check_branch
      %7159 = sbr.rel (0) target = $region45
    $region44: #{tpu_custom_call.1} parent=1 // pred_region
      %s7161 = ssub.s32 2048, 2048
      %7162 = vsyncadd [#allocation4], %s7161
      %s7163 = sshll.u32 [#allocation10], 4
      %s7164 = int_to_ptr.vmem [resolvable:$true] %s7163
      %7169 = dma.vmem_to_hbm [thread:$0]  %s7164, 2048, %s6, [#allocation4], 128, 128, 8
    $region45: #{tpu_custom_call.1} parent=1 // pred_fallthru
      _
    // Predicated region
    $region46: #{tpu_custom_call.1} parent=1 // pred_check
      _
    $region47: #{tpu_custom_call.1} parent=1 // pred_check_branch
      %7171 = sbr.rel (0) target = $region49
    $region48: #{tpu_custom_call.1} parent=1 // pred_region
      %7172 = dma.done [#allocation4], 2048
    $region49: #{tpu_custom_call.1} parent=1 // pred_fallthru
      _
    %7173 = vsyncpa [#allocation3], 1
    %7174 = vsyncpa [#allocation6], 1
    %7175 = vsyncpa [#allocation9], 1
    %7176 = vsyncpa [#allocation4], 1

</llo_original>
